<compile_context>
chip_gen: v7x
topology: tpu7x:2x2x1
jax: 0.10.0
libtpu: 0.0.40
codegen_flags: <defaults>
</compile_context>

<pallas_src>
import math

import jax
import jax.numpy as jnp
from jax import lax
from jax.experimental import pallas as pl
from jax.experimental.pallas import tpu as pltpu


# ----------------------------------------------------------------------------
# Kernel 1: sigmoid + focal loss + IoU loss on a lane-dense (B, C*H*W) slab
# ----------------------------------------------------------------------------
def _make_focal_iou_kernel(B, N, alpha, gamma):
    inv_total = 1.0 / float(B * N)
    inv_batch = 1.0 / float(B)

    def kernel(pred_ref, tgt_ref, sig_ref, scal_ref):
        x = pred_ref[...]                      # (B, N), N lane-dense
        t = tgt_ref[...]

        # sigmoid (reused by focal, IoU and the MS-SSIM kernel downstream)
        p = 1.0 / (1.0 + jnp.exp(-x))
        sig_ref[...] = p                       # unmasked full-width stores

        # focal loss (mean over all elements)
        pt = t * p + (1.0 - t) * (1.0 - p)
        one_m = 1.0 - pt
        if gamma == 2.0:
            focal_weight = alpha * (one_m * one_m)   # explicit square, no pow
        else:
            focal_weight = alpha * (one_m ** gamma)
        fl = -focal_weight * jnp.log(pt + 1e-6)
        focal = jnp.sum(fl) * inv_total

        # IoU loss: mean over batch of (1 - I/U), one batched lane reduction
        inter = jnp.sum(t * p, axis=1, keepdims=True)          # (B, 1)
        t_sum = jnp.sum(t, axis=1, keepdims=True)
        p_sum = jnp.sum(p, axis=1, keepdims=True)
        union = t_sum + p_sum - inter
        iou = jnp.sum(1.0 - inter / union) * inv_batch

        scal_ref[0] = focal
        scal_ref[1] = iou

    return kernel


def focal_iou_sigmoid(pred, target, alpha=0.25, gamma=2.0):
    B, C, H, W = pred.shape
    N = C * H * W
    pred2 = pred.reshape(B, N).astype(jnp.float32)
    tgt2 = target.reshape(B, N).astype(jnp.float32)
    kernel = _make_focal_iou_kernel(B, N, float(alpha), float(gamma))
    sig2, scal = pl.pallas_call(
        kernel,
        out_shape=(
            jax.ShapeDtypeStruct((B, N), jnp.float32),
            jax.ShapeDtypeStruct((2,), jnp.float32),
        ),
        in_specs=[
            pl.BlockSpec(memory_space=pltpu.MemorySpace.VMEM),
            pl.BlockSpec(memory_space=pltpu.MemorySpace.VMEM),
        ],
        out_specs=(
            pl.BlockSpec(memory_space=pltpu.MemorySpace.VMEM),
            pl.BlockSpec(memory_space=pltpu.MemorySpace.SMEM),
        ),
    )(pred2, tgt2)
    return scal[0], scal[1], sig2.reshape(B, C, H, W)


# ----------------------------------------------------------------------------
# Kernel 2: fused 5-level MS-SSIM pyramid (gaussian conv + means + 2x2 pooling)
# ----------------------------------------------------------------------------
def _gaussian_1d(ws, sigma=1.5):
    g = [math.exp(-((x - ws // 2) ** 2) / (2.0 * sigma ** 2)) for x in range(ws)]
    s = sum(g)
    return [v / s for v in g]


def _make_msssim_kernel(BC, H, W, levels, window_size):
    # static per-level geometry
    geom = []
    for lvl in range(levels):
        hl, wl = H >> lvl, W >> lvl
        ws = min(window_size, hl, wl)
        geom.append((hl, wl, ws))

    def kernel(a0_ref, b0_ref, mssim_ref, mcs_ref, *pool_refs):
        lvl_refs = [(a0_ref, b0_ref)]
        for lvl in range(1, levels):
            lvl_refs.append((pool_refs[2 * (lvl - 1)], pool_refs[2 * (lvl - 1) + 1]))

        for lvl in range(levels):
            hl, wl, ws = geom[lvl]
            hp, wp = hl - ws + 1, wl - ws + 1
            g = _gaussian_1d(ws)
            aref, bref = lvl_refs[lvl]

            # dynamic value range (reference semantics with val_range=None)
            a_full = aref[...]
            max_val = jnp.where(jnp.max(a_full) > 128.0, 255.0, 1.0)
            min_val = jnp.where(jnp.min(a_full) < -0.5, -1.0, 0.0)
            lr = max_val - min_val
            c1 = (0.01 * lr) ** 2
            c2 = (0.03 * lr) ** 2

            # ---- per-level constant operators (hoisted out of the plane loop) ----
            if hp == 1 and wp == 1:
                # window covers the whole plane -> weighted full-window sum
                ih = lax.broadcasted_iota(jnp.int32, (hl, wl), 0)
                iw = lax.broadcasted_iota(jnp.int32, (hl, wl), 1)
                gh = jnp.zeros((hl, wl), jnp.float32)
                gw = jnp.zeros((hl, wl), jnp.float32)
                for k in range(ws):
                    gh = gh + jnp.where(ih == k, jnp.float32(g[k]), 0.0)
                    gw = gw + jnp.where(iw == k, jnp.float32(g[k]), 0.0)
                w2d = gh * gw

                def conv(q, _w2d=w2d):
                    return jnp.sum(_w2d * q)
            else:
                # separable gaussian conv as two small MXU matmuls (band matrices)
                rh = lax.broadcasted_iota(jnp.int32, (hp, hl), 0)
                ch = lax.broadcasted_iota(jnp.int32, (hp, hl), 1)
                dh = ch - rh                                    # = c - p
                rw = lax.broadcasted_iota(jnp.int32, (wl, wp), 0)
                cw = lax.broadcasted_iota(jnp.int32, (wl, wp), 1)
                dw = rw - cw                                    # = w - q
                gh_band = jnp.zeros((hp, hl), jnp.float32)
                gw_band = jnp.zeros((wl, wp), jnp.float32)
                for k in range(ws):
                    gh_band = gh_band + jnp.where(dh == k, jnp.float32(g[k]), 0.0)
                    gw_band = gw_band + jnp.where(dw == k, jnp.float32(g[k]), 0.0)

                def conv(q, _gh=gh_band, _gw=gw_band):
                    tmp = jnp.dot(q, _gw, preferred_element_type=jnp.float32)
                    return jnp.dot(_gh, tmp, preferred_element_type=jnp.float32)

            do_pool = lvl < levels - 1
            if do_pool:
                hn, wn = hl // 2, wl // 2
                rp = lax.broadcasted_iota(jnp.int32, (hn, hl), 0)
                cp = lax.broadcasted_iota(jnp.int32, (hn, hl), 1)
                ph = jnp.where((cp == 2 * rp) | (cp == 2 * rp + 1),
                               jnp.float32(0.5), 0.0)            # (hn, hl)
                rq = lax.broadcasted_iota(jnp.int32, (wl, wn), 0)
                cq = lax.broadcasted_iota(jnp.int32, (wl, wn), 1)
                pw = jnp.where((rq == 2 * cq) | (rq == 2 * cq + 1),
                               jnp.float32(0.5), 0.0)            # (wl, wn)
                na_ref, nb_ref = lvl_refs[lvl + 1]

            def plane_body(bc, carry):
                ssim_acc, cs_acc = carry
                a = aref[bc]                                     # (hl, wl)
                b = bref[bc]
                mu1 = conv(a)
                mu2 = conv(b)
                s11 = conv(a * a)
                s22 = conv(b * b)
                s12 = conv(a * b)
                mu1_sq = mu1 * mu1
                mu2_sq = mu2 * mu2
                mu1_mu2 = mu1 * mu2
                sigma1_sq = s11 - mu1_sq
                sigma2_sq = s22 - mu2_sq
                sigma12 = s12 - mu1_mu2
                v1 = 2.0 * sigma12 + c2
                v2 = sigma1_sq + sigma2_sq + c2
                cs_map = v1 / v2
                ssim_map = ((2.0 * mu1_mu2 + c1) * v1) / ((mu1_sq + mu2_sq + c1) * v2)
                if do_pool:
                    # 2x2 average pooling of this plane into the next level
                    na_ref[bc] = jnp.dot(
                        ph, jnp.dot(a, pw, preferred_element_type=jnp.float32),
                        preferred_element_type=jnp.float32)
                    nb_ref[bc] = jnp.dot(
                        ph, jnp.dot(b, pw, preferred_element_type=jnp.float32),
                        preferred_element_type=jnp.float32)
                return (ssim_acc + jnp.sum(ssim_map), cs_acc + jnp.sum(cs_map))

            ssim_sum, cs_sum = lax.fori_loop(
                0, BC, plane_body,
                (jnp.zeros((), jnp.float32), jnp.zeros((), jnp.float32)))

            inv_denom = jnp.float32(1.0 / float(BC * hp * wp))
            mssim_ref[lvl] = ssim_sum * inv_denom
            mcs_ref[lvl] = cs_sum * inv_denom

    return kernel


def msssim_pyramid(img1, img2, window_size=11, levels=5):
    B, C, H, W = img1.shape
    assert H % (1 << (levels - 1)) == 0 and W % (1 << (levels - 1)) == 0, \
        "spatial dims must be divisible by 2**(levels-1)"
    BC = B * C
    a0 = img1.reshape(BC, H, W).astype(jnp.float32)
    b0 = img2.reshape(BC, H, W).astype(jnp.float32)

    scratch = []
    for lvl in range(1, levels):
        hl, wl = H >> lvl, W >> lvl
        scratch.append(pltpu.VMEM((BC, hl, wl), jnp.float32))
        scratch.append(pltpu.VMEM((BC, hl, wl), jnp.float32))

    kernel = _make_msssim_kernel(BC, H, W, levels, window_size)
    mssim, mcs = pl.pallas_call(
        kernel,
        out_shape=(
            jax.ShapeDtypeStruct((levels,), jnp.float32),
            jax.ShapeDtypeStruct((levels,), jnp.float32),
        ),
        in_specs=[
            pl.BlockSpec(memory_space=pltpu.MemorySpace.VMEM),
            pl.BlockSpec(memory_space=pltpu.MemorySpace.VMEM),
        ],
        out_specs=(
            pl.BlockSpec(memory_space=pltpu.MemorySpace.SMEM),
            pl.BlockSpec(memory_space=pltpu.MemorySpace.SMEM),
        ),
        scratch_shapes=scratch,
    )(a0, b0)
    return mssim, mcs


# ----------------------------------------------------------------------------
# Full composite loss (all on-device, jittable)
# ----------------------------------------------------------------------------
_MSSSIM_WEIGHTS = (0.0448, 0.2856, 0.3001, 0.2363, 0.1333)


def focal_loss_with_iou_and_ssim(pred, target, alpha=0.25, gamma=2.0):
    focal, iou, sig = focal_iou_sigmoid(pred, target, alpha=alpha, gamma=gamma)

    mssim, mcs = msssim_pyramid(sig, target, window_size=11,
                                levels=len(_MSSSIM_WEIGHTS))
    w = jnp.asarray(_MSSSIM_WEIGHTS, jnp.float32)
    pow1 = mcs ** w
    pow2 = mssim ** w
    # exactly the reference combination: prod(pow1[:-1] * pow2[-1])
    output = jnp.prod(pow1[:-1] * pow2[-1])
    mss = jnp.clip(1.0 - output, 0.0, 1.0)

    # dynamic loss weighting: reference uses .item()+numpy (detached); here it is
    # computed on-device with stop_gradient -> same forward value, no host syncs.
    losses = lax.stop_gradient(jnp.stack([focal, iou, mss]))
    wts = 1.0 / (losses + 1e-6)
    wts = wts / jnp.sum(wts)

    return wts[0] * focal + wts[1] * iou + wts[2] * mss


# ----------------------------------------------------------------------------
# Demo
# ----------------------------------------------------------------------------
if __name__ == "__main__":
    key = jax.random.PRNGKey(0)
    k1, k2 = jax.random.split(key)

    # spatial = 32 so all 5 MS-SSIM pyramid levels are valid (32,16,8,4,2)
    B, C, H, W = 2, 4, 32, 32
    target = (jax.random.uniform(k1, (B, C, H, W)) > 0.5).astype(jnp.float32)
    noise = jax.random.normal(k2, (B, C, H, W), dtype=jnp.float32)
    pred = 4.0 * (target - 0.5) + 0.5 * noise   # logits loosely matching target

    loss_fn = jax.jit(focal_loss_with_iou_and_ssim)
    total = loss_fn(pred, target)
    jax.block_until_ready(total)
    print("KERNEL_OK")
</pallas_src>

<mosaic_0001>
module attributes {stable_mosaic.version = 11 : i64} {
  func.func @kernel(%arg0: memref<2x4096xf32, #tpu.memory_space<vmem>>, %arg1: memref<2x4096xf32, #tpu.memory_space<vmem>>, %arg2: memref<2x4096xf32, #tpu.memory_space<vmem>>, %arg3: memref<2xf32, #tpu.memory_space<smem>>) attributes {dimension_semantics = [], scalar_prefetch = 0 : i64, scratch_operands = 0 : i64, tpu.core_type = #tpu.core_type<tc>} {
    %c0 = arith.constant 0 : index
    %c0_0 = arith.constant 0 : index
    %0 = vector.load %arg0[%c0, %c0_0] : memref<2x4096xf32, #tpu.memory_space<vmem>>, vector<2x4096xf32>
    %c0_1 = arith.constant 0 : index
    %c0_2 = arith.constant 0 : index
    %1 = vector.load %arg1[%c0_1, %c0_2] : memref<2x4096xf32, #tpu.memory_space<vmem>>, vector<2x4096xf32>
    %cst = arith.constant 0.000000e+00 : f32
    %2 = vector.broadcast %cst : f32 to vector<2x4096xf32>
    %3 = arith.subf %2, %0 : vector<2x4096xf32>
    %4 = math.exp %3 : vector<2x4096xf32>
    %cst_3 = arith.constant 1.000000e+00 : f32
    %5 = vector.broadcast %cst_3 : f32 to vector<2x4096xf32>
    %6 = arith.addf %5, %4 : vector<2x4096xf32>
    %cst_4 = arith.constant 1.000000e+00 : f32
    %7 = vector.broadcast %cst_4 : f32 to vector<2x4096xf32>
    %8 = arith.divf %7, %6 : vector<2x4096xf32>
    %c0_5 = arith.constant 0 : index
    %c0_6 = arith.constant 0 : index
    %9 = vector.load %arg2[%c0_5, %c0_6] : memref<2x4096xf32, #tpu.memory_space<vmem>>, vector<2x4096xf32>
    tpu.vector_store %arg2[%c0_5, %c0_6], %8 {strides = array<i32>} : memref<2x4096xf32, #tpu.memory_space<vmem>>, vector<2x4096xf32>,
    %10 = arith.mulf %1, %8 : vector<2x4096xf32>
    %cst_7 = arith.constant 1.000000e+00 : f32
    %11 = vector.broadcast %cst_7 : f32 to vector<2x4096xf32>
    %12 = arith.subf %11, %1 : vector<2x4096xf32>
    %cst_8 = arith.constant 1.000000e+00 : f32
    %13 = vector.broadcast %cst_8 : f32 to vector<2x4096xf32>
    %14 = arith.subf %13, %8 : vector<2x4096xf32>
    %15 = arith.mulf %12, %14 : vector<2x4096xf32>
    %16 = arith.addf %10, %15 : vector<2x4096xf32>
    %cst_9 = arith.constant 1.000000e+00 : f32
    %17 = vector.broadcast %cst_9 : f32 to vector<2x4096xf32>
    %18 = arith.subf %17, %16 : vector<2x4096xf32>
    %19 = arith.mulf %18, %18 : vector<2x4096xf32>
    %cst_10 = arith.constant 2.500000e-01 : f32
    %20 = vector.broadcast %cst_10 : f32 to vector<2x4096xf32>
    %21 = arith.mulf %20, %19 : vector<2x4096xf32>
    %cst_11 = arith.constant 0.000000e+00 : f32
    %22 = vector.broadcast %cst_11 : f32 to vector<2x4096xf32>
    %23 = arith.subf %22, %21 : vector<2x4096xf32>
    %cst_12 = arith.constant 9.99999997E-7 : f32
    %24 = vector.broadcast %cst_12 : f32 to vector<2x4096xf32>
    %25 = arith.addf %16, %24 : vector<2x4096xf32>
    %26 = math.log %25 : vector<2x4096xf32>
    %27 = arith.mulf %23, %26 : vector<2x4096xf32>
    %28 = vector.shape_cast %27 : vector<2x4096xf32> to vector<1x2x4096xf32>
    %cst_13 = arith.constant dense<0.000000e+00> : vector<1xf32>
    %29 = vector.multi_reduction <add>, %28, %cst_13 [1, 2] : vector<1x2x4096xf32> to vector<1xf32>
    %30 = vector.shape_cast %29 : vector<1xf32> to vector<1x1x1xf32>
    %31 = vector.extract %30[0, 0, 0] : f32 from vector<1x1x1xf32>
    %cst_14 = arith.constant 1.22070313E-4 : f32
    %32 = arith.mulf %31, %cst_14 : f32
    %33 = arith.mulf %1, %8 : vector<2x4096xf32>
    %cst_15 = arith.constant dense<0.000000e+00> : vector<2xf32>
    %34 = vector.multi_reduction <add>, %33, %cst_15 [1] : vector<2x4096xf32> to vector<2xf32>
    %35 = vector.shape_cast %34 : vector<2xf32> to vector<2x1xf32>
    %cst_16 = arith.constant dense<0.000000e+00> : vector<2xf32>
    %36 = vector.multi_reduction <add>, %1, %cst_16 [1] : vector<2x4096xf32> to vector<2xf32>
    %37 = vector.shape_cast %36 : vector<2xf32> to vector<2x1xf32>
    %cst_17 = arith.constant dense<0.000000e+00> : vector<2xf32>
    %38 = vector.multi_reduction <add>, %8, %cst_17 [1] : vector<2x4096xf32> to vector<2xf32>
    %39 = vector.shape_cast %38 : vector<2xf32> to vector<2x1xf32>
    %40 = arith.addf %37, %39 : vector<2x1xf32>
    %41 = arith.subf %40, %35 : vector<2x1xf32>
    %42 = arith.divf %35, %41 : vector<2x1xf32>
    %cst_18 = arith.constant 1.000000e+00 : f32
    %43 = vector.broadcast %cst_18 : f32 to vector<2x1xf32>
    %44 = arith.subf %43, %42 : vector<2x1xf32>
    %45 = vector.shape_cast %44 : vector<2x1xf32> to vector<1x2x1xf32>
    %cst_19 = arith.constant dense<0.000000e+00> : vector<1xf32>
    %46 = vector.multi_reduction <add>, %45, %cst_19 [1, 2] : vector<1x2x1xf32> to vector<1xf32>
    %47 = vector.shape_cast %46 : vector<1xf32> to vector<1x1x1xf32>
    %48 = vector.extract %47[0, 0, 0] : f32 from vector<1x1x1xf32>
    %cst_20 = arith.constant 5.000000e-01 : f32
    %49 = arith.mulf %48, %cst_20 : f32
    %c0_21 = arith.constant 0 : index
    %50 = memref.load %arg3[%c0_21] : memref<2xf32, #tpu.memory_space<smem>>
    memref.store %32, %arg3[%c0_21] : memref<2xf32, #tpu.memory_space<smem>>
    %c1 = arith.constant 1 : index
    %51 = memref.load %arg3[%c1] : memref<2xf32, #tpu.memory_space<smem>>
    memref.store %49, %arg3[%c1] : memref<2xf32, #tpu.memory_space<smem>>
    return
  }
}

module attributes {stable_mosaic.version = 11 : i64} {
  func.func @kernel(%arg0: memref<8x32x32xf32, #tpu.memory_space<vmem>>, %arg1: memref<8x32x32xf32, #tpu.memory_space<vmem>>, %arg2: memref<5xf32, #tpu.memory_space<smem>>, %arg3: memref<5xf32, #tpu.memory_space<smem>>, %arg4: memref<8x16x16xf32, #tpu.memory_space<vmem>>, %arg5: memref<8x16x16xf32, #tpu.memory_space<vmem>>, %arg6: memref<8x8x8xf32, #tpu.memory_space<vmem>>, %arg7: memref<8x8x8xf32, #tpu.memory_space<vmem>>, %arg8: memref<8x4x4xf32, #tpu.memory_space<vmem>>, %arg9: memref<8x4x4xf32, #tpu.memory_space<vmem>>, %arg10: memref<8x2x2xf32, #tpu.memory_space<vmem>>, %arg11: memref<8x2x2xf32, #tpu.memory_space<vmem>>) attributes {dimension_semantics = [], scalar_prefetch = 0 : i64, scratch_operands = 8 : i64, tpu.core_type = #tpu.core_type<tc>} {
    %c0 = arith.constant 0 : index
    %c0_0 = arith.constant 0 : index
    %c0_1 = arith.constant 0 : index
    %0 = vector.load %arg0[%c0, %c0_0, %c0_1] : memref<8x32x32xf32, #tpu.memory_space<vmem>>, vector<8x32x32xf32>
    %1 = vector.shape_cast %0 : vector<8x32x32xf32> to vector<1x8x32x32xf32>
    %cst = arith.constant dense<0xFF800000> : vector<1xf32>
    %2 = vector.multi_reduction <maximumf>, %1, %cst [1, 2, 3] : vector<1x8x32x32xf32> to vector<1xf32>
    %3 = vector.shape_cast %2 : vector<1xf32> to vector<1x1x1x1xf32>
    %4 = vector.extract %3[0, 0, 0, 0] : f32 from vector<1x1x1x1xf32>
    %cst_2 = arith.constant 1.280000e+02 : f32
    %5 = arith.cmpf ogt, %4, %cst_2 : f32
    %cst_3 = arith.constant 2.550000e+02 : f32
    %cst_4 = arith.constant 1.000000e+00 : f32
    %6 = arith.select %5, %cst_3, %cst_4 : f32
    %7 = vector.shape_cast %0 : vector<8x32x32xf32> to vector<1x8x32x32xf32>
    %cst_5 = arith.constant dense<0x7F800000> : vector<1xf32>
    %8 = vector.multi_reduction <minimumf>, %7, %cst_5 [1, 2, 3] : vector<1x8x32x32xf32> to vector<1xf32>
    %9 = vector.shape_cast %8 : vector<1xf32> to vector<1x1x1x1xf32>
    %10 = vector.extract %9[0, 0, 0, 0] : f32 from vector<1x1x1x1xf32>
    %cst_6 = arith.constant -5.000000e-01 : f32
    %11 = arith.cmpf olt, %10, %cst_6 : f32
    %cst_7 = arith.constant -1.000000e+00 : f32
    %cst_8 = arith.constant 0.000000e+00 : f32
    %12 = arith.select %11, %cst_7, %cst_8 : f32
    %13 = arith.subf %6, %12 : f32
    %cst_9 = arith.constant 0.00999999977 : f32
    %14 = arith.mulf %cst_9, %13 : f32
    %15 = arith.mulf %14, %14 : f32
    %cst_10 = arith.constant 3.000000e-02 : f32
    %16 = arith.mulf %cst_10, %13 : f32
    %17 = arith.mulf %16, %16 : f32
    %18 = tpu.iota {dimensions = array<i32: 0>} : vector<22x32xi32>
    %19 = tpu.iota {dimensions = array<i32: 1>} : vector<22x32xi32>
    %20 = arith.subi %19, %18 : vector<22x32xi32>
    %21 = tpu.iota {dimensions = array<i32: 0>} : vector<32x22xi32>
    %22 = tpu.iota {dimensions = array<i32: 1>} : vector<32x22xi32>
    %23 = arith.subi %21, %22 : vector<32x22xi32>
    %cst_11 = arith.constant 0.000000e+00 : f32
    %24 = vector.broadcast %cst_11 : f32 to vector<22x32xf32>
    %cst_12 = arith.constant 0.000000e+00 : f32
    %25 = vector.broadcast %cst_12 : f32 to vector<32x22xf32>
    %c0_i32 = arith.constant 0 : i32
    %26 = vector.broadcast %c0_i32 : i32 to vector<22x32xi32>
    %27 = arith.cmpi eq, %20, %26 : vector<22x32xi32>
    %cst_13 = arith.constant 0.00102838012 : f32
    %cst_14 = arith.constant 0.000000e+00 : f32
    %28 = vector.broadcast %cst_13 : f32 to vector<22x32xf32>
    %29 = vector.broadcast %cst_14 : f32 to vector<22x32xf32>
    %30 = arith.select %27, %28, %29 : vector<22x32xi1>, vector<22x32xf32>
    %31 = arith.addf %24, %30 : vector<22x32xf32>
    %c0_i32_15 = arith.constant 0 : i32
    %32 = vector.broadcast %c0_i32_15 : i32 to vector<32x22xi32>
    %33 = arith.cmpi eq, %23, %32 : vector<32x22xi32>
    %cst_16 = arith.constant 0.00102838012 : f32
    %cst_17 = arith.constant 0.000000e+00 : f32
    %34 = vector.broadcast %cst_16 : f32 to vector<32x22xf32>
    %35 = vector.broadcast %cst_17 : f32 to vector<32x22xf32>
    %36 = arith.select %33, %34, %35 : vector<32x22xi1>, vector<32x22xf32>
    %37 = arith.addf %25, %36 : vector<32x22xf32>
    %c1_i32 = arith.constant 1 : i32
    %38 = vector.broadcast %c1_i32 : i32 to vector<22x32xi32>
    %39 = arith.cmpi eq, %20, %38 : vector<22x32xi32>
    %cst_18 = arith.constant 0.00759875821 : f32
    %cst_19 = arith.constant 0.000000e+00 : f32
    %40 = vector.broadcast %cst_18 : f32 to vector<22x32xf32>
    %41 = vector.broadcast %cst_19 : f32 to vector<22x32xf32>
    %42 = arith.select %39, %40, %41 : vector<22x32xi1>, vector<22x32xf32>
    %43 = arith.addf %31, %42 : vector<22x32xf32>
    %c1_i32_20 = arith.constant 1 : i32
    %44 = vector.broadcast %c1_i32_20 : i32 to vector<32x22xi32>
    %45 = arith.cmpi eq, %23, %44 : vector<32x22xi32>
    %cst_21 = arith.constant 0.00759875821 : f32
    %cst_22 = arith.constant 0.000000e+00 : f32
    %46 = vector.broadcast %cst_21 : f32 to vector<32x22xf32>
    %47 = vector.broadcast %cst_22 : f32 to vector<32x22xf32>
    %48 = arith.select %45, %46, %47 : vector<32x22xi1>, vector<32x22xf32>
    %49 = arith.addf %37, %48 : vector<32x22xf32>
    %c2_i32 = arith.constant 2 : i32
    %50 = vector.broadcast %c2_i32 : i32 to vector<22x32xi32>
    %51 = arith.cmpi eq, %20, %50 : vector<22x32xi32>
    %cst_23 = arith.constant 0.0360007733 : f32
    %cst_24 = arith.constant 0.000000e+00 : f32
    %52 = vector.broadcast %cst_23 : f32 to vector<22x32xf32>
    %53 = vector.broadcast %cst_24 : f32 to vector<22x32xf32>
    %54 = arith.select %51, %52, %53 : vector<22x32xi1>, vector<22x32xf32>
    %55 = arith.addf %43, %54 : vector<22x32xf32>
    %c2_i32_25 = arith.constant 2 : i32
    %56 = vector.broadcast %c2_i32_25 : i32 to vector<32x22xi32>
    %57 = arith.cmpi eq, %23, %56 : vector<32x22xi32>
    %cst_26 = arith.constant 0.0360007733 : f32
    %cst_27 = arith.constant 0.000000e+00 : f32
    %58 = vector.broadcast %cst_26 : f32 to vector<32x22xf32>
    %59 = vector.broadcast %cst_27 : f32 to vector<32x22xf32>
    %60 = arith.select %57, %58, %59 : vector<32x22xi1>, vector<32x22xf32>
    %61 = arith.addf %49, %60 : vector<32x22xf32>
    %c3_i32 = arith.constant 3 : i32
    %62 = vector.broadcast %c3_i32 : i32 to vector<22x32xi32>
    %63 = arith.cmpi eq, %20, %62 : vector<22x32xi32>
    %cst_28 = arith.constant 0.109360687 : f32
    %cst_29 = arith.constant 0.000000e+00 : f32
    %64 = vector.broadcast %cst_28 : f32 to vector<22x32xf32>
    %65 = vector.broadcast %cst_29 : f32 to vector<22x32xf32>
    %66 = arith.select %63, %64, %65 : vector<22x32xi1>, vector<22x32xf32>
    %67 = arith.addf %55, %66 : vector<22x32xf32>
    %c3_i32_30 = arith.constant 3 : i32
    %68 = vector.broadcast %c3_i32_30 : i32 to vector<32x22xi32>
    %69 = arith.cmpi eq, %23, %68 : vector<32x22xi32>
    %cst_31 = arith.constant 0.109360687 : f32
    %cst_32 = arith.constant 0.000000e+00 : f32
    %70 = vector.broadcast %cst_31 : f32 to vector<32x22xf32>
    %71 = vector.broadcast %cst_32 : f32 to vector<32x22xf32>
    %72 = arith.select %69, %70, %71 : vector<32x22xi1>, vector<32x22xf32>
    %73 = arith.addf %61, %72 : vector<32x22xf32>
    %c4_i32 = arith.constant 4 : i32
    %74 = vector.broadcast %c4_i32 : i32 to vector<22x32xi32>
    %75 = arith.cmpi eq, %20, %74 : vector<22x32xi32>
    %cst_33 = arith.constant 0.213005543 : f32
    %cst_34 = arith.constant 0.000000e+00 : f32
    %76 = vector.broadcast %cst_33 : f32 to vector<22x32xf32>
    %77 = vector.broadcast %cst_34 : f32 to vector<22x32xf32>
    %78 = arith.select %75, %76, %77 : vector<22x32xi1>, vector<22x32xf32>
    %79 = arith.addf %67, %78 : vector<22x32xf32>
    %c4_i32_35 = arith.constant 4 : i32
    %80 = vector.broadcast %c4_i32_35 : i32 to vector<32x22xi32>
    %81 = arith.cmpi eq, %23, %80 : vector<32x22xi32>
    %cst_36 = arith.constant 0.213005543 : f32
    %cst_37 = arith.constant 0.000000e+00 : f32
    %82 = vector.broadcast %cst_36 : f32 to vector<32x22xf32>
    %83 = vector.broadcast %cst_37 : f32 to vector<32x22xf32>
    %84 = arith.select %81, %82, %83 : vector<32x22xi1>, vector<32x22xf32>
    %85 = arith.addf %73, %84 : vector<32x22xf32>
    %c5_i32 = arith.constant 5 : i32
    %86 = vector.broadcast %c5_i32 : i32 to vector<22x32xi32>
    %87 = arith.cmpi eq, %20, %86 : vector<22x32xi32>
    %cst_38 = arith.constant 0.266011715 : f32
    %cst_39 = arith.constant 0.000000e+00 : f32
    %88 = vector.broadcast %cst_38 : f32 to vector<22x32xf32>
    %89 = vector.broadcast %cst_39 : f32 to vector<22x32xf32>
    %90 = arith.select %87, %88, %89 : vector<22x32xi1>, vector<22x32xf32>
    %91 = arith.addf %79, %90 : vector<22x32xf32>
    %c5_i32_40 = arith.constant 5 : i32
    %92 = vector.broadcast %c5_i32_40 : i32 to vector<32x22xi32>
    %93 = arith.cmpi eq, %23, %92 : vector<32x22xi32>
    %cst_41 = arith.constant 0.266011715 : f32
    %cst_42 = arith.constant 0.000000e+00 : f32
    %94 = vector.broadcast %cst_41 : f32 to vector<32x22xf32>
    %95 = vector.broadcast %cst_42 : f32 to vector<32x22xf32>
    %96 = arith.select %93, %94, %95 : vector<32x22xi1>, vector<32x22xf32>
    %97 = arith.addf %85, %96 : vector<32x22xf32>
    %c6_i32 = arith.constant 6 : i32
    %98 = vector.broadcast %c6_i32 : i32 to vector<22x32xi32>
    %99 = arith.cmpi eq, %20, %98 : vector<22x32xi32>
    %cst_43 = arith.constant 0.213005543 : f32
    %cst_44 = arith.constant 0.000000e+00 : f32
    %100 = vector.broadcast %cst_43 : f32 to vector<22x32xf32>
    %101 = vector.broadcast %cst_44 : f32 to vector<22x32xf32>
    %102 = arith.select %99, %100, %101 : vector<22x32xi1>, vector<22x32xf32>
    %103 = arith.addf %91, %102 : vector<22x32xf32>
    %c6_i32_45 = arith.constant 6 : i32
    %104 = vector.broadcast %c6_i32_45 : i32 to vector<32x22xi32>
    %105 = arith.cmpi eq, %23, %104 : vector<32x22xi32>
    %cst_46 = arith.constant 0.213005543 : f32
    %cst_47 = arith.constant 0.000000e+00 : f32
    %106 = vector.broadcast %cst_46 : f32 to vector<32x22xf32>
    %107 = vector.broadcast %cst_47 : f32 to vector<32x22xf32>
    %108 = arith.select %105, %106, %107 : vector<32x22xi1>, vector<32x22xf32>
    %109 = arith.addf %97, %108 : vector<32x22xf32>
    %c7_i32 = arith.constant 7 : i32
    %110 = vector.broadcast %c7_i32 : i32 to vector<22x32xi32>
    %111 = arith.cmpi eq, %20, %110 : vector<22x32xi32>
    %cst_48 = arith.constant 0.109360687 : f32
    %cst_49 = arith.constant 0.000000e+00 : f32
    %112 = vector.broadcast %cst_48 : f32 to vector<22x32xf32>
    %113 = vector.broadcast %cst_49 : f32 to vector<22x32xf32>
    %114 = arith.select %111, %112, %113 : vector<22x32xi1>, vector<22x32xf32>
    %115 = arith.addf %103, %114 : vector<22x32xf32>
    %c7_i32_50 = arith.constant 7 : i32
    %116 = vector.broadcast %c7_i32_50 : i32 to vector<32x22xi32>
    %117 = arith.cmpi eq, %23, %116 : vector<32x22xi32>
    %cst_51 = arith.constant 0.109360687 : f32
    %cst_52 = arith.constant 0.000000e+00 : f32
    %118 = vector.broadcast %cst_51 : f32 to vector<32x22xf32>
    %119 = vector.broadcast %cst_52 : f32 to vector<32x22xf32>
    %120 = arith.select %117, %118, %119 : vector<32x22xi1>, vector<32x22xf32>
    %121 = arith.addf %109, %120 : vector<32x22xf32>
    %c8_i32 = arith.constant 8 : i32
    %122 = vector.broadcast %c8_i32 : i32 to vector<22x32xi32>
    %123 = arith.cmpi eq, %20, %122 : vector<22x32xi32>
    %cst_53 = arith.constant 0.0360007733 : f32
    %cst_54 = arith.constant 0.000000e+00 : f32
    %124 = vector.broadcast %cst_53 : f32 to vector<22x32xf32>
    %125 = vector.broadcast %cst_54 : f32 to vector<22x32xf32>
    %126 = arith.select %123, %124, %125 : vector<22x32xi1>, vector<22x32xf32>
    %127 = arith.addf %115, %126 : vector<22x32xf32>
    %c8_i32_55 = arith.constant 8 : i32
    %128 = vector.broadcast %c8_i32_55 : i32 to vector<32x22xi32>
    %129 = arith.cmpi eq, %23, %128 : vector<32x22xi32>
    %cst_56 = arith.constant 0.0360007733 : f32
    %cst_57 = arith.constant 0.000000e+00 : f32
    %130 = vector.broadcast %cst_56 : f32 to vector<32x22xf32>
    %131 = vector.broadcast %cst_57 : f32 to vector<32x22xf32>
    %132 = arith.select %129, %130, %131 : vector<32x22xi1>, vector<32x22xf32>
    %133 = arith.addf %121, %132 : vector<32x22xf32>
    %c9_i32 = arith.constant 9 : i32
    %134 = vector.broadcast %c9_i32 : i32 to vector<22x32xi32>
    %135 = arith.cmpi eq, %20, %134 : vector<22x32xi32>
    %cst_58 = arith.constant 0.00759875821 : f32
    %cst_59 = arith.constant 0.000000e+00 : f32
    %136 = vector.broadcast %cst_58 : f32 to vector<22x32xf32>
    %137 = vector.broadcast %cst_59 : f32 to vector<22x32xf32>
    %138 = arith.select %135, %136, %137 : vector<22x32xi1>, vector<22x32xf32>
    %139 = arith.addf %127, %138 : vector<22x32xf32>
    %c9_i32_60 = arith.constant 9 : i32
    %140 = vector.broadcast %c9_i32_60 : i32 to vector<32x22xi32>
    %141 = arith.cmpi eq, %23, %140 : vector<32x22xi32>
    %cst_61 = arith.constant 0.00759875821 : f32
    %cst_62 = arith.constant 0.000000e+00 : f32
    %142 = vector.broadcast %cst_61 : f32 to vector<32x22xf32>
    %143 = vector.broadcast %cst_62 : f32 to vector<32x22xf32>
    %144 = arith.select %141, %142, %143 : vector<32x22xi1>, vector<32x22xf32>
    %145 = arith.addf %133, %144 : vector<32x22xf32>
    %c10_i32 = arith.constant 10 : i32
    %146 = vector.broadcast %c10_i32 : i32 to vector<22x32xi32>
    %147 = arith.cmpi eq, %20, %146 : vector<22x32xi32>
    %cst_63 = arith.constant 0.00102838012 : f32
    %cst_64 = arith.constant 0.000000e+00 : f32
    %148 = vector.broadcast %cst_63 : f32 to vector<22x32xf32>
    %149 = vector.broadcast %cst_64 : f32 to vector<22x32xf32>
    %150 = arith.select %147, %148, %149 : vector<22x32xi1>, vector<22x32xf32>
    %151 = arith.addf %139, %150 : vector<22x32xf32>
    %c10_i32_65 = arith.constant 10 : i32
    %152 = vector.broadcast %c10_i32_65 : i32 to vector<32x22xi32>
    %153 = arith.cmpi eq, %23, %152 : vector<32x22xi32>
    %cst_66 = arith.constant 0.00102838012 : f32
    %cst_67 = arith.constant 0.000000e+00 : f32
    %154 = vector.broadcast %cst_66 : f32 to vector<32x22xf32>
    %155 = vector.broadcast %cst_67 : f32 to vector<32x22xf32>
    %156 = arith.select %153, %154, %155 : vector<32x22xi1>, vector<32x22xf32>
    %157 = arith.addf %145, %156 : vector<32x22xf32>
    %158 = tpu.iota {dimensions = array<i32: 0>} : vector<16x32xi32>
    %159 = tpu.iota {dimensions = array<i32: 1>} : vector<16x32xi32>
    %c2_i32_68 = arith.constant 2 : i32
    %160 = vector.broadcast %c2_i32_68 : i32 to vector<16x32xi32>
    %161 = arith.muli %160, %158 : vector<16x32xi32>
    %162 = arith.cmpi eq, %159, %161 : vector<16x32xi32>
    %c2_i32_69 = arith.constant 2 : i32
    %163 = vector.broadcast %c2_i32_69 : i32 to vector<16x32xi32>
    %164 = arith.muli %163, %158 : vector<16x32xi32>
    %c1_i32_70 = arith.constant 1 : i32
    %165 = vector.broadcast %c1_i32_70 : i32 to vector<16x32xi32>
    %166 = arith.addi %164, %165 : vector<16x32xi32>
    %167 = arith.cmpi eq, %159, %166 : vector<16x32xi32>
    %168 = arith.ori %162, %167 : vector<16x32xi1>
    %cst_71 = arith.constant 5.000000e-01 : f32
    %cst_72 = arith.constant 0.000000e+00 : f32
    %169 = vector.broadcast %cst_71 : f32 to vector<16x32xf32>
    %170 = vector.broadcast %cst_72 : f32 to vector<16x32xf32>
    %171 = arith.select %168, %169, %170 : vector<16x32xi1>, vector<16x32xf32>
    %172 = tpu.iota {dimensions = array<i32: 0>} : vector<32x16xi32>
    %173 = tpu.iota {dimensions = array<i32: 1>} : vector<32x16xi32>
    %c2_i32_73 = arith.constant 2 : i32
    %174 = vector.broadcast %c2_i32_73 : i32 to vector<32x16xi32>
    %175 = arith.muli %174, %173 : vector<32x16xi32>
    %176 = arith.cmpi eq, %172, %175 : vector<32x16xi32>
    %c2_i32_74 = arith.constant 2 : i32
    %177 = vector.broadcast %c2_i32_74 : i32 to vector<32x16xi32>
    %178 = arith.muli %177, %173 : vector<32x16xi32>
    %c1_i32_75 = arith.constant 1 : i32
    %179 = vector.broadcast %c1_i32_75 : i32 to vector<32x16xi32>
    %180 = arith.addi %178, %179 : vector<32x16xi32>
    %181 = arith.cmpi eq, %172, %180 : vector<32x16xi32>
    %182 = arith.ori %176, %181 : vector<32x16xi1>
    %cst_76 = arith.constant 5.000000e-01 : f32
    %cst_77 = arith.constant 0.000000e+00 : f32
    %183 = vector.broadcast %cst_76 : f32 to vector<32x16xf32>
    %184 = vector.broadcast %cst_77 : f32 to vector<32x16xf32>
    %185 = arith.select %182, %183, %184 : vector<32x16xi1>, vector<32x16xf32>
    %cst_78 = arith.constant 0.000000e+00 : f32
    %cst_79 = arith.constant 0.000000e+00 : f32
    %c0_i32_80 = arith.constant 0 : i32
    %c8_i32_81 = arith.constant 8 : i32
    %186 = arith.addi %c0_i32_80, %c8_i32_81 : i32
    %c1_i32_82 = arith.constant 1 : i32
    %187:2 = scf.for %arg12 = %c0_i32_80 to %186 step %c1_i32_82 iter_args(%arg13 = %cst_78, %arg14 = %cst_79) -> (f32, f32)  : i32 {
      %695 = arith.index_cast %arg12 : i32 to index
      %c0_364 = arith.constant 0 : index
      %c0_365 = arith.constant 0 : index
      %696 = vector.load %arg0[%695, %c0_364, %c0_365] : memref<8x32x32xf32, #tpu.memory_space<vmem>>, vector<1x32x32xf32>
      %697 = vector.shape_cast %696 : vector<1x32x32xf32> to vector<32x32xf32>
      %698 = arith.index_cast %arg12 : i32 to index
      %c0_366 = arith.constant 0 : index
      %c0_367 = arith.constant 0 : index
      %699 = vector.load %arg1[%698, %c0_366, %c0_367] : memref<8x32x32xf32, #tpu.memory_space<vmem>>, vector<1x32x32xf32>
      %700 = vector.shape_cast %699 : vector<1x32x32xf32> to vector<32x32xf32>
      %cst_368 = arith.constant dense<0.000000e+00> : vector<32x22xf32>
      %701 = tpu.matmul %697, %157, %cst_368 {dimension_numbers = #tpu.dot_dimension_numbers<[1], [0], [0], [1], [0, 0, 1, 1], [], []>} : vector<32x32xf32>, vector<32x22xf32>, vector<32x22xf32> -> vector<32x22xf32>
      %cst_369 = arith.constant dense<0.000000e+00> : vector<22x22xf32>
      %702 = tpu.matmul %151, %701, %cst_369 {dimension_numbers = #tpu.dot_dimension_numbers<[1], [0], [0], [1], [0, 0, 1, 1], [], []>} : vector<22x32xf32>, vector<32x22xf32>, vector<22x22xf32> -> vector<22x22xf32>
      %cst_370 = arith.constant dense<0.000000e+00> : vector<32x22xf32>
      %703 = tpu.matmul %700, %157, %cst_370 {dimension_numbers = #tpu.dot_dimension_numbers<[1], [0], [0], [1], [0, 0, 1, 1], [], []>} : vector<32x32xf32>, vector<32x22xf32>, vector<32x22xf32> -> vector<32x22xf32>
      %cst_371 = arith.constant dense<0.000000e+00> : vector<22x22xf32>
      %704 = tpu.matmul %151, %703, %cst_371 {dimension_numbers = #tpu.dot_dimension_numbers<[1], [0], [0], [1], [0, 0, 1, 1], [], []>} : vector<22x32xf32>, vector<32x22xf32>, vector<22x22xf32> -> vector<22x22xf32>
      %705 = arith.mulf %697, %697 : vector<32x32xf32>
      %cst_372 = arith.constant dense<0.000000e+00> : vector<32x22xf32>
      %706 = tpu.matmul %705, %157, %cst_372 {dimension_numbers = #tpu.dot_dimension_numbers<[1], [0], [0], [1], [0, 0, 1, 1], [], []>} : vector<32x32xf32>, vector<32x22xf32>, vector<32x22xf32> -> vector<32x22xf32>
      %cst_373 = arith.constant dense<0.000000e+00> : vector<22x22xf32>
      %707 = tpu.matmul %151, %706, %cst_373 {dimension_numbers = #tpu.dot_dimension_numbers<[1], [0], [0], [1], [0, 0, 1, 1], [], []>} : vector<22x32xf32>, vector<32x22xf32>, vector<22x22xf32> -> vector<22x22xf32>
      %708 = arith.mulf %700, %700 : vector<32x32xf32>
      %cst_374 = arith.constant dense<0.000000e+00> : vector<32x22xf32>
      %709 = tpu.matmul %708, %157, %cst_374 {dimension_numbers = #tpu.dot_dimension_numbers<[1], [0], [0], [1], [0, 0, 1, 1], [], []>} : vector<32x32xf32>, vector<32x22xf32>, vector<32x22xf32> -> vector<32x22xf32>
      %cst_375 = arith.constant dense<0.000000e+00> : vector<22x22xf32>
      %710 = tpu.matmul %151, %709, %cst_375 {dimension_numbers = #tpu.dot_dimension_numbers<[1], [0], [0], [1], [0, 0, 1, 1], [], []>} : vector<22x32xf32>, vector<32x22xf32>, vector<22x22xf32> -> vector<22x22xf32>
      %711 = arith.mulf %697, %700 : vector<32x32xf32>
      %cst_376 = arith.constant dense<0.000000e+00> : vector<32x22xf32>
      %712 = tpu.matmul %711, %157, %cst_376 {dimension_numbers = #tpu.dot_dimension_numbers<[1], [0], [0], [1], [0, 0, 1, 1], [], []>} : vector<32x32xf32>, vector<32x22xf32>, vector<32x22xf32> -> vector<32x22xf32>
      %cst_377 = arith.constant dense<0.000000e+00> : vector<22x22xf32>
      %713 = tpu.matmul %151, %712, %cst_377 {dimension_numbers = #tpu.dot_dimension_numbers<[1], [0], [0], [1], [0, 0, 1, 1], [], []>} : vector<22x32xf32>, vector<32x22xf32>, vector<22x22xf32> -> vector<22x22xf32>
      %714 = arith.mulf %702, %702 : vector<22x22xf32>
      %715 = arith.mulf %704, %704 : vector<22x22xf32>
      %716 = arith.mulf %702, %704 : vector<22x22xf32>
      %717 = arith.subf %707, %714 : vector<22x22xf32>
      %718 = arith.subf %710, %715 : vector<22x22xf32>
      %719 = arith.subf %713, %716 : vector<22x22xf32>
      %cst_378 = arith.constant 2.000000e+00 : f32
      %720 = vector.broadcast %cst_378 : f32 to vector<22x22xf32>
      %721 = arith.mulf %720, %719 : vector<22x22xf32>
      %722 = vector.broadcast %17 : f32 to vector<22x22xf32>
      %723 = arith.addf %721, %722 : vector<22x22xf32>
      %724 = arith.addf %717, %718 : vector<22x22xf32>
      %725 = vector.broadcast %17 : f32 to vector<22x22xf32>
      %726 = arith.addf %724, %725 : vector<22x22xf32>
      %727 = arith.divf %723, %726 : vector<22x22xf32>
      %cst_379 = arith.constant 2.000000e+00 : f32
      %728 = vector.broadcast %cst_379 : f32 to vector<22x22xf32>
      %729 = arith.mulf %728, %716 : vector<22x22xf32>
      %730 = vector.broadcast %15 : f32 to vector<22x22xf32>
      %731 = arith.addf %729, %730 : vector<22x22xf32>
      %732 = arith.mulf %731, %723 : vector<22x22xf32>
      %733 = arith.addf %714, %715 : vector<22x22xf32>
      %734 = vector.broadcast %15 : f32 to vector<22x22xf32>
      %735 = arith.addf %733, %734 : vector<22x22xf32>
      %736 = arith.mulf %735, %726 : vector<22x22xf32>
      %737 = arith.divf %732, %736 : vector<22x22xf32>
      %cst_380 = arith.constant dense<0.000000e+00> : vector<32x16xf32>
      %738 = tpu.matmul %697, %185, %cst_380 {dimension_numbers = #tpu.dot_dimension_numbers<[1], [0], [0], [1], [0, 0, 1, 1], [], []>} : vector<32x32xf32>, vector<32x16xf32>, vector<32x16xf32> -> vector<32x16xf32>
      %cst_381 = arith.constant dense<0.000000e+00> : vector<16x16xf32>
      %739 = tpu.matmul %171, %738, %cst_381 {dimension_numbers = #tpu.dot_dimension_numbers<[1], [0], [0], [1], [0, 0, 1, 1], [], []>} : vector<16x32xf32>, vector<32x16xf32>, vector<16x16xf32> -> vector<16x16xf32>
      %740 = arith.index_cast %arg12 : i32 to index
      %c0_382 = arith.constant 0 : index
      %c0_383 = arith.constant 0 : index
      %741 = vector.load %arg4[%740, %c0_382, %c0_383] : memref<8x16x16xf32, #tpu.memory_space<vmem>>, vector<1x16x16xf32>
      %742 = vector.shape_cast %741 : vector<1x16x16xf32> to vector<16x16xf32>
      %743 = vector.shape_cast %739 : vector<16x16xf32> to vector<1x16x16xf32>
      tpu.vector_store %arg4[%740, %c0_382, %c0_383], %743 {strides = array<i32>} : memref<8x16x16xf32, #tpu.memory_space<vmem>>, vector<1x16x16xf32>,
      %cst_384 = arith.constant dense<0.000000e+00> : vector<32x16xf32>
      %744 = tpu.matmul %700, %185, %cst_384 {dimension_numbers = #tpu.dot_dimension_numbers<[1], [0], [0], [1], [0, 0, 1, 1], [], []>} : vector<32x32xf32>, vector<32x16xf32>, vector<32x16xf32> -> vector<32x16xf32>
      %cst_385 = arith.constant dense<0.000000e+00> : vector<16x16xf32>
      %745 = tpu.matmul %171, %744, %cst_385 {dimension_numbers = #tpu.dot_dimension_numbers<[1], [0], [0], [1], [0, 0, 1, 1], [], []>} : vector<16x32xf32>, vector<32x16xf32>, vector<16x16xf32> -> vector<16x16xf32>
      %746 = arith.index_cast %arg12 : i32 to index
      %c0_386 = arith.constant 0 : index
      %c0_387 = arith.constant 0 : index
      %747 = vector.load %arg5[%746, %c0_386, %c0_387] : memref<8x16x16xf32, #tpu.memory_space<vmem>>, vector<1x16x16xf32>
      %748 = vector.shape_cast %747 : vector<1x16x16xf32> to vector<16x16xf32>
      %749 = vector.shape_cast %745 : vector<16x16xf32> to vector<1x16x16xf32>
      tpu.vector_store %arg5[%746, %c0_386, %c0_387], %749 {strides = array<i32>} : memref<8x16x16xf32, #tpu.memory_space<vmem>>, vector<1x16x16xf32>,
      %750 = vector.shape_cast %737 : vector<22x22xf32> to vector<1x22x22xf32>
      %cst_388 = arith.constant dense<0.000000e+00> : vector<1xf32>
      %751 = vector.multi_reduction <add>, %750, %cst_388 [1, 2] : vector<1x22x22xf32> to vector<1xf32>
      %752 = vector.shape_cast %751 : vector<1xf32> to vector<1x1x1xf32>
      %753 = vector.extract %752[0, 0, 0] : f32 from vector<1x1x1xf32>
      %754 = arith.addf %arg13, %753 : f32
      %755 = vector.shape_cast %727 : vector<22x22xf32> to vector<1x22x22xf32>
      %cst_389 = arith.constant dense<0.000000e+00> : vector<1xf32>
      %756 = vector.multi_reduction <add>, %755, %cst_389 [1, 2] : vector<1x22x22xf32> to vector<1xf32>
      %757 = vector.shape_cast %756 : vector<1xf32> to vector<1x1x1xf32>
      %758 = vector.extract %757[0, 0, 0] : f32 from vector<1x1x1xf32>
      %759 = arith.addf %arg14, %758 : f32
      scf.yield %754, %759 : f32, f32
    }
    %c8_i32_83 = arith.constant 8 : i32
    %cst_84 = arith.constant 2.58264452E-4 : f32
    %188 = arith.mulf %187#0, %cst_84 : f32
    %c0_85 = arith.constant 0 : index
    %189 = memref.load %arg2[%c0_85] : memref<5xf32, #tpu.memory_space<smem>>
    memref.store %188, %arg2[%c0_85] : memref<5xf32, #tpu.memory_space<smem>>
    %cst_86 = arith.constant 2.58264452E-4 : f32
    %190 = arith.mulf %187#1, %cst_86 : f32
    %c0_87 = arith.constant 0 : index
    %191 = memref.load %arg3[%c0_87] : memref<5xf32, #tpu.memory_space<smem>>
    memref.store %190, %arg3[%c0_87] : memref<5xf32, #tpu.memory_space<smem>>
    %c0_88 = arith.constant 0 : index
    %c0_89 = arith.constant 0 : index
    %c0_90 = arith.constant 0 : index
    %192 = vector.load %arg4[%c0_88, %c0_89, %c0_90] : memref<8x16x16xf32, #tpu.memory_space<vmem>>, vector<8x16x16xf32>
    %193 = vector.shape_cast %192 : vector<8x16x16xf32> to vector<1x8x16x16xf32>
    %cst_91 = arith.constant dense<0xFF800000> : vector<1xf32>
    %194 = vector.multi_reduction <maximumf>, %193, %cst_91 [1, 2, 3] : vector<1x8x16x16xf32> to vector<1xf32>
    %195 = vector.shape_cast %194 : vector<1xf32> to vector<1x1x1x1xf32>
    %196 = vector.extract %195[0, 0, 0, 0] : f32 from vector<1x1x1x1xf32>
    %cst_92 = arith.constant 1.280000e+02 : f32
    %197 = arith.cmpf ogt, %196, %cst_92 : f32
    %cst_93 = arith.constant 2.550000e+02 : f32
    %cst_94 = arith.constant 1.000000e+00 : f32
    %198 = arith.select %197, %cst_93, %cst_94 : f32
    %199 = vector.shape_cast %192 : vector<8x16x16xf32> to vector<1x8x16x16xf32>
    %cst_95 = arith.constant dense<0x7F800000> : vector<1xf32>
    %200 = vector.multi_reduction <minimumf>, %199, %cst_95 [1, 2, 3] : vector<1x8x16x16xf32> to vector<1xf32>
    %201 = vector.shape_cast %200 : vector<1xf32> to vector<1x1x1x1xf32>
    %202 = vector.extract %201[0, 0, 0, 0] : f32 from vector<1x1x1x1xf32>
    %cst_96 = arith.constant -5.000000e-01 : f32
    %203 = arith.cmpf olt, %202, %cst_96 : f32
    %cst_97 = arith.constant -1.000000e+00 : f32
    %cst_98 = arith.constant 0.000000e+00 : f32
    %204 = arith.select %203, %cst_97, %cst_98 : f32
    %205 = arith.subf %198, %204 : f32
    %cst_99 = arith.constant 0.00999999977 : f32
    %206 = arith.mulf %cst_99, %205 : f32
    %207 = arith.mulf %206, %206 : f32
    %cst_100 = arith.constant 3.000000e-02 : f32
    %208 = arith.mulf %cst_100, %205 : f32
    %209 = arith.mulf %208, %208 : f32
    %210 = tpu.iota {dimensions = array<i32: 0>} : vector<6x16xi32>
    %211 = tpu.iota {dimensions = array<i32: 1>} : vector<6x16xi32>
    %212 = arith.subi %211, %210 : vector<6x16xi32>
    %213 = tpu.iota {dimensions = array<i32: 0>} : vector<16x6xi32>
    %214 = tpu.iota {dimensions = array<i32: 1>} : vector<16x6xi32>
    %215 = arith.subi %213, %214 : vector<16x6xi32>
    %cst_101 = arith.constant 0.000000e+00 : f32
    %216 = vector.broadcast %cst_101 : f32 to vector<6x16xf32>
    %cst_102 = arith.constant 0.000000e+00 : f32
    %217 = vector.broadcast %cst_102 : f32 to vector<16x6xf32>
    %c0_i32_103 = arith.constant 0 : i32
    %218 = vector.broadcast %c0_i32_103 : i32 to vector<6x16xi32>
    %219 = arith.cmpi eq, %212, %218 : vector<6x16xi32>
    %cst_104 = arith.constant 0.00102838012 : f32
    %cst_105 = arith.constant 0.000000e+00 : f32
    %220 = vector.broadcast %cst_104 : f32 to vector<6x16xf32>
    %221 = vector.broadcast %cst_105 : f32 to vector<6x16xf32>
    %222 = arith.select %219, %220, %221 : vector<6x16xi1>, vector<6x16xf32>
    %223 = arith.addf %216, %222 : vector<6x16xf32>
    %c0_i32_106 = arith.constant 0 : i32
    %224 = vector.broadcast %c0_i32_106 : i32 to vector<16x6xi32>
    %225 = arith.cmpi eq, %215, %224 : vector<16x6xi32>
    %cst_107 = arith.constant 0.00102838012 : f32
    %cst_108 = arith.constant 0.000000e+00 : f32
    %226 = vector.broadcast %cst_107 : f32 to vector<16x6xf32>
    %227 = vector.broadcast %cst_108 : f32 to vector<16x6xf32>
    %228 = arith.select %225, %226, %227 : vector<16x6xi1>, vector<16x6xf32>
    %229 = arith.addf %217, %228 : vector<16x6xf32>
    %c1_i32_109 = arith.constant 1 : i32
    %230 = vector.broadcast %c1_i32_109 : i32 to vector<6x16xi32>
    %231 = arith.cmpi eq, %212, %230 : vector<6x16xi32>
    %cst_110 = arith.constant 0.00759875821 : f32
    %cst_111 = arith.constant 0.000000e+00 : f32
    %232 = vector.broadcast %cst_110 : f32 to vector<6x16xf32>
    %233 = vector.broadcast %cst_111 : f32 to vector<6x16xf32>
    %234 = arith.select %231, %232, %233 : vector<6x16xi1>, vector<6x16xf32>
    %235 = arith.addf %223, %234 : vector<6x16xf32>
    %c1_i32_112 = arith.constant 1 : i32
    %236 = vector.broadcast %c1_i32_112 : i32 to vector<16x6xi32>
    %237 = arith.cmpi eq, %215, %236 : vector<16x6xi32>
    %cst_113 = arith.constant 0.00759875821 : f32
    %cst_114 = arith.constant 0.000000e+00 : f32
    %238 = vector.broadcast %cst_113 : f32 to vector<16x6xf32>
    %239 = vector.broadcast %cst_114 : f32 to vector<16x6xf32>
    %240 = arith.select %237, %238, %239 : vector<16x6xi1>, vector<16x6xf32>
    %241 = arith.addf %229, %240 : vector<16x6xf32>
    %c2_i32_115 = arith.constant 2 : i32
    %242 = vector.broadcast %c2_i32_115 : i32 to vector<6x16xi32>
    %243 = arith.cmpi eq, %212, %242 : vector<6x16xi32>
    %cst_116 = arith.constant 0.0360007733 : f32
    %cst_117 = arith.constant 0.000000e+00 : f32
    %244 = vector.broadcast %cst_116 : f32 to vector<6x16xf32>
    %245 = vector.broadcast %cst_117 : f32 to vector<6x16xf32>
    %246 = arith.select %243, %244, %245 : vector<6x16xi1>, vector<6x16xf32>
    %247 = arith.addf %235, %246 : vector<6x16xf32>
    %c2_i32_118 = arith.constant 2 : i32
    %248 = vector.broadcast %c2_i32_118 : i32 to vector<16x6xi32>
    %249 = arith.cmpi eq, %215, %248 : vector<16x6xi32>
    %cst_119 = arith.constant 0.0360007733 : f32
    %cst_120 = arith.constant 0.000000e+00 : f32
    %250 = vector.broadcast %cst_119 : f32 to vector<16x6xf32>
    %251 = vector.broadcast %cst_120 : f32 to vector<16x6xf32>
    %252 = arith.select %249, %250, %251 : vector<16x6xi1>, vector<16x6xf32>
    %253 = arith.addf %241, %252 : vector<16x6xf32>
    %c3_i32_121 = arith.constant 3 : i32
    %254 = vector.broadcast %c3_i32_121 : i32 to vector<6x16xi32>
    %255 = arith.cmpi eq, %212, %254 : vector<6x16xi32>
    %cst_122 = arith.constant 0.109360687 : f32
    %cst_123 = arith.constant 0.000000e+00 : f32
    %256 = vector.broadcast %cst_122 : f32 to vector<6x16xf32>
    %257 = vector.broadcast %cst_123 : f32 to vector<6x16xf32>
    %258 = arith.select %255, %256, %257 : vector<6x16xi1>, vector<6x16xf32>
    %259 = arith.addf %247, %258 : vector<6x16xf32>
    %c3_i32_124 = arith.constant 3 : i32
    %260 = vector.broadcast %c3_i32_124 : i32 to vector<16x6xi32>
    %261 = arith.cmpi eq, %215, %260 : vector<16x6xi32>
    %cst_125 = arith.constant 0.109360687 : f32
    %cst_126 = arith.constant 0.000000e+00 : f32
    %262 = vector.broadcast %cst_125 : f32 to vector<16x6xf32>
    %263 = vector.broadcast %cst_126 : f32 to vector<16x6xf32>
    %264 = arith.select %261, %262, %263 : vector<16x6xi1>, vector<16x6xf32>
    %265 = arith.addf %253, %264 : vector<16x6xf32>
    %c4_i32_127 = arith.constant 4 : i32
    %266 = vector.broadcast %c4_i32_127 : i32 to vector<6x16xi32>
    %267 = arith.cmpi eq, %212, %266 : vector<6x16xi32>
    %cst_128 = arith.constant 0.213005543 : f32
    %cst_129 = arith.constant 0.000000e+00 : f32
    %268 = vector.broadcast %cst_128 : f32 to vector<6x16xf32>
    %269 = vector.broadcast %cst_129 : f32 to vector<6x16xf32>
    %270 = arith.select %267, %268, %269 : vector<6x16xi1>, vector<6x16xf32>
    %271 = arith.addf %259, %270 : vector<6x16xf32>
    %c4_i32_130 = arith.constant 4 : i32
    %272 = vector.broadcast %c4_i32_130 : i32 to vector<16x6xi32>
    %273 = arith.cmpi eq, %215, %272 : vector<16x6xi32>
    %cst_131 = arith.constant 0.213005543 : f32
    %cst_132 = arith.constant 0.000000e+00 : f32
    %274 = vector.broadcast %cst_131 : f32 to vector<16x6xf32>
    %275 = vector.broadcast %cst_132 : f32 to vector<16x6xf32>
    %276 = arith.select %273, %274, %275 : vector<16x6xi1>, vector<16x6xf32>
    %277 = arith.addf %265, %276 : vector<16x6xf32>
    %c5_i32_133 = arith.constant 5 : i32
    %278 = vector.broadcast %c5_i32_133 : i32 to vector<6x16xi32>
    %279 = arith.cmpi eq, %212, %278 : vector<6x16xi32>
    %cst_134 = arith.constant 0.266011715 : f32
    %cst_135 = arith.constant 0.000000e+00 : f32
    %280 = vector.broadcast %cst_134 : f32 to vector<6x16xf32>
    %281 = vector.broadcast %cst_135 : f32 to vector<6x16xf32>
    %282 = arith.select %279, %280, %281 : vector<6x16xi1>, vector<6x16xf32>
    %283 = arith.addf %271, %282 : vector<6x16xf32>
    %c5_i32_136 = arith.constant 5 : i32
    %284 = vector.broadcast %c5_i32_136 : i32 to vector<16x6xi32>
    %285 = arith.cmpi eq, %215, %284 : vector<16x6xi32>
    %cst_137 = arith.constant 0.266011715 : f32
    %cst_138 = arith.constant 0.000000e+00 : f32
    %286 = vector.broadcast %cst_137 : f32 to vector<16x6xf32>
    %287 = vector.broadcast %cst_138 : f32 to vector<16x6xf32>
    %288 = arith.select %285, %286, %287 : vector<16x6xi1>, vector<16x6xf32>
    %289 = arith.addf %277, %288 : vector<16x6xf32>
    %c6_i32_139 = arith.constant 6 : i32
    %290 = vector.broadcast %c6_i32_139 : i32 to vector<6x16xi32>
    %291 = arith.cmpi eq, %212, %290 : vector<6x16xi32>
    %cst_140 = arith.constant 0.213005543 : f32
    %cst_141 = arith.constant 0.000000e+00 : f32
    %292 = vector.broadcast %cst_140 : f32 to vector<6x16xf32>
    %293 = vector.broadcast %cst_141 : f32 to vector<6x16xf32>
    %294 = arith.select %291, %292, %293 : vector<6x16xi1>, vector<6x16xf32>
    %295 = arith.addf %283, %294 : vector<6x16xf32>
    %c6_i32_142 = arith.constant 6 : i32
    %296 = vector.broadcast %c6_i32_142 : i32 to vector<16x6xi32>
    %297 = arith.cmpi eq, %215, %296 : vector<16x6xi32>
    %cst_143 = arith.constant 0.213005543 : f32
    %cst_144 = arith.constant 0.000000e+00 : f32
    %298 = vector.broadcast %cst_143 : f32 to vector<16x6xf32>
    %299 = vector.broadcast %cst_144 : f32 to vector<16x6xf32>
    %300 = arith.select %297, %298, %299 : vector<16x6xi1>, vector<16x6xf32>
    %301 = arith.addf %289, %300 : vector<16x6xf32>
    %c7_i32_145 = arith.constant 7 : i32
    %302 = vector.broadcast %c7_i32_145 : i32 to vector<6x16xi32>
    %303 = arith.cmpi eq, %212, %302 : vector<6x16xi32>
    %cst_146 = arith.constant 0.109360687 : f32
    %cst_147 = arith.constant 0.000000e+00 : f32
    %304 = vector.broadcast %cst_146 : f32 to vector<6x16xf32>
    %305 = vector.broadcast %cst_147 : f32 to vector<6x16xf32>
    %306 = arith.select %303, %304, %305 : vector<6x16xi1>, vector<6x16xf32>
    %307 = arith.addf %295, %306 : vector<6x16xf32>
    %c7_i32_148 = arith.constant 7 : i32
    %308 = vector.broadcast %c7_i32_148 : i32 to vector<16x6xi32>
    %309 = arith.cmpi eq, %215, %308 : vector<16x6xi32>
    %cst_149 = arith.constant 0.109360687 : f32
    %cst_150 = arith.constant 0.000000e+00 : f32
    %310 = vector.broadcast %cst_149 : f32 to vector<16x6xf32>
    %311 = vector.broadcast %cst_150 : f32 to vector<16x6xf32>
    %312 = arith.select %309, %310, %311 : vector<16x6xi1>, vector<16x6xf32>
    %313 = arith.addf %301, %312 : vector<16x6xf32>
    %c8_i32_151 = arith.constant 8 : i32
    %314 = vector.broadcast %c8_i32_151 : i32 to vector<6x16xi32>
    %315 = arith.cmpi eq, %212, %314 : vector<6x16xi32>
    %cst_152 = arith.constant 0.0360007733 : f32
    %cst_153 = arith.constant 0.000000e+00 : f32
    %316 = vector.broadcast %cst_152 : f32 to vector<6x16xf32>
    %317 = vector.broadcast %cst_153 : f32 to vector<6x16xf32>
    %318 = arith.select %315, %316, %317 : vector<6x16xi1>, vector<6x16xf32>
    %319 = arith.addf %307, %318 : vector<6x16xf32>
    %c8_i32_154 = arith.constant 8 : i32
    %320 = vector.broadcast %c8_i32_154 : i32 to vector<16x6xi32>
    %321 = arith.cmpi eq, %215, %320 : vector<16x6xi32>
    %cst_155 = arith.constant 0.0360007733 : f32
    %cst_156 = arith.constant 0.000000e+00 : f32
    %322 = vector.broadcast %cst_155 : f32 to vector<16x6xf32>
    %323 = vector.broadcast %cst_156 : f32 to vector<16x6xf32>
    %324 = arith.select %321, %322, %323 : vector<16x6xi1>, vector<16x6xf32>
    %325 = arith.addf %313, %324 : vector<16x6xf32>
    %c9_i32_157 = arith.constant 9 : i32
    %326 = vector.broadcast %c9_i32_157 : i32 to vector<6x16xi32>
    %327 = arith.cmpi eq, %212, %326 : vector<6x16xi32>
    %cst_158 = arith.constant 0.00759875821 : f32
    %cst_159 = arith.constant 0.000000e+00 : f32
    %328 = vector.broadcast %cst_158 : f32 to vector<6x16xf32>
    %329 = vector.broadcast %cst_159 : f32 to vector<6x16xf32>
    %330 = arith.select %327, %328, %329 : vector<6x16xi1>, vector<6x16xf32>
    %331 = arith.addf %319, %330 : vector<6x16xf32>
    %c9_i32_160 = arith.constant 9 : i32
    %332 = vector.broadcast %c9_i32_160 : i32 to vector<16x6xi32>
    %333 = arith.cmpi eq, %215, %332 : vector<16x6xi32>
    %cst_161 = arith.constant 0.00759875821 : f32
    %cst_162 = arith.constant 0.000000e+00 : f32
    %334 = vector.broadcast %cst_161 : f32 to vector<16x6xf32>
    %335 = vector.broadcast %cst_162 : f32 to vector<16x6xf32>
    %336 = arith.select %333, %334, %335 : vector<16x6xi1>, vector<16x6xf32>
    %337 = arith.addf %325, %336 : vector<16x6xf32>
    %c10_i32_163 = arith.constant 10 : i32
    %338 = vector.broadcast %c10_i32_163 : i32 to vector<6x16xi32>
    %339 = arith.cmpi eq, %212, %338 : vector<6x16xi32>
    %cst_164 = arith.constant 0.00102838012 : f32
    %cst_165 = arith.constant 0.000000e+00 : f32
    %340 = vector.broadcast %cst_164 : f32 to vector<6x16xf32>
    %341 = vector.broadcast %cst_165 : f32 to vector<6x16xf32>
    %342 = arith.select %339, %340, %341 : vector<6x16xi1>, vector<6x16xf32>
    %343 = arith.addf %331, %342 : vector<6x16xf32>
    %c10_i32_166 = arith.constant 10 : i32
    %344 = vector.broadcast %c10_i32_166 : i32 to vector<16x6xi32>
    %345 = arith.cmpi eq, %215, %344 : vector<16x6xi32>
    %cst_167 = arith.constant 0.00102838012 : f32
    %cst_168 = arith.constant 0.000000e+00 : f32
    %346 = vector.broadcast %cst_167 : f32 to vector<16x6xf32>
    %347 = vector.broadcast %cst_168 : f32 to vector<16x6xf32>
    %348 = arith.select %345, %346, %347 : vector<16x6xi1>, vector<16x6xf32>
    %349 = arith.addf %337, %348 : vector<16x6xf32>
    %350 = tpu.iota {dimensions = array<i32: 0>} : vector<8x16xi32>
    %351 = tpu.iota {dimensions = array<i32: 1>} : vector<8x16xi32>
    %c2_i32_169 = arith.constant 2 : i32
    %352 = vector.broadcast %c2_i32_169 : i32 to vector<8x16xi32>
    %353 = arith.muli %352, %350 : vector<8x16xi32>
    %354 = arith.cmpi eq, %351, %353 : vector<8x16xi32>
    %c2_i32_170 = arith.constant 2 : i32
    %355 = vector.broadcast %c2_i32_170 : i32 to vector<8x16xi32>
    %356 = arith.muli %355, %350 : vector<8x16xi32>
    %c1_i32_171 = arith.constant 1 : i32
    %357 = vector.broadcast %c1_i32_171 : i32 to vector<8x16xi32>
    %358 = arith.addi %356, %357 : vector<8x16xi32>
    %359 = arith.cmpi eq, %351, %358 : vector<8x16xi32>
    %360 = arith.ori %354, %359 : vector<8x16xi1>
    %cst_172 = arith.constant 5.000000e-01 : f32
    %cst_173 = arith.constant 0.000000e+00 : f32
    %361 = vector.broadcast %cst_172 : f32 to vector<8x16xf32>
    %362 = vector.broadcast %cst_173 : f32 to vector<8x16xf32>
    %363 = arith.select %360, %361, %362 : vector<8x16xi1>, vector<8x16xf32>
    %364 = tpu.iota {dimensions = array<i32: 0>} : vector<16x8xi32>
    %365 = tpu.iota {dimensions = array<i32: 1>} : vector<16x8xi32>
    %c2_i32_174 = arith.constant 2 : i32
    %366 = vector.broadcast %c2_i32_174 : i32 to vector<16x8xi32>
    %367 = arith.muli %366, %365 : vector<16x8xi32>
    %368 = arith.cmpi eq, %364, %367 : vector<16x8xi32>
    %c2_i32_175 = arith.constant 2 : i32
    %369 = vector.broadcast %c2_i32_175 : i32 to vector<16x8xi32>
    %370 = arith.muli %369, %365 : vector<16x8xi32>
    %c1_i32_176 = arith.constant 1 : i32
    %371 = vector.broadcast %c1_i32_176 : i32 to vector<16x8xi32>
    %372 = arith.addi %370, %371 : vector<16x8xi32>
    %373 = arith.cmpi eq, %364, %372 : vector<16x8xi32>
    %374 = arith.ori %368, %373 : vector<16x8xi1>
    %cst_177 = arith.constant 5.000000e-01 : f32
    %cst_178 = arith.constant 0.000000e+00 : f32
    %375 = vector.broadcast %cst_177 : f32 to vector<16x8xf32>
    %376 = vector.broadcast %cst_178 : f32 to vector<16x8xf32>
    %377 = arith.select %374, %375, %376 : vector<16x8xi1>, vector<16x8xf32>
    %cst_179 = arith.constant 0.000000e+00 : f32
    %cst_180 = arith.constant 0.000000e+00 : f32
    %c0_i32_181 = arith.constant 0 : i32
    %c8_i32_182 = arith.constant 8 : i32
    %378 = arith.addi %c0_i32_181, %c8_i32_182 : i32
    %c1_i32_183 = arith.constant 1 : i32
    %379:2 = scf.for %arg12 = %c0_i32_181 to %378 step %c1_i32_183 iter_args(%arg13 = %cst_179, %arg14 = %cst_180) -> (f32, f32)  : i32 {
      %695 = arith.index_cast %arg12 : i32 to index
      %c0_364 = arith.constant 0 : index
      %c0_365 = arith.constant 0 : index
      %696 = vector.load %arg4[%695, %c0_364, %c0_365] : memref<8x16x16xf32, #tpu.memory_space<vmem>>, vector<1x16x16xf32>
      %697 = vector.shape_cast %696 : vector<1x16x16xf32> to vector<16x16xf32>
      %698 = arith.index_cast %arg12 : i32 to index
      %c0_366 = arith.constant 0 : index
      %c0_367 = arith.constant 0 : index
      %699 = vector.load %arg5[%698, %c0_366, %c0_367] : memref<8x16x16xf32, #tpu.memory_space<vmem>>, vector<1x16x16xf32>
      %700 = vector.shape_cast %699 : vector<1x16x16xf32> to vector<16x16xf32>
      %cst_368 = arith.constant dense<0.000000e+00> : vector<16x6xf32>
      %701 = tpu.matmul %697, %349, %cst_368 {dimension_numbers = #tpu.dot_dimension_numbers<[1], [0], [0], [1], [0, 0, 1, 1], [], []>} : vector<16x16xf32>, vector<16x6xf32>, vector<16x6xf32> -> vector<16x6xf32>
      %cst_369 = arith.constant dense<0.000000e+00> : vector<6x6xf32>
      %702 = tpu.matmul %343, %701, %cst_369 {dimension_numbers = #tpu.dot_dimension_numbers<[1], [0], [0], [1], [0, 0, 1, 1], [], []>} : vector<6x16xf32>, vector<16x6xf32>, vector<6x6xf32> -> vector<6x6xf32>
      %cst_370 = arith.constant dense<0.000000e+00> : vector<16x6xf32>
      %703 = tpu.matmul %700, %349, %cst_370 {dimension_numbers = #tpu.dot_dimension_numbers<[1], [0], [0], [1], [0, 0, 1, 1], [], []>} : vector<16x16xf32>, vector<16x6xf32>, vector<16x6xf32> -> vector<16x6xf32>
      %cst_371 = arith.constant dense<0.000000e+00> : vector<6x6xf32>
      %704 = tpu.matmul %343, %703, %cst_371 {dimension_numbers = #tpu.dot_dimension_numbers<[1], [0], [0], [1], [0, 0, 1, 1], [], []>} : vector<6x16xf32>, vector<16x6xf32>, vector<6x6xf32> -> vector<6x6xf32>
      %705 = arith.mulf %697, %697 : vector<16x16xf32>
      %cst_372 = arith.constant dense<0.000000e+00> : vector<16x6xf32>
      %706 = tpu.matmul %705, %349, %cst_372 {dimension_numbers = #tpu.dot_dimension_numbers<[1], [0], [0], [1], [0, 0, 1, 1], [], []>} : vector<16x16xf32>, vector<16x6xf32>, vector<16x6xf32> -> vector<16x6xf32>
      %cst_373 = arith.constant dense<0.000000e+00> : vector<6x6xf32>
      %707 = tpu.matmul %343, %706, %cst_373 {dimension_numbers = #tpu.dot_dimension_numbers<[1], [0], [0], [1], [0, 0, 1, 1], [], []>} : vector<6x16xf32>, vector<16x6xf32>, vector<6x6xf32> -> vector<6x6xf32>
      %708 = arith.mulf %700, %700 : vector<16x16xf32>
      %cst_374 = arith.constant dense<0.000000e+00> : vector<16x6xf32>
      %709 = tpu.matmul %708, %349, %cst_374 {dimension_numbers = #tpu.dot_dimension_numbers<[1], [0], [0], [1], [0, 0, 1, 1], [], []>} : vector<16x16xf32>, vector<16x6xf32>, vector<16x6xf32> -> vector<16x6xf32>
      %cst_375 = arith.constant dense<0.000000e+00> : vector<6x6xf32>
      %710 = tpu.matmul %343, %709, %cst_375 {dimension_numbers = #tpu.dot_dimension_numbers<[1], [0], [0], [1], [0, 0, 1, 1], [], []>} : vector<6x16xf32>, vector<16x6xf32>, vector<6x6xf32> -> vector<6x6xf32>
      %711 = arith.mulf %697, %700 : vector<16x16xf32>
      %cst_376 = arith.constant dense<0.000000e+00> : vector<16x6xf32>
      %712 = tpu.matmul %711, %349, %cst_376 {dimension_numbers = #tpu.dot_dimension_numbers<[1], [0], [0], [1], [0, 0, 1, 1], [], []>} : vector<16x16xf32>, vector<16x6xf32>, vector<16x6xf32> -> vector<16x6xf32>
      %cst_377 = arith.constant dense<0.000000e+00> : vector<6x6xf32>
      %713 = tpu.matmul %343, %712, %cst_377 {dimension_numbers = #tpu.dot_dimension_numbers<[1], [0], [0], [1], [0, 0, 1, 1], [], []>} : vector<6x16xf32>, vector<16x6xf32>, vector<6x6xf32> -> vector<6x6xf32>
      %714 = arith.mulf %702, %702 : vector<6x6xf32>
      %715 = arith.mulf %704, %704 : vector<6x6xf32>
      %716 = arith.mulf %702, %704 : vector<6x6xf32>
      %717 = arith.subf %707, %714 : vector<6x6xf32>
      %718 = arith.subf %710, %715 : vector<6x6xf32>
      %719 = arith.subf %713, %716 : vector<6x6xf32>
      %cst_378 = arith.constant 2.000000e+00 : f32
      %720 = vector.broadcast %cst_378 : f32 to vector<6x6xf32>
      %721 = arith.mulf %720, %719 : vector<6x6xf32>
      %722 = vector.broadcast %209 : f32 to vector<6x6xf32>
      %723 = arith.addf %721, %722 : vector<6x6xf32>
      %724 = arith.addf %717, %718 : vector<6x6xf32>
      %725 = vector.broadcast %209 : f32 to vector<6x6xf32>
      %726 = arith.addf %724, %725 : vector<6x6xf32>
      %727 = arith.divf %723, %726 : vector<6x6xf32>
      %cst_379 = arith.constant 2.000000e+00 : f32
      %728 = vector.broadcast %cst_379 : f32 to vector<6x6xf32>
      %729 = arith.mulf %728, %716 : vector<6x6xf32>
      %730 = vector.broadcast %207 : f32 to vector<6x6xf32>
      %731 = arith.addf %729, %730 : vector<6x6xf32>
      %732 = arith.mulf %731, %723 : vector<6x6xf32>
      %733 = arith.addf %714, %715 : vector<6x6xf32>
      %734 = vector.broadcast %207 : f32 to vector<6x6xf32>
      %735 = arith.addf %733, %734 : vector<6x6xf32>
      %736 = arith.mulf %735, %726 : vector<6x6xf32>
      %737 = arith.divf %732, %736 : vector<6x6xf32>
      %cst_380 = arith.constant dense<0.000000e+00> : vector<16x8xf32>
      %738 = tpu.matmul %697, %377, %cst_380 {dimension_numbers = #tpu.dot_dimension_numbers<[1], [0], [0], [1], [0, 0, 1, 1], [], []>} : vector<16x16xf32>, vector<16x8xf32>, vector<16x8xf32> -> vector<16x8xf32>
      %cst_381 = arith.constant dense<0.000000e+00> : vector<8x8xf32>
      %739 = tpu.matmul %363, %738, %cst_381 {dimension_numbers = #tpu.dot_dimension_numbers<[1], [0], [0], [1], [0, 0, 1, 1], [], []>} : vector<8x16xf32>, vector<16x8xf32>, vector<8x8xf32> -> vector<8x8xf32>
      %740 = arith.index_cast %arg12 : i32 to index
      %c0_382 = arith.constant 0 : index
      %c0_383 = arith.constant 0 : index
      %741 = vector.load %arg6[%740, %c0_382, %c0_383] : memref<8x8x8xf32, #tpu.memory_space<vmem>>, vector<1x8x8xf32>
      %742 = vector.shape_cast %741 : vector<1x8x8xf32> to vector<8x8xf32>
      %743 = vector.shape_cast %739 : vector<8x8xf32> to vector<1x8x8xf32>
      tpu.vector_store %arg6[%740, %c0_382, %c0_383], %743 {strides = array<i32>} : memref<8x8x8xf32, #tpu.memory_space<vmem>>, vector<1x8x8xf32>,
      %cst_384 = arith.constant dense<0.000000e+00> : vector<16x8xf32>
      %744 = tpu.matmul %700, %377, %cst_384 {dimension_numbers = #tpu.dot_dimension_numbers<[1], [0], [0], [1], [0, 0, 1, 1], [], []>} : vector<16x16xf32>, vector<16x8xf32>, vector<16x8xf32> -> vector<16x8xf32>
      %cst_385 = arith.constant dense<0.000000e+00> : vector<8x8xf32>
      %745 = tpu.matmul %363, %744, %cst_385 {dimension_numbers = #tpu.dot_dimension_numbers<[1], [0], [0], [1], [0, 0, 1, 1], [], []>} : vector<8x16xf32>, vector<16x8xf32>, vector<8x8xf32> -> vector<8x8xf32>
      %746 = arith.index_cast %arg12 : i32 to index
      %c0_386 = arith.constant 0 : index
      %c0_387 = arith.constant 0 : index
      %747 = vector.load %arg7[%746, %c0_386, %c0_387] : memref<8x8x8xf32, #tpu.memory_space<vmem>>, vector<1x8x8xf32>
      %748 = vector.shape_cast %747 : vector<1x8x8xf32> to vector<8x8xf32>
      %749 = vector.shape_cast %745 : vector<8x8xf32> to vector<1x8x8xf32>
      tpu.vector_store %arg7[%746, %c0_386, %c0_387], %749 {strides = array<i32>} : memref<8x8x8xf32, #tpu.memory_space<vmem>>, vector<1x8x8xf32>,
      %750 = vector.shape_cast %737 : vector<6x6xf32> to vector<1x6x6xf32>
      %cst_388 = arith.constant dense<0.000000e+00> : vector<1xf32>
      %751 = vector.multi_reduction <add>, %750, %cst_388 [1, 2] : vector<1x6x6xf32> to vector<1xf32>
      %752 = vector.shape_cast %751 : vector<1xf32> to vector<1x1x1xf32>
      %753 = vector.extract %752[0, 0, 0] : f32 from vector<1x1x1xf32>
      %754 = arith.addf %arg13, %753 : f32
      %755 = vector.shape_cast %727 : vector<6x6xf32> to vector<1x6x6xf32>
      %cst_389 = arith.constant dense<0.000000e+00> : vector<1xf32>
      %756 = vector.multi_reduction <add>, %755, %cst_389 [1, 2] : vector<1x6x6xf32> to vector<1xf32>
      %757 = vector.shape_cast %756 : vector<1xf32> to vector<1x1x1xf32>
      %758 = vector.extract %757[0, 0, 0] : f32 from vector<1x1x1xf32>
      %759 = arith.addf %arg14, %758 : f32
      scf.yield %754, %759 : f32, f32
    }
    %c8_i32_184 = arith.constant 8 : i32
    %cst_185 = arith.constant 0.00347222225 : f32
    %380 = arith.mulf %379#0, %cst_185 : f32
    %c1 = arith.constant 1 : index
    %381 = memref.load %arg2[%c1] : memref<5xf32, #tpu.memory_space<smem>>
    memref.store %380, %arg2[%c1] : memref<5xf32, #tpu.memory_space<smem>>
    %cst_186 = arith.constant 0.00347222225 : f32
    %382 = arith.mulf %379#1, %cst_186 : f32
    %c1_187 = arith.constant 1 : index
    %383 = memref.load %arg3[%c1_187] : memref<5xf32, #tpu.memory_space<smem>>
    memref.store %382, %arg3[%c1_187] : memref<5xf32, #tpu.memory_space<smem>>
    %c0_188 = arith.constant 0 : index
    %c0_189 = arith.constant 0 : index
    %c0_190 = arith.constant 0 : index
    %384 = vector.load %arg6[%c0_188, %c0_189, %c0_190] : memref<8x8x8xf32, #tpu.memory_space<vmem>>, vector<8x8x8xf32>
    %385 = vector.shape_cast %384 : vector<8x8x8xf32> to vector<1x8x8x8xf32>
    %cst_191 = arith.constant dense<0xFF800000> : vector<1xf32>
    %386 = vector.multi_reduction <maximumf>, %385, %cst_191 [1, 2, 3] : vector<1x8x8x8xf32> to vector<1xf32>
    %387 = vector.shape_cast %386 : vector<1xf32> to vector<1x1x1x1xf32>
    %388 = vector.extract %387[0, 0, 0, 0] : f32 from vector<1x1x1x1xf32>
    %cst_192 = arith.constant 1.280000e+02 : f32
    %389 = arith.cmpf ogt, %388, %cst_192 : f32
    %cst_193 = arith.constant 2.550000e+02 : f32
    %cst_194 = arith.constant 1.000000e+00 : f32
    %390 = arith.select %389, %cst_193, %cst_194 : f32
    %391 = vector.shape_cast %384 : vector<8x8x8xf32> to vector<1x8x8x8xf32>
    %cst_195 = arith.constant dense<0x7F800000> : vector<1xf32>
    %392 = vector.multi_reduction <minimumf>, %391, %cst_195 [1, 2, 3] : vector<1x8x8x8xf32> to vector<1xf32>
    %393 = vector.shape_cast %392 : vector<1xf32> to vector<1x1x1x1xf32>
    %394 = vector.extract %393[0, 0, 0, 0] : f32 from vector<1x1x1x1xf32>
    %cst_196 = arith.constant -5.000000e-01 : f32
    %395 = arith.cmpf olt, %394, %cst_196 : f32
    %cst_197 = arith.constant -1.000000e+00 : f32
    %cst_198 = arith.constant 0.000000e+00 : f32
    %396 = arith.select %395, %cst_197, %cst_198 : f32
    %397 = arith.subf %390, %396 : f32
    %cst_199 = arith.constant 0.00999999977 : f32
    %398 = arith.mulf %cst_199, %397 : f32
    %399 = arith.mulf %398, %398 : f32
    %cst_200 = arith.constant 3.000000e-02 : f32
    %400 = arith.mulf %cst_200, %397 : f32
    %401 = arith.mulf %400, %400 : f32
    %402 = tpu.iota {dimensions = array<i32: 0>} : vector<8x8xi32>
    %403 = tpu.iota {dimensions = array<i32: 1>} : vector<8x8xi32>
    %cst_201 = arith.constant 0.000000e+00 : f32
    %404 = vector.broadcast %cst_201 : f32 to vector<8x8xf32>
    %cst_202 = arith.constant 0.000000e+00 : f32
    %405 = vector.broadcast %cst_202 : f32 to vector<8x8xf32>
    %c0_i32_203 = arith.constant 0 : i32
    %406 = vector.broadcast %c0_i32_203 : i32 to vector<8x8xi32>
    %407 = arith.cmpi eq, %402, %406 : vector<8x8xi32>
    %cst_204 = arith.constant 0.00767284352 : f32
    %cst_205 = arith.constant 0.000000e+00 : f32
    %408 = vector.broadcast %cst_204 : f32 to vector<8x8xf32>
    %409 = vector.broadcast %cst_205 : f32 to vector<8x8xf32>
    %410 = arith.select %407, %408, %409 : vector<8x8xi1>, vector<8x8xf32>
    %411 = arith.addf %404, %410 : vector<8x8xf32>
    %c0_i32_206 = arith.constant 0 : i32
    %412 = vector.broadcast %c0_i32_206 : i32 to vector<8x8xi32>
    %413 = arith.cmpi eq, %403, %412 : vector<8x8xi32>
    %cst_207 = arith.constant 0.00767284352 : f32
    %cst_208 = arith.constant 0.000000e+00 : f32
    %414 = vector.broadcast %cst_207 : f32 to vector<8x8xf32>
    %415 = vector.broadcast %cst_208 : f32 to vector<8x8xf32>
    %416 = arith.select %413, %414, %415 : vector<8x8xi1>, vector<8x8xf32>
    %417 = arith.addf %405, %416 : vector<8x8xf32>
    %c1_i32_209 = arith.constant 1 : i32
    %418 = vector.broadcast %c1_i32_209 : i32 to vector<8x8xi32>
    %419 = arith.cmpi eq, %402, %418 : vector<8x8xi32>
    %cst_210 = arith.constant 0.0363517664 : f32
    %cst_211 = arith.constant 0.000000e+00 : f32
    %420 = vector.broadcast %cst_210 : f32 to vector<8x8xf32>
    %421 = vector.broadcast %cst_211 : f32 to vector<8x8xf32>
    %422 = arith.select %419, %420, %421 : vector<8x8xi1>, vector<8x8xf32>
    %423 = arith.addf %411, %422 : vector<8x8xf32>
    %c1_i32_212 = arith.constant 1 : i32
    %424 = vector.broadcast %c1_i32_212 : i32 to vector<8x8xi32>
    %425 = arith.cmpi eq, %403, %424 : vector<8x8xi32>
    %cst_213 = arith.constant 0.0363517664 : f32
    %cst_214 = arith.constant 0.000000e+00 : f32
    %426 = vector.broadcast %cst_213 : f32 to vector<8x8xf32>
    %427 = vector.broadcast %cst_214 : f32 to vector<8x8xf32>
    %428 = arith.select %425, %426, %427 : vector<8x8xi1>, vector<8x8xf32>
    %429 = arith.addf %417, %428 : vector<8x8xf32>
    %c2_i32_215 = arith.constant 2 : i32
    %430 = vector.broadcast %c2_i32_215 : i32 to vector<8x8xi32>
    %431 = arith.cmpi eq, %402, %430 : vector<8x8xi32>
    %cst_216 = arith.constant 0.110426918 : f32
    %cst_217 = arith.constant 0.000000e+00 : f32
    %432 = vector.broadcast %cst_216 : f32 to vector<8x8xf32>
    %433 = vector.broadcast %cst_217 : f32 to vector<8x8xf32>
    %434 = arith.select %431, %432, %433 : vector<8x8xi1>, vector<8x8xf32>
    %435 = arith.addf %423, %434 : vector<8x8xf32>
    %c2_i32_218 = arith.constant 2 : i32
    %436 = vector.broadcast %c2_i32_218 : i32 to vector<8x8xi32>
    %437 = arith.cmpi eq, %403, %436 : vector<8x8xi32>
    %cst_219 = arith.constant 0.110426918 : f32
    %cst_220 = arith.constant 0.000000e+00 : f32
    %438 = vector.broadcast %cst_219 : f32 to vector<8x8xf32>
    %439 = vector.broadcast %cst_220 : f32 to vector<8x8xf32>
    %440 = arith.select %437, %438, %439 : vector<8x8xi1>, vector<8x8xf32>
    %441 = arith.addf %429, %440 : vector<8x8xf32>
    %c3_i32_221 = arith.constant 3 : i32
    %442 = vector.broadcast %c3_i32_221 : i32 to vector<8x8xi32>
    %443 = arith.cmpi eq, %402, %442 : vector<8x8xi32>
    %cst_222 = arith.constant 0.215082273 : f32
    %cst_223 = arith.constant 0.000000e+00 : f32
    %444 = vector.broadcast %cst_222 : f32 to vector<8x8xf32>
    %445 = vector.broadcast %cst_223 : f32 to vector<8x8xf32>
    %446 = arith.select %443, %444, %445 : vector<8x8xi1>, vector<8x8xf32>
    %447 = arith.addf %435, %446 : vector<8x8xf32>
    %c3_i32_224 = arith.constant 3 : i32
    %448 = vector.broadcast %c3_i32_224 : i32 to vector<8x8xi32>
    %449 = arith.cmpi eq, %403, %448 : vector<8x8xi32>
    %cst_225 = arith.constant 0.215082273 : f32
    %cst_226 = arith.constant 0.000000e+00 : f32
    %450 = vector.broadcast %cst_225 : f32 to vector<8x8xf32>
    %451 = vector.broadcast %cst_226 : f32 to vector<8x8xf32>
    %452 = arith.select %449, %450, %451 : vector<8x8xi1>, vector<8x8xf32>
    %453 = arith.addf %441, %452 : vector<8x8xf32>
    %c4_i32_227 = arith.constant 4 : i32
    %454 = vector.broadcast %c4_i32_227 : i32 to vector<8x8xi32>
    %455 = arith.cmpi eq, %402, %454 : vector<8x8xi32>
    %cst_228 = arith.constant 0.268605262 : f32
    %cst_229 = arith.constant 0.000000e+00 : f32
    %456 = vector.broadcast %cst_228 : f32 to vector<8x8xf32>
    %457 = vector.broadcast %cst_229 : f32 to vector<8x8xf32>
    %458 = arith.select %455, %456, %457 : vector<8x8xi1>, vector<8x8xf32>
    %459 = arith.addf %447, %458 : vector<8x8xf32>
    %c4_i32_230 = arith.constant 4 : i32
    %460 = vector.broadcast %c4_i32_230 : i32 to vector<8x8xi32>
    %461 = arith.cmpi eq, %403, %460 : vector<8x8xi32>
    %cst_231 = arith.constant 0.268605262 : f32
    %cst_232 = arith.constant 0.000000e+00 : f32
    %462 = vector.broadcast %cst_231 : f32 to vector<8x8xf32>
    %463 = vector.broadcast %cst_232 : f32 to vector<8x8xf32>
    %464 = arith.select %461, %462, %463 : vector<8x8xi1>, vector<8x8xf32>
    %465 = arith.addf %453, %464 : vector<8x8xf32>
    %c5_i32_233 = arith.constant 5 : i32
    %466 = vector.broadcast %c5_i32_233 : i32 to vector<8x8xi32>
    %467 = arith.cmpi eq, %402, %466 : vector<8x8xi32>
    %cst_234 = arith.constant 0.215082273 : f32
    %cst_235 = arith.constant 0.000000e+00 : f32
    %468 = vector.broadcast %cst_234 : f32 to vector<8x8xf32>
    %469 = vector.broadcast %cst_235 : f32 to vector<8x8xf32>
    %470 = arith.select %467, %468, %469 : vector<8x8xi1>, vector<8x8xf32>
    %471 = arith.addf %459, %470 : vector<8x8xf32>
    %c5_i32_236 = arith.constant 5 : i32
    %472 = vector.broadcast %c5_i32_236 : i32 to vector<8x8xi32>
    %473 = arith.cmpi eq, %403, %472 : vector<8x8xi32>
    %cst_237 = arith.constant 0.215082273 : f32
    %cst_238 = arith.constant 0.000000e+00 : f32
    %474 = vector.broadcast %cst_237 : f32 to vector<8x8xf32>
    %475 = vector.broadcast %cst_238 : f32 to vector<8x8xf32>
    %476 = arith.select %473, %474, %475 : vector<8x8xi1>, vector<8x8xf32>
    %477 = arith.addf %465, %476 : vector<8x8xf32>
    %c6_i32_239 = arith.constant 6 : i32
    %478 = vector.broadcast %c6_i32_239 : i32 to vector<8x8xi32>
    %479 = arith.cmpi eq, %402, %478 : vector<8x8xi32>
    %cst_240 = arith.constant 0.110426918 : f32
    %cst_241 = arith.constant 0.000000e+00 : f32
    %480 = vector.broadcast %cst_240 : f32 to vector<8x8xf32>
    %481 = vector.broadcast %cst_241 : f32 to vector<8x8xf32>
    %482 = arith.select %479, %480, %481 : vector<8x8xi1>, vector<8x8xf32>
    %483 = arith.addf %471, %482 : vector<8x8xf32>
    %c6_i32_242 = arith.constant 6 : i32
    %484 = vector.broadcast %c6_i32_242 : i32 to vector<8x8xi32>
    %485 = arith.cmpi eq, %403, %484 : vector<8x8xi32>
    %cst_243 = arith.constant 0.110426918 : f32
    %cst_244 = arith.constant 0.000000e+00 : f32
    %486 = vector.broadcast %cst_243 : f32 to vector<8x8xf32>
    %487 = vector.broadcast %cst_244 : f32 to vector<8x8xf32>
    %488 = arith.select %485, %486, %487 : vector<8x8xi1>, vector<8x8xf32>
    %489 = arith.addf %477, %488 : vector<8x8xf32>
    %c7_i32_245 = arith.constant 7 : i32
    %490 = vector.broadcast %c7_i32_245 : i32 to vector<8x8xi32>
    %491 = arith.cmpi eq, %402, %490 : vector<8x8xi32>
    %cst_246 = arith.constant 0.0363517664 : f32
    %cst_247 = arith.constant 0.000000e+00 : f32
    %492 = vector.broadcast %cst_246 : f32 to vector<8x8xf32>
    %493 = vector.broadcast %cst_247 : f32 to vector<8x8xf32>
    %494 = arith.select %491, %492, %493 : vector<8x8xi1>, vector<8x8xf32>
    %495 = arith.addf %483, %494 : vector<8x8xf32>
    %c7_i32_248 = arith.constant 7 : i32
    %496 = vector.broadcast %c7_i32_248 : i32 to vector<8x8xi32>
    %497 = arith.cmpi eq, %403, %496 : vector<8x8xi32>
    %cst_249 = arith.constant 0.0363517664 : f32
    %cst_250 = arith.constant 0.000000e+00 : f32
    %498 = vector.broadcast %cst_249 : f32 to vector<8x8xf32>
    %499 = vector.broadcast %cst_250 : f32 to vector<8x8xf32>
    %500 = arith.select %497, %498, %499 : vector<8x8xi1>, vector<8x8xf32>
    %501 = arith.addf %489, %500 : vector<8x8xf32>
    %502 = arith.mulf %495, %501 : vector<8x8xf32>
    %503 = tpu.iota {dimensions = array<i32: 0>} : vector<4x8xi32>
    %504 = tpu.iota {dimensions = array<i32: 1>} : vector<4x8xi32>
    %c2_i32_251 = arith.constant 2 : i32
    %505 = vector.broadcast %c2_i32_251 : i32 to vector<4x8xi32>
    %506 = arith.muli %505, %503 : vector<4x8xi32>
    %507 = arith.cmpi eq, %504, %506 : vector<4x8xi32>
    %c2_i32_252 = arith.constant 2 : i32
    %508 = vector.broadcast %c2_i32_252 : i32 to vector<4x8xi32>
    %509 = arith.muli %508, %503 : vector<4x8xi32>
    %c1_i32_253 = arith.constant 1 : i32
    %510 = vector.broadcast %c1_i32_253 : i32 to vector<4x8xi32>
    %511 = arith.addi %509, %510 : vector<4x8xi32>
    %512 = arith.cmpi eq, %504, %511 : vector<4x8xi32>
    %513 = arith.ori %507, %512 : vector<4x8xi1>
    %cst_254 = arith.constant 5.000000e-01 : f32
    %cst_255 = arith.constant 0.000000e+00 : f32
    %514 = vector.broadcast %cst_254 : f32 to vector<4x8xf32>
    %515 = vector.broadcast %cst_255 : f32 to vector<4x8xf32>
    %516 = arith.select %513, %514, %515 : vector<4x8xi1>, vector<4x8xf32>
    %517 = tpu.iota {dimensions = array<i32: 0>} : vector<8x4xi32>
    %518 = tpu.iota {dimensions = array<i32: 1>} : vector<8x4xi32>
    %c2_i32_256 = arith.constant 2 : i32
    %519 = vector.broadcast %c2_i32_256 : i32 to vector<8x4xi32>
    %520 = arith.muli %519, %518 : vector<8x4xi32>
    %521 = arith.cmpi eq, %517, %520 : vector<8x4xi32>
    %c2_i32_257 = arith.constant 2 : i32
    %522 = vector.broadcast %c2_i32_257 : i32 to vector<8x4xi32>
    %523 = arith.muli %522, %518 : vector<8x4xi32>
    %c1_i32_258 = arith.constant 1 : i32
    %524 = vector.broadcast %c1_i32_258 : i32 to vector<8x4xi32>
    %525 = arith.addi %523, %524 : vector<8x4xi32>
    %526 = arith.cmpi eq, %517, %525 : vector<8x4xi32>
    %527 = arith.ori %521, %526 : vector<8x4xi1>
    %cst_259 = arith.constant 5.000000e-01 : f32
    %cst_260 = arith.constant 0.000000e+00 : f32
    %528 = vector.broadcast %cst_259 : f32 to vector<8x4xf32>
    %529 = vector.broadcast %cst_260 : f32 to vector<8x4xf32>
    %530 = arith.select %527, %528, %529 : vector<8x4xi1>, vector<8x4xf32>
    %cst_261 = arith.constant 0.000000e+00 : f32
    %cst_262 = arith.constant 0.000000e+00 : f32
    %c0_i32_263 = arith.constant 0 : i32
    %c8_i32_264 = arith.constant 8 : i32
    %531 = arith.addi %c0_i32_263, %c8_i32_264 : i32
    %c1_i32_265 = arith.constant 1 : i32
    %532:2 = scf.for %arg12 = %c0_i32_263 to %531 step %c1_i32_265 iter_args(%arg13 = %cst_261, %arg14 = %cst_262) -> (f32, f32)  : i32 {
      %695 = arith.index_cast %arg12 : i32 to index
      %c0_364 = arith.constant 0 : index
      %c0_365 = arith.constant 0 : index
      %696 = vector.load %arg6[%695, %c0_364, %c0_365] : memref<8x8x8xf32, #tpu.memory_space<vmem>>, vector<1x8x8xf32>
      %697 = vector.shape_cast %696 : vector<1x8x8xf32> to vector<8x8xf32>
      %698 = arith.index_cast %arg12 : i32 to index
      %c0_366 = arith.constant 0 : index
      %c0_367 = arith.constant 0 : index
      %699 = vector.load %arg7[%698, %c0_366, %c0_367] : memref<8x8x8xf32, #tpu.memory_space<vmem>>, vector<1x8x8xf32>
      %700 = vector.shape_cast %699 : vector<1x8x8xf32> to vector<8x8xf32>
      %701 = arith.mulf %502, %697 : vector<8x8xf32>
      %702 = vector.shape_cast %701 : vector<8x8xf32> to vector<1x8x8xf32>
      %cst_368 = arith.constant dense<0.000000e+00> : vector<1xf32>
      %703 = vector.multi_reduction <add>, %702, %cst_368 [1, 2] : vector<1x8x8xf32> to vector<1xf32>
      %704 = vector.shape_cast %703 : vector<1xf32> to vector<1x1x1xf32>
      %705 = vector.extract %704[0, 0, 0] : f32 from vector<1x1x1xf32>
      %706 = arith.mulf %502, %700 : vector<8x8xf32>
      %707 = vector.shape_cast %706 : vector<8x8xf32> to vector<1x8x8xf32>
      %cst_369 = arith.constant dense<0.000000e+00> : vector<1xf32>
      %708 = vector.multi_reduction <add>, %707, %cst_369 [1, 2] : vector<1x8x8xf32> to vector<1xf32>
      %709 = vector.shape_cast %708 : vector<1xf32> to vector<1x1x1xf32>
      %710 = vector.extract %709[0, 0, 0] : f32 from vector<1x1x1xf32>
      %711 = arith.mulf %697, %697 : vector<8x8xf32>
      %712 = arith.mulf %502, %711 : vector<8x8xf32>
      %713 = vector.shape_cast %712 : vector<8x8xf32> to vector<1x8x8xf32>
      %cst_370 = arith.constant dense<0.000000e+00> : vector<1xf32>
      %714 = vector.multi_reduction <add>, %713, %cst_370 [1, 2] : vector<1x8x8xf32> to vector<1xf32>
      %715 = vector.shape_cast %714 : vector<1xf32> to vector<1x1x1xf32>
      %716 = vector.extract %715[0, 0, 0] : f32 from vector<1x1x1xf32>
      %717 = arith.mulf %700, %700 : vector<8x8xf32>
      %718 = arith.mulf %502, %717 : vector<8x8xf32>
      %719 = vector.shape_cast %718 : vector<8x8xf32> to vector<1x8x8xf32>
      %cst_371 = arith.constant dense<0.000000e+00> : vector<1xf32>
      %720 = vector.multi_reduction <add>, %719, %cst_371 [1, 2] : vector<1x8x8xf32> to vector<1xf32>
      %721 = vector.shape_cast %720 : vector<1xf32> to vector<1x1x1xf32>
      %722 = vector.extract %721[0, 0, 0] : f32 from vector<1x1x1xf32>
      %723 = arith.mulf %697, %700 : vector<8x8xf32>
      %724 = arith.mulf %502, %723 : vector<8x8xf32>
      %725 = vector.shape_cast %724 : vector<8x8xf32> to vector<1x8x8xf32>
      %cst_372 = arith.constant dense<0.000000e+00> : vector<1xf32>
      %726 = vector.multi_reduction <add>, %725, %cst_372 [1, 2] : vector<1x8x8xf32> to vector<1xf32>
      %727 = vector.shape_cast %726 : vector<1xf32> to vector<1x1x1xf32>
      %728 = vector.extract %727[0, 0, 0] : f32 from vector<1x1x1xf32>
      %729 = arith.mulf %705, %705 : f32
      %730 = arith.mulf %710, %710 : f32
      %731 = arith.mulf %705, %710 : f32
      %732 = arith.subf %716, %729 : f32
      %733 = arith.subf %722, %730 : f32
      %734 = arith.subf %728, %731 : f32
      %cst_373 = arith.constant 2.000000e+00 : f32
      %735 = arith.mulf %cst_373, %734 : f32
      %736 = arith.addf %735, %401 : f32
      %737 = arith.addf %732, %733 : f32
      %738 = arith.addf %737, %401 : f32
      %739 = arith.divf %736, %738 : f32
      %cst_374 = arith.constant 2.000000e+00 : f32
      %740 = arith.mulf %cst_374, %731 : f32
      %741 = arith.addf %740, %399 : f32
      %742 = arith.mulf %741, %736 : f32
      %743 = arith.addf %729, %730 : f32
      %744 = arith.addf %743, %399 : f32
      %745 = arith.mulf %744, %738 : f32
      %746 = arith.divf %742, %745 : f32
      %cst_375 = arith.constant dense<0.000000e+00> : vector<8x4xf32>
      %747 = tpu.matmul %697, %530, %cst_375 {dimension_numbers = #tpu.dot_dimension_numbers<[1], [0], [0], [1], [0, 0, 1, 1], [], []>} : vector<8x8xf32>, vector<8x4xf32>, vector<8x4xf32> -> vector<8x4xf32>
      %cst_376 = arith.constant dense<0.000000e+00> : vector<4x4xf32>
      %748 = tpu.matmul %516, %747, %cst_376 {dimension_numbers = #tpu.dot_dimension_numbers<[1], [0], [0], [1], [0, 0, 1, 1], [], []>} : vector<4x8xf32>, vector<8x4xf32>, vector<4x4xf32> -> vector<4x4xf32>
      %749 = arith.index_cast %arg12 : i32 to index
      %c0_377 = arith.constant 0 : index
      %c0_378 = arith.constant 0 : index
      %750 = vector.load %arg8[%749, %c0_377, %c0_378] : memref<8x4x4xf32, #tpu.memory_space<vmem>>, vector<1x4x4xf32>
      %751 = vector.shape_cast %750 : vector<1x4x4xf32> to vector<4x4xf32>
      %752 = vector.shape_cast %748 : vector<4x4xf32> to vector<1x4x4xf32>
      tpu.vector_store %arg8[%749, %c0_377, %c0_378], %752 {strides = array<i32>} : memref<8x4x4xf32, #tpu.memory_space<vmem>>, vector<1x4x4xf32>,
      %cst_379 = arith.constant dense<0.000000e+00> : vector<8x4xf32>
      %753 = tpu.matmul %700, %530, %cst_379 {dimension_numbers = #tpu.dot_dimension_numbers<[1], [0], [0], [1], [0, 0, 1, 1], [], []>} : vector<8x8xf32>, vector<8x4xf32>, vector<8x4xf32> -> vector<8x4xf32>
      %cst_380 = arith.constant dense<0.000000e+00> : vector<4x4xf32>
      %754 = tpu.matmul %516, %753, %cst_380 {dimension_numbers = #tpu.dot_dimension_numbers<[1], [0], [0], [1], [0, 0, 1, 1], [], []>} : vector<4x8xf32>, vector<8x4xf32>, vector<4x4xf32> -> vector<4x4xf32>
      %755 = arith.index_cast %arg12 : i32 to index
      %c0_381 = arith.constant 0 : index
      %c0_382 = arith.constant 0 : index
      %756 = vector.load %arg9[%755, %c0_381, %c0_382] : memref<8x4x4xf32, #tpu.memory_space<vmem>>, vector<1x4x4xf32>
      %757 = vector.shape_cast %756 : vector<1x4x4xf32> to vector<4x4xf32>
      %758 = vector.shape_cast %754 : vector<4x4xf32> to vector<1x4x4xf32>
      tpu.vector_store %arg9[%755, %c0_381, %c0_382], %758 {strides = array<i32>} : memref<8x4x4xf32, #tpu.memory_space<vmem>>, vector<1x4x4xf32>,
      %759 = vector.broadcast %746 : f32 to vector<1xf32>
      %cst_383 = arith.constant dense<0.000000e+00> : vector<1xf32>
      %760 = vector.multi_reduction <add>, %759, %cst_383 [] : vector<1xf32> to vector<1xf32>
      %761 = vector.extract %760[0] : f32 from vector<1xf32>
      %762 = arith.addf %arg13, %761 : f32
      %763 = vector.broadcast %739 : f32 to vector<1xf32>
      %cst_384 = arith.constant dense<0.000000e+00> : vector<1xf32>
      %764 = vector.multi_reduction <add>, %763, %cst_384 [] : vector<1xf32> to vector<1xf32>
      %765 = vector.extract %764[0] : f32 from vector<1xf32>
      %766 = arith.addf %arg14, %765 : f32
      scf.yield %762, %766 : f32, f32
    }
    %c8_i32_266 = arith.constant 8 : i32
    %cst_267 = arith.constant 1.250000e-01 : f32
    %533 = arith.mulf %532#0, %cst_267 : f32
    %c2 = arith.constant 2 : index
    %534 = memref.load %arg2[%c2] : memref<5xf32, #tpu.memory_space<smem>>
    memref.store %533, %arg2[%c2] : memref<5xf32, #tpu.memory_space<smem>>
    %cst_268 = arith.constant 1.250000e-01 : f32
    %535 = arith.mulf %532#1, %cst_268 : f32
    %c2_269 = arith.constant 2 : index
    %536 = memref.load %arg3[%c2_269] : memref<5xf32, #tpu.memory_space<smem>>
    memref.store %535, %arg3[%c2_269] : memref<5xf32, #tpu.memory_space<smem>>
    %c0_270 = arith.constant 0 : index
    %c0_271 = arith.constant 0 : index
    %c0_272 = arith.constant 0 : index
    %537 = vector.load %arg8[%c0_270, %c0_271, %c0_272] : memref<8x4x4xf32, #tpu.memory_space<vmem>>, vector<8x4x4xf32>
    %538 = vector.shape_cast %537 : vector<8x4x4xf32> to vector<1x8x4x4xf32>
    %cst_273 = arith.constant dense<0xFF800000> : vector<1xf32>
    %539 = vector.multi_reduction <maximumf>, %538, %cst_273 [1, 2, 3] : vector<1x8x4x4xf32> to vector<1xf32>
    %540 = vector.shape_cast %539 : vector<1xf32> to vector<1x1x1x1xf32>
    %541 = vector.extract %540[0, 0, 0, 0] : f32 from vector<1x1x1x1xf32>
    %cst_274 = arith.constant 1.280000e+02 : f32
    %542 = arith.cmpf ogt, %541, %cst_274 : f32
    %cst_275 = arith.constant 2.550000e+02 : f32
    %cst_276 = arith.constant 1.000000e+00 : f32
    %543 = arith.select %542, %cst_275, %cst_276 : f32
    %544 = vector.shape_cast %537 : vector<8x4x4xf32> to vector<1x8x4x4xf32>
    %cst_277 = arith.constant dense<0x7F800000> : vector<1xf32>
    %545 = vector.multi_reduction <minimumf>, %544, %cst_277 [1, 2, 3] : vector<1x8x4x4xf32> to vector<1xf32>
    %546 = vector.shape_cast %545 : vector<1xf32> to vector<1x1x1x1xf32>
    %547 = vector.extract %546[0, 0, 0, 0] : f32 from vector<1x1x1x1xf32>
    %cst_278 = arith.constant -5.000000e-01 : f32
    %548 = arith.cmpf olt, %547, %cst_278 : f32
    %cst_279 = arith.constant -1.000000e+00 : f32
    %cst_280 = arith.constant 0.000000e+00 : f32
    %549 = arith.select %548, %cst_279, %cst_280 : f32
    %550 = arith.subf %543, %549 : f32
    %cst_281 = arith.constant 0.00999999977 : f32
    %551 = arith.mulf %cst_281, %550 : f32
    %552 = arith.mulf %551, %551 : f32
    %cst_282 = arith.constant 3.000000e-02 : f32
    %553 = arith.mulf %cst_282, %550 : f32
    %554 = arith.mulf %553, %553 : f32
    %555 = tpu.iota {dimensions = array<i32: 0>} : vector<4x4xi32>
    %556 = tpu.iota {dimensions = array<i32: 1>} : vector<4x4xi32>
    %cst_283 = arith.constant 0.000000e+00 : f32
    %557 = vector.broadcast %cst_283 : f32 to vector<4x4xf32>
    %cst_284 = arith.constant 0.000000e+00 : f32
    %558 = vector.broadcast %cst_284 : f32 to vector<4x4xf32>
    %c0_i32_285 = arith.constant 0 : i32
    %559 = vector.broadcast %c0_i32_285 : i32 to vector<4x4xi32>
    %560 = arith.cmpi eq, %555, %559 : vector<4x4xi32>
    %cst_286 = arith.constant 0.136464864 : f32
    %cst_287 = arith.constant 0.000000e+00 : f32
    %561 = vector.broadcast %cst_286 : f32 to vector<4x4xf32>
    %562 = vector.broadcast %cst_287 : f32 to vector<4x4xf32>
    %563 = arith.select %560, %561, %562 : vector<4x4xi1>, vector<4x4xf32>
    %564 = arith.addf %557, %563 : vector<4x4xf32>
    %c0_i32_288 = arith.constant 0 : i32
    %565 = vector.broadcast %c0_i32_288 : i32 to vector<4x4xi32>
    %566 = arith.cmpi eq, %556, %565 : vector<4x4xi32>
    %cst_289 = arith.constant 0.136464864 : f32
    %cst_290 = arith.constant 0.000000e+00 : f32
    %567 = vector.broadcast %cst_289 : f32 to vector<4x4xf32>
    %568 = vector.broadcast %cst_290 : f32 to vector<4x4xf32>
    %569 = arith.select %566, %567, %568 : vector<4x4xi1>, vector<4x4xf32>
    %570 = arith.addf %558, %569 : vector<4x4xf32>
    %c1_i32_291 = arith.constant 1 : i32
    %571 = vector.broadcast %c1_i32_291 : i32 to vector<4x4xi32>
    %572 = arith.cmpi eq, %555, %571 : vector<4x4xi32>
    %cst_292 = arith.constant 0.265797257 : f32
    %cst_293 = arith.constant 0.000000e+00 : f32
    %573 = vector.broadcast %cst_292 : f32 to vector<4x4xf32>
    %574 = vector.broadcast %cst_293 : f32 to vector<4x4xf32>
    %575 = arith.select %572, %573, %574 : vector<4x4xi1>, vector<4x4xf32>
    %576 = arith.addf %564, %575 : vector<4x4xf32>
    %c1_i32_294 = arith.constant 1 : i32
    %577 = vector.broadcast %c1_i32_294 : i32 to vector<4x4xi32>
    %578 = arith.cmpi eq, %556, %577 : vector<4x4xi32>
    %cst_295 = arith.constant 0.265797257 : f32
    %cst_296 = arith.constant 0.000000e+00 : f32
    %579 = vector.broadcast %cst_295 : f32 to vector<4x4xf32>
    %580 = vector.broadcast %cst_296 : f32 to vector<4x4xf32>
    %581 = arith.select %578, %579, %580 : vector<4x4xi1>, vector<4x4xf32>
    %582 = arith.addf %570, %581 : vector<4x4xf32>
    %c2_i32_297 = arith.constant 2 : i32
    %583 = vector.broadcast %c2_i32_297 : i32 to vector<4x4xi32>
    %584 = arith.cmpi eq, %555, %583 : vector<4x4xi32>
    %cst_298 = arith.constant 0.331940621 : f32
    %cst_299 = arith.constant 0.000000e+00 : f32
    %585 = vector.broadcast %cst_298 : f32 to vector<4x4xf32>
    %586 = vector.broadcast %cst_299 : f32 to vector<4x4xf32>
    %587 = arith.select %584, %585, %586 : vector<4x4xi1>, vector<4x4xf32>
    %588 = arith.addf %576, %587 : vector<4x4xf32>
    %c2_i32_300 = arith.constant 2 : i32
    %589 = vector.broadcast %c2_i32_300 : i32 to vector<4x4xi32>
    %590 = arith.cmpi eq, %556, %589 : vector<4x4xi32>
    %cst_301 = arith.constant 0.331940621 : f32
    %cst_302 = arith.constant 0.000000e+00 : f32
    %591 = vector.broadcast %cst_301 : f32 to vector<4x4xf32>
    %592 = vector.broadcast %cst_302 : f32 to vector<4x4xf32>
    %593 = arith.select %590, %591, %592 : vector<4x4xi1>, vector<4x4xf32>
    %594 = arith.addf %582, %593 : vector<4x4xf32>
    %c3_i32_303 = arith.constant 3 : i32
    %595 = vector.broadcast %c3_i32_303 : i32 to vector<4x4xi32>
    %596 = arith.cmpi eq, %555, %595 : vector<4x4xi32>
    %cst_304 = arith.constant 0.265797257 : f32
    %cst_305 = arith.constant 0.000000e+00 : f32
    %597 = vector.broadcast %cst_304 : f32 to vector<4x4xf32>
    %598 = vector.broadcast %cst_305 : f32 to vector<4x4xf32>
    %599 = arith.select %596, %597, %598 : vector<4x4xi1>, vector<4x4xf32>
    %600 = arith.addf %588, %599 : vector<4x4xf32>
    %c3_i32_306 = arith.constant 3 : i32
    %601 = vector.broadcast %c3_i32_306 : i32 to vector<4x4xi32>
    %602 = arith.cmpi eq, %556, %601 : vector<4x4xi32>
    %cst_307 = arith.constant 0.265797257 : f32
    %cst_308 = arith.constant 0.000000e+00 : f32
    %603 = vector.broadcast %cst_307 : f32 to vector<4x4xf32>
    %604 = vector.broadcast %cst_308 : f32 to vector<4x4xf32>
    %605 = arith.select %602, %603, %604 : vector<4x4xi1>, vector<4x4xf32>
    %606 = arith.addf %594, %605 : vector<4x4xf32>
    %607 = arith.mulf %600, %606 : vector<4x4xf32>
    %608 = tpu.iota {dimensions = array<i32: 0>} : vector<2x4xi32>
    %609 = tpu.iota {dimensions = array<i32: 1>} : vector<2x4xi32>
    %c2_i32_309 = arith.constant 2 : i32
    %610 = vector.broadcast %c2_i32_309 : i32 to vector<2x4xi32>
    %611 = arith.muli %610, %608 : vector<2x4xi32>
    %612 = arith.cmpi eq, %609, %611 : vector<2x4xi32>
    %c2_i32_310 = arith.constant 2 : i32
    %613 = vector.broadcast %c2_i32_310 : i32 to vector<2x4xi32>
    %614 = arith.muli %613, %608 : vector<2x4xi32>
    %c1_i32_311 = arith.constant 1 : i32
    %615 = vector.broadcast %c1_i32_311 : i32 to vector<2x4xi32>
    %616 = arith.addi %614, %615 : vector<2x4xi32>
    %617 = arith.cmpi eq, %609, %616 : vector<2x4xi32>
    %618 = arith.ori %612, %617 : vector<2x4xi1>
    %cst_312 = arith.constant 5.000000e-01 : f32
    %cst_313 = arith.constant 0.000000e+00 : f32
    %619 = vector.broadcast %cst_312 : f32 to vector<2x4xf32>
    %620 = vector.broadcast %cst_313 : f32 to vector<2x4xf32>
    %621 = arith.select %618, %619, %620 : vector<2x4xi1>, vector<2x4xf32>
    %622 = tpu.iota {dimensions = array<i32: 0>} : vector<4x2xi32>
    %623 = tpu.iota {dimensions = array<i32: 1>} : vector<4x2xi32>
    %c2_i32_314 = arith.constant 2 : i32
    %624 = vector.broadcast %c2_i32_314 : i32 to vector<4x2xi32>
    %625 = arith.muli %624, %623 : vector<4x2xi32>
    %626 = arith.cmpi eq, %622, %625 : vector<4x2xi32>
    %c2_i32_315 = arith.constant 2 : i32
    %627 = vector.broadcast %c2_i32_315 : i32 to vector<4x2xi32>
    %628 = arith.muli %627, %623 : vector<4x2xi32>
    %c1_i32_316 = arith.constant 1 : i32
    %629 = vector.broadcast %c1_i32_316 : i32 to vector<4x2xi32>
    %630 = arith.addi %628, %629 : vector<4x2xi32>
    %631 = arith.cmpi eq, %622, %630 : vector<4x2xi32>
    %632 = arith.ori %626, %631 : vector<4x2xi1>
    %cst_317 = arith.constant 5.000000e-01 : f32
    %cst_318 = arith.constant 0.000000e+00 : f32
    %633 = vector.broadcast %cst_317 : f32 to vector<4x2xf32>
    %634 = vector.broadcast %cst_318 : f32 to vector<4x2xf32>
    %635 = arith.select %632, %633, %634 : vector<4x2xi1>, vector<4x2xf32>
    %cst_319 = arith.constant 0.000000e+00 : f32
    %cst_320 = arith.constant 0.000000e+00 : f32
    %c0_i32_321 = arith.constant 0 : i32
    %c8_i32_322 = arith.constant 8 : i32
    %636 = arith.addi %c0_i32_321, %c8_i32_322 : i32
    %c1_i32_323 = arith.constant 1 : i32
    %637:2 = scf.for %arg12 = %c0_i32_321 to %636 step %c1_i32_323 iter_args(%arg13 = %cst_319, %arg14 = %cst_320) -> (f32, f32)  : i32 {
      %695 = arith.index_cast %arg12 : i32 to index
      %c0_364 = arith.constant 0 : index
      %c0_365 = arith.constant 0 : index
      %696 = vector.load %arg8[%695, %c0_364, %c0_365] : memref<8x4x4xf32, #tpu.memory_space<vmem>>, vector<1x4x4xf32>
      %697 = vector.shape_cast %696 : vector<1x4x4xf32> to vector<4x4xf32>
      %698 = arith.index_cast %arg12 : i32 to index
      %c0_366 = arith.constant 0 : index
      %c0_367 = arith.constant 0 : index
      %699 = vector.load %arg9[%698, %c0_366, %c0_367] : memref<8x4x4xf32, #tpu.memory_space<vmem>>, vector<1x4x4xf32>
      %700 = vector.shape_cast %699 : vector<1x4x4xf32> to vector<4x4xf32>
      %701 = arith.mulf %607, %697 : vector<4x4xf32>
      %702 = vector.shape_cast %701 : vector<4x4xf32> to vector<1x4x4xf32>
      %cst_368 = arith.constant dense<0.000000e+00> : vector<1xf32>
      %703 = vector.multi_reduction <add>, %702, %cst_368 [1, 2] : vector<1x4x4xf32> to vector<1xf32>
      %704 = vector.shape_cast %703 : vector<1xf32> to vector<1x1x1xf32>
      %705 = vector.extract %704[0, 0, 0] : f32 from vector<1x1x1xf32>
      %706 = arith.mulf %607, %700 : vector<4x4xf32>
      %707 = vector.shape_cast %706 : vector<4x4xf32> to vector<1x4x4xf32>
      %cst_369 = arith.constant dense<0.000000e+00> : vector<1xf32>
      %708 = vector.multi_reduction <add>, %707, %cst_369 [1, 2] : vector<1x4x4xf32> to vector<1xf32>
      %709 = vector.shape_cast %708 : vector<1xf32> to vector<1x1x1xf32>
      %710 = vector.extract %709[0, 0, 0] : f32 from vector<1x1x1xf32>
      %711 = arith.mulf %697, %697 : vector<4x4xf32>
      %712 = arith.mulf %607, %711 : vector<4x4xf32>
      %713 = vector.shape_cast %712 : vector<4x4xf32> to vector<1x4x4xf32>
      %cst_370 = arith.constant dense<0.000000e+00> : vector<1xf32>
      %714 = vector.multi_reduction <add>, %713, %cst_370 [1, 2] : vector<1x4x4xf32> to vector<1xf32>
      %715 = vector.shape_cast %714 : vector<1xf32> to vector<1x1x1xf32>
      %716 = vector.extract %715[0, 0, 0] : f32 from vector<1x1x1xf32>
      %717 = arith.mulf %700, %700 : vector<4x4xf32>
      %718 = arith.mulf %607, %717 : vector<4x4xf32>
      %719 = vector.shape_cast %718 : vector<4x4xf32> to vector<1x4x4xf32>
      %cst_371 = arith.constant dense<0.000000e+00> : vector<1xf32>
      %720 = vector.multi_reduction <add>, %719, %cst_371 [1, 2] : vector<1x4x4xf32> to vector<1xf32>
      %721 = vector.shape_cast %720 : vector<1xf32> to vector<1x1x1xf32>
      %722 = vector.extract %721[0, 0, 0] : f32 from vector<1x1x1xf32>
      %723 = arith.mulf %697, %700 : vector<4x4xf32>
      %724 = arith.mulf %607, %723 : vector<4x4xf32>
      %725 = vector.shape_cast %724 : vector<4x4xf32> to vector<1x4x4xf32>
      %cst_372 = arith.constant dense<0.000000e+00> : vector<1xf32>
      %726 = vector.multi_reduction <add>, %725, %cst_372 [1, 2] : vector<1x4x4xf32> to vector<1xf32>
      %727 = vector.shape_cast %726 : vector<1xf32> to vector<1x1x1xf32>
      %728 = vector.extract %727[0, 0, 0] : f32 from vector<1x1x1xf32>
      %729 = arith.mulf %705, %705 : f32
      %730 = arith.mulf %710, %710 : f32
      %731 = arith.mulf %705, %710 : f32
      %732 = arith.subf %716, %729 : f32
      %733 = arith.subf %722, %730 : f32
      %734 = arith.subf %728, %731 : f32
      %cst_373 = arith.constant 2.000000e+00 : f32
      %735 = arith.mulf %cst_373, %734 : f32
      %736 = arith.addf %735, %554 : f32
      %737 = arith.addf %732, %733 : f32
      %738 = arith.addf %737, %554 : f32
      %739 = arith.divf %736, %738 : f32
      %cst_374 = arith.constant 2.000000e+00 : f32
      %740 = arith.mulf %cst_374, %731 : f32
      %741 = arith.addf %740, %552 : f32
      %742 = arith.mulf %741, %736 : f32
      %743 = arith.addf %729, %730 : f32
      %744 = arith.addf %743, %552 : f32
      %745 = arith.mulf %744, %738 : f32
      %746 = arith.divf %742, %745 : f32
      %cst_375 = arith.constant dense<0.000000e+00> : vector<4x2xf32>
      %747 = tpu.matmul %697, %635, %cst_375 {dimension_numbers = #tpu.dot_dimension_numbers<[1], [0], [0], [1], [0, 0, 1, 1], [], []>} : vector<4x4xf32>, vector<4x2xf32>, vector<4x2xf32> -> vector<4x2xf32>
      %cst_376 = arith.constant dense<0.000000e+00> : vector<2x2xf32>
      %748 = tpu.matmul %621, %747, %cst_376 {dimension_numbers = #tpu.dot_dimension_numbers<[1], [0], [0], [1], [0, 0, 1, 1], [], []>} : vector<2x4xf32>, vector<4x2xf32>, vector<2x2xf32> -> vector<2x2xf32>
      %749 = arith.index_cast %arg12 : i32 to index
      %c0_377 = arith.constant 0 : index
      %c0_378 = arith.constant 0 : index
      %750 = vector.load %arg10[%749, %c0_377, %c0_378] : memref<8x2x2xf32, #tpu.memory_space<vmem>>, vector<1x2x2xf32>
      %751 = vector.shape_cast %750 : vector<1x2x2xf32> to vector<2x2xf32>
      %752 = vector.shape_cast %748 : vector<2x2xf32> to vector<1x2x2xf32>
      tpu.vector_store %arg10[%749, %c0_377, %c0_378], %752 {strides = array<i32>} : memref<8x2x2xf32, #tpu.memory_space<vmem>>, vector<1x2x2xf32>,
      %cst_379 = arith.constant dense<0.000000e+00> : vector<4x2xf32>
      %753 = tpu.matmul %700, %635, %cst_379 {dimension_numbers = #tpu.dot_dimension_numbers<[1], [0], [0], [1], [0, 0, 1, 1], [], []>} : vector<4x4xf32>, vector<4x2xf32>, vector<4x2xf32> -> vector<4x2xf32>
      %cst_380 = arith.constant dense<0.000000e+00> : vector<2x2xf32>
      %754 = tpu.matmul %621, %753, %cst_380 {dimension_numbers = #tpu.dot_dimension_numbers<[1], [0], [0], [1], [0, 0, 1, 1], [], []>} : vector<2x4xf32>, vector<4x2xf32>, vector<2x2xf32> -> vector<2x2xf32>
      %755 = arith.index_cast %arg12 : i32 to index
      %c0_381 = arith.constant 0 : index
      %c0_382 = arith.constant 0 : index
      %756 = vector.load %arg11[%755, %c0_381, %c0_382] : memref<8x2x2xf32, #tpu.memory_space<vmem>>, vector<1x2x2xf32>
      %757 = vector.shape_cast %756 : vector<1x2x2xf32> to vector<2x2xf32>
      %758 = vector.shape_cast %754 : vector<2x2xf32> to vector<1x2x2xf32>
      tpu.vector_store %arg11[%755, %c0_381, %c0_382], %758 {strides = array<i32>} : memref<8x2x2xf32, #tpu.memory_space<vmem>>, vector<1x2x2xf32>,
      %759 = vector.broadcast %746 : f32 to vector<1xf32>
      %cst_383 = arith.constant dense<0.000000e+00> : vector<1xf32>
      %760 = vector.multi_reduction <add>, %759, %cst_383 [] : vector<1xf32> to vector<1xf32>
      %761 = vector.extract %760[0] : f32 from vector<1xf32>
      %762 = arith.addf %arg13, %761 : f32
      %763 = vector.broadcast %739 : f32 to vector<1xf32>
      %cst_384 = arith.constant dense<0.000000e+00> : vector<1xf32>
      %764 = vector.multi_reduction <add>, %763, %cst_384 [] : vector<1xf32> to vector<1xf32>
      %765 = vector.extract %764[0] : f32 from vector<1xf32>
      %766 = arith.addf %arg14, %765 : f32
      scf.yield %762, %766 : f32, f32
    }
    %c8_i32_324 = arith.constant 8 : i32
    %cst_325 = arith.constant 1.250000e-01 : f32
    %638 = arith.mulf %637#0, %cst_325 : f32
    %c3 = arith.constant 3 : index
    %639 = memref.load %arg2[%c3] : memref<5xf32, #tpu.memory_space<smem>>
    memref.store %638, %arg2[%c3] : memref<5xf32, #tpu.memory_space<smem>>
    %cst_326 = arith.constant 1.250000e-01 : f32
    %640 = arith.mulf %637#1, %cst_326 : f32
    %c3_327 = arith.constant 3 : index
    %641 = memref.load %arg3[%c3_327] : memref<5xf32, #tpu.memory_space<smem>>
    memref.store %640, %arg3[%c3_327] : memref<5xf32, #tpu.memory_space<smem>>
    %c0_328 = arith.constant 0 : index
    %c0_329 = arith.constant 0 : index
    %c0_330 = arith.constant 0 : index
    %642 = vector.load %arg10[%c0_328, %c0_329, %c0_330] : memref<8x2x2xf32, #tpu.memory_space<vmem>>, vector<8x2x2xf32>
    %643 = vector.shape_cast %642 : vector<8x2x2xf32> to vector<1x8x2x2xf32>
    %cst_331 = arith.constant dense<0xFF800000> : vector<1xf32>
    %644 = vector.multi_reduction <maximumf>, %643, %cst_331 [1, 2, 3] : vector<1x8x2x2xf32> to vector<1xf32>
    %645 = vector.shape_cast %644 : vector<1xf32> to vector<1x1x1x1xf32>
    %646 = vector.extract %645[0, 0, 0, 0] : f32 from vector<1x1x1x1xf32>
    %cst_332 = arith.constant 1.280000e+02 : f32
    %647 = arith.cmpf ogt, %646, %cst_332 : f32
    %cst_333 = arith.constant 2.550000e+02 : f32
    %cst_334 = arith.constant 1.000000e+00 : f32
    %648 = arith.select %647, %cst_333, %cst_334 : f32
    %649 = vector.shape_cast %642 : vector<8x2x2xf32> to vector<1x8x2x2xf32>
    %cst_335 = arith.constant dense<0x7F800000> : vector<1xf32>
    %650 = vector.multi_reduction <minimumf>, %649, %cst_335 [1, 2, 3] : vector<1x8x2x2xf32> to vector<1xf32>
    %651 = vector.shape_cast %650 : vector<1xf32> to vector<1x1x1x1xf32>
    %652 = vector.extract %651[0, 0, 0, 0] : f32 from vector<1x1x1x1xf32>
    %cst_336 = arith.constant -5.000000e-01 : f32
    %653 = arith.cmpf olt, %652, %cst_336 : f32
    %cst_337 = arith.constant -1.000000e+00 : f32
    %cst_338 = arith.constant 0.000000e+00 : f32
    %654 = arith.select %653, %cst_337, %cst_338 : f32
    %655 = arith.subf %648, %654 : f32
    %cst_339 = arith.constant 0.00999999977 : f32
    %656 = arith.mulf %cst_339, %655 : f32
    %657 = arith.mulf %656, %656 : f32
    %cst_340 = arith.constant 3.000000e-02 : f32
    %658 = arith.mulf %cst_340, %655 : f32
    %659 = arith.mulf %658, %658 : f32
    %660 = tpu.iota {dimensions = array<i32: 0>} : vector<2x2xi32>
    %661 = tpu.iota {dimensions = array<i32: 1>} : vector<2x2xi32>
    %cst_341 = arith.constant 0.000000e+00 : f32
    %662 = vector.broadcast %cst_341 : f32 to vector<2x2xf32>
    %cst_342 = arith.constant 0.000000e+00 : f32
    %663 = vector.broadcast %cst_342 : f32 to vector<2x2xf32>
    %c0_i32_343 = arith.constant 0 : i32
    %664 = vector.broadcast %c0_i32_343 : i32 to vector<2x2xi32>
    %665 = arith.cmpi eq, %660, %664 : vector<2x2xi32>
    %cst_344 = arith.constant 0.444671959 : f32
    %cst_345 = arith.constant 0.000000e+00 : f32
    %666 = vector.broadcast %cst_344 : f32 to vector<2x2xf32>
    %667 = vector.broadcast %cst_345 : f32 to vector<2x2xf32>
    %668 = arith.select %665, %666, %667 : vector<2x2xi1>, vector<2x2xf32>
    %669 = arith.addf %662, %668 : vector<2x2xf32>
    %c0_i32_346 = arith.constant 0 : i32
    %670 = vector.broadcast %c0_i32_346 : i32 to vector<2x2xi32>
    %671 = arith.cmpi eq, %661, %670 : vector<2x2xi32>
    %cst_347 = arith.constant 0.444671959 : f32
    %cst_348 = arith.constant 0.000000e+00 : f32
    %672 = vector.broadcast %cst_347 : f32 to vector<2x2xf32>
    %673 = vector.broadcast %cst_348 : f32 to vector<2x2xf32>
    %674 = arith.select %671, %672, %673 : vector<2x2xi1>, vector<2x2xf32>
    %675 = arith.addf %663, %674 : vector<2x2xf32>
    %c1_i32_349 = arith.constant 1 : i32
    %676 = vector.broadcast %c1_i32_349 : i32 to vector<2x2xi32>
    %677 = arith.cmpi eq, %660, %676 : vector<2x2xi32>
    %cst_350 = arith.constant 0.555328071 : f32
    %cst_351 = arith.constant 0.000000e+00 : f32
    %678 = vector.broadcast %cst_350 : f32 to vector<2x2xf32>
    %679 = vector.broadcast %cst_351 : f32 to vector<2x2xf32>
    %680 = arith.select %677, %678, %679 : vector<2x2xi1>, vector<2x2xf32>
    %681 = arith.addf %669, %680 : vector<2x2xf32>
    %c1_i32_352 = arith.constant 1 : i32
    %682 = vector.broadcast %c1_i32_352 : i32 to vector<2x2xi32>
    %683 = arith.cmpi eq, %661, %682 : vector<2x2xi32>
    %cst_353 = arith.constant 0.555328071 : f32
    %cst_354 = arith.constant 0.000000e+00 : f32
    %684 = vector.broadcast %cst_353 : f32 to vector<2x2xf32>
    %685 = vector.broadcast %cst_354 : f32 to vector<2x2xf32>
    %686 = arith.select %683, %684, %685 : vector<2x2xi1>, vector<2x2xf32>
    %687 = arith.addf %675, %686 : vector<2x2xf32>
    %688 = arith.mulf %681, %687 : vector<2x2xf32>
    %cst_355 = arith.constant 0.000000e+00 : f32
    %cst_356 = arith.constant 0.000000e+00 : f32
    %c0_i32_357 = arith.constant 0 : i32
    %c8_i32_358 = arith.constant 8 : i32
    %689 = arith.addi %c0_i32_357, %c8_i32_358 : i32
    %c1_i32_359 = arith.constant 1 : i32
    %690:2 = scf.for %arg12 = %c0_i32_357 to %689 step %c1_i32_359 iter_args(%arg13 = %cst_355, %arg14 = %cst_356) -> (f32, f32)  : i32 {
      %695 = arith.index_cast %arg12 : i32 to index
      %c0_364 = arith.constant 0 : index
      %c0_365 = arith.constant 0 : index
      %696 = vector.load %arg10[%695, %c0_364, %c0_365] : memref<8x2x2xf32, #tpu.memory_space<vmem>>, vector<1x2x2xf32>
      %697 = vector.shape_cast %696 : vector<1x2x2xf32> to vector<2x2xf32>
      %698 = arith.index_cast %arg12 : i32 to index
      %c0_366 = arith.constant 0 : index
      %c0_367 = arith.constant 0 : index
      %699 = vector.load %arg11[%698, %c0_366, %c0_367] : memref<8x2x2xf32, #tpu.memory_space<vmem>>, vector<1x2x2xf32>
      %700 = vector.shape_cast %699 : vector<1x2x2xf32> to vector<2x2xf32>
      %701 = arith.mulf %688, %697 : vector<2x2xf32>
      %702 = vector.shape_cast %701 : vector<2x2xf32> to vector<1x2x2xf32>
      %cst_368 = arith.constant dense<0.000000e+00> : vector<1xf32>
      %703 = vector.multi_reduction <add>, %702, %cst_368 [1, 2] : vector<1x2x2xf32> to vector<1xf32>
      %704 = vector.shape_cast %703 : vector<1xf32> to vector<1x1x1xf32>
      %705 = vector.extract %704[0, 0, 0] : f32 from vector<1x1x1xf32>
      %706 = arith.mulf %688, %700 : vector<2x2xf32>
      %707 = vector.shape_cast %706 : vector<2x2xf32> to vector<1x2x2xf32>
      %cst_369 = arith.constant dense<0.000000e+00> : vector<1xf32>
      %708 = vector.multi_reduction <add>, %707, %cst_369 [1, 2] : vector<1x2x2xf32> to vector<1xf32>
      %709 = vector.shape_cast %708 : vector<1xf32> to vector<1x1x1xf32>
      %710 = vector.extract %709[0, 0, 0] : f32 from vector<1x1x1xf32>
      %711 = arith.mulf %697, %697 : vector<2x2xf32>
      %712 = arith.mulf %688, %711 : vector<2x2xf32>
      %713 = vector.shape_cast %712 : vector<2x2xf32> to vector<1x2x2xf32>
      %cst_370 = arith.constant dense<0.000000e+00> : vector<1xf32>
      %714 = vector.multi_reduction <add>, %713, %cst_370 [1, 2] : vector<1x2x2xf32> to vector<1xf32>
      %715 = vector.shape_cast %714 : vector<1xf32> to vector<1x1x1xf32>
      %716 = vector.extract %715[0, 0, 0] : f32 from vector<1x1x1xf32>
      %717 = arith.mulf %700, %700 : vector<2x2xf32>
      %718 = arith.mulf %688, %717 : vector<2x2xf32>
      %719 = vector.shape_cast %718 : vector<2x2xf32> to vector<1x2x2xf32>
      %cst_371 = arith.constant dense<0.000000e+00> : vector<1xf32>
      %720 = vector.multi_reduction <add>, %719, %cst_371 [1, 2] : vector<1x2x2xf32> to vector<1xf32>
      %721 = vector.shape_cast %720 : vector<1xf32> to vector<1x1x1xf32>
      %722 = vector.extract %721[0, 0, 0] : f32 from vector<1x1x1xf32>
      %723 = arith.mulf %697, %700 : vector<2x2xf32>
      %724 = arith.mulf %688, %723 : vector<2x2xf32>
      %725 = vector.shape_cast %724 : vector<2x2xf32> to vector<1x2x2xf32>
      %cst_372 = arith.constant dense<0.000000e+00> : vector<1xf32>
      %726 = vector.multi_reduction <add>, %725, %cst_372 [1, 2] : vector<1x2x2xf32> to vector<1xf32>
      %727 = vector.shape_cast %726 : vector<1xf32> to vector<1x1x1xf32>
      %728 = vector.extract %727[0, 0, 0] : f32 from vector<1x1x1xf32>
      %729 = arith.mulf %705, %705 : f32
      %730 = arith.mulf %710, %710 : f32
      %731 = arith.mulf %705, %710 : f32
      %732 = arith.subf %716, %729 : f32
      %733 = arith.subf %722, %730 : f32
      %734 = arith.subf %728, %731 : f32
      %cst_373 = arith.constant 2.000000e+00 : f32
      %735 = arith.mulf %cst_373, %734 : f32
      %736 = arith.addf %735, %659 : f32
      %737 = arith.addf %732, %733 : f32
      %738 = arith.addf %737, %659 : f32
      %739 = arith.divf %736, %738 : f32
      %cst_374 = arith.constant 2.000000e+00 : f32
      %740 = arith.mulf %cst_374, %731 : f32
      %741 = arith.addf %740, %657 : f32
      %742 = arith.mulf %741, %736 : f32
      %743 = arith.addf %729, %730 : f32
      %744 = arith.addf %743, %657 : f32
      %745 = arith.mulf %744, %738 : f32
      %746 = arith.divf %742, %745 : f32
      %747 = vector.broadcast %746 : f32 to vector<1xf32>
      %cst_375 = arith.constant dense<0.000000e+00> : vector<1xf32>
      %748 = vector.multi_reduction <add>, %747, %cst_375 [] : vector<1xf32> to vector<1xf32>
      %749 = vector.extract %748[0] : f32 from vector<1xf32>
      %750 = arith.addf %arg13, %749 : f32
      %751 = vector.broadcast %739 : f32 to vector<1xf32>
      %cst_376 = arith.constant dense<0.000000e+00> : vector<1xf32>
      %752 = vector.multi_reduction <add>, %751, %cst_376 [] : vector<1xf32> to vector<1xf32>
      %753 = vector.extract %752[0] : f32 from vector<1xf32>
      %754 = arith.addf %arg14, %753 : f32
      scf.yield %750, %754 : f32, f32
    }
    %c8_i32_360 = arith.constant 8 : i32
    %cst_361 = arith.constant 1.250000e-01 : f32
    %691 = arith.mulf %690#0, %cst_361 : f32
    %c4 = arith.constant 4 : index
    %692 = memref.load %arg2[%c4] : memref<5xf32, #tpu.memory_space<smem>>
    memref.store %691, %arg2[%c4] : memref<5xf32, #tpu.memory_space<smem>>
    %cst_362 = arith.constant 1.250000e-01 : f32
    %693 = arith.mulf %690#1, %cst_362 : f32
    %c4_363 = arith.constant 4 : index
    %694 = memref.load %arg3[%c4_363] : memref<5xf32, #tpu.memory_space<smem>>
    memref.store %693, %arg3[%c4_363] : memref<5xf32, #tpu.memory_space<smem>>
    return
  }
}

</mosaic_0001>

<llo_original>
// kernel: focal_loss_with_iou_and_ssim.2
$region0: #{focal_loss_with_iou_and_ssim.2}
  #allocation0 [shape = 'u32[]', space=smem, size = 0x4, offset = 0x4, fixed_abs, tag = 'smem constant byte address 0x4 - core index']
  #allocation1 [shape = 'u32[144,128]{1,0:T(1,128)}', space=vmem, size = 0x12000, scoped, tag = 'internal scratch']
  %s0 = inlined_call_operand.vmem [shape: f32[2,4096], index: 0, kind: input, shape index: {}]
  %s1 = inlined_call_operand.vmem [shape: f32[2,4096], index: 1, kind: input, shape index: {}]
  %s2 = inlined_call_operand.vmem [shape: f32[2,4096], index: 2, kind: output, shape index: {0}]
  %s3 = inlined_call_operand.vmem [shape: f32[2], index: 3, kind: output, shape index: {1}]
  %4 = xla_tuple %s2, %s3
  %s5 = sld [smem:[#allocation0]]
  $region26: #{focal_loss_with_iou_and_ssim.2} parent=0
    _
  %s7 = ssub.s32 1, %s5
  %s8 = scalar_select 0, %s7, %s5
  $region1: #{focal_loss_with_iou_and_ssim.2} parent=0
    #allocation2 [shape = 'u8[512]{0}', space=smem, size = 0x200, scoped, tag = 'output window, operand 1, single buffered']
    #allocation3 [shape = 's32[1]{0}', space=sflag, size = 0x4, scoped, tag = 'scoped memory for focal_loss_with_iou_and_ssim.2']
    %9 = vsyncpa [#allocation3], 0
    // Predicated region
    $region2: #{focal_loss_with_iou_and_ssim.2} parent=1 // pred_check
      _
    $region3: #{focal_loss_with_iou_and_ssim.2} parent=1 // pred_check_branch
      %11 = sbr.rel (0) target = $region5
    $region4: #{focal_loss_with_iou_and_ssim.2} parent=1 // pred_region
      _
    $region5: #{focal_loss_with_iou_and_ssim.2} parent=1 // pred_fallthru
      _
    // Predicated region
    $region6: #{focal_loss_with_iou_and_ssim.2} parent=1 // pred_check
      _
    $region7: #{focal_loss_with_iou_and_ssim.2} parent=1 // pred_check_branch
      %13 = sbr.rel (0) target = $region9
    $region8: #{focal_loss_with_iou_and_ssim.2} parent=1 // pred_region
      _
    $region9: #{focal_loss_with_iou_and_ssim.2} parent=1 // pred_fallthru
      _
    %v14 = vld [vmem:[%s0] sm:$0xff]
    %v15 = vld [vmem:[%s0 + $0x8] sm:$0xff]
    %v16 = vld [vmem:[%s0 + $0x10] sm:$0xff]
    %v17 = vld [vmem:[%s0 + $0x18] sm:$0xff]
    %v18 = vld [vmem:[%s0 + $0x20] sm:$0xff]
    %v19 = vld [vmem:[%s0 + $0x28] sm:$0xff]
    %v20 = vld [vmem:[%s0 + $0x30] sm:$0xff]
    %v21 = vld [vmem:[%s0 + $0x38] sm:$0xff]
    %v22 = vld [vmem:[%s1] sm:$0xff]
    %v23 = vld [vmem:[%s1 + $0x8] sm:$0xff]
    %v24 = vld [vmem:[%s1 + $0x10] sm:$0xff]
    %v25 = vld [vmem:[%s1 + $0x18] sm:$0xff]
    %v26 = vld [vmem:[%s1 + $0x20] sm:$0xff]
    %v27 = vld [vmem:[%s1 + $0x28] sm:$0xff]
    %v28 = vld [vmem:[%s1 + $0x30] sm:$0xff]
    %v29 = vld [vmem:[%s1 + $0x38] sm:$0xff]
    %v30 = vsub.f32 0.0, %v14
    %v31 = vsub.f32 0.0, %v15
    %v32 = vsub.f32 0.0, %v16
    %v33 = vsub.f32 0.0, %v17
    %v34 = vsub.f32 0.0, %v18
    %v35 = vsub.f32 0.0, %v19
    %v36 = vsub.f32 0.0, %v20
    %v37 = vsub.f32 0.0, %v21
    %v38 = vmul.f32 %v30, 1.442695
    %v39 = vpow.pop %v38
    %v40 = vmul.f32 %v31, 1.442695
    %v41 = vpow.pop %v40
    %v42 = vmul.f32 %v32, 1.442695
    %v43 = vpow.pop %v42
    %v44 = vmul.f32 %v33, 1.442695
    %v45 = vpow.pop %v44
    %v46 = vmul.f32 %v34, 1.442695
    %v47 = vpow.pop %v46
    %v48 = vmul.f32 %v35, 1.442695
    %v49 = vpow.pop %v48
    %v50 = vmul.f32 %v36, 1.442695
    %v51 = vpow.pop %v50
    %v52 = vmul.f32 %v37, 1.442695
    %v53 = vpow.pop %v52
    %v54 = vadd.f32 %v39, 1.0
    %v55 = vadd.f32 %v41, 1.0
    %v56 = vadd.f32 %v43, 1.0
    %v57 = vadd.f32 %v45, 1.0
    %v58 = vadd.f32 %v47, 1.0
    %v59 = vadd.f32 %v49, 1.0
    %v60 = vadd.f32 %v51, 1.0
    %v61 = vadd.f32 %v53, 1.0
    %v62 = vrcp.pop %v54
    %v63 = vmul.f32 1.0, %v62
    %v64 = vrcp.pop %v55
    %v65 = vmul.f32 1.0, %v64
    %v66 = vrcp.pop %v56
    %v67 = vmul.f32 1.0, %v66
    %v68 = vrcp.pop %v57
    %v69 = vmul.f32 1.0, %v68
    %v70 = vrcp.pop %v58
    %v71 = vmul.f32 1.0, %v70
    %v72 = vrcp.pop %v59
    %v73 = vmul.f32 1.0, %v72
    %v74 = vrcp.pop %v60
    %v75 = vmul.f32 1.0, %v74
    %v76 = vrcp.pop %v61
    %v77 = vmul.f32 1.0, %v76
    %78 = vst [vmem:[%s2] sm:$0xff] %v63
    %79 = vst [vmem:[%s2 + $0x8] sm:$0xff] %v65
    %80 = vst [vmem:[%s2 + $0x10] sm:$0xff] %v67
    %81 = vst [vmem:[%s2 + $0x18] sm:$0xff] %v69
    %82 = vst [vmem:[%s2 + $0x20] sm:$0xff] %v71
    %83 = vst [vmem:[%s2 + $0x28] sm:$0xff] %v73
    %84 = vst [vmem:[%s2 + $0x30] sm:$0xff] %v75
    %85 = vst [vmem:[%s2 + $0x38] sm:$0xff] %v77
    %v86 = vmul.f32 %v22, %v63
    %v87 = vmul.f32 %v23, %v65
    %v88 = vmul.f32 %v24, %v67
    %v89 = vmul.f32 %v25, %v69
    %v90 = vmul.f32 %v26, %v71
    %v91 = vmul.f32 %v27, %v73
    %v92 = vmul.f32 %v28, %v75
    %v93 = vmul.f32 %v29, %v77
    %v94 = vsub.f32 1.0, %v22
    %v95 = vsub.f32 1.0, %v23
    %v96 = vsub.f32 1.0, %v24
    %v97 = vsub.f32 1.0, %v25
    %v98 = vsub.f32 1.0, %v26
    %v99 = vsub.f32 1.0, %v27
    %v100 = vsub.f32 1.0, %v28
    %v101 = vsub.f32 1.0, %v29
    %v102 = vsub.f32 1.0, %v63
    %v103 = vsub.f32 1.0, %v65
    %v104 = vsub.f32 1.0, %v67
    %v105 = vsub.f32 1.0, %v69
    %v106 = vsub.f32 1.0, %v71
    %v107 = vsub.f32 1.0, %v73
    %v108 = vsub.f32 1.0, %v75
    %v109 = vsub.f32 1.0, %v77
    %v110 = vmul.f32 %v94, %v102
    %v111 = vmul.f32 %v95, %v103
    %v112 = vmul.f32 %v96, %v104
    %v113 = vmul.f32 %v97, %v105
    %v114 = vmul.f32 %v98, %v106
    %v115 = vmul.f32 %v99, %v107
    %v116 = vmul.f32 %v100, %v108
    %v117 = vmul.f32 %v101, %v109
    %v118 = vadd.f32 %v86, %v110
    %v119 = vadd.f32 %v87, %v111
    %v120 = vadd.f32 %v88, %v112
    %v121 = vadd.f32 %v89, %v113
    %v122 = vadd.f32 %v90, %v114
    %v123 = vadd.f32 %v91, %v115
    %v124 = vadd.f32 %v92, %v116
    %v125 = vadd.f32 %v93, %v117
    %v126 = vsub.f32 1.0, %v118
    %v127 = vsub.f32 1.0, %v119
    %v128 = vsub.f32 1.0, %v120
    %v129 = vsub.f32 1.0, %v121
    %v130 = vsub.f32 1.0, %v122
    %v131 = vsub.f32 1.0, %v123
    %v132 = vsub.f32 1.0, %v124
    %v133 = vsub.f32 1.0, %v125
    %v134 = vmul.f32 %v126, %v126
    %v135 = vmul.f32 %v127, %v127
    %v136 = vmul.f32 %v128, %v128
    %v137 = vmul.f32 %v129, %v129
    %v138 = vmul.f32 %v130, %v130
    %v139 = vmul.f32 %v131, %v131
    %v140 = vmul.f32 %v132, %v132
    %v141 = vmul.f32 %v133, %v133
    %v142 = vmul.f32 %v134, 0.25
    %v143 = vmul.f32 %v135, 0.25
    %v144 = vmul.f32 %v136, 0.25
    %v145 = vmul.f32 %v137, 0.25
    %v146 = vmul.f32 %v138, 0.25
    %v147 = vmul.f32 %v139, 0.25
    %v148 = vmul.f32 %v140, 0.25
    %v149 = vmul.f32 %v141, 0.25
    %v150 = vsub.f32 0.0, %v142
    %v151 = vsub.f32 0.0, %v143
    %v152 = vsub.f32 0.0, %v144
    %v153 = vsub.f32 0.0, %v145
    %v154 = vsub.f32 0.0, %v146
    %v155 = vsub.f32 0.0, %v147
    %v156 = vsub.f32 0.0, %v148
    %v157 = vsub.f32 0.0, %v149
    %v158 = vadd.f32 %v118, 1e-06
    %v159 = vadd.f32 %v119, 1e-06
    %v160 = vadd.f32 %v120, 1e-06
    %v161 = vadd.f32 %v121, 1e-06
    %v162 = vadd.f32 %v122, 1e-06
    %v163 = vadd.f32 %v123, 1e-06
    %v164 = vadd.f32 %v124, 1e-06
    %v165 = vadd.f32 %v125, 1e-06
    %v166 = vlog2.pop %v158
    %v167 = vmul.f32 %v166, 0.6931472
    %v168 = vlog2.pop %v159
    %v169 = vmul.f32 %v168, 0.6931472
    %v170 = vlog2.pop %v160
    %v171 = vmul.f32 %v170, 0.6931472
    %v172 = vlog2.pop %v161
    %v173 = vmul.f32 %v172, 0.6931472
    %v174 = vlog2.pop %v162
    %v175 = vmul.f32 %v174, 0.6931472
    %v176 = vlog2.pop %v163
    %v177 = vmul.f32 %v176, 0.6931472
    %v178 = vlog2.pop %v164
    %v179 = vmul.f32 %v178, 0.6931472
    %v180 = vlog2.pop %v165
    %v181 = vmul.f32 %v180, 0.6931472
    %v182 = vmul.f32 %v150, %v167
    %v183 = vmul.f32 %v151, %v169
    %v184 = vmul.f32 %v152, %v171
    %v185 = vmul.f32 %v153, %v173
    %v186 = vmul.f32 %v154, %v175
    %v187 = vmul.f32 %v155, %v177
    %v188 = vmul.f32 %v156, %v179
    %v189 = vmul.f32 %v157, %v181
    %v198 = vcombine.high %v182, %v182
    %v200 = vunpack.c.l.s4 1983009808
    %v201 = vunpack.c.0.s8 %v200
    %v202 = vlaneseq
    %v203 = vshrl.u32 %v202, 7
    %v204 = vsub.s32 %v201, %v203
    %v205 = vrot.slane %v182, %v204
    %v207 = vunpack.c.l.s4 1983009808
    %v208 = vunpack.c.0.s8 %v207
    %v209 = vlaneseq
    %v210 = vshrl.u32 %v209, 7
    %v211 = vsub.s32 %v208, %v210
    %v212 = vrot.slane %v198, %v211
    %v213 = vcombine.high %v205, %v205
    %v214 = vcombine.high %v212, %v212
    %v215 = vcombine.high %v183, %v183
    %v217 = vunpack.c.l.s4 1983009808
    %v218 = vunpack.c.0.s8 %v217
    %v219 = vlaneseq
    %v220 = vshrl.u32 %v219, 7
    %v221 = vsub.s32 %v218, %v220
    %v222 = vrot.slane %v183, %v221
    %v224 = vunpack.c.l.s4 1983009808
    %v225 = vunpack.c.0.s8 %v224
    %v226 = vlaneseq
    %v227 = vshrl.u32 %v226, 7
    %v228 = vsub.s32 %v225, %v227
    %v229 = vrot.slane %v215, %v228
    %v230 = vcombine.high %v222, %v222
    %v231 = vcombine.high %v229, %v229
    %v232 = vcombine.high %v184, %v184
    %v234 = vunpack.c.l.s4 1983009808
    %v235 = vunpack.c.0.s8 %v234
    %v236 = vlaneseq
    %v237 = vshrl.u32 %v236, 7
    %v238 = vsub.s32 %v235, %v237
    %v239 = vrot.slane %v184, %v238
    %v241 = vunpack.c.l.s4 1983009808
    %v242 = vunpack.c.0.s8 %v241
    %v243 = vlaneseq
    %v244 = vshrl.u32 %v243, 7
    %v245 = vsub.s32 %v242, %v244
    %v246 = vrot.slane %v232, %v245
    %v247 = vcombine.high %v239, %v239
    %v248 = vcombine.high %v246, %v246
    %v249 = vcombine.high %v185, %v185
    %v251 = vunpack.c.l.s4 1983009808
    %v252 = vunpack.c.0.s8 %v251
    %v253 = vlaneseq
    %v254 = vshrl.u32 %v253, 7
    %v255 = vsub.s32 %v252, %v254
    %v256 = vrot.slane %v185, %v255
    %v258 = vunpack.c.l.s4 1983009808
    %v259 = vunpack.c.0.s8 %v258
    %v260 = vlaneseq
    %v261 = vshrl.u32 %v260, 7
    %v262 = vsub.s32 %v259, %v261
    %v263 = vrot.slane %v249, %v262
    %v264 = vcombine.high %v256, %v256
    %v265 = vcombine.high %v263, %v263
    %v266 = vcombine.high %v186, %v186
    %v268 = vunpack.c.l.s4 1983009808
    %v269 = vunpack.c.0.s8 %v268
    %v270 = vlaneseq
    %v271 = vshrl.u32 %v270, 7
    %v272 = vsub.s32 %v269, %v271
    %v273 = vrot.slane %v186, %v272
    %v275 = vunpack.c.l.s4 1983009808
    %v276 = vunpack.c.0.s8 %v275
    %v277 = vlaneseq
    %v278 = vshrl.u32 %v277, 7
    %v279 = vsub.s32 %v276, %v278
    %v280 = vrot.slane %v266, %v279
    %v281 = vcombine.high %v273, %v273
    %v282 = vcombine.high %v280, %v280
    %v283 = vcombine.high %v187, %v187
    %v285 = vunpack.c.l.s4 1983009808
    %v286 = vunpack.c.0.s8 %v285
    %v287 = vlaneseq
    %v288 = vshrl.u32 %v287, 7
    %v289 = vsub.s32 %v286, %v288
    %v290 = vrot.slane %v187, %v289
    %v292 = vunpack.c.l.s4 1983009808
    %v293 = vunpack.c.0.s8 %v292
    %v294 = vlaneseq
    %v295 = vshrl.u32 %v294, 7
    %v296 = vsub.s32 %v293, %v295
    %v297 = vrot.slane %v283, %v296
    %v298 = vcombine.high %v290, %v290
    %v299 = vcombine.high %v297, %v297
    %v300 = vcombine.high %v188, %v188
    %v302 = vunpack.c.l.s4 1983009808
    %v303 = vunpack.c.0.s8 %v302
    %v304 = vlaneseq
    %v305 = vshrl.u32 %v304, 7
    %v306 = vsub.s32 %v303, %v305
    %v307 = vrot.slane %v188, %v306
    %v309 = vunpack.c.l.s4 1983009808
    %v310 = vunpack.c.0.s8 %v309
    %v311 = vlaneseq
    %v312 = vshrl.u32 %v311, 7
    %v313 = vsub.s32 %v310, %v312
    %v314 = vrot.slane %v300, %v313
    %v315 = vcombine.high %v307, %v307
    %v316 = vcombine.high %v314, %v314
    %v317 = vcombine.high %v189, %v189
    %v319 = vunpack.c.l.s4 1983009808
    %v320 = vunpack.c.0.s8 %v319
    %v321 = vlaneseq
    %v322 = vshrl.u32 %v321, 7
    %v323 = vsub.s32 %v320, %v322
    %v324 = vrot.slane %v189, %v323
    %v326 = vunpack.c.l.s4 1983009808
    %v327 = vunpack.c.0.s8 %v326
    %v328 = vlaneseq
    %v329 = vshrl.u32 %v328, 7
    %v330 = vsub.s32 %v327, %v329
    %v331 = vrot.slane %v317, %v330
    %v332 = vcombine.high %v324, %v324
    %v333 = vcombine.high %v331, %v331
    %vm366 = vcmask 1041408
    %v367 = vsel %vm366, %v205, 0.0
    %v368 = vsel %vm366, %v213, 0.0
    %v369 = vadd.f32 %v367, %v368
    %v370 = vsel %vm366, %v212, 0.0
    %v371 = vadd.f32 %v369, %v370
    %v372 = vsel %vm366, %v214, 0.0
    %v373 = vadd.f32 %v371, %v372
    %v374 = vsel %vm366, %v222, 0.0
    %v375 = vadd.f32 %v373, %v374
    %v376 = vsel %vm366, %v230, 0.0
    %v377 = vadd.f32 %v375, %v376
    %v378 = vsel %vm366, %v229, 0.0
    %v379 = vadd.f32 %v377, %v378
    %v380 = vsel %vm366, %v231, 0.0
    %v381 = vadd.f32 %v379, %v380
    %v382 = vsel %vm366, %v239, 0.0
    %v383 = vadd.f32 %v381, %v382
    %v384 = vsel %vm366, %v247, 0.0
    %v385 = vadd.f32 %v383, %v384
    %v386 = vsel %vm366, %v246, 0.0
    %v387 = vadd.f32 %v385, %v386
    %v388 = vsel %vm366, %v248, 0.0
    %v389 = vadd.f32 %v387, %v388
    %v390 = vsel %vm366, %v256, 0.0
    %v391 = vadd.f32 %v389, %v390
    %v392 = vsel %vm366, %v264, 0.0
    %v393 = vadd.f32 %v391, %v392
    %v394 = vsel %vm366, %v263, 0.0
    %v395 = vadd.f32 %v393, %v394
    %v396 = vsel %vm366, %v265, 0.0
    %v397 = vadd.f32 %v395, %v396
    %v398 = vsel %vm366, %v273, 0.0
    %v399 = vadd.f32 %v397, %v398
    %v400 = vsel %vm366, %v281, 0.0
    %v401 = vadd.f32 %v399, %v400
    %v402 = vsel %vm366, %v280, 0.0
    %v403 = vadd.f32 %v401, %v402
    %v404 = vsel %vm366, %v282, 0.0
    %v405 = vadd.f32 %v403, %v404
    %v406 = vsel %vm366, %v290, 0.0
    %v407 = vadd.f32 %v405, %v406
    %v408 = vsel %vm366, %v298, 0.0
    %v409 = vadd.f32 %v407, %v408
    %v410 = vsel %vm366, %v297, 0.0
    %v411 = vadd.f32 %v409, %v410
    %v412 = vsel %vm366, %v299, 0.0
    %v413 = vadd.f32 %v411, %v412
    %v414 = vsel %vm366, %v307, 0.0
    %v415 = vadd.f32 %v413, %v414
    %v416 = vsel %vm366, %v315, 0.0
    %v417 = vadd.f32 %v415, %v416
    %v418 = vsel %vm366, %v314, 0.0
    %v419 = vadd.f32 %v417, %v418
    %v420 = vsel %vm366, %v316, 0.0
    %v421 = vadd.f32 %v419, %v420
    %v422 = vsel %vm366, %v324, 0.0
    %v423 = vadd.f32 %v421, %v422
    %v424 = vsel %vm366, %v332, 0.0
    %v425 = vadd.f32 %v423, %v424
    %v426 = vsel %vm366, %v331, 0.0
    %v427 = vadd.f32 %v425, %v426
    %v428 = vsel %vm366, %v333, 0.0
    %v429 = vadd.f32 %v427, %v428
    %430 = vadd.xlane.f32.xlu0 %v429
    %v431 = vpop.xlane.xlu0 %430
    %v432 = vrot.slane %v431, 4
    %v433 = vadd.f32 %v431, %v432
    %v434 = vrot.slane %v433, 2
    %v435 = vadd.f32 %v433, %v434
    %v436 = vrot.slane %v435, 1
    %v437 = vadd.f32 %v435, %v436
    %s438 = vtos %v437
    %s439 = smul.f32 %s438, 0.00012207031
    %v448 = vcombine.high %v86, %v86
    %v450 = vunpack.c.l.s4 1983009808
    %v451 = vunpack.c.0.s8 %v450
    %v452 = vlaneseq
    %v453 = vshrl.u32 %v452, 7
    %v454 = vsub.s32 %v451, %v453
    %v455 = vrot.slane %v86, %v454
    %v457 = vunpack.c.l.s4 1983009808
    %v458 = vunpack.c.0.s8 %v457
    %v459 = vlaneseq
    %v460 = vshrl.u32 %v459, 7
    %v461 = vsub.s32 %v458, %v460
    %v462 = vrot.slane %v448, %v461
    %v463 = vcombine.high %v455, %v455
    %v464 = vcombine.high %v462, %v462
    %v465 = vcombine.high %v87, %v87
    %v467 = vunpack.c.l.s4 1983009808
    %v468 = vunpack.c.0.s8 %v467
    %v469 = vlaneseq
    %v470 = vshrl.u32 %v469, 7
    %v471 = vsub.s32 %v468, %v470
    %v472 = vrot.slane %v87, %v471
    %v474 = vunpack.c.l.s4 1983009808
    %v475 = vunpack.c.0.s8 %v474
    %v476 = vlaneseq
    %v477 = vshrl.u32 %v476, 7
    %v478 = vsub.s32 %v475, %v477
    %v479 = vrot.slane %v465, %v478
    %v480 = vcombine.high %v472, %v472
    %v481 = vcombine.high %v479, %v479
    %v482 = vcombine.high %v88, %v88
    %v484 = vunpack.c.l.s4 1983009808
    %v485 = vunpack.c.0.s8 %v484
    %v486 = vlaneseq
    %v487 = vshrl.u32 %v486, 7
    %v488 = vsub.s32 %v485, %v487
    %v489 = vrot.slane %v88, %v488
    %v491 = vunpack.c.l.s4 1983009808
    %v492 = vunpack.c.0.s8 %v491
    %v493 = vlaneseq
    %v494 = vshrl.u32 %v493, 7
    %v495 = vsub.s32 %v492, %v494
    %v496 = vrot.slane %v482, %v495
    %v497 = vcombine.high %v489, %v489
    %v498 = vcombine.high %v496, %v496
    %v499 = vcombine.high %v89, %v89
    %v501 = vunpack.c.l.s4 1983009808
    %v502 = vunpack.c.0.s8 %v501
    %v503 = vlaneseq
    %v504 = vshrl.u32 %v503, 7
    %v505 = vsub.s32 %v502, %v504
    %v506 = vrot.slane %v89, %v505
    %v508 = vunpack.c.l.s4 1983009808
    %v509 = vunpack.c.0.s8 %v508
    %v510 = vlaneseq
    %v511 = vshrl.u32 %v510, 7
    %v512 = vsub.s32 %v509, %v511
    %v513 = vrot.slane %v499, %v512
    %v514 = vcombine.high %v506, %v506
    %v515 = vcombine.high %v513, %v513
    %v516 = vcombine.high %v90, %v90
    %v518 = vunpack.c.l.s4 1983009808
    %v519 = vunpack.c.0.s8 %v518
    %v520 = vlaneseq
    %v521 = vshrl.u32 %v520, 7
    %v522 = vsub.s32 %v519, %v521
    %v523 = vrot.slane %v90, %v522
    %v525 = vunpack.c.l.s4 1983009808
    %v526 = vunpack.c.0.s8 %v525
    %v527 = vlaneseq
    %v528 = vshrl.u32 %v527, 7
    %v529 = vsub.s32 %v526, %v528
    %v530 = vrot.slane %v516, %v529
    %v531 = vcombine.high %v523, %v523
    %v532 = vcombine.high %v530, %v530
    %v533 = vcombine.high %v91, %v91
    %v535 = vunpack.c.l.s4 1983009808
    %v536 = vunpack.c.0.s8 %v535
    %v537 = vlaneseq
    %v538 = vshrl.u32 %v537, 7
    %v539 = vsub.s32 %v536, %v538
    %v540 = vrot.slane %v91, %v539
    %v542 = vunpack.c.l.s4 1983009808
    %v543 = vunpack.c.0.s8 %v542
    %v544 = vlaneseq
    %v545 = vshrl.u32 %v544, 7
    %v546 = vsub.s32 %v543, %v545
    %v547 = vrot.slane %v533, %v546
    %v548 = vcombine.high %v540, %v540
    %v549 = vcombine.high %v547, %v547
    %v550 = vcombine.high %v92, %v92
    %v552 = vunpack.c.l.s4 1983009808
    %v553 = vunpack.c.0.s8 %v552
    %v554 = vlaneseq
    %v555 = vshrl.u32 %v554, 7
    %v556 = vsub.s32 %v553, %v555
    %v557 = vrot.slane %v92, %v556
    %v559 = vunpack.c.l.s4 1983009808
    %v560 = vunpack.c.0.s8 %v559
    %v561 = vlaneseq
    %v562 = vshrl.u32 %v561, 7
    %v563 = vsub.s32 %v560, %v562
    %v564 = vrot.slane %v550, %v563
    %v565 = vcombine.high %v557, %v557
    %v566 = vcombine.high %v564, %v564
    %v567 = vcombine.high %v93, %v93
    %v569 = vunpack.c.l.s4 1983009808
    %v570 = vunpack.c.0.s8 %v569
    %v571 = vlaneseq
    %v572 = vshrl.u32 %v571, 7
    %v573 = vsub.s32 %v570, %v572
    %v574 = vrot.slane %v93, %v573
    %v576 = vunpack.c.l.s4 1983009808
    %v577 = vunpack.c.0.s8 %v576
    %v578 = vlaneseq
    %v579 = vshrl.u32 %v578, 7
    %v580 = vsub.s32 %v577, %v579
    %v581 = vrot.slane %v567, %v580
    %v582 = vcombine.high %v574, %v574
    %v583 = vcombine.high %v581, %v581
    %v616 = vsel %vm366, %v455, 0.0
    %v617 = vsel %vm366, %v463, 0.0
    %v618 = vadd.f32 %v616, %v617
    %v619 = vsel %vm366, %v462, 0.0
    %v620 = vadd.f32 %v618, %v619
    %v621 = vsel %vm366, %v464, 0.0
    %v622 = vadd.f32 %v620, %v621
    %v623 = vsel %vm366, %v472, 0.0
    %v624 = vadd.f32 %v622, %v623
    %v625 = vsel %vm366, %v480, 0.0
    %v626 = vadd.f32 %v624, %v625
    %v627 = vsel %vm366, %v479, 0.0
    %v628 = vadd.f32 %v626, %v627
    %v629 = vsel %vm366, %v481, 0.0
    %v630 = vadd.f32 %v628, %v629
    %v631 = vsel %vm366, %v489, 0.0
    %v632 = vadd.f32 %v630, %v631
    %v633 = vsel %vm366, %v497, 0.0
    %v634 = vadd.f32 %v632, %v633
    %v635 = vsel %vm366, %v496, 0.0
    %v636 = vadd.f32 %v634, %v635
    %v637 = vsel %vm366, %v498, 0.0
    %v638 = vadd.f32 %v636, %v637
    %v639 = vsel %vm366, %v506, 0.0
    %v640 = vadd.f32 %v638, %v639
    %v641 = vsel %vm366, %v514, 0.0
    %v642 = vadd.f32 %v640, %v641
    %v643 = vsel %vm366, %v513, 0.0
    %v644 = vadd.f32 %v642, %v643
    %v645 = vsel %vm366, %v515, 0.0
    %v646 = vadd.f32 %v644, %v645
    %v647 = vsel %vm366, %v523, 0.0
    %v648 = vadd.f32 %v646, %v647
    %v649 = vsel %vm366, %v531, 0.0
    %v650 = vadd.f32 %v648, %v649
    %v651 = vsel %vm366, %v530, 0.0
    %v652 = vadd.f32 %v650, %v651
    %v653 = vsel %vm366, %v532, 0.0
    %v654 = vadd.f32 %v652, %v653
    %v655 = vsel %vm366, %v540, 0.0
    %v656 = vadd.f32 %v654, %v655
    %v657 = vsel %vm366, %v548, 0.0
    %v658 = vadd.f32 %v656, %v657
    %v659 = vsel %vm366, %v547, 0.0
    %v660 = vadd.f32 %v658, %v659
    %v661 = vsel %vm366, %v549, 0.0
    %v662 = vadd.f32 %v660, %v661
    %v663 = vsel %vm366, %v557, 0.0
    %v664 = vadd.f32 %v662, %v663
    %v665 = vsel %vm366, %v565, 0.0
    %v666 = vadd.f32 %v664, %v665
    %v667 = vsel %vm366, %v564, 0.0
    %v668 = vadd.f32 %v666, %v667
    %v669 = vsel %vm366, %v566, 0.0
    %v670 = vadd.f32 %v668, %v669
    %v671 = vsel %vm366, %v574, 0.0
    %v672 = vadd.f32 %v670, %v671
    %v673 = vsel %vm366, %v582, 0.0
    %v674 = vadd.f32 %v672, %v673
    %v675 = vsel %vm366, %v581, 0.0
    %v676 = vadd.f32 %v674, %v675
    %v677 = vsel %vm366, %v583, 0.0
    %v678 = vadd.f32 %v676, %v677
    %679 = vadd.xlane.f32.xlu0 %v678
    %v680 = vpop.xlane.xlu0 %679
    %v689 = vcombine.high %v22, %v22
    %v691 = vunpack.c.l.s4 1983009808
    %v692 = vunpack.c.0.s8 %v691
    %v693 = vlaneseq
    %v694 = vshrl.u32 %v693, 7
    %v695 = vsub.s32 %v692, %v694
    %v696 = vrot.slane %v22, %v695
    %v698 = vunpack.c.l.s4 1983009808
    %v699 = vunpack.c.0.s8 %v698
    %v700 = vlaneseq
    %v701 = vshrl.u32 %v700, 7
    %v702 = vsub.s32 %v699, %v701
    %v703 = vrot.slane %v689, %v702
    %v704 = vcombine.high %v696, %v696
    %v705 = vcombine.high %v703, %v703
    %v706 = vcombine.high %v23, %v23
    %v708 = vunpack.c.l.s4 1983009808
    %v709 = vunpack.c.0.s8 %v708
    %v710 = vlaneseq
    %v711 = vshrl.u32 %v710, 7
    %v712 = vsub.s32 %v709, %v711
    %v713 = vrot.slane %v23, %v712
    %v715 = vunpack.c.l.s4 1983009808
    %v716 = vunpack.c.0.s8 %v715
    %v717 = vlaneseq
    %v718 = vshrl.u32 %v717, 7
    %v719 = vsub.s32 %v716, %v718
    %v720 = vrot.slane %v706, %v719
    %v721 = vcombine.high %v713, %v713
    %v722 = vcombine.high %v720, %v720
    %v723 = vcombine.high %v24, %v24
    %v725 = vunpack.c.l.s4 1983009808
    %v726 = vunpack.c.0.s8 %v725
    %v727 = vlaneseq
    %v728 = vshrl.u32 %v727, 7
    %v729 = vsub.s32 %v726, %v728
    %v730 = vrot.slane %v24, %v729
    %v732 = vunpack.c.l.s4 1983009808
    %v733 = vunpack.c.0.s8 %v732
    %v734 = vlaneseq
    %v735 = vshrl.u32 %v734, 7
    %v736 = vsub.s32 %v733, %v735
    %v737 = vrot.slane %v723, %v736
    %v738 = vcombine.high %v730, %v730
    %v739 = vcombine.high %v737, %v737
    %v740 = vcombine.high %v25, %v25
    %v742 = vunpack.c.l.s4 1983009808
    %v743 = vunpack.c.0.s8 %v742
    %v744 = vlaneseq
    %v745 = vshrl.u32 %v744, 7
    %v746 = vsub.s32 %v743, %v745
    %v747 = vrot.slane %v25, %v746
    %v749 = vunpack.c.l.s4 1983009808
    %v750 = vunpack.c.0.s8 %v749
    %v751 = vlaneseq
    %v752 = vshrl.u32 %v751, 7
    %v753 = vsub.s32 %v750, %v752
    %v754 = vrot.slane %v740, %v753
    %v755 = vcombine.high %v747, %v747
    %v756 = vcombine.high %v754, %v754
    %v757 = vcombine.high %v26, %v26
    %v759 = vunpack.c.l.s4 1983009808
    %v760 = vunpack.c.0.s8 %v759
    %v761 = vlaneseq
    %v762 = vshrl.u32 %v761, 7
    %v763 = vsub.s32 %v760, %v762
    %v764 = vrot.slane %v26, %v763
    %v766 = vunpack.c.l.s4 1983009808
    %v767 = vunpack.c.0.s8 %v766
    %v768 = vlaneseq
    %v769 = vshrl.u32 %v768, 7
    %v770 = vsub.s32 %v767, %v769
    %v771 = vrot.slane %v757, %v770
    %v772 = vcombine.high %v764, %v764
    %v773 = vcombine.high %v771, %v771
    %v774 = vcombine.high %v27, %v27
    %v776 = vunpack.c.l.s4 1983009808
    %v777 = vunpack.c.0.s8 %v776
    %v778 = vlaneseq
    %v779 = vshrl.u32 %v778, 7
    %v780 = vsub.s32 %v777, %v779
    %v781 = vrot.slane %v27, %v780
    %v783 = vunpack.c.l.s4 1983009808
    %v784 = vunpack.c.0.s8 %v783
    %v785 = vlaneseq
    %v786 = vshrl.u32 %v785, 7
    %v787 = vsub.s32 %v784, %v786
    %v788 = vrot.slane %v774, %v787
    %v789 = vcombine.high %v781, %v781
    %v790 = vcombine.high %v788, %v788
    %v791 = vcombine.high %v28, %v28
    %v793 = vunpack.c.l.s4 1983009808
    %v794 = vunpack.c.0.s8 %v793
    %v795 = vlaneseq
    %v796 = vshrl.u32 %v795, 7
    %v797 = vsub.s32 %v794, %v796
    %v798 = vrot.slane %v28, %v797
    %v800 = vunpack.c.l.s4 1983009808
    %v801 = vunpack.c.0.s8 %v800
    %v802 = vlaneseq
    %v803 = vshrl.u32 %v802, 7
    %v804 = vsub.s32 %v801, %v803
    %v805 = vrot.slane %v791, %v804
    %v806 = vcombine.high %v798, %v798
    %v807 = vcombine.high %v805, %v805
    %v808 = vcombine.high %v29, %v29
    %v810 = vunpack.c.l.s4 1983009808
    %v811 = vunpack.c.0.s8 %v810
    %v812 = vlaneseq
    %v813 = vshrl.u32 %v812, 7
    %v814 = vsub.s32 %v811, %v813
    %v815 = vrot.slane %v29, %v814
    %v817 = vunpack.c.l.s4 1983009808
    %v818 = vunpack.c.0.s8 %v817
    %v819 = vlaneseq
    %v820 = vshrl.u32 %v819, 7
    %v821 = vsub.s32 %v818, %v820
    %v822 = vrot.slane %v808, %v821
    %v823 = vcombine.high %v815, %v815
    %v824 = vcombine.high %v822, %v822
    %v857 = vsel %vm366, %v696, 0.0
    %v858 = vsel %vm366, %v704, 0.0
    %v859 = vadd.f32 %v857, %v858
    %v860 = vsel %vm366, %v703, 0.0
    %v861 = vadd.f32 %v859, %v860
    %v862 = vsel %vm366, %v705, 0.0
    %v863 = vadd.f32 %v861, %v862
    %v864 = vsel %vm366, %v713, 0.0
    %v865 = vadd.f32 %v863, %v864
    %v866 = vsel %vm366, %v721, 0.0
    %v867 = vadd.f32 %v865, %v866
    %v868 = vsel %vm366, %v720, 0.0
    %v869 = vadd.f32 %v867, %v868
    %v870 = vsel %vm366, %v722, 0.0
    %v871 = vadd.f32 %v869, %v870
    %v872 = vsel %vm366, %v730, 0.0
    %v873 = vadd.f32 %v871, %v872
    %v874 = vsel %vm366, %v738, 0.0
    %v875 = vadd.f32 %v873, %v874
    %v876 = vsel %vm366, %v737, 0.0
    %v877 = vadd.f32 %v875, %v876
    %v878 = vsel %vm366, %v739, 0.0
    %v879 = vadd.f32 %v877, %v878
    %v880 = vsel %vm366, %v747, 0.0
    %v881 = vadd.f32 %v879, %v880
    %v882 = vsel %vm366, %v755, 0.0
    %v883 = vadd.f32 %v881, %v882
    %v884 = vsel %vm366, %v754, 0.0
    %v885 = vadd.f32 %v883, %v884
    %v886 = vsel %vm366, %v756, 0.0
    %v887 = vadd.f32 %v885, %v886
    %v888 = vsel %vm366, %v764, 0.0
    %v889 = vadd.f32 %v887, %v888
    %v890 = vsel %vm366, %v772, 0.0
    %v891 = vadd.f32 %v889, %v890
    %v892 = vsel %vm366, %v771, 0.0
    %v893 = vadd.f32 %v891, %v892
    %v894 = vsel %vm366, %v773, 0.0
    %v895 = vadd.f32 %v893, %v894
    %v896 = vsel %vm366, %v781, 0.0
    %v897 = vadd.f32 %v895, %v896
    %v898 = vsel %vm366, %v789, 0.0
    %v899 = vadd.f32 %v897, %v898
    %v900 = vsel %vm366, %v788, 0.0
    %v901 = vadd.f32 %v899, %v900
    %v902 = vsel %vm366, %v790, 0.0
    %v903 = vadd.f32 %v901, %v902
    %v904 = vsel %vm366, %v798, 0.0
    %v905 = vadd.f32 %v903, %v904
    %v906 = vsel %vm366, %v806, 0.0
    %v907 = vadd.f32 %v905, %v906
    %v908 = vsel %vm366, %v805, 0.0
    %v909 = vadd.f32 %v907, %v908
    %v910 = vsel %vm366, %v807, 0.0
    %v911 = vadd.f32 %v909, %v910
    %v912 = vsel %vm366, %v815, 0.0
    %v913 = vadd.f32 %v911, %v912
    %v914 = vsel %vm366, %v823, 0.0
    %v915 = vadd.f32 %v913, %v914
    %v916 = vsel %vm366, %v822, 0.0
    %v917 = vadd.f32 %v915, %v916
    %v918 = vsel %vm366, %v824, 0.0
    %v919 = vadd.f32 %v917, %v918
    %920 = vadd.xlane.f32.xlu0 %v919
    %v921 = vpop.xlane.xlu0 %920
    %v930 = vcombine.high %v63, %v63
    %v932 = vunpack.c.l.s4 1983009808
    %v933 = vunpack.c.0.s8 %v932
    %v934 = vlaneseq
    %v935 = vshrl.u32 %v934, 7
    %v936 = vsub.s32 %v933, %v935
    %v937 = vrot.slane %v63, %v936
    %v939 = vunpack.c.l.s4 1983009808
    %v940 = vunpack.c.0.s8 %v939
    %v941 = vlaneseq
    %v942 = vshrl.u32 %v941, 7
    %v943 = vsub.s32 %v940, %v942
    %v944 = vrot.slane %v930, %v943
    %v945 = vcombine.high %v937, %v937
    %v946 = vcombine.high %v944, %v944
    %v947 = vcombine.high %v65, %v65
    %v949 = vunpack.c.l.s4 1983009808
    %v950 = vunpack.c.0.s8 %v949
    %v951 = vlaneseq
    %v952 = vshrl.u32 %v951, 7
    %v953 = vsub.s32 %v950, %v952
    %v954 = vrot.slane %v65, %v953
    %v956 = vunpack.c.l.s4 1983009808
    %v957 = vunpack.c.0.s8 %v956
    %v958 = vlaneseq
    %v959 = vshrl.u32 %v958, 7
    %v960 = vsub.s32 %v957, %v959
    %v961 = vrot.slane %v947, %v960
    %v962 = vcombine.high %v954, %v954
    %v963 = vcombine.high %v961, %v961
    %v964 = vcombine.high %v67, %v67
    %v966 = vunpack.c.l.s4 1983009808
    %v967 = vunpack.c.0.s8 %v966
    %v968 = vlaneseq
    %v969 = vshrl.u32 %v968, 7
    %v970 = vsub.s32 %v967, %v969
    %v971 = vrot.slane %v67, %v970
    %v973 = vunpack.c.l.s4 1983009808
    %v974 = vunpack.c.0.s8 %v973
    %v975 = vlaneseq
    %v976 = vshrl.u32 %v975, 7
    %v977 = vsub.s32 %v974, %v976
    %v978 = vrot.slane %v964, %v977
    %v979 = vcombine.high %v971, %v971
    %v980 = vcombine.high %v978, %v978
    %v981 = vcombine.high %v69, %v69
    %v983 = vunpack.c.l.s4 1983009808
    %v984 = vunpack.c.0.s8 %v983
    %v985 = vlaneseq
    %v986 = vshrl.u32 %v985, 7
    %v987 = vsub.s32 %v984, %v986
    %v988 = vrot.slane %v69, %v987
    %v990 = vunpack.c.l.s4 1983009808
    %v991 = vunpack.c.0.s8 %v990
    %v992 = vlaneseq
    %v993 = vshrl.u32 %v992, 7
    %v994 = vsub.s32 %v991, %v993
    %v995 = vrot.slane %v981, %v994
    %v996 = vcombine.high %v988, %v988
    %v997 = vcombine.high %v995, %v995
    %v998 = vcombine.high %v71, %v71
    %v1000 = vunpack.c.l.s4 1983009808
    %v1001 = vunpack.c.0.s8 %v1000
    %v1002 = vlaneseq
    %v1003 = vshrl.u32 %v1002, 7
    %v1004 = vsub.s32 %v1001, %v1003
    %v1005 = vrot.slane %v71, %v1004
    %v1007 = vunpack.c.l.s4 1983009808
    %v1008 = vunpack.c.0.s8 %v1007
    %v1009 = vlaneseq
    %v1010 = vshrl.u32 %v1009, 7
    %v1011 = vsub.s32 %v1008, %v1010
    %v1012 = vrot.slane %v998, %v1011
    %v1013 = vcombine.high %v1005, %v1005
    %v1014 = vcombine.high %v1012, %v1012
    %v1015 = vcombine.high %v73, %v73
    %v1017 = vunpack.c.l.s4 1983009808
    %v1018 = vunpack.c.0.s8 %v1017
    %v1019 = vlaneseq
    %v1020 = vshrl.u32 %v1019, 7
    %v1021 = vsub.s32 %v1018, %v1020
    %v1022 = vrot.slane %v73, %v1021
    %v1024 = vunpack.c.l.s4 1983009808
    %v1025 = vunpack.c.0.s8 %v1024
    %v1026 = vlaneseq
    %v1027 = vshrl.u32 %v1026, 7
    %v1028 = vsub.s32 %v1025, %v1027
    %v1029 = vrot.slane %v1015, %v1028
    %v1030 = vcombine.high %v1022, %v1022
    %v1031 = vcombine.high %v1029, %v1029
    %v1032 = vcombine.high %v75, %v75
    %v1034 = vunpack.c.l.s4 1983009808
    %v1035 = vunpack.c.0.s8 %v1034
    %v1036 = vlaneseq
    %v1037 = vshrl.u32 %v1036, 7
    %v1038 = vsub.s32 %v1035, %v1037
    %v1039 = vrot.slane %v75, %v1038
    %v1041 = vunpack.c.l.s4 1983009808
    %v1042 = vunpack.c.0.s8 %v1041
    %v1043 = vlaneseq
    %v1044 = vshrl.u32 %v1043, 7
    %v1045 = vsub.s32 %v1042, %v1044
    %v1046 = vrot.slane %v1032, %v1045
    %v1047 = vcombine.high %v1039, %v1039
    %v1048 = vcombine.high %v1046, %v1046
    %v1049 = vcombine.high %v77, %v77
    %v1051 = vunpack.c.l.s4 1983009808
    %v1052 = vunpack.c.0.s8 %v1051
    %v1053 = vlaneseq
    %v1054 = vshrl.u32 %v1053, 7
    %v1055 = vsub.s32 %v1052, %v1054
    %v1056 = vrot.slane %v77, %v1055
    %v1058 = vunpack.c.l.s4 1983009808
    %v1059 = vunpack.c.0.s8 %v1058
    %v1060 = vlaneseq
    %v1061 = vshrl.u32 %v1060, 7
    %v1062 = vsub.s32 %v1059, %v1061
    %v1063 = vrot.slane %v1049, %v1062
    %v1064 = vcombine.high %v1056, %v1056
    %v1065 = vcombine.high %v1063, %v1063
    %v1098 = vsel %vm366, %v937, 0.0
    %v1099 = vsel %vm366, %v945, 0.0
    %v1100 = vadd.f32 %v1098, %v1099
    %v1101 = vsel %vm366, %v944, 0.0
    %v1102 = vadd.f32 %v1100, %v1101
    %v1103 = vsel %vm366, %v946, 0.0
    %v1104 = vadd.f32 %v1102, %v1103
    %v1105 = vsel %vm366, %v954, 0.0
    %v1106 = vadd.f32 %v1104, %v1105
    %v1107 = vsel %vm366, %v962, 0.0
    %v1108 = vadd.f32 %v1106, %v1107
    %v1109 = vsel %vm366, %v961, 0.0
    %v1110 = vadd.f32 %v1108, %v1109
    %v1111 = vsel %vm366, %v963, 0.0
    %v1112 = vadd.f32 %v1110, %v1111
    %v1113 = vsel %vm366, %v971, 0.0
    %v1114 = vadd.f32 %v1112, %v1113
    %v1115 = vsel %vm366, %v979, 0.0
    %v1116 = vadd.f32 %v1114, %v1115
    %v1117 = vsel %vm366, %v978, 0.0
    %v1118 = vadd.f32 %v1116, %v1117
    %v1119 = vsel %vm366, %v980, 0.0
    %v1120 = vadd.f32 %v1118, %v1119
    %v1121 = vsel %vm366, %v988, 0.0
    %v1122 = vadd.f32 %v1120, %v1121
    %v1123 = vsel %vm366, %v996, 0.0
    %v1124 = vadd.f32 %v1122, %v1123
    %v1125 = vsel %vm366, %v995, 0.0
    %v1126 = vadd.f32 %v1124, %v1125
    %v1127 = vsel %vm366, %v997, 0.0
    %v1128 = vadd.f32 %v1126, %v1127
    %v1129 = vsel %vm366, %v1005, 0.0
    %v1130 = vadd.f32 %v1128, %v1129
    %v1131 = vsel %vm366, %v1013, 0.0
    %v1132 = vadd.f32 %v1130, %v1131
    %v1133 = vsel %vm366, %v1012, 0.0
    %v1134 = vadd.f32 %v1132, %v1133
    %v1135 = vsel %vm366, %v1014, 0.0
    %v1136 = vadd.f32 %v1134, %v1135
    %v1137 = vsel %vm366, %v1022, 0.0
    %v1138 = vadd.f32 %v1136, %v1137
    %v1139 = vsel %vm366, %v1030, 0.0
    %v1140 = vadd.f32 %v1138, %v1139
    %v1141 = vsel %vm366, %v1029, 0.0
    %v1142 = vadd.f32 %v1140, %v1141
    %v1143 = vsel %vm366, %v1031, 0.0
    %v1144 = vadd.f32 %v1142, %v1143
    %v1145 = vsel %vm366, %v1039, 0.0
    %v1146 = vadd.f32 %v1144, %v1145
    %v1147 = vsel %vm366, %v1047, 0.0
    %v1148 = vadd.f32 %v1146, %v1147
    %v1149 = vsel %vm366, %v1046, 0.0
    %v1150 = vadd.f32 %v1148, %v1149
    %v1151 = vsel %vm366, %v1048, 0.0
    %v1152 = vadd.f32 %v1150, %v1151
    %v1153 = vsel %vm366, %v1056, 0.0
    %v1154 = vadd.f32 %v1152, %v1153
    %v1155 = vsel %vm366, %v1064, 0.0
    %v1156 = vadd.f32 %v1154, %v1155
    %v1157 = vsel %vm366, %v1063, 0.0
    %v1158 = vadd.f32 %v1156, %v1157
    %v1159 = vsel %vm366, %v1065, 0.0
    %v1160 = vadd.f32 %v1158, %v1159
    %1161 = vadd.xlane.f32.xlu0 %v1160
    %v1162 = vpop.xlane.xlu0 %1161
    %v1163 = vadd.f32 %v921, %v1162
    %v1164 = vsub.f32 %v1163, %v680
    %v1165 = vrcp.pop %v1164
    %v1166 = vmul.f32 %v680, %v1165
    %v1167 = vsub.f32 1.0, %v1166
    %vm1168 = vcmask 1024
    %v1169 = vsel %vm1168, %v1167, 0.0
    %1170 = vadd.xlane.f32.xlu0 %v1169
    %v1171 = vpop.xlane.xlu0 %1170
    %v1172 = vrot.slane %v1171, 4
    %v1173 = vadd.f32 %v1171, %v1172
    %v1174 = vrot.slane %v1173, 2
    %v1175 = vadd.f32 %v1173, %v1174
    %v1176 = vrot.slane %v1175, 1
    %v1177 = vadd.f32 %v1175, %v1176
    %s1178 = vtos %v1177
    %s1179 = smul.f32 %s1178, 0.5
    %s1180 = scalar_lea.smem [#allocation2], 0
    %1181 = sst [smem:[%s1180]] %s439
    %s1182 = scalar_lea.smem [#allocation2], 1
    %1183 = sst [smem:[%s1182]] %s1179
    // Predicated region
    $region10: #{focal_loss_with_iou_and_ssim.2} parent=1 // pred_check
      _
    $region11: #{focal_loss_with_iou_and_ssim.2} parent=1 // pred_check_branch
      %1185 = sbr.rel (0) target = $region13
    $region12: #{focal_loss_with_iou_and_ssim.2} parent=1 // pred_region
      _
    $region13: #{focal_loss_with_iou_and_ssim.2} parent=1 // pred_fallthru
      _
    // Predicated region
    $region14: #{focal_loss_with_iou_and_ssim.2} parent=1 // pred_check
      _
    $region15: #{focal_loss_with_iou_and_ssim.2} parent=1 // pred_check_branch
      %1187 = sbr.rel (0) target = $region17
    $region16: #{focal_loss_with_iou_and_ssim.2} parent=1 // pred_region
      %s1189 = ssub.s32 16, 16
      %1190 = vsyncadd [#allocation3], %s1189
      %s1192 = sshll.u32 %s3, 4
      %s1193 = int_to_ptr.vmem [resolvable:$true] %s1192
      %1195 = dma.smem_to_vmem [#allocation2], 16, %s1193, [#allocation3]
    $region17: #{focal_loss_with_iou_and_ssim.2} parent=1 // pred_fallthru
      _
    // Predicated region
    $region18: #{focal_loss_with_iou_and_ssim.2} parent=1 // pred_check
      _
    $region19: #{focal_loss_with_iou_and_ssim.2} parent=1 // pred_check_branch
      %1197 = sbr.rel (0) target = $region21
    $region20: #{focal_loss_with_iou_and_ssim.2} parent=1 // pred_region
      _
    $region21: #{focal_loss_with_iou_and_ssim.2} parent=1 // pred_fallthru
      _
    // Predicated region
    $region22: #{focal_loss_with_iou_and_ssim.2} parent=1 // pred_check
      _
    $region23: #{focal_loss_with_iou_and_ssim.2} parent=1 // pred_check_branch
      %1199 = sbr.rel (0) target = $region25
    $region24: #{focal_loss_with_iou_and_ssim.2} parent=1 // pred_region
      %1200 = dma.done [#allocation3], 16
    $region25: #{focal_loss_with_iou_and_ssim.2} parent=1 // pred_fallthru
      _
    %1201 = sfence
    %1202 = vsyncpa [#allocation3], 1

// kernel: focal_loss_with_iou_and_ssim.3
$region0: #{focal_loss_with_iou_and_ssim.3}
  #allocation0 [shape = 'u32[]', space=smem, size = 0x4, offset = 0x4, fixed_abs, tag = 'smem constant byte address 0x4 - core index']
  #allocation1 [shape = 'u32[144,128]{1,0:T(1,128)}', space=vmem, size = 0x12000, scoped, tag = 'internal scratch']
  #allocation2 [shape = 'f32[8,16,16]{2,1,0:T(8,128)}', space=vmem, size = 0x10000, scoped, tag = 'scratch operand']
  #allocation3 [shape = 'f32[8,16,16]{2,1,0:T(8,128)}', space=vmem, size = 0x10000, scoped, tag = 'scratch operand']
  #allocation4 [shape = 'f32[8,8,8]{2,1,0:T(8,128)}', space=vmem, size = 0x8000, scoped, tag = 'scratch operand']
  #allocation5 [shape = 'f32[8,8,8]{2,1,0:T(8,128)}', space=vmem, size = 0x8000, scoped, tag = 'scratch operand']
  #allocation6 [shape = 'f32[8,4,4]{2,1,0:T(4,128)}', space=vmem, size = 0x4000, scoped, tag = 'scratch operand']
  #allocation7 [shape = 'f32[8,4,4]{2,1,0:T(4,128)}', space=vmem, size = 0x4000, scoped, tag = 'scratch operand']
  #allocation8 [shape = 'f32[8,2,2]{2,1,0:T(2,128)}', space=vmem, size = 0x2000, scoped, tag = 'scratch operand']
  #allocation9 [shape = 'f32[8,2,2]{2,1,0:T(2,128)}', space=vmem, size = 0x2000, scoped, tag = 'scratch operand']
  %s0 = inlined_call_operand.vmem [shape: f32[8,32,32], index: 0, kind: input, shape index: {}]
  %s1 = inlined_call_operand.vmem [shape: f32[8,32,32], index: 1, kind: input, shape index: {}]
  %s2 = inlined_call_operand.vmem [shape: f32[5], index: 2, kind: output, shape index: {0}]
  %s3 = inlined_call_operand.vmem [shape: f32[5], index: 3, kind: output, shape index: {1}]
  %4 = xla_tuple %s2, %s3
  %s5 = sld [smem:[#allocation0]]
  $region61: #{focal_loss_with_iou_and_ssim.3} parent=0
    _
  %s7 = ssub.s32 1, %s5
  %s8 = scalar_select 0, %s7, %s5
  $region1: #{focal_loss_with_iou_and_ssim.3} parent=0
    #allocation10 [shape = 'u8[512]{0}', space=smem, size = 0x200, scoped, tag = 'output window, operand 0, single buffered']
    #allocation11 [shape = 's32[1]{0}', space=sflag, size = 0x4, scoped, tag = 'scoped memory for focal_loss_with_iou_and_ssim.3']
    #allocation12 [shape = 'u8[512]{0}', space=smem, size = 0x200, scoped, tag = 'output window, operand 1, single buffered']
    #allocation13 [shape = 's32[1]{0}', space=sflag, size = 0x4, scoped, tag = 'scoped memory for focal_loss_with_iou_and_ssim.3']
    %9 = vsyncpa [#allocation11], 0
    %10 = vsyncpa [#allocation13], 0
    // Predicated region
    $region2: #{focal_loss_with_iou_and_ssim.3} parent=1 // pred_check
      _
    $region3: #{focal_loss_with_iou_and_ssim.3} parent=1 // pred_check_branch
      %12 = sbr.rel (0) target = $region5
    $region4: #{focal_loss_with_iou_and_ssim.3} parent=1 // pred_region
      _
    $region5: #{focal_loss_with_iou_and_ssim.3} parent=1 // pred_fallthru
      _
    // Predicated region
    $region6: #{focal_loss_with_iou_and_ssim.3} parent=1 // pred_check
      _
    $region7: #{focal_loss_with_iou_and_ssim.3} parent=1 // pred_check_branch
      %14 = sbr.rel (0) target = $region9
    $region8: #{focal_loss_with_iou_and_ssim.3} parent=1 // pred_region
      _
    $region9: #{focal_loss_with_iou_and_ssim.3} parent=1 // pred_fallthru
      _
    %v15 = vld [vmem:[%s0] sm:$0xff]
    %v16 = vld [vmem:[%s0 + $0x8] sm:$0xff]
    %v17 = vld [vmem:[%s0 + $0x10] sm:$0xff]
    %v18 = vld [vmem:[%s0 + $0x18] sm:$0xff]
    %v19 = vld [vmem:[%s0 + $0x20] sm:$0xff]
    %v20 = vld [vmem:[%s0 + $0x28] sm:$0xff]
    %v21 = vld [vmem:[%s0 + $0x30] sm:$0xff]
    %v22 = vld [vmem:[%s0 + $0x38] sm:$0xff]
    %v23 = vld [vmem:[%s0 + $0x40] sm:$0xff]
    %v24 = vld [vmem:[%s0 + $0x48] sm:$0xff]
    %v25 = vld [vmem:[%s0 + $0x50] sm:$0xff]
    %v26 = vld [vmem:[%s0 + $0x58] sm:$0xff]
    %v27 = vld [vmem:[%s0 + $0x60] sm:$0xff]
    %v28 = vld [vmem:[%s0 + $0x68] sm:$0xff]
    %v29 = vld [vmem:[%s0 + $0x70] sm:$0xff]
    %v30 = vld [vmem:[%s0 + $0x78] sm:$0xff]
    %v31 = vld [vmem:[%s0 + $0x80] sm:$0xff]
    %v32 = vld [vmem:[%s0 + $0x88] sm:$0xff]
    %v33 = vld [vmem:[%s0 + $0x90] sm:$0xff]
    %v34 = vld [vmem:[%s0 + $0x98] sm:$0xff]
    %v35 = vld [vmem:[%s0 + $0xa0] sm:$0xff]
    %v36 = vld [vmem:[%s0 + $0xa8] sm:$0xff]
    %v37 = vld [vmem:[%s0 + $0xb0] sm:$0xff]
    %v38 = vld [vmem:[%s0 + $0xb8] sm:$0xff]
    %v39 = vld [vmem:[%s0 + $0xc0] sm:$0xff]
    %v40 = vld [vmem:[%s0 + $0xc8] sm:$0xff]
    %v41 = vld [vmem:[%s0 + $0xd0] sm:$0xff]
    %v42 = vld [vmem:[%s0 + $0xd8] sm:$0xff]
    %v43 = vld [vmem:[%s0 + $0xe0] sm:$0xff]
    %v44 = vld [vmem:[%s0 + $0xe8] sm:$0xff]
    %v45 = vld [vmem:[%s0 + $0xf0] sm:$0xff]
    %v46 = vld [vmem:[%s0 + $0xf8] sm:$0xff]
    %vm47 = vcmask 261120
    %v48 = vsel %vm47, %v15, -inf
    %v49 = vsel %vm47, %v16, -inf
    %v50 = vsel %vm47, %v17, -inf
    %v51 = vsel %vm47, %v18, -inf
    %v52 = vsel %vm47, %v19, -inf
    %v53 = vmax.f32 %v48, %v52
    %v54 = vsel %vm47, %v20, -inf
    %v55 = vmax.f32 %v49, %v54
    %v56 = vsel %vm47, %v21, -inf
    %v57 = vmax.f32 %v50, %v56
    %v58 = vsel %vm47, %v22, -inf
    %v59 = vmax.f32 %v51, %v58
    %v60 = vsel %vm47, %v23, -inf
    %v61 = vmax.f32 %v53, %v60
    %v62 = vsel %vm47, %v24, -inf
    %v63 = vmax.f32 %v55, %v62
    %v64 = vsel %vm47, %v25, -inf
    %v65 = vmax.f32 %v57, %v64
    %v66 = vsel %vm47, %v26, -inf
    %v67 = vmax.f32 %v59, %v66
    %v68 = vsel %vm47, %v27, -inf
    %v69 = vmax.f32 %v61, %v68
    %v70 = vsel %vm47, %v28, -inf
    %v71 = vmax.f32 %v63, %v70
    %v72 = vsel %vm47, %v29, -inf
    %v73 = vmax.f32 %v65, %v72
    %v74 = vsel %vm47, %v30, -inf
    %v75 = vmax.f32 %v67, %v74
    %v76 = vsel %vm47, %v31, -inf
    %v77 = vmax.f32 %v69, %v76
    %v78 = vsel %vm47, %v32, -inf
    %v79 = vmax.f32 %v71, %v78
    %v80 = vsel %vm47, %v33, -inf
    %v81 = vmax.f32 %v73, %v80
    %v82 = vsel %vm47, %v34, -inf
    %v83 = vmax.f32 %v75, %v82
    %v84 = vsel %vm47, %v35, -inf
    %v85 = vmax.f32 %v77, %v84
    %v86 = vsel %vm47, %v36, -inf
    %v87 = vmax.f32 %v79, %v86
    %v88 = vsel %vm47, %v37, -inf
    %v89 = vmax.f32 %v81, %v88
    %v90 = vsel %vm47, %v38, -inf
    %v91 = vmax.f32 %v83, %v90
    %v92 = vsel %vm47, %v39, -inf
    %v93 = vmax.f32 %v85, %v92
    %v94 = vsel %vm47, %v40, -inf
    %v95 = vmax.f32 %v87, %v94
    %v96 = vsel %vm47, %v41, -inf
    %v97 = vmax.f32 %v89, %v96
    %v98 = vsel %vm47, %v42, -inf
    %v99 = vmax.f32 %v91, %v98
    %v100 = vsel %vm47, %v43, -inf
    %v101 = vmax.f32 %v93, %v100
    %v102 = vsel %vm47, %v44, -inf
    %v103 = vmax.f32 %v95, %v102
    %v104 = vsel %vm47, %v45, -inf
    %v105 = vmax.f32 %v97, %v104
    %v106 = vsel %vm47, %v46, -inf
    %v107 = vmax.f32 %v99, %v106
    %v108 = vmax.f32 %v101, %v103
    %v109 = vmax.f32 %v105, %v107
    %v110 = vmax.f32 %v108, %v109
    %111 = vmax.xlane.f32.xlu0 %v110
    %v112 = vpop.xlane.xlu0 %111
    %v113 = vrot.slane %v112, 4
    %v114 = vmax.f32 %v112, %v113
    %v115 = vrot.slane %v114, 2
    %v116 = vmax.f32 %v114, %v115
    %v117 = vrot.slane %v116, 1
    %v118 = vmax.f32 %v116, %v117
    %s119 = vtos %v118
    %p120 = scmp.gt.f32.partialorder %s119, 128.0
    %s121 = scalar_select %p120, 255.0, 1.0
    %v122 = vsel %vm47, %v15, inf
    %v123 = vsel %vm47, %v16, inf
    %v124 = vsel %vm47, %v17, inf
    %v125 = vsel %vm47, %v18, inf
    %v126 = vsel %vm47, %v19, inf
    %v127 = vmin.f32 %v122, %v126
    %v128 = vsel %vm47, %v20, inf
    %v129 = vmin.f32 %v123, %v128
    %v130 = vsel %vm47, %v21, inf
    %v131 = vmin.f32 %v124, %v130
    %v132 = vsel %vm47, %v22, inf
    %v133 = vmin.f32 %v125, %v132
    %v134 = vsel %vm47, %v23, inf
    %v135 = vmin.f32 %v127, %v134
    %v136 = vsel %vm47, %v24, inf
    %v137 = vmin.f32 %v129, %v136
    %v138 = vsel %vm47, %v25, inf
    %v139 = vmin.f32 %v131, %v138
    %v140 = vsel %vm47, %v26, inf
    %v141 = vmin.f32 %v133, %v140
    %v142 = vsel %vm47, %v27, inf
    %v143 = vmin.f32 %v135, %v142
    %v144 = vsel %vm47, %v28, inf
    %v145 = vmin.f32 %v137, %v144
    %v146 = vsel %vm47, %v29, inf
    %v147 = vmin.f32 %v139, %v146
    %v148 = vsel %vm47, %v30, inf
    %v149 = vmin.f32 %v141, %v148
    %v150 = vsel %vm47, %v31, inf
    %v151 = vmin.f32 %v143, %v150
    %v152 = vsel %vm47, %v32, inf
    %v153 = vmin.f32 %v145, %v152
    %v154 = vsel %vm47, %v33, inf
    %v155 = vmin.f32 %v147, %v154
    %v156 = vsel %vm47, %v34, inf
    %v157 = vmin.f32 %v149, %v156
    %v158 = vsel %vm47, %v35, inf
    %v159 = vmin.f32 %v151, %v158
    %v160 = vsel %vm47, %v36, inf
    %v161 = vmin.f32 %v153, %v160
    %v162 = vsel %vm47, %v37, inf
    %v163 = vmin.f32 %v155, %v162
    %v164 = vsel %vm47, %v38, inf
    %v165 = vmin.f32 %v157, %v164
    %v166 = vsel %vm47, %v39, inf
    %v167 = vmin.f32 %v159, %v166
    %v168 = vsel %vm47, %v40, inf
    %v169 = vmin.f32 %v161, %v168
    %v170 = vsel %vm47, %v41, inf
    %v171 = vmin.f32 %v163, %v170
    %v172 = vsel %vm47, %v42, inf
    %v173 = vmin.f32 %v165, %v172
    %v174 = vsel %vm47, %v43, inf
    %v175 = vmin.f32 %v167, %v174
    %v176 = vsel %vm47, %v44, inf
    %v177 = vmin.f32 %v169, %v176
    %v178 = vsel %vm47, %v45, inf
    %v179 = vmin.f32 %v171, %v178
    %v180 = vsel %vm47, %v46, inf
    %v181 = vmin.f32 %v173, %v180
    %v182 = vmin.f32 %v175, %v177
    %v183 = vmin.f32 %v179, %v181
    %v184 = vmin.f32 %v182, %v183
    %185 = vmin.xlane.f32.xlu0 %v184
    %v186 = vpop.xlane.xlu0 %185
    %v187 = vrot.slane %v186, 4
    %v188 = vmin.f32 %v186, %v187
    %v189 = vrot.slane %v188, 2
    %v190 = vmin.f32 %v188, %v189
    %v191 = vrot.slane %v190, 1
    %v192 = vmin.f32 %v190, %v191
    %s193 = vtos %v192
    %p194 = scmp.lt.f32.partialorder %s193, -0.5
    %s195 = scalar_select %p194, -1.0, 0.0
    %s196 = ssub.f32 %s121, %s195
    %s197 = smul.f32 %s196, 0.01
    %s198 = smul.f32 %s197, %s197
    %s199 = smul.f32 %s196, 0.03
    %s200 = smul.f32 %s199, %s199
    %v201 = vlaneseq
    %v202 = vshrl.u32 %v201, 7
    %v203 = vadd.s32 %v202, 8
    %v204 = vadd.s32 %v202, 16
    %v205 = vlaneseq
    %v206 = vand.u32 %v205, 127
    %v207 = vsub.s32 %v206, %v202
    %v208 = vsub.s32 %v206, %v203
    %v209 = vsub.s32 %v206, %v204
    %v210 = vadd.s32 %v202, 24
    %v211 = vsub.s32 %v202, %v206
    %v212 = vsub.s32 %v203, %v206
    %v213 = vsub.s32 %v204, %v206
    %v214 = vsub.s32 %v210, %v206
    %vm215 = vcmp.eq.s32.totalorder %v207, 0
    %vm216 = vcmp.eq.s32.totalorder %v208, 0
    %vm217 = vcmp.eq.s32.totalorder %v209, 0
    %v218 = vsel %vm215, 0.0010283801, 0.0
    %v219 = vsel %vm216, 0.0010283801, 0.0
    %v220 = vsel %vm217, 0.0010283801, 0.0
    %v221 = vadd.f32 %v218, 0.0
    %v222 = vadd.f32 %v219, 0.0
    %v223 = vadd.f32 %v220, 0.0
    %vm224 = vcmp.eq.s32.totalorder %v211, 0
    %vm225 = vcmp.eq.s32.totalorder %v212, 0
    %vm226 = vcmp.eq.s32.totalorder %v213, 0
    %vm227 = vcmp.eq.s32.totalorder %v214, 0
    %v228 = vsel %vm224, 0.0010283801, 0.0
    %v229 = vsel %vm225, 0.0010283801, 0.0
    %v230 = vsel %vm226, 0.0010283801, 0.0
    %v231 = vsel %vm227, 0.0010283801, 0.0
    %v232 = vadd.f32 %v228, 0.0
    %v233 = vadd.f32 %v229, 0.0
    %v234 = vadd.f32 %v230, 0.0
    %v235 = vadd.f32 %v231, 0.0
    %vm236 = vcmp.eq.s32.totalorder %v207, 1
    %vm237 = vcmp.eq.s32.totalorder %v208, 1
    %vm238 = vcmp.eq.s32.totalorder %v209, 1
    %v239 = vsel %vm236, 0.007598758, 0.0
    %v240 = vsel %vm237, 0.007598758, 0.0
    %v241 = vsel %vm238, 0.007598758, 0.0
    %v242 = vadd.f32 %v221, %v239
    %v243 = vadd.f32 %v222, %v240
    %v244 = vadd.f32 %v223, %v241
    %vm245 = vcmp.eq.s32.totalorder %v211, 1
    %vm246 = vcmp.eq.s32.totalorder %v212, 1
    %vm247 = vcmp.eq.s32.totalorder %v213, 1
    %vm248 = vcmp.eq.s32.totalorder %v214, 1
    %v249 = vsel %vm245, 0.007598758, 0.0
    %v250 = vsel %vm246, 0.007598758, 0.0
    %v251 = vsel %vm247, 0.007598758, 0.0
    %v252 = vsel %vm248, 0.007598758, 0.0
    %v253 = vadd.f32 %v232, %v249
    %v254 = vadd.f32 %v233, %v250
    %v255 = vadd.f32 %v234, %v251
    %v256 = vadd.f32 %v235, %v252
    %vm257 = vcmp.eq.s32.totalorder %v207, 2
    %vm258 = vcmp.eq.s32.totalorder %v208, 2
    %vm259 = vcmp.eq.s32.totalorder %v209, 2
    %v260 = vsel %vm257, 0.036000773, 0.0
    %v261 = vsel %vm258, 0.036000773, 0.0
    %v262 = vsel %vm259, 0.036000773, 0.0
    %v263 = vadd.f32 %v242, %v260
    %v264 = vadd.f32 %v243, %v261
    %v265 = vadd.f32 %v244, %v262
    %vm266 = vcmp.eq.s32.totalorder %v211, 2
    %vm267 = vcmp.eq.s32.totalorder %v212, 2
    %vm268 = vcmp.eq.s32.totalorder %v213, 2
    %vm269 = vcmp.eq.s32.totalorder %v214, 2
    %v270 = vsel %vm266, 0.036000773, 0.0
    %v271 = vsel %vm267, 0.036000773, 0.0
    %v272 = vsel %vm268, 0.036000773, 0.0
    %v273 = vsel %vm269, 0.036000773, 0.0
    %v274 = vadd.f32 %v253, %v270
    %v275 = vadd.f32 %v254, %v271
    %v276 = vadd.f32 %v255, %v272
    %v277 = vadd.f32 %v256, %v273
    %vm278 = vcmp.eq.s32.totalorder %v207, 3
    %vm279 = vcmp.eq.s32.totalorder %v208, 3
    %vm280 = vcmp.eq.s32.totalorder %v209, 3
    %v281 = vsel %vm278, 0.10936069, 0.0
    %v282 = vsel %vm279, 0.10936069, 0.0
    %v283 = vsel %vm280, 0.10936069, 0.0
    %v284 = vadd.f32 %v263, %v281
    %v285 = vadd.f32 %v264, %v282
    %v286 = vadd.f32 %v265, %v283
    %vm287 = vcmp.eq.s32.totalorder %v211, 3
    %vm288 = vcmp.eq.s32.totalorder %v212, 3
    %vm289 = vcmp.eq.s32.totalorder %v213, 3
    %vm290 = vcmp.eq.s32.totalorder %v214, 3
    %v291 = vsel %vm287, 0.10936069, 0.0
    %v292 = vsel %vm288, 0.10936069, 0.0
    %v293 = vsel %vm289, 0.10936069, 0.0
    %v294 = vsel %vm290, 0.10936069, 0.0
    %v295 = vadd.f32 %v274, %v291
    %v296 = vadd.f32 %v275, %v292
    %v297 = vadd.f32 %v276, %v293
    %v298 = vadd.f32 %v277, %v294
    %vm299 = vcmp.eq.s32.totalorder %v207, 4
    %vm300 = vcmp.eq.s32.totalorder %v208, 4
    %vm301 = vcmp.eq.s32.totalorder %v209, 4
    %v302 = vsel %vm299, 0.21300554, 0.0
    %v303 = vsel %vm300, 0.21300554, 0.0
    %v304 = vsel %vm301, 0.21300554, 0.0
    %v305 = vadd.f32 %v284, %v302
    %v306 = vadd.f32 %v285, %v303
    %v307 = vadd.f32 %v286, %v304
    %vm308 = vcmp.eq.s32.totalorder %v211, 4
    %vm309 = vcmp.eq.s32.totalorder %v212, 4
    %vm310 = vcmp.eq.s32.totalorder %v213, 4
    %vm311 = vcmp.eq.s32.totalorder %v214, 4
    %v312 = vsel %vm308, 0.21300554, 0.0
    %v313 = vsel %vm309, 0.21300554, 0.0
    %v314 = vsel %vm310, 0.21300554, 0.0
    %v315 = vsel %vm311, 0.21300554, 0.0
    %v316 = vadd.f32 %v295, %v312
    %v317 = vadd.f32 %v296, %v313
    %v318 = vadd.f32 %v297, %v314
    %v319 = vadd.f32 %v298, %v315
    %vm320 = vcmp.eq.s32.totalorder %v207, 5
    %vm321 = vcmp.eq.s32.totalorder %v208, 5
    %vm322 = vcmp.eq.s32.totalorder %v209, 5
    %v323 = vsel %vm320, 0.26601171, 0.0
    %v324 = vsel %vm321, 0.26601171, 0.0
    %v325 = vsel %vm322, 0.26601171, 0.0
    %v326 = vadd.f32 %v305, %v323
    %v327 = vadd.f32 %v306, %v324
    %v328 = vadd.f32 %v307, %v325
    %vm329 = vcmp.eq.s32.totalorder %v211, 5
    %vm330 = vcmp.eq.s32.totalorder %v212, 5
    %vm331 = vcmp.eq.s32.totalorder %v213, 5
    %vm332 = vcmp.eq.s32.totalorder %v214, 5
    %v333 = vsel %vm329, 0.26601171, 0.0
    %v334 = vsel %vm330, 0.26601171, 0.0
    %v335 = vsel %vm331, 0.26601171, 0.0
    %v336 = vsel %vm332, 0.26601171, 0.0
    %v337 = vadd.f32 %v316, %v333
    %v338 = vadd.f32 %v317, %v334
    %v339 = vadd.f32 %v318, %v335
    %v340 = vadd.f32 %v319, %v336
    %vm341 = vcmp.eq.s32.totalorder %v207, 6
    %vm342 = vcmp.eq.s32.totalorder %v208, 6
    %vm343 = vcmp.eq.s32.totalorder %v209, 6
    %v344 = vsel %vm341, 0.21300554, 0.0
    %v345 = vsel %vm342, 0.21300554, 0.0
    %v346 = vsel %vm343, 0.21300554, 0.0
    %v347 = vadd.f32 %v326, %v344
    %v348 = vadd.f32 %v327, %v345
    %v349 = vadd.f32 %v328, %v346
    %vm350 = vcmp.eq.s32.totalorder %v211, 6
    %vm351 = vcmp.eq.s32.totalorder %v212, 6
    %vm352 = vcmp.eq.s32.totalorder %v213, 6
    %vm353 = vcmp.eq.s32.totalorder %v214, 6
    %v354 = vsel %vm350, 0.21300554, 0.0
    %v355 = vsel %vm351, 0.21300554, 0.0
    %v356 = vsel %vm352, 0.21300554, 0.0
    %v357 = vsel %vm353, 0.21300554, 0.0
    %v358 = vadd.f32 %v337, %v354
    %v359 = vadd.f32 %v338, %v355
    %v360 = vadd.f32 %v339, %v356
    %v361 = vadd.f32 %v340, %v357
    %vm362 = vcmp.eq.s32.totalorder %v207, 7
    %vm363 = vcmp.eq.s32.totalorder %v208, 7
    %vm364 = vcmp.eq.s32.totalorder %v209, 7
    %v365 = vsel %vm362, 0.10936069, 0.0
    %v366 = vsel %vm363, 0.10936069, 0.0
    %v367 = vsel %vm364, 0.10936069, 0.0
    %v368 = vadd.f32 %v347, %v365
    %v369 = vadd.f32 %v348, %v366
    %v370 = vadd.f32 %v349, %v367
    %vm371 = vcmp.eq.s32.totalorder %v211, 7
    %vm372 = vcmp.eq.s32.totalorder %v212, 7
    %vm373 = vcmp.eq.s32.totalorder %v213, 7
    %vm374 = vcmp.eq.s32.totalorder %v214, 7
    %v375 = vsel %vm371, 0.10936069, 0.0
    %v376 = vsel %vm372, 0.10936069, 0.0
    %v377 = vsel %vm373, 0.10936069, 0.0
    %v378 = vsel %vm374, 0.10936069, 0.0
    %v379 = vadd.f32 %v358, %v375
    %v380 = vadd.f32 %v359, %v376
    %v381 = vadd.f32 %v360, %v377
    %v382 = vadd.f32 %v361, %v378
    %vm383 = vcmp.eq.s32.totalorder %v207, 8
    %vm384 = vcmp.eq.s32.totalorder %v208, 8
    %vm385 = vcmp.eq.s32.totalorder %v209, 8
    %v386 = vsel %vm383, 0.036000773, 0.0
    %v387 = vsel %vm384, 0.036000773, 0.0
    %v388 = vsel %vm385, 0.036000773, 0.0
    %v389 = vadd.f32 %v368, %v386
    %v390 = vadd.f32 %v369, %v387
    %v391 = vadd.f32 %v370, %v388
    %vm392 = vcmp.eq.s32.totalorder %v211, 8
    %vm393 = vcmp.eq.s32.totalorder %v212, 8
    %vm394 = vcmp.eq.s32.totalorder %v213, 8
    %vm395 = vcmp.eq.s32.totalorder %v214, 8
    %v396 = vsel %vm392, 0.036000773, 0.0
    %v397 = vsel %vm393, 0.036000773, 0.0
    %v398 = vsel %vm394, 0.036000773, 0.0
    %v399 = vsel %vm395, 0.036000773, 0.0
    %v400 = vadd.f32 %v379, %v396
    %v401 = vadd.f32 %v380, %v397
    %v402 = vadd.f32 %v381, %v398
    %v403 = vadd.f32 %v382, %v399
    %vm404 = vcmp.eq.s32.totalorder %v207, 9
    %vm405 = vcmp.eq.s32.totalorder %v208, 9
    %vm406 = vcmp.eq.s32.totalorder %v209, 9
    %v407 = vsel %vm404, 0.007598758, 0.0
    %v408 = vsel %vm405, 0.007598758, 0.0
    %v409 = vsel %vm406, 0.007598758, 0.0
    %v410 = vadd.f32 %v389, %v407
    %v411 = vadd.f32 %v390, %v408
    %v412 = vadd.f32 %v391, %v409
    %vm413 = vcmp.eq.s32.totalorder %v211, 9
    %vm414 = vcmp.eq.s32.totalorder %v212, 9
    %vm415 = vcmp.eq.s32.totalorder %v213, 9
    %vm416 = vcmp.eq.s32.totalorder %v214, 9
    %v417 = vsel %vm413, 0.007598758, 0.0
    %v418 = vsel %vm414, 0.007598758, 0.0
    %v419 = vsel %vm415, 0.007598758, 0.0
    %v420 = vsel %vm416, 0.007598758, 0.0
    %v421 = vadd.f32 %v400, %v417
    %v422 = vadd.f32 %v401, %v418
    %v423 = vadd.f32 %v402, %v419
    %v424 = vadd.f32 %v403, %v420
    %vm425 = vcmp.eq.s32.totalorder %v207, 10
    %vm426 = vcmp.eq.s32.totalorder %v208, 10
    %vm427 = vcmp.eq.s32.totalorder %v209, 10
    %v428 = vsel %vm425, 0.0010283801, 0.0
    %v429 = vsel %vm426, 0.0010283801, 0.0
    %v430 = vsel %vm427, 0.0010283801, 0.0
    %v431 = vadd.f32 %v410, %v428
    %v432 = vadd.f32 %v411, %v429
    %v433 = vadd.f32 %v412, %v430
    %vm434 = vcmp.eq.s32.totalorder %v211, 10
    %vm435 = vcmp.eq.s32.totalorder %v212, 10
    %vm436 = vcmp.eq.s32.totalorder %v213, 10
    %vm437 = vcmp.eq.s32.totalorder %v214, 10
    %v438 = vsel %vm434, 0.0010283801, 0.0
    %v439 = vsel %vm435, 0.0010283801, 0.0
    %v440 = vsel %vm436, 0.0010283801, 0.0
    %v441 = vsel %vm437, 0.0010283801, 0.0
    %v442 = vadd.f32 %v421, %v438
    %v443 = vadd.f32 %v422, %v439
    %v444 = vadd.f32 %v423, %v440
    %v445 = vadd.f32 %v424, %v441
    %v446 = vmul.u32 %v202, 2
    %v447 = vmul.u32 %v203, 2
    %vm448 = vcmp.eq.s32.totalorder %v206, %v446
    %vm449 = vcmp.eq.s32.totalorder %v206, %v447
    %v450 = vadd.s32 %v446, 1
    %v451 = vadd.s32 %v447, 1
    %vm452 = vcmp.eq.s32.totalorder %v206, %v450
    %vm453 = vcmp.eq.s32.totalorder %v206, %v451
    %vm454 = vmor %vm448, %vm452
    %vm455 = vmor %vm449, %vm453
    %v456 = vsel %vm454, 0.5, 0.0
    %v457 = vsel %vm455, 0.5, 0.0
    %v458 = vmul.u32 %v206, 2
    %vm459 = vcmp.eq.s32.totalorder %v202, %v458
    %vm460 = vcmp.eq.s32.totalorder %v203, %v458
    %vm461 = vcmp.eq.s32.totalorder %v204, %v458
    %vm462 = vcmp.eq.s32.totalorder %v210, %v458
    %v463 = vadd.s32 %v458, 1
    %vm464 = vcmp.eq.s32.totalorder %v202, %v463
    %vm465 = vcmp.eq.s32.totalorder %v203, %v463
    %vm466 = vcmp.eq.s32.totalorder %v204, %v463
    %vm467 = vcmp.eq.s32.totalorder %v210, %v463
    %vm468 = vmor %vm459, %vm464
    %vm469 = vmor %vm460, %vm465
    %vm470 = vmor %vm461, %vm466
    %vm471 = vmor %vm462, %vm467
    %v472 = vsel %vm468, 0.5, 0.0
    %v473 = vsel %vm469, 0.5, 0.0
    %v474 = vsel %vm470, 0.5, 0.0
    %v475 = vsel %vm471, 0.5, 0.0
    loop: start=0, step=1, limit=8
    $region10: #{focal_loss_with_iou_and_ssim.3} parent=1 // loop_pre_header
      _
    $region11: #{focal_loss_with_iou_and_ssim.3} parent=1 // loop_header
      %s477 = sphi 0, %s481
      %p478 = scmp.ge.s32.totalorder %s477, 8
      %s482 = sphi 0.0, %s1813
      %s483 = sphi 0.0, %s1828
    $region12: #{focal_loss_with_iou_and_ssim.3} parent=1 // loop_header_branch
      %480 = sbr.rel (%p478) target = $region16
    $region13: #{focal_loss_with_iou_and_ssim.3} parent=1 // loop_body
      %s484 = smul.u32 %s477, 32
      %s485 = scalar_lea.vmem %s0, %s484
      %v486 = vld [vmem:[%s485] sm:$0xff]
      %v487 = vld [vmem:[%s485 + $0x8] sm:$0xff]
      %v488 = vld [vmem:[%s485 + $0x10] sm:$0xff]
      %v489 = vld [vmem:[%s485 + $0x18] sm:$0xff]
      %s490 = scalar_lea.vmem %s1, %s484
      %v491 = vld [vmem:[%s490] sm:$0xff]
      %v492 = vld [vmem:[%s490 + $0x8] sm:$0xff]
      %v493 = vld [vmem:[%s490 + $0x10] sm:$0xff]
      %v494 = vld [vmem:[%s490 + $0x18] sm:$0xff]
      %v496 = vsel %vm47, %v486, 0
      %v499 = vsel %vm47, %v487, 0
      %v502 = vsel %vm47, %v488, 0
      %v505 = vsel %vm47, %v489, 0
      %507 = vmatprep.subr.mxu0 0.0
      %508 = vmatpush1.msra.mxu0 %v442
      %509 = vmatprep.subr.mxu0 0.0
      %510 = vmatpush1.msra.mxu0 %v443
      %511 = vmatprep.subr.mxu0 0.0
      %512 = vmatpush1.msra.mxu0 %v444
      %513 = vmatprep.subr.mxu0 0.0
      %514 = vmatpush1.msra.mxu0 %v445
      %515 = vmatprep.subr.mxu0 0.0
      %516 = vmatpush1.msra.mxu0 0.0
      %517 = vmatprep.subr.mxu0 0.0
      %518 = vmatpush1.msra.mxu0 0.0
      %519 = vmatprep.subr.mxu0 0.0
      %520 = vmatpush1.msra.mxu0 0.0
      %521 = vmatprep.subr.mxu0 0.0
      %522 = vmatpush1.msra.mxu0 0.0
      %523 = vmatprep.subr.mxu0 0.0
      %524 = vmatpush1.msra.mxu0 0.0
      %525 = vmatprep.subr.mxu0 0.0
      %526 = vmatpush1.msra.mxu0 0.0
      %527 = vmatprep.subr.mxu0 0.0
      %528 = vmatpush1.msra.mxu0 0.0
      %529 = vmatprep.subr.mxu0 0.0
      %530 = vmatpush1.msra.mxu0 0.0
      %531 = vmatprep.subr.mxu0 0.0
      %532 = vmatpush1.msra.mxu0 0.0
      %533 = vmatprep.subr.mxu0 0.0
      %534 = vmatpush1.msra.mxu0 0.0
      %535 = vmatprep.subr.mxu0 0.0
      %536 = vmatpush1.msra.mxu0 0.0
      %537 = vmatprep.subr.mxu0 0.0
      %538 = vmatpush1.msra.mxu0 0.0
      %539 = vmatprep.subr.mxu0 0.0
      %540 = vmatpush1.msra.mxu0 0.0
      %541 = vmatprep.subr.mxu0 0.0
      %542 = vmatpush1.msra.mxu0 0.0
      %543 = vmatprep.subr.mxu0 0.0
      %544 = vmatpush1.msra.mxu0 0.0
      %545 = vmatprep.subr.mxu0 0.0
      %546 = vmatpush1.msra.mxu0 0.0
      %547 = vmatprep.subr.mxu0 0.0
      %548 = vmatpush1.msra.mxu0 0.0
      %549 = vmatprep.subr.mxu0 0.0
      %550 = vmatpush1.msra.mxu0 0.0
      %551 = vmatprep.subr.mxu0 0.0
      %552 = vmatpush1.msra.mxu0 0.0
      %553 = vmatprep.subr.mxu0 0.0
      %554 = vmatpush1.msra.mxu0 0.0
      %555 = vmatprep.subr.mxu0 0.0
      %556 = vmatpush1.msra.mxu0 0.0
      %557 = vmatprep.subr.mxu0 0.0
      %558 = vmatpush1.msra.mxu0 0.0
      %559 = vmatprep.subr.mxu0 0.0
      %560 = vmatpush1.msra.mxu0 0.0
      %561 = vmatprep.subr.mxu0 0.0
      %562 = vmatpush1.msra.mxu0 0.0
      %563 = vmatprep.subr.mxu0 0.0
      %564 = vmatpush1.msra.mxu0 0.0
      %565 = vmatprep.subr.mxu0 0.0
      %566 = vmatpush1.msra.mxu0 0.0
      %567 = vmatprep.subr.mxu0 0.0
      %568 = vmatpush1.msra.mxu0 0.0
      %569 = vmatprep.subr.mxu0 0.0
      %570 = vmatpush1.msra.mxu0 0.0
      %571 = vmatprep.mubr.f32.mxu0 0.0
      %572 = vmatmul.mubr.f32.gmra.mrb[0].mxu0 %v496
      %v573 = vpop.f32.mrb[0].mxu0
      %v574 = vadd.f32 0.0, %v573
      %v575 = vpop.f32.mrb[0].mxu0
      %576 = vmatprep.mubr.f32.mxu0 0.0
      %577 = vmatmul.mubr.f32.gmra.mrb[0].mxu0 %v499
      %v578 = vpop.f32.mrb[0].mxu0
      %v579 = vadd.f32 0.0, %v578
      %v580 = vpop.f32.mrb[0].mxu0
      %581 = vmatprep.mubr.f32.mxu0 0.0
      %582 = vmatmul.mubr.f32.gmra.mrb[0].mxu0 %v502
      %v583 = vpop.f32.mrb[0].mxu0
      %v584 = vadd.f32 0.0, %v583
      %v585 = vpop.f32.mrb[0].mxu0
      %586 = vmatprep.mubr.f32.mxu0 0.0
      %587 = vmatmul.mubr.f32.gmra.mrb[0].mxu0 %v505
      %v588 = vpop.f32.mrb[0].mxu0
      %v589 = vadd.f32 0.0, %v588
      %v590 = vpop.f32.mrb[0].mxu0
      %591 = vdwg.mxu0
      %v593 = vsel %vm47, %v431, 0
      %v596 = vsel %vm47, %v432, 0
      %v599 = vsel %vm47, %v433, 0
      %601 = vmatprep.subr.mxu0 0.0
      %602 = vmatpush1.msra.mxu0 %v574
      %603 = vmatprep.subr.mxu0 0.0
      %604 = vmatpush1.msra.mxu0 %v579
      %605 = vmatprep.subr.mxu0 0.0
      %606 = vmatpush1.msra.mxu0 %v584
      %607 = vmatprep.subr.mxu0 0.0
      %608 = vmatpush1.msra.mxu0 %v589
      %609 = vmatprep.subr.mxu0 0.0
      %610 = vmatpush1.msra.mxu0 0.0
      %611 = vmatprep.subr.mxu0 0.0
      %612 = vmatpush1.msra.mxu0 0.0
      %613 = vmatprep.subr.mxu0 0.0
      %614 = vmatpush1.msra.mxu0 0.0
      %615 = vmatprep.subr.mxu0 0.0
      %616 = vmatpush1.msra.mxu0 0.0
      %617 = vmatprep.subr.mxu0 0.0
      %618 = vmatpush1.msra.mxu0 0.0
      %619 = vmatprep.subr.mxu0 0.0
      %620 = vmatpush1.msra.mxu0 0.0
      %621 = vmatprep.subr.mxu0 0.0
      %622 = vmatpush1.msra.mxu0 0.0
      %623 = vmatprep.subr.mxu0 0.0
      %624 = vmatpush1.msra.mxu0 0.0
      %625 = vmatprep.subr.mxu0 0.0
      %626 = vmatpush1.msra.mxu0 0.0
      %627 = vmatprep.subr.mxu0 0.0
      %628 = vmatpush1.msra.mxu0 0.0
      %629 = vmatprep.subr.mxu0 0.0
      %630 = vmatpush1.msra.mxu0 0.0
      %631 = vmatprep.subr.mxu0 0.0
      %632 = vmatpush1.msra.mxu0 0.0
      %633 = vmatprep.subr.mxu0 0.0
      %634 = vmatpush1.msra.mxu0 0.0
      %635 = vmatprep.subr.mxu0 0.0
      %636 = vmatpush1.msra.mxu0 0.0
      %637 = vmatprep.subr.mxu0 0.0
      %638 = vmatpush1.msra.mxu0 0.0
      %639 = vmatprep.subr.mxu0 0.0
      %640 = vmatpush1.msra.mxu0 0.0
      %641 = vmatprep.subr.mxu0 0.0
      %642 = vmatpush1.msra.mxu0 0.0
      %643 = vmatprep.subr.mxu0 0.0
      %644 = vmatpush1.msra.mxu0 0.0
      %645 = vmatprep.subr.mxu0 0.0
      %646 = vmatpush1.msra.mxu0 0.0
      %647 = vmatprep.subr.mxu0 0.0
      %648 = vmatpush1.msra.mxu0 0.0
      %649 = vmatprep.subr.mxu0 0.0
      %650 = vmatpush1.msra.mxu0 0.0
      %651 = vmatprep.subr.mxu0 0.0
      %652 = vmatpush1.msra.mxu0 0.0
      %653 = vmatprep.subr.mxu0 0.0
      %654 = vmatpush1.msra.mxu0 0.0
      %655 = vmatprep.subr.mxu0 0.0
      %656 = vmatpush1.msra.mxu0 0.0
      %657 = vmatprep.subr.mxu0 0.0
      %658 = vmatpush1.msra.mxu0 0.0
      %659 = vmatprep.subr.mxu0 0.0
      %660 = vmatpush1.msra.mxu0 0.0
      %661 = vmatprep.subr.mxu0 0.0
      %662 = vmatpush1.msra.mxu0 0.0
      %663 = vmatprep.subr.mxu0 0.0
      %664 = vmatpush1.msra.mxu0 0.0
      %665 = vmatprep.mubr.f32.mxu0 0.0
      %666 = vmatmul.mubr.f32.gmra.mrb[0].mxu0 %v593
      %v667 = vpop.f32.mrb[0].mxu0
      %v668 = vadd.f32 0.0, %v667
      %v669 = vpop.f32.mrb[0].mxu0
      %670 = vmatprep.mubr.f32.mxu0 0.0
      %671 = vmatmul.mubr.f32.gmra.mrb[0].mxu0 %v596
      %v672 = vpop.f32.mrb[0].mxu0
      %v673 = vadd.f32 0.0, %v672
      %v674 = vpop.f32.mrb[0].mxu0
      %675 = vmatprep.mubr.f32.mxu0 0.0
      %676 = vmatmul.mubr.f32.gmra.mrb[0].mxu0 %v599
      %v677 = vpop.f32.mrb[0].mxu0
      %v678 = vadd.f32 0.0, %v677
      %v679 = vpop.f32.mrb[0].mxu0
      %680 = vdwg.mxu0
      %v682 = vsel %vm47, %v491, 0
      %v685 = vsel %vm47, %v492, 0
      %v688 = vsel %vm47, %v493, 0
      %v691 = vsel %vm47, %v494, 0
      %693 = vmatprep.subr.mxu0 0.0
      %694 = vmatpush1.msra.mxu0 %v442
      %695 = vmatprep.subr.mxu0 0.0
      %696 = vmatpush1.msra.mxu0 %v443
      %697 = vmatprep.subr.mxu0 0.0
      %698 = vmatpush1.msra.mxu0 %v444
      %699 = vmatprep.subr.mxu0 0.0
      %700 = vmatpush1.msra.mxu0 %v445
      %701 = vmatprep.subr.mxu0 0.0
      %702 = vmatpush1.msra.mxu0 0.0
      %703 = vmatprep.subr.mxu0 0.0
      %704 = vmatpush1.msra.mxu0 0.0
      %705 = vmatprep.subr.mxu0 0.0
      %706 = vmatpush1.msra.mxu0 0.0
      %707 = vmatprep.subr.mxu0 0.0
      %708 = vmatpush1.msra.mxu0 0.0
      %709 = vmatprep.subr.mxu0 0.0
      %710 = vmatpush1.msra.mxu0 0.0
      %711 = vmatprep.subr.mxu0 0.0
      %712 = vmatpush1.msra.mxu0 0.0
      %713 = vmatprep.subr.mxu0 0.0
      %714 = vmatpush1.msra.mxu0 0.0
      %715 = vmatprep.subr.mxu0 0.0
      %716 = vmatpush1.msra.mxu0 0.0
      %717 = vmatprep.subr.mxu0 0.0
      %718 = vmatpush1.msra.mxu0 0.0
      %719 = vmatprep.subr.mxu0 0.0
      %720 = vmatpush1.msra.mxu0 0.0
      %721 = vmatprep.subr.mxu0 0.0
      %722 = vmatpush1.msra.mxu0 0.0
      %723 = vmatprep.subr.mxu0 0.0
      %724 = vmatpush1.msra.mxu0 0.0
      %725 = vmatprep.subr.mxu0 0.0
      %726 = vmatpush1.msra.mxu0 0.0
      %727 = vmatprep.subr.mxu0 0.0
      %728 = vmatpush1.msra.mxu0 0.0
      %729 = vmatprep.subr.mxu0 0.0
      %730 = vmatpush1.msra.mxu0 0.0
      %731 = vmatprep.subr.mxu0 0.0
      %732 = vmatpush1.msra.mxu0 0.0
      %733 = vmatprep.subr.mxu0 0.0
      %734 = vmatpush1.msra.mxu0 0.0
      %735 = vmatprep.subr.mxu0 0.0
      %736 = vmatpush1.msra.mxu0 0.0
      %737 = vmatprep.subr.mxu0 0.0
      %738 = vmatpush1.msra.mxu0 0.0
      %739 = vmatprep.subr.mxu0 0.0
      %740 = vmatpush1.msra.mxu0 0.0
      %741 = vmatprep.subr.mxu0 0.0
      %742 = vmatpush1.msra.mxu0 0.0
      %743 = vmatprep.subr.mxu0 0.0
      %744 = vmatpush1.msra.mxu0 0.0
      %745 = vmatprep.subr.mxu0 0.0
      %746 = vmatpush1.msra.mxu0 0.0
      %747 = vmatprep.subr.mxu0 0.0
      %748 = vmatpush1.msra.mxu0 0.0
      %749 = vmatprep.subr.mxu0 0.0
      %750 = vmatpush1.msra.mxu0 0.0
      %751 = vmatprep.subr.mxu0 0.0
      %752 = vmatpush1.msra.mxu0 0.0
      %753 = vmatprep.subr.mxu0 0.0
      %754 = vmatpush1.msra.mxu0 0.0
      %755 = vmatprep.subr.mxu0 0.0
      %756 = vmatpush1.msra.mxu0 0.0
      %757 = vmatprep.mubr.f32.mxu0 0.0
      %758 = vmatmul.mubr.f32.gmra.mrb[0].mxu0 %v682
      %v759 = vpop.f32.mrb[0].mxu0
      %v760 = vadd.f32 0.0, %v759
      %v761 = vpop.f32.mrb[0].mxu0
      %762 = vmatprep.mubr.f32.mxu0 0.0
      %763 = vmatmul.mubr.f32.gmra.mrb[0].mxu0 %v685
      %v764 = vpop.f32.mrb[0].mxu0
      %v765 = vadd.f32 0.0, %v764
      %v766 = vpop.f32.mrb[0].mxu0
      %767 = vmatprep.mubr.f32.mxu0 0.0
      %768 = vmatmul.mubr.f32.gmra.mrb[0].mxu0 %v688
      %v769 = vpop.f32.mrb[0].mxu0
      %v770 = vadd.f32 0.0, %v769
      %v771 = vpop.f32.mrb[0].mxu0
      %772 = vmatprep.mubr.f32.mxu0 0.0
      %773 = vmatmul.mubr.f32.gmra.mrb[0].mxu0 %v691
      %v774 = vpop.f32.mrb[0].mxu0
      %v775 = vadd.f32 0.0, %v774
      %v776 = vpop.f32.mrb[0].mxu0
      %777 = vdwg.mxu0
      %778 = vmatprep.subr.mxu0 0.0
      %779 = vmatpush1.msra.mxu0 %v760
      %780 = vmatprep.subr.mxu0 0.0
      %781 = vmatpush1.msra.mxu0 %v765
      %782 = vmatprep.subr.mxu0 0.0
      %783 = vmatpush1.msra.mxu0 %v770
      %784 = vmatprep.subr.mxu0 0.0
      %785 = vmatpush1.msra.mxu0 %v775
      %786 = vmatprep.subr.mxu0 0.0
      %787 = vmatpush1.msra.mxu0 0.0
      %788 = vmatprep.subr.mxu0 0.0
      %789 = vmatpush1.msra.mxu0 0.0
      %790 = vmatprep.subr.mxu0 0.0
      %791 = vmatpush1.msra.mxu0 0.0
      %792 = vmatprep.subr.mxu0 0.0
      %793 = vmatpush1.msra.mxu0 0.0
      %794 = vmatprep.subr.mxu0 0.0
      %795 = vmatpush1.msra.mxu0 0.0
      %796 = vmatprep.subr.mxu0 0.0
      %797 = vmatpush1.msra.mxu0 0.0
      %798 = vmatprep.subr.mxu0 0.0
      %799 = vmatpush1.msra.mxu0 0.0
      %800 = vmatprep.subr.mxu0 0.0
      %801 = vmatpush1.msra.mxu0 0.0
      %802 = vmatprep.subr.mxu0 0.0
      %803 = vmatpush1.msra.mxu0 0.0
      %804 = vmatprep.subr.mxu0 0.0
      %805 = vmatpush1.msra.mxu0 0.0
      %806 = vmatprep.subr.mxu0 0.0
      %807 = vmatpush1.msra.mxu0 0.0
      %808 = vmatprep.subr.mxu0 0.0
      %809 = vmatpush1.msra.mxu0 0.0
      %810 = vmatprep.subr.mxu0 0.0
      %811 = vmatpush1.msra.mxu0 0.0
      %812 = vmatprep.subr.mxu0 0.0
      %813 = vmatpush1.msra.mxu0 0.0
      %814 = vmatprep.subr.mxu0 0.0
      %815 = vmatpush1.msra.mxu0 0.0
      %816 = vmatprep.subr.mxu0 0.0
      %817 = vmatpush1.msra.mxu0 0.0
      %818 = vmatprep.subr.mxu0 0.0
      %819 = vmatpush1.msra.mxu0 0.0
      %820 = vmatprep.subr.mxu0 0.0
      %821 = vmatpush1.msra.mxu0 0.0
      %822 = vmatprep.subr.mxu0 0.0
      %823 = vmatpush1.msra.mxu0 0.0
      %824 = vmatprep.subr.mxu0 0.0
      %825 = vmatpush1.msra.mxu0 0.0
      %826 = vmatprep.subr.mxu0 0.0
      %827 = vmatpush1.msra.mxu0 0.0
      %828 = vmatprep.subr.mxu0 0.0
      %829 = vmatpush1.msra.mxu0 0.0
      %830 = vmatprep.subr.mxu0 0.0
      %831 = vmatpush1.msra.mxu0 0.0
      %832 = vmatprep.subr.mxu0 0.0
      %833 = vmatpush1.msra.mxu0 0.0
      %834 = vmatprep.subr.mxu0 0.0
      %835 = vmatpush1.msra.mxu0 0.0
      %836 = vmatprep.subr.mxu0 0.0
      %837 = vmatpush1.msra.mxu0 0.0
      %838 = vmatprep.subr.mxu0 0.0
      %839 = vmatpush1.msra.mxu0 0.0
      %840 = vmatprep.subr.mxu0 0.0
      %841 = vmatpush1.msra.mxu0 0.0
      %842 = vmatprep.mubr.f32.mxu0 0.0
      %843 = vmatmul.mubr.f32.gmra.mrb[0].mxu0 %v593
      %v844 = vpop.f32.mrb[0].mxu0
      %v845 = vadd.f32 0.0, %v844
      %v846 = vpop.f32.mrb[0].mxu0
      %847 = vmatprep.mubr.f32.mxu0 0.0
      %848 = vmatmul.mubr.f32.gmra.mrb[0].mxu0 %v596
      %v849 = vpop.f32.mrb[0].mxu0
      %v850 = vadd.f32 0.0, %v849
      %v851 = vpop.f32.mrb[0].mxu0
      %852 = vmatprep.mubr.f32.mxu0 0.0
      %853 = vmatmul.mubr.f32.gmra.mrb[0].mxu0 %v599
      %v854 = vpop.f32.mrb[0].mxu0
      %v855 = vadd.f32 0.0, %v854
      %v856 = vpop.f32.mrb[0].mxu0
      %857 = vdwg.mxu0
      %v858 = vmul.f32 %v486, %v486
      %v859 = vmul.f32 %v487, %v487
      %v860 = vmul.f32 %v488, %v488
      %v861 = vmul.f32 %v489, %v489
      %v863 = vsel %vm47, %v858, 0
      %v866 = vsel %vm47, %v859, 0
      %v869 = vsel %vm47, %v860, 0
      %v872 = vsel %vm47, %v861, 0
      %874 = vmatprep.subr.mxu0 0.0
      %875 = vmatpush1.msra.mxu0 %v442
      %876 = vmatprep.subr.mxu0 0.0
      %877 = vmatpush1.msra.mxu0 %v443
      %878 = vmatprep.subr.mxu0 0.0
      %879 = vmatpush1.msra.mxu0 %v444
      %880 = vmatprep.subr.mxu0 0.0
      %881 = vmatpush1.msra.mxu0 %v445
      %882 = vmatprep.subr.mxu0 0.0
      %883 = vmatpush1.msra.mxu0 0.0
      %884 = vmatprep.subr.mxu0 0.0
      %885 = vmatpush1.msra.mxu0 0.0
      %886 = vmatprep.subr.mxu0 0.0
      %887 = vmatpush1.msra.mxu0 0.0
      %888 = vmatprep.subr.mxu0 0.0
      %889 = vmatpush1.msra.mxu0 0.0
      %890 = vmatprep.subr.mxu0 0.0
      %891 = vmatpush1.msra.mxu0 0.0
      %892 = vmatprep.subr.mxu0 0.0
      %893 = vmatpush1.msra.mxu0 0.0
      %894 = vmatprep.subr.mxu0 0.0
      %895 = vmatpush1.msra.mxu0 0.0
      %896 = vmatprep.subr.mxu0 0.0
      %897 = vmatpush1.msra.mxu0 0.0
      %898 = vmatprep.subr.mxu0 0.0
      %899 = vmatpush1.msra.mxu0 0.0
      %900 = vmatprep.subr.mxu0 0.0
      %901 = vmatpush1.msra.mxu0 0.0
      %902 = vmatprep.subr.mxu0 0.0
      %903 = vmatpush1.msra.mxu0 0.0
      %904 = vmatprep.subr.mxu0 0.0
      %905 = vmatpush1.msra.mxu0 0.0
      %906 = vmatprep.subr.mxu0 0.0
      %907 = vmatpush1.msra.mxu0 0.0
      %908 = vmatprep.subr.mxu0 0.0
      %909 = vmatpush1.msra.mxu0 0.0
      %910 = vmatprep.subr.mxu0 0.0
      %911 = vmatpush1.msra.mxu0 0.0
      %912 = vmatprep.subr.mxu0 0.0
      %913 = vmatpush1.msra.mxu0 0.0
      %914 = vmatprep.subr.mxu0 0.0
      %915 = vmatpush1.msra.mxu0 0.0
      %916 = vmatprep.subr.mxu0 0.0
      %917 = vmatpush1.msra.mxu0 0.0
      %918 = vmatprep.subr.mxu0 0.0
      %919 = vmatpush1.msra.mxu0 0.0
      %920 = vmatprep.subr.mxu0 0.0
      %921 = vmatpush1.msra.mxu0 0.0
      %922 = vmatprep.subr.mxu0 0.0
      %923 = vmatpush1.msra.mxu0 0.0
      %924 = vmatprep.subr.mxu0 0.0
      %925 = vmatpush1.msra.mxu0 0.0
      %926 = vmatprep.subr.mxu0 0.0
      %927 = vmatpush1.msra.mxu0 0.0
      %928 = vmatprep.subr.mxu0 0.0
      %929 = vmatpush1.msra.mxu0 0.0
      %930 = vmatprep.subr.mxu0 0.0
      %931 = vmatpush1.msra.mxu0 0.0
      %932 = vmatprep.subr.mxu0 0.0
      %933 = vmatpush1.msra.mxu0 0.0
      %934 = vmatprep.subr.mxu0 0.0
      %935 = vmatpush1.msra.mxu0 0.0
      %936 = vmatprep.subr.mxu0 0.0
      %937 = vmatpush1.msra.mxu0 0.0
      %938 = vmatprep.mubr.f32.mxu0 0.0
      %939 = vmatmul.mubr.f32.gmra.mrb[0].mxu0 %v863
      %v940 = vpop.f32.mrb[0].mxu0
      %v941 = vadd.f32 0.0, %v940
      %v942 = vpop.f32.mrb[0].mxu0
      %943 = vmatprep.mubr.f32.mxu0 0.0
      %944 = vmatmul.mubr.f32.gmra.mrb[0].mxu0 %v866
      %v945 = vpop.f32.mrb[0].mxu0
      %v946 = vadd.f32 0.0, %v945
      %v947 = vpop.f32.mrb[0].mxu0
      %948 = vmatprep.mubr.f32.mxu0 0.0
      %949 = vmatmul.mubr.f32.gmra.mrb[0].mxu0 %v869
      %v950 = vpop.f32.mrb[0].mxu0
      %v951 = vadd.f32 0.0, %v950
      %v952 = vpop.f32.mrb[0].mxu0
      %953 = vmatprep.mubr.f32.mxu0 0.0
      %954 = vmatmul.mubr.f32.gmra.mrb[0].mxu0 %v872
      %v955 = vpop.f32.mrb[0].mxu0
      %v956 = vadd.f32 0.0, %v955
      %v957 = vpop.f32.mrb[0].mxu0
      %958 = vdwg.mxu0
      %959 = vmatprep.subr.mxu0 0.0
      %960 = vmatpush1.msra.mxu0 %v941
      %961 = vmatprep.subr.mxu0 0.0
      %962 = vmatpush1.msra.mxu0 %v946
      %963 = vmatprep.subr.mxu0 0.0
      %964 = vmatpush1.msra.mxu0 %v951
      %965 = vmatprep.subr.mxu0 0.0
      %966 = vmatpush1.msra.mxu0 %v956
      %967 = vmatprep.subr.mxu0 0.0
      %968 = vmatpush1.msra.mxu0 0.0
      %969 = vmatprep.subr.mxu0 0.0
      %970 = vmatpush1.msra.mxu0 0.0
      %971 = vmatprep.subr.mxu0 0.0
      %972 = vmatpush1.msra.mxu0 0.0
      %973 = vmatprep.subr.mxu0 0.0
      %974 = vmatpush1.msra.mxu0 0.0
      %975 = vmatprep.subr.mxu0 0.0
      %976 = vmatpush1.msra.mxu0 0.0
      %977 = vmatprep.subr.mxu0 0.0
      %978 = vmatpush1.msra.mxu0 0.0
      %979 = vmatprep.subr.mxu0 0.0
      %980 = vmatpush1.msra.mxu0 0.0
      %981 = vmatprep.subr.mxu0 0.0
      %982 = vmatpush1.msra.mxu0 0.0
      %983 = vmatprep.subr.mxu0 0.0
      %984 = vmatpush1.msra.mxu0 0.0
      %985 = vmatprep.subr.mxu0 0.0
      %986 = vmatpush1.msra.mxu0 0.0
      %987 = vmatprep.subr.mxu0 0.0
      %988 = vmatpush1.msra.mxu0 0.0
      %989 = vmatprep.subr.mxu0 0.0
      %990 = vmatpush1.msra.mxu0 0.0
      %991 = vmatprep.subr.mxu0 0.0
      %992 = vmatpush1.msra.mxu0 0.0
      %993 = vmatprep.subr.mxu0 0.0
      %994 = vmatpush1.msra.mxu0 0.0
      %995 = vmatprep.subr.mxu0 0.0
      %996 = vmatpush1.msra.mxu0 0.0
      %997 = vmatprep.subr.mxu0 0.0
      %998 = vmatpush1.msra.mxu0 0.0
      %999 = vmatprep.subr.mxu0 0.0
      %1000 = vmatpush1.msra.mxu0 0.0
      %1001 = vmatprep.subr.mxu0 0.0
      %1002 = vmatpush1.msra.mxu0 0.0
      %1003 = vmatprep.subr.mxu0 0.0
      %1004 = vmatpush1.msra.mxu0 0.0
      %1005 = vmatprep.subr.mxu0 0.0
      %1006 = vmatpush1.msra.mxu0 0.0
      %1007 = vmatprep.subr.mxu0 0.0
      %1008 = vmatpush1.msra.mxu0 0.0
      %1009 = vmatprep.subr.mxu0 0.0
      %1010 = vmatpush1.msra.mxu0 0.0
      %1011 = vmatprep.subr.mxu0 0.0
      %1012 = vmatpush1.msra.mxu0 0.0
      %1013 = vmatprep.subr.mxu0 0.0
      %1014 = vmatpush1.msra.mxu0 0.0
      %1015 = vmatprep.subr.mxu0 0.0
      %1016 = vmatpush1.msra.mxu0 0.0
      %1017 = vmatprep.subr.mxu0 0.0
      %1018 = vmatpush1.msra.mxu0 0.0
      %1019 = vmatprep.subr.mxu0 0.0
      %1020 = vmatpush1.msra.mxu0 0.0
      %1021 = vmatprep.subr.mxu0 0.0
      %1022 = vmatpush1.msra.mxu0 0.0
      %1023 = vmatprep.mubr.f32.mxu0 0.0
      %1024 = vmatmul.mubr.f32.gmra.mrb[0].mxu0 %v593
      %v1025 = vpop.f32.mrb[0].mxu0
      %v1026 = vadd.f32 0.0, %v1025
      %v1027 = vpop.f32.mrb[0].mxu0
      %1028 = vmatprep.mubr.f32.mxu0 0.0
      %1029 = vmatmul.mubr.f32.gmra.mrb[0].mxu0 %v596
      %v1030 = vpop.f32.mrb[0].mxu0
      %v1031 = vadd.f32 0.0, %v1030
      %v1032 = vpop.f32.mrb[0].mxu0
      %1033 = vmatprep.mubr.f32.mxu0 0.0
      %1034 = vmatmul.mubr.f32.gmra.mrb[0].mxu0 %v599
      %v1035 = vpop.f32.mrb[0].mxu0
      %v1036 = vadd.f32 0.0, %v1035
      %v1037 = vpop.f32.mrb[0].mxu0
      %1038 = vdwg.mxu0
      %v1039 = vmul.f32 %v491, %v491
      %v1040 = vmul.f32 %v492, %v492
      %v1041 = vmul.f32 %v493, %v493
      %v1042 = vmul.f32 %v494, %v494
      %v1044 = vsel %vm47, %v1039, 0
      %v1047 = vsel %vm47, %v1040, 0
      %v1050 = vsel %vm47, %v1041, 0
      %v1053 = vsel %vm47, %v1042, 0
      %1055 = vmatprep.subr.mxu0 0.0
      %1056 = vmatpush1.msra.mxu0 %v442
      %1057 = vmatprep.subr.mxu0 0.0
      %1058 = vmatpush1.msra.mxu0 %v443
      %1059 = vmatprep.subr.mxu0 0.0
      %1060 = vmatpush1.msra.mxu0 %v444
      %1061 = vmatprep.subr.mxu0 0.0
      %1062 = vmatpush1.msra.mxu0 %v445
      %1063 = vmatprep.subr.mxu0 0.0
      %1064 = vmatpush1.msra.mxu0 0.0
      %1065 = vmatprep.subr.mxu0 0.0
      %1066 = vmatpush1.msra.mxu0 0.0
      %1067 = vmatprep.subr.mxu0 0.0
      %1068 = vmatpush1.msra.mxu0 0.0
      %1069 = vmatprep.subr.mxu0 0.0
      %1070 = vmatpush1.msra.mxu0 0.0
      %1071 = vmatprep.subr.mxu0 0.0
      %1072 = vmatpush1.msra.mxu0 0.0
      %1073 = vmatprep.subr.mxu0 0.0
      %1074 = vmatpush1.msra.mxu0 0.0
      %1075 = vmatprep.subr.mxu0 0.0
      %1076 = vmatpush1.msra.mxu0 0.0
      %1077 = vmatprep.subr.mxu0 0.0
      %1078 = vmatpush1.msra.mxu0 0.0
      %1079 = vmatprep.subr.mxu0 0.0
      %1080 = vmatpush1.msra.mxu0 0.0
      %1081 = vmatprep.subr.mxu0 0.0
      %1082 = vmatpush1.msra.mxu0 0.0
      %1083 = vmatprep.subr.mxu0 0.0
      %1084 = vmatpush1.msra.mxu0 0.0
      %1085 = vmatprep.subr.mxu0 0.0
      %1086 = vmatpush1.msra.mxu0 0.0
      %1087 = vmatprep.subr.mxu0 0.0
      %1088 = vmatpush1.msra.mxu0 0.0
      %1089 = vmatprep.subr.mxu0 0.0
      %1090 = vmatpush1.msra.mxu0 0.0
      %1091 = vmatprep.subr.mxu0 0.0
      %1092 = vmatpush1.msra.mxu0 0.0
      %1093 = vmatprep.subr.mxu0 0.0
      %1094 = vmatpush1.msra.mxu0 0.0
      %1095 = vmatprep.subr.mxu0 0.0
      %1096 = vmatpush1.msra.mxu0 0.0
      %1097 = vmatprep.subr.mxu0 0.0
      %1098 = vmatpush1.msra.mxu0 0.0
      %1099 = vmatprep.subr.mxu0 0.0
      %1100 = vmatpush1.msra.mxu0 0.0
      %1101 = vmatprep.subr.mxu0 0.0
      %1102 = vmatpush1.msra.mxu0 0.0
      %1103 = vmatprep.subr.mxu0 0.0
      %1104 = vmatpush1.msra.mxu0 0.0
      %1105 = vmatprep.subr.mxu0 0.0
      %1106 = vmatpush1.msra.mxu0 0.0
      %1107 = vmatprep.subr.mxu0 0.0
      %1108 = vmatpush1.msra.mxu0 0.0
      %1109 = vmatprep.subr.mxu0 0.0
      %1110 = vmatpush1.msra.mxu0 0.0
      %1111 = vmatprep.subr.mxu0 0.0
      %1112 = vmatpush1.msra.mxu0 0.0
      %1113 = vmatprep.subr.mxu0 0.0
      %1114 = vmatpush1.msra.mxu0 0.0
      %1115 = vmatprep.subr.mxu0 0.0
      %1116 = vmatpush1.msra.mxu0 0.0
      %1117 = vmatprep.subr.mxu0 0.0
      %1118 = vmatpush1.msra.mxu0 0.0
      %1119 = vmatprep.mubr.f32.mxu0 0.0
      %1120 = vmatmul.mubr.f32.gmra.mrb[0].mxu0 %v1044
      %v1121 = vpop.f32.mrb[0].mxu0
      %v1122 = vadd.f32 0.0, %v1121
      %v1123 = vpop.f32.mrb[0].mxu0
      %1124 = vmatprep.mubr.f32.mxu0 0.0
      %1125 = vmatmul.mubr.f32.gmra.mrb[0].mxu0 %v1047
      %v1126 = vpop.f32.mrb[0].mxu0
      %v1127 = vadd.f32 0.0, %v1126
      %v1128 = vpop.f32.mrb[0].mxu0
      %1129 = vmatprep.mubr.f32.mxu0 0.0
      %1130 = vmatmul.mubr.f32.gmra.mrb[0].mxu0 %v1050
      %v1131 = vpop.f32.mrb[0].mxu0
      %v1132 = vadd.f32 0.0, %v1131
      %v1133 = vpop.f32.mrb[0].mxu0
      %1134 = vmatprep.mubr.f32.mxu0 0.0
      %1135 = vmatmul.mubr.f32.gmra.mrb[0].mxu0 %v1053
      %v1136 = vpop.f32.mrb[0].mxu0
      %v1137 = vadd.f32 0.0, %v1136
      %v1138 = vpop.f32.mrb[0].mxu0
      %1139 = vdwg.mxu0
      %1140 = vmatprep.subr.mxu0 0.0
      %1141 = vmatpush1.msra.mxu0 %v1122
      %1142 = vmatprep.subr.mxu0 0.0
      %1143 = vmatpush1.msra.mxu0 %v1127
      %1144 = vmatprep.subr.mxu0 0.0
      %1145 = vmatpush1.msra.mxu0 %v1132
      %1146 = vmatprep.subr.mxu0 0.0
      %1147 = vmatpush1.msra.mxu0 %v1137
      %1148 = vmatprep.subr.mxu0 0.0
      %1149 = vmatpush1.msra.mxu0 0.0
      %1150 = vmatprep.subr.mxu0 0.0
      %1151 = vmatpush1.msra.mxu0 0.0
      %1152 = vmatprep.subr.mxu0 0.0
      %1153 = vmatpush1.msra.mxu0 0.0
      %1154 = vmatprep.subr.mxu0 0.0
      %1155 = vmatpush1.msra.mxu0 0.0
      %1156 = vmatprep.subr.mxu0 0.0
      %1157 = vmatpush1.msra.mxu0 0.0
      %1158 = vmatprep.subr.mxu0 0.0
      %1159 = vmatpush1.msra.mxu0 0.0
      %1160 = vmatprep.subr.mxu0 0.0
      %1161 = vmatpush1.msra.mxu0 0.0
      %1162 = vmatprep.subr.mxu0 0.0
      %1163 = vmatpush1.msra.mxu0 0.0
      %1164 = vmatprep.subr.mxu0 0.0
      %1165 = vmatpush1.msra.mxu0 0.0
      %1166 = vmatprep.subr.mxu0 0.0
      %1167 = vmatpush1.msra.mxu0 0.0
      %1168 = vmatprep.subr.mxu0 0.0
      %1169 = vmatpush1.msra.mxu0 0.0
      %1170 = vmatprep.subr.mxu0 0.0
      %1171 = vmatpush1.msra.mxu0 0.0
      %1172 = vmatprep.subr.mxu0 0.0
      %1173 = vmatpush1.msra.mxu0 0.0
      %1174 = vmatprep.subr.mxu0 0.0
      %1175 = vmatpush1.msra.mxu0 0.0
      %1176 = vmatprep.subr.mxu0 0.0
      %1177 = vmatpush1.msra.mxu0 0.0
      %1178 = vmatprep.subr.mxu0 0.0
      %1179 = vmatpush1.msra.mxu0 0.0
      %1180 = vmatprep.subr.mxu0 0.0
      %1181 = vmatpush1.msra.mxu0 0.0
      %1182 = vmatprep.subr.mxu0 0.0
      %1183 = vmatpush1.msra.mxu0 0.0
      %1184 = vmatprep.subr.mxu0 0.0
      %1185 = vmatpush1.msra.mxu0 0.0
      %1186 = vmatprep.subr.mxu0 0.0
      %1187 = vmatpush1.msra.mxu0 0.0
      %1188 = vmatprep.subr.mxu0 0.0
      %1189 = vmatpush1.msra.mxu0 0.0
      %1190 = vmatprep.subr.mxu0 0.0
      %1191 = vmatpush1.msra.mxu0 0.0
      %1192 = vmatprep.subr.mxu0 0.0
      %1193 = vmatpush1.msra.mxu0 0.0
      %1194 = vmatprep.subr.mxu0 0.0
      %1195 = vmatpush1.msra.mxu0 0.0
      %1196 = vmatprep.subr.mxu0 0.0
      %1197 = vmatpush1.msra.mxu0 0.0
      %1198 = vmatprep.subr.mxu0 0.0
      %1199 = vmatpush1.msra.mxu0 0.0
      %1200 = vmatprep.subr.mxu0 0.0
      %1201 = vmatpush1.msra.mxu0 0.0
      %1202 = vmatprep.subr.mxu0 0.0
      %1203 = vmatpush1.msra.mxu0 0.0
      %1204 = vmatprep.mubr.f32.mxu0 0.0
      %1205 = vmatmul.mubr.f32.gmra.mrb[0].mxu0 %v593
      %v1206 = vpop.f32.mrb[0].mxu0
      %v1207 = vadd.f32 0.0, %v1206
      %v1208 = vpop.f32.mrb[0].mxu0
      %1209 = vmatprep.mubr.f32.mxu0 0.0
      %1210 = vmatmul.mubr.f32.gmra.mrb[0].mxu0 %v596
      %v1211 = vpop.f32.mrb[0].mxu0
      %v1212 = vadd.f32 0.0, %v1211
      %v1213 = vpop.f32.mrb[0].mxu0
      %1214 = vmatprep.mubr.f32.mxu0 0.0
      %1215 = vmatmul.mubr.f32.gmra.mrb[0].mxu0 %v599
      %v1216 = vpop.f32.mrb[0].mxu0
      %v1217 = vadd.f32 0.0, %v1216
      %v1218 = vpop.f32.mrb[0].mxu0
      %1219 = vdwg.mxu0
      %v1220 = vmul.f32 %v486, %v491
      %v1221 = vmul.f32 %v487, %v492
      %v1222 = vmul.f32 %v488, %v493
      %v1223 = vmul.f32 %v489, %v494
      %v1225 = vsel %vm47, %v1220, 0
      %v1228 = vsel %vm47, %v1221, 0
      %v1231 = vsel %vm47, %v1222, 0
      %v1234 = vsel %vm47, %v1223, 0
      %1236 = vmatprep.subr.mxu0 0.0
      %1237 = vmatpush1.msra.mxu0 %v442
      %1238 = vmatprep.subr.mxu0 0.0
      %1239 = vmatpush1.msra.mxu0 %v443
      %1240 = vmatprep.subr.mxu0 0.0
      %1241 = vmatpush1.msra.mxu0 %v444
      %1242 = vmatprep.subr.mxu0 0.0
      %1243 = vmatpush1.msra.mxu0 %v445
      %1244 = vmatprep.subr.mxu0 0.0
      %1245 = vmatpush1.msra.mxu0 0.0
      %1246 = vmatprep.subr.mxu0 0.0
      %1247 = vmatpush1.msra.mxu0 0.0
      %1248 = vmatprep.subr.mxu0 0.0
      %1249 = vmatpush1.msra.mxu0 0.0
      %1250 = vmatprep.subr.mxu0 0.0
      %1251 = vmatpush1.msra.mxu0 0.0
      %1252 = vmatprep.subr.mxu0 0.0
      %1253 = vmatpush1.msra.mxu0 0.0
      %1254 = vmatprep.subr.mxu0 0.0
      %1255 = vmatpush1.msra.mxu0 0.0
      %1256 = vmatprep.subr.mxu0 0.0
      %1257 = vmatpush1.msra.mxu0 0.0
      %1258 = vmatprep.subr.mxu0 0.0
      %1259 = vmatpush1.msra.mxu0 0.0
      %1260 = vmatprep.subr.mxu0 0.0
      %1261 = vmatpush1.msra.mxu0 0.0
      %1262 = vmatprep.subr.mxu0 0.0
      %1263 = vmatpush1.msra.mxu0 0.0
      %1264 = vmatprep.subr.mxu0 0.0
      %1265 = vmatpush1.msra.mxu0 0.0
      %1266 = vmatprep.subr.mxu0 0.0
      %1267 = vmatpush1.msra.mxu0 0.0
      %1268 = vmatprep.subr.mxu0 0.0
      %1269 = vmatpush1.msra.mxu0 0.0
      %1270 = vmatprep.subr.mxu0 0.0
      %1271 = vmatpush1.msra.mxu0 0.0
      %1272 = vmatprep.subr.mxu0 0.0
      %1273 = vmatpush1.msra.mxu0 0.0
      %1274 = vmatprep.subr.mxu0 0.0
      %1275 = vmatpush1.msra.mxu0 0.0
      %1276 = vmatprep.subr.mxu0 0.0
      %1277 = vmatpush1.msra.mxu0 0.0
      %1278 = vmatprep.subr.mxu0 0.0
      %1279 = vmatpush1.msra.mxu0 0.0
      %1280 = vmatprep.subr.mxu0 0.0
      %1281 = vmatpush1.msra.mxu0 0.0
      %1282 = vmatprep.subr.mxu0 0.0
      %1283 = vmatpush1.msra.mxu0 0.0
      %1284 = vmatprep.subr.mxu0 0.0
      %1285 = vmatpush1.msra.mxu0 0.0
      %1286 = vmatprep.subr.mxu0 0.0
      %1287 = vmatpush1.msra.mxu0 0.0
      %1288 = vmatprep.subr.mxu0 0.0
      %1289 = vmatpush1.msra.mxu0 0.0
      %1290 = vmatprep.subr.mxu0 0.0
      %1291 = vmatpush1.msra.mxu0 0.0
      %1292 = vmatprep.subr.mxu0 0.0
      %1293 = vmatpush1.msra.mxu0 0.0
      %1294 = vmatprep.subr.mxu0 0.0
      %1295 = vmatpush1.msra.mxu0 0.0
      %1296 = vmatprep.subr.mxu0 0.0
      %1297 = vmatpush1.msra.mxu0 0.0
      %1298 = vmatprep.subr.mxu0 0.0
      %1299 = vmatpush1.msra.mxu0 0.0
      %1300 = vmatprep.mubr.f32.mxu0 0.0
      %1301 = vmatmul.mubr.f32.gmra.mrb[0].mxu0 %v1225
      %v1302 = vpop.f32.mrb[0].mxu0
      %v1303 = vadd.f32 0.0, %v1302
      %v1304 = vpop.f32.mrb[0].mxu0
      %1305 = vmatprep.mubr.f32.mxu0 0.0
      %1306 = vmatmul.mubr.f32.gmra.mrb[0].mxu0 %v1228
      %v1307 = vpop.f32.mrb[0].mxu0
      %v1308 = vadd.f32 0.0, %v1307
      %v1309 = vpop.f32.mrb[0].mxu0
      %1310 = vmatprep.mubr.f32.mxu0 0.0
      %1311 = vmatmul.mubr.f32.gmra.mrb[0].mxu0 %v1231
      %v1312 = vpop.f32.mrb[0].mxu0
      %v1313 = vadd.f32 0.0, %v1312
      %v1314 = vpop.f32.mrb[0].mxu0
      %1315 = vmatprep.mubr.f32.mxu0 0.0
      %1316 = vmatmul.mubr.f32.gmra.mrb[0].mxu0 %v1234
      %v1317 = vpop.f32.mrb[0].mxu0
      %v1318 = vadd.f32 0.0, %v1317
      %v1319 = vpop.f32.mrb[0].mxu0
      %1320 = vdwg.mxu0
      %1321 = vmatprep.subr.mxu0 0.0
      %1322 = vmatpush1.msra.mxu0 %v1303
      %1323 = vmatprep.subr.mxu0 0.0
      %1324 = vmatpush1.msra.mxu0 %v1308
      %1325 = vmatprep.subr.mxu0 0.0
      %1326 = vmatpush1.msra.mxu0 %v1313
      %1327 = vmatprep.subr.mxu0 0.0
      %1328 = vmatpush1.msra.mxu0 %v1318
      %1329 = vmatprep.subr.mxu0 0.0
      %1330 = vmatpush1.msra.mxu0 0.0
      %1331 = vmatprep.subr.mxu0 0.0
      %1332 = vmatpush1.msra.mxu0 0.0
      %1333 = vmatprep.subr.mxu0 0.0
      %1334 = vmatpush1.msra.mxu0 0.0
      %1335 = vmatprep.subr.mxu0 0.0
      %1336 = vmatpush1.msra.mxu0 0.0
      %1337 = vmatprep.subr.mxu0 0.0
      %1338 = vmatpush1.msra.mxu0 0.0
      %1339 = vmatprep.subr.mxu0 0.0
      %1340 = vmatpush1.msra.mxu0 0.0
      %1341 = vmatprep.subr.mxu0 0.0
      %1342 = vmatpush1.msra.mxu0 0.0
      %1343 = vmatprep.subr.mxu0 0.0
      %1344 = vmatpush1.msra.mxu0 0.0
      %1345 = vmatprep.subr.mxu0 0.0
      %1346 = vmatpush1.msra.mxu0 0.0
      %1347 = vmatprep.subr.mxu0 0.0
      %1348 = vmatpush1.msra.mxu0 0.0
      %1349 = vmatprep.subr.mxu0 0.0
      %1350 = vmatpush1.msra.mxu0 0.0
      %1351 = vmatprep.subr.mxu0 0.0
      %1352 = vmatpush1.msra.mxu0 0.0
      %1353 = vmatprep.subr.mxu0 0.0
      %1354 = vmatpush1.msra.mxu0 0.0
      %1355 = vmatprep.subr.mxu0 0.0
      %1356 = vmatpush1.msra.mxu0 0.0
      %1357 = vmatprep.subr.mxu0 0.0
      %1358 = vmatpush1.msra.mxu0 0.0
      %1359 = vmatprep.subr.mxu0 0.0
      %1360 = vmatpush1.msra.mxu0 0.0
      %1361 = vmatprep.subr.mxu0 0.0
      %1362 = vmatpush1.msra.mxu0 0.0
      %1363 = vmatprep.subr.mxu0 0.0
      %1364 = vmatpush1.msra.mxu0 0.0
      %1365 = vmatprep.subr.mxu0 0.0
      %1366 = vmatpush1.msra.mxu0 0.0
      %1367 = vmatprep.subr.mxu0 0.0
      %1368 = vmatpush1.msra.mxu0 0.0
      %1369 = vmatprep.subr.mxu0 0.0
      %1370 = vmatpush1.msra.mxu0 0.0
      %1371 = vmatprep.subr.mxu0 0.0
      %1372 = vmatpush1.msra.mxu0 0.0
      %1373 = vmatprep.subr.mxu0 0.0
      %1374 = vmatpush1.msra.mxu0 0.0
      %1375 = vmatprep.subr.mxu0 0.0
      %1376 = vmatpush1.msra.mxu0 0.0
      %1377 = vmatprep.subr.mxu0 0.0
      %1378 = vmatpush1.msra.mxu0 0.0
      %1379 = vmatprep.subr.mxu0 0.0
      %1380 = vmatpush1.msra.mxu0 0.0
      %1381 = vmatprep.subr.mxu0 0.0
      %1382 = vmatpush1.msra.mxu0 0.0
      %1383 = vmatprep.subr.mxu0 0.0
      %1384 = vmatpush1.msra.mxu0 0.0
      %1385 = vmatprep.mubr.f32.mxu0 0.0
      %1386 = vmatmul.mubr.f32.gmra.mrb[0].mxu0 %v593
      %v1387 = vpop.f32.mrb[0].mxu0
      %v1388 = vadd.f32 0.0, %v1387
      %v1389 = vpop.f32.mrb[0].mxu0
      %1390 = vmatprep.mubr.f32.mxu0 0.0
      %1391 = vmatmul.mubr.f32.gmra.mrb[0].mxu0 %v596
      %v1392 = vpop.f32.mrb[0].mxu0
      %v1393 = vadd.f32 0.0, %v1392
      %v1394 = vpop.f32.mrb[0].mxu0
      %1395 = vmatprep.mubr.f32.mxu0 0.0
      %1396 = vmatmul.mubr.f32.gmra.mrb[0].mxu0 %v599
      %v1397 = vpop.f32.mrb[0].mxu0
      %v1398 = vadd.f32 0.0, %v1397
      %v1399 = vpop.f32.mrb[0].mxu0
      %1400 = vdwg.mxu0
      %v1401 = vmul.f32 %v668, %v668
      %v1402 = vmul.f32 %v673, %v673
      %v1403 = vmul.f32 %v678, %v678
      %v1404 = vmul.f32 %v845, %v845
      %v1405 = vmul.f32 %v850, %v850
      %v1406 = vmul.f32 %v855, %v855
      %v1407 = vmul.f32 %v668, %v845
      %v1408 = vmul.f32 %v673, %v850
      %v1409 = vmul.f32 %v678, %v855
      %v1410 = vsub.f32 %v1026, %v1401
      %v1411 = vsub.f32 %v1031, %v1402
      %v1412 = vsub.f32 %v1036, %v1403
      %v1413 = vsub.f32 %v1207, %v1404
      %v1414 = vsub.f32 %v1212, %v1405
      %v1415 = vsub.f32 %v1217, %v1406
      %v1416 = vsub.f32 %v1388, %v1407
      %v1417 = vsub.f32 %v1393, %v1408
      %v1418 = vsub.f32 %v1398, %v1409
      %v1419 = vmul.f32 %v1416, 2.0
      %v1420 = vmul.f32 %v1417, 2.0
      %v1421 = vmul.f32 %v1418, 2.0
      %v1422 = vstv %s200
      %v1423 = vadd.f32 %v1419, %v1422
      %v1424 = vadd.f32 %v1420, %v1422
      %v1425 = vadd.f32 %v1421, %v1422
      %v1426 = vadd.f32 %v1410, %v1413
      %v1427 = vadd.f32 %v1411, %v1414
      %v1428 = vadd.f32 %v1412, %v1415
      %v1429 = vadd.f32 %v1426, %v1422
      %v1430 = vadd.f32 %v1427, %v1422
      %v1431 = vadd.f32 %v1428, %v1422
      %v1432 = vrcp.pop %v1429
      %v1433 = vmul.f32 %v1423, %v1432
      %v1434 = vrcp.pop %v1430
      %v1435 = vmul.f32 %v1424, %v1434
      %v1436 = vrcp.pop %v1431
      %v1437 = vmul.f32 %v1425, %v1436
      %v1438 = vmul.f32 %v1407, 2.0
      %v1439 = vmul.f32 %v1408, 2.0
      %v1440 = vmul.f32 %v1409, 2.0
      %v1441 = vstv %s198
      %v1442 = vadd.f32 %v1438, %v1441
      %v1443 = vadd.f32 %v1439, %v1441
      %v1444 = vadd.f32 %v1440, %v1441
      %v1445 = vmul.f32 %v1442, %v1423
      %v1446 = vmul.f32 %v1443, %v1424
      %v1447 = vmul.f32 %v1444, %v1425
      %v1448 = vadd.f32 %v1401, %v1404
      %v1449 = vadd.f32 %v1402, %v1405
      %v1450 = vadd.f32 %v1403, %v1406
      %v1451 = vadd.f32 %v1448, %v1441
      %v1452 = vadd.f32 %v1449, %v1441
      %v1453 = vadd.f32 %v1450, %v1441
      %v1454 = vmul.f32 %v1451, %v1429
      %v1455 = vmul.f32 %v1452, %v1430
      %v1456 = vmul.f32 %v1453, %v1431
      %v1457 = vrcp.pop %v1454
      %v1458 = vmul.f32 %v1445, %v1457
      %v1459 = vrcp.pop %v1455
      %v1460 = vmul.f32 %v1446, %v1459
      %v1461 = vrcp.pop %v1456
      %v1462 = vmul.f32 %v1447, %v1461
      %1463 = vmatprep.subr.mxu0 0.0
      %1464 = vmatpush1.msra.mxu0 %v472
      %1465 = vmatprep.subr.mxu0 0.0
      %1466 = vmatpush1.msra.mxu0 %v473
      %1467 = vmatprep.subr.mxu0 0.0
      %1468 = vmatpush1.msra.mxu0 %v474
      %1469 = vmatprep.subr.mxu0 0.0
      %1470 = vmatpush1.msra.mxu0 %v475
      %1471 = vmatprep.subr.mxu0 0.0
      %1472 = vmatpush1.msra.mxu0 0.0
      %1473 = vmatprep.subr.mxu0 0.0
      %1474 = vmatpush1.msra.mxu0 0.0
      %1475 = vmatprep.subr.mxu0 0.0
      %1476 = vmatpush1.msra.mxu0 0.0
      %1477 = vmatprep.subr.mxu0 0.0
      %1478 = vmatpush1.msra.mxu0 0.0
      %1479 = vmatprep.subr.mxu0 0.0
      %1480 = vmatpush1.msra.mxu0 0.0
      %1481 = vmatprep.subr.mxu0 0.0
      %1482 = vmatpush1.msra.mxu0 0.0
      %1483 = vmatprep.subr.mxu0 0.0
      %1484 = vmatpush1.msra.mxu0 0.0
      %1485 = vmatprep.subr.mxu0 0.0
      %1486 = vmatpush1.msra.mxu0 0.0
      %1487 = vmatprep.subr.mxu0 0.0
      %1488 = vmatpush1.msra.mxu0 0.0
      %1489 = vmatprep.subr.mxu0 0.0
      %1490 = vmatpush1.msra.mxu0 0.0
      %1491 = vmatprep.subr.mxu0 0.0
      %1492 = vmatpush1.msra.mxu0 0.0
      %1493 = vmatprep.subr.mxu0 0.0
      %1494 = vmatpush1.msra.mxu0 0.0
      %1495 = vmatprep.subr.mxu0 0.0
      %1496 = vmatpush1.msra.mxu0 0.0
      %1497 = vmatprep.subr.mxu0 0.0
      %1498 = vmatpush1.msra.mxu0 0.0
      %1499 = vmatprep.subr.mxu0 0.0
      %1500 = vmatpush1.msra.mxu0 0.0
      %1501 = vmatprep.subr.mxu0 0.0
      %1502 = vmatpush1.msra.mxu0 0.0
      %1503 = vmatprep.subr.mxu0 0.0
      %1504 = vmatpush1.msra.mxu0 0.0
      %1505 = vmatprep.subr.mxu0 0.0
      %1506 = vmatpush1.msra.mxu0 0.0
      %1507 = vmatprep.subr.mxu0 0.0
      %1508 = vmatpush1.msra.mxu0 0.0
      %1509 = vmatprep.subr.mxu0 0.0
      %1510 = vmatpush1.msra.mxu0 0.0
      %1511 = vmatprep.subr.mxu0 0.0
      %1512 = vmatpush1.msra.mxu0 0.0
      %1513 = vmatprep.subr.mxu0 0.0
      %1514 = vmatpush1.msra.mxu0 0.0
      %1515 = vmatprep.subr.mxu0 0.0
      %1516 = vmatpush1.msra.mxu0 0.0
      %1517 = vmatprep.subr.mxu0 0.0
      %1518 = vmatpush1.msra.mxu0 0.0
      %1519 = vmatprep.subr.mxu0 0.0
      %1520 = vmatpush1.msra.mxu0 0.0
      %1521 = vmatprep.subr.mxu0 0.0
      %1522 = vmatpush1.msra.mxu0 0.0
      %1523 = vmatprep.subr.mxu0 0.0
      %1524 = vmatpush1.msra.mxu0 0.0
      %1525 = vmatprep.subr.mxu0 0.0
      %1526 = vmatpush1.msra.mxu0 0.0
      %1527 = vmatprep.mubr.f32.mxu0 0.0
      %1528 = vmatmul.mubr.f32.gmra.mrb[0].mxu0 %v496
      %v1529 = vpop.f32.mrb[0].mxu0
      %v1530 = vadd.f32 0.0, %v1529
      %v1531 = vpop.f32.mrb[0].mxu0
      %1532 = vmatprep.mubr.f32.mxu0 0.0
      %1533 = vmatmul.mubr.f32.gmra.mrb[0].mxu0 %v499
      %v1534 = vpop.f32.mrb[0].mxu0
      %v1535 = vadd.f32 0.0, %v1534
      %v1536 = vpop.f32.mrb[0].mxu0
      %1537 = vmatprep.mubr.f32.mxu0 0.0
      %1538 = vmatmul.mubr.f32.gmra.mrb[0].mxu0 %v502
      %v1539 = vpop.f32.mrb[0].mxu0
      %v1540 = vadd.f32 0.0, %v1539
      %v1541 = vpop.f32.mrb[0].mxu0
      %1542 = vmatprep.mubr.f32.mxu0 0.0
      %1543 = vmatmul.mubr.f32.gmra.mrb[0].mxu0 %v505
      %v1544 = vpop.f32.mrb[0].mxu0
      %v1545 = vadd.f32 0.0, %v1544
      %v1546 = vpop.f32.mrb[0].mxu0
      %1547 = vdwg.mxu0
      %v1549 = vsel %vm47, %v456, 0
      %v1552 = vsel %vm47, %v457, 0
      %1554 = vmatprep.subr.mxu0 0.0
      %1555 = vmatpush1.msra.mxu0 %v1530
      %1556 = vmatprep.subr.mxu0 0.0
      %1557 = vmatpush1.msra.mxu0 %v1535
      %1558 = vmatprep.subr.mxu0 0.0
      %1559 = vmatpush1.msra.mxu0 %v1540
      %1560 = vmatprep.subr.mxu0 0.0
      %1561 = vmatpush1.msra.mxu0 %v1545
      %1562 = vmatprep.subr.mxu0 0.0
      %1563 = vmatpush1.msra.mxu0 0.0
      %1564 = vmatprep.subr.mxu0 0.0
      %1565 = vmatpush1.msra.mxu0 0.0
      %1566 = vmatprep.subr.mxu0 0.0
      %1567 = vmatpush1.msra.mxu0 0.0
      %1568 = vmatprep.subr.mxu0 0.0
      %1569 = vmatpush1.msra.mxu0 0.0
      %1570 = vmatprep.subr.mxu0 0.0
      %1571 = vmatpush1.msra.mxu0 0.0
      %1572 = vmatprep.subr.mxu0 0.0
      %1573 = vmatpush1.msra.mxu0 0.0
      %1574 = vmatprep.subr.mxu0 0.0
      %1575 = vmatpush1.msra.mxu0 0.0
      %1576 = vmatprep.subr.mxu0 0.0
      %1577 = vmatpush1.msra.mxu0 0.0
      %1578 = vmatprep.subr.mxu0 0.0
      %1579 = vmatpush1.msra.mxu0 0.0
      %1580 = vmatprep.subr.mxu0 0.0
      %1581 = vmatpush1.msra.mxu0 0.0
      %1582 = vmatprep.subr.mxu0 0.0
      %1583 = vmatpush1.msra.mxu0 0.0
      %1584 = vmatprep.subr.mxu0 0.0
      %1585 = vmatpush1.msra.mxu0 0.0
      %1586 = vmatprep.subr.mxu0 0.0
      %1587 = vmatpush1.msra.mxu0 0.0
      %1588 = vmatprep.subr.mxu0 0.0
      %1589 = vmatpush1.msra.mxu0 0.0
      %1590 = vmatprep.subr.mxu0 0.0
      %1591 = vmatpush1.msra.mxu0 0.0
      %1592 = vmatprep.subr.mxu0 0.0
      %1593 = vmatpush1.msra.mxu0 0.0
      %1594 = vmatprep.subr.mxu0 0.0
      %1595 = vmatpush1.msra.mxu0 0.0
      %1596 = vmatprep.subr.mxu0 0.0
      %1597 = vmatpush1.msra.mxu0 0.0
      %1598 = vmatprep.subr.mxu0 0.0
      %1599 = vmatpush1.msra.mxu0 0.0
      %1600 = vmatprep.subr.mxu0 0.0
      %1601 = vmatpush1.msra.mxu0 0.0
      %1602 = vmatprep.subr.mxu0 0.0
      %1603 = vmatpush1.msra.mxu0 0.0
      %1604 = vmatprep.subr.mxu0 0.0
      %1605 = vmatpush1.msra.mxu0 0.0
      %1606 = vmatprep.subr.mxu0 0.0
      %1607 = vmatpush1.msra.mxu0 0.0
      %1608 = vmatprep.subr.mxu0 0.0
      %1609 = vmatpush1.msra.mxu0 0.0
      %1610 = vmatprep.subr.mxu0 0.0
      %1611 = vmatpush1.msra.mxu0 0.0
      %1612 = vmatprep.subr.mxu0 0.0
      %1613 = vmatpush1.msra.mxu0 0.0
      %1614 = vmatprep.subr.mxu0 0.0
      %1615 = vmatpush1.msra.mxu0 0.0
      %1616 = vmatprep.subr.mxu0 0.0
      %1617 = vmatpush1.msra.mxu0 0.0
      %1618 = vmatprep.mubr.f32.mxu0 0.0
      %1619 = vmatmul.mubr.f32.gmra.mrb[0].mxu0 %v1549
      %v1620 = vpop.f32.mrb[0].mxu0
      %v1621 = vadd.f32 0.0, %v1620
      %v1622 = vpop.f32.mrb[0].mxu0
      %1623 = vmatprep.mubr.f32.mxu0 0.0
      %1624 = vmatmul.mubr.f32.gmra.mrb[0].mxu0 %v1552
      %v1625 = vpop.f32.mrb[0].mxu0
      %v1626 = vadd.f32 0.0, %v1625
      %v1627 = vpop.f32.mrb[0].mxu0
      %1628 = vdwg.mxu0
      %s1629 = smul.u32 %s477, 16
      %s1630 = scalar_lea.vmem [#allocation2], %s1629
      %vm1631 = vcmask 130048
      %1632 = vst.msk [vmem:[%s1630] sm:$0xff] %vm1631, %v1621
      %1633 = vst.msk [vmem:[%s1630 + $0x8] sm:$0xff] %vm1631, %v1626
      %1634 = vmatprep.subr.mxu0 0.0
      %1635 = vmatpush1.msra.mxu0 %v472
      %1636 = vmatprep.subr.mxu0 0.0
      %1637 = vmatpush1.msra.mxu0 %v473
      %1638 = vmatprep.subr.mxu0 0.0
      %1639 = vmatpush1.msra.mxu0 %v474
      %1640 = vmatprep.subr.mxu0 0.0
      %1641 = vmatpush1.msra.mxu0 %v475
      %1642 = vmatprep.subr.mxu0 0.0
      %1643 = vmatpush1.msra.mxu0 0.0
      %1644 = vmatprep.subr.mxu0 0.0
      %1645 = vmatpush1.msra.mxu0 0.0
      %1646 = vmatprep.subr.mxu0 0.0
      %1647 = vmatpush1.msra.mxu0 0.0
      %1648 = vmatprep.subr.mxu0 0.0
      %1649 = vmatpush1.msra.mxu0 0.0
      %1650 = vmatprep.subr.mxu0 0.0
      %1651 = vmatpush1.msra.mxu0 0.0
      %1652 = vmatprep.subr.mxu0 0.0
      %1653 = vmatpush1.msra.mxu0 0.0
      %1654 = vmatprep.subr.mxu0 0.0
      %1655 = vmatpush1.msra.mxu0 0.0
      %1656 = vmatprep.subr.mxu0 0.0
      %1657 = vmatpush1.msra.mxu0 0.0
      %1658 = vmatprep.subr.mxu0 0.0
      %1659 = vmatpush1.msra.mxu0 0.0
      %1660 = vmatprep.subr.mxu0 0.0
      %1661 = vmatpush1.msra.mxu0 0.0
      %1662 = vmatprep.subr.mxu0 0.0
      %1663 = vmatpush1.msra.mxu0 0.0
      %1664 = vmatprep.subr.mxu0 0.0
      %1665 = vmatpush1.msra.mxu0 0.0
      %1666 = vmatprep.subr.mxu0 0.0
      %1667 = vmatpush1.msra.mxu0 0.0
      %1668 = vmatprep.subr.mxu0 0.0
      %1669 = vmatpush1.msra.mxu0 0.0
      %1670 = vmatprep.subr.mxu0 0.0
      %1671 = vmatpush1.msra.mxu0 0.0
      %1672 = vmatprep.subr.mxu0 0.0
      %1673 = vmatpush1.msra.mxu0 0.0
      %1674 = vmatprep.subr.mxu0 0.0
      %1675 = vmatpush1.msra.mxu0 0.0
      %1676 = vmatprep.subr.mxu0 0.0
      %1677 = vmatpush1.msra.mxu0 0.0
      %1678 = vmatprep.subr.mxu0 0.0
      %1679 = vmatpush1.msra.mxu0 0.0
      %1680 = vmatprep.subr.mxu0 0.0
      %1681 = vmatpush1.msra.mxu0 0.0
      %1682 = vmatprep.subr.mxu0 0.0
      %1683 = vmatpush1.msra.mxu0 0.0
      %1684 = vmatprep.subr.mxu0 0.0
      %1685 = vmatpush1.msra.mxu0 0.0
      %1686 = vmatprep.subr.mxu0 0.0
      %1687 = vmatpush1.msra.mxu0 0.0
      %1688 = vmatprep.subr.mxu0 0.0
      %1689 = vmatpush1.msra.mxu0 0.0
      %1690 = vmatprep.subr.mxu0 0.0
      %1691 = vmatpush1.msra.mxu0 0.0
      %1692 = vmatprep.subr.mxu0 0.0
      %1693 = vmatpush1.msra.mxu0 0.0
      %1694 = vmatprep.subr.mxu0 0.0
      %1695 = vmatpush1.msra.mxu0 0.0
      %1696 = vmatprep.subr.mxu0 0.0
      %1697 = vmatpush1.msra.mxu0 0.0
      %1698 = vmatprep.mubr.f32.mxu0 0.0
      %1699 = vmatmul.mubr.f32.gmra.mrb[0].mxu0 %v682
      %v1700 = vpop.f32.mrb[0].mxu0
      %v1701 = vadd.f32 0.0, %v1700
      %v1702 = vpop.f32.mrb[0].mxu0
      %1703 = vmatprep.mubr.f32.mxu0 0.0
      %1704 = vmatmul.mubr.f32.gmra.mrb[0].mxu0 %v685
      %v1705 = vpop.f32.mrb[0].mxu0
      %v1706 = vadd.f32 0.0, %v1705
      %v1707 = vpop.f32.mrb[0].mxu0
      %1708 = vmatprep.mubr.f32.mxu0 0.0
      %1709 = vmatmul.mubr.f32.gmra.mrb[0].mxu0 %v688
      %v1710 = vpop.f32.mrb[0].mxu0
      %v1711 = vadd.f32 0.0, %v1710
      %v1712 = vpop.f32.mrb[0].mxu0
      %1713 = vmatprep.mubr.f32.mxu0 0.0
      %1714 = vmatmul.mubr.f32.gmra.mrb[0].mxu0 %v691
      %v1715 = vpop.f32.mrb[0].mxu0
      %v1716 = vadd.f32 0.0, %v1715
      %v1717 = vpop.f32.mrb[0].mxu0
      %1718 = vdwg.mxu0
      %1719 = vmatprep.subr.mxu0 0.0
      %1720 = vmatpush1.msra.mxu0 %v1701
      %1721 = vmatprep.subr.mxu0 0.0
      %1722 = vmatpush1.msra.mxu0 %v1706
      %1723 = vmatprep.subr.mxu0 0.0
      %1724 = vmatpush1.msra.mxu0 %v1711
      %1725 = vmatprep.subr.mxu0 0.0
      %1726 = vmatpush1.msra.mxu0 %v1716
      %1727 = vmatprep.subr.mxu0 0.0
      %1728 = vmatpush1.msra.mxu0 0.0
      %1729 = vmatprep.subr.mxu0 0.0
      %1730 = vmatpush1.msra.mxu0 0.0
      %1731 = vmatprep.subr.mxu0 0.0
      %1732 = vmatpush1.msra.mxu0 0.0
      %1733 = vmatprep.subr.mxu0 0.0
      %1734 = vmatpush1.msra.mxu0 0.0
      %1735 = vmatprep.subr.mxu0 0.0
      %1736 = vmatpush1.msra.mxu0 0.0
      %1737 = vmatprep.subr.mxu0 0.0
      %1738 = vmatpush1.msra.mxu0 0.0
      %1739 = vmatprep.subr.mxu0 0.0
      %1740 = vmatpush1.msra.mxu0 0.0
      %1741 = vmatprep.subr.mxu0 0.0
      %1742 = vmatpush1.msra.mxu0 0.0
      %1743 = vmatprep.subr.mxu0 0.0
      %1744 = vmatpush1.msra.mxu0 0.0
      %1745 = vmatprep.subr.mxu0 0.0
      %1746 = vmatpush1.msra.mxu0 0.0
      %1747 = vmatprep.subr.mxu0 0.0
      %1748 = vmatpush1.msra.mxu0 0.0
      %1749 = vmatprep.subr.mxu0 0.0
      %1750 = vmatpush1.msra.mxu0 0.0
      %1751 = vmatprep.subr.mxu0 0.0
      %1752 = vmatpush1.msra.mxu0 0.0
      %1753 = vmatprep.subr.mxu0 0.0
      %1754 = vmatpush1.msra.mxu0 0.0
      %1755 = vmatprep.subr.mxu0 0.0
      %1756 = vmatpush1.msra.mxu0 0.0
      %1757 = vmatprep.subr.mxu0 0.0
      %1758 = vmatpush1.msra.mxu0 0.0
      %1759 = vmatprep.subr.mxu0 0.0
      %1760 = vmatpush1.msra.mxu0 0.0
      %1761 = vmatprep.subr.mxu0 0.0
      %1762 = vmatpush1.msra.mxu0 0.0
      %1763 = vmatprep.subr.mxu0 0.0
      %1764 = vmatpush1.msra.mxu0 0.0
      %1765 = vmatprep.subr.mxu0 0.0
      %1766 = vmatpush1.msra.mxu0 0.0
      %1767 = vmatprep.subr.mxu0 0.0
      %1768 = vmatpush1.msra.mxu0 0.0
      %1769 = vmatprep.subr.mxu0 0.0
      %1770 = vmatpush1.msra.mxu0 0.0
      %1771 = vmatprep.subr.mxu0 0.0
      %1772 = vmatpush1.msra.mxu0 0.0
      %1773 = vmatprep.subr.mxu0 0.0
      %1774 = vmatpush1.msra.mxu0 0.0
      %1775 = vmatprep.subr.mxu0 0.0
      %1776 = vmatpush1.msra.mxu0 0.0
      %1777 = vmatprep.subr.mxu0 0.0
      %1778 = vmatpush1.msra.mxu0 0.0
      %1779 = vmatprep.subr.mxu0 0.0
      %1780 = vmatpush1.msra.mxu0 0.0
      %1781 = vmatprep.subr.mxu0 0.0
      %1782 = vmatpush1.msra.mxu0 0.0
      %1783 = vmatprep.mubr.f32.mxu0 0.0
      %1784 = vmatmul.mubr.f32.gmra.mrb[0].mxu0 %v1549
      %v1785 = vpop.f32.mrb[0].mxu0
      %v1786 = vadd.f32 0.0, %v1785
      %v1787 = vpop.f32.mrb[0].mxu0
      %1788 = vmatprep.mubr.f32.mxu0 0.0
      %1789 = vmatmul.mubr.f32.gmra.mrb[0].mxu0 %v1552
      %v1790 = vpop.f32.mrb[0].mxu0
      %v1791 = vadd.f32 0.0, %v1790
      %v1792 = vpop.f32.mrb[0].mxu0
      %1793 = vdwg.mxu0
      %s1794 = scalar_lea.vmem [#allocation3], %s1629
      %1795 = vst.msk [vmem:[%s1794] sm:$0xff] %vm1631, %v1786
      %1796 = vst.msk [vmem:[%s1794 + $0x8] sm:$0xff] %vm1631, %v1791
      %vm1797 = vcmask 179200
      %v1798 = vsel %vm1797, %v1458, 0.0
      %v1799 = vsel %vm1797, %v1460, 0.0
      %v1800 = vadd.f32 %v1798, %v1799
      %vm1801 = vcmask 177152
      %v1802 = vsel %vm1801, %v1462, 0.0
      %v1803 = vadd.f32 %v1800, %v1802
      %1804 = vadd.xlane.f32.xlu0 %v1803
      %v1805 = vpop.xlane.xlu0 %1804
      %v1806 = vrot.slane %v1805, 4
      %v1807 = vadd.f32 %v1805, %v1806
      %v1808 = vrot.slane %v1807, 2
      %v1809 = vadd.f32 %v1807, %v1808
      %v1810 = vrot.slane %v1809, 1
      %v1811 = vadd.f32 %v1809, %v1810
      %s1812 = vtos %v1811
      %s1813 = sadd.f32 %s482, %s1812
      %v1814 = vsel %vm1797, %v1433, 0.0
      %v1815 = vsel %vm1797, %v1435, 0.0
      %v1816 = vadd.f32 %v1814, %v1815
      %v1817 = vsel %vm1801, %v1437, 0.0
      %v1818 = vadd.f32 %v1816, %v1817
      %1819 = vadd.xlane.f32.xlu0 %v1818
      %v1820 = vpop.xlane.xlu0 %1819
      %v1821 = vrot.slane %v1820, 4
      %v1822 = vadd.f32 %v1820, %v1821
      %v1823 = vrot.slane %v1822, 2
      %v1824 = vadd.f32 %v1822, %v1823
      %v1825 = vrot.slane %v1824, 1
      %v1826 = vadd.f32 %v1824, %v1825
      %s1827 = vtos %v1826
      %s1828 = sadd.f32 %s483, %s1827
    $region14: #{focal_loss_with_iou_and_ssim.3} parent=1 // loop_footer
      %s481 = sadd.s32 1, %s477
    $region15: #{focal_loss_with_iou_and_ssim.3} parent=1 // loop_footer_branch
      %476 = sbr.rel target = $region11
    $region16: #{focal_loss_with_iou_and_ssim.3} parent=1 // loop_exit
      _
    %s1829 = smul.f32 %s482, 0.00025826445
    %s1830 = scalar_lea.smem [#allocation10], 0
    %1831 = sst [smem:[%s1830]] %s1829
    %s1832 = smul.f32 %s483, 0.00025826445
    %s1833 = scalar_lea.smem [#allocation12], 0
    %1834 = sst [smem:[%s1833]] %s1832
    %v1835 = vld [vmem:[#allocation2] sm:$0xff]
    %v1836 = vld [vmem:[#allocation2 + $0x8] sm:$0xff]
    %v1837 = vld [vmem:[#allocation2 + $0x10] sm:$0xff]
    %v1838 = vld [vmem:[#allocation2 + $0x18] sm:$0xff]
    %v1839 = vld [vmem:[#allocation2 + $0x20] sm:$0xff]
    %v1840 = vld [vmem:[#allocation2 + $0x28] sm:$0xff]
    %v1841 = vld [vmem:[#allocation2 + $0x30] sm:$0xff]
    %v1842 = vld [vmem:[#allocation2 + $0x38] sm:$0xff]
    %v1843 = vld [vmem:[#allocation2 + $0x40] sm:$0xff]
    %v1844 = vld [vmem:[#allocation2 + $0x48] sm:$0xff]
    %v1845 = vld [vmem:[#allocation2 + $0x50] sm:$0xff]
    %v1846 = vld [vmem:[#allocation2 + $0x58] sm:$0xff]
    %v1847 = vld [vmem:[#allocation2 + $0x60] sm:$0xff]
    %v1848 = vld [vmem:[#allocation2 + $0x68] sm:$0xff]
    %v1849 = vld [vmem:[#allocation2 + $0x70] sm:$0xff]
    %v1850 = vld [vmem:[#allocation2 + $0x78] sm:$0xff]
    %vm1851 = vcmask 130048
    %v1852 = vsel %vm1851, %v1835, -inf
    %v1853 = vsel %vm1851, %v1836, -inf
    %v1854 = vsel %vm1851, %v1837, -inf
    %v1855 = vsel %vm1851, %v1838, -inf
    %v1856 = vsel %vm1851, %v1839, -inf
    %v1857 = vmax.f32 %v1852, %v1856
    %v1858 = vsel %vm1851, %v1840, -inf
    %v1859 = vmax.f32 %v1853, %v1858
    %v1860 = vsel %vm1851, %v1841, -inf
    %v1861 = vmax.f32 %v1854, %v1860
    %v1862 = vsel %vm1851, %v1842, -inf
    %v1863 = vmax.f32 %v1855, %v1862
    %v1864 = vsel %vm1851, %v1843, -inf
    %v1865 = vmax.f32 %v1857, %v1864
    %v1866 = vsel %vm1851, %v1844, -inf
    %v1867 = vmax.f32 %v1859, %v1866
    %v1868 = vsel %vm1851, %v1845, -inf
    %v1869 = vmax.f32 %v1861, %v1868
    %v1870 = vsel %vm1851, %v1846, -inf
    %v1871 = vmax.f32 %v1863, %v1870
    %v1872 = vsel %vm1851, %v1847, -inf
    %v1873 = vmax.f32 %v1865, %v1872
    %v1874 = vsel %vm1851, %v1848, -inf
    %v1875 = vmax.f32 %v1867, %v1874
    %v1876 = vsel %vm1851, %v1849, -inf
    %v1877 = vmax.f32 %v1869, %v1876
    %v1878 = vsel %vm1851, %v1850, -inf
    %v1879 = vmax.f32 %v1871, %v1878
    %v1880 = vmax.f32 %v1873, %v1875
    %v1881 = vmax.f32 %v1877, %v1879
    %v1882 = vmax.f32 %v1880, %v1881
    %1883 = vmax.xlane.f32.xlu0 %v1882
    %v1884 = vpop.xlane.xlu0 %1883
    %v1885 = vrot.slane %v1884, 4
    %v1886 = vmax.f32 %v1884, %v1885
    %v1887 = vrot.slane %v1886, 2
    %v1888 = vmax.f32 %v1886, %v1887
    %v1889 = vrot.slane %v1888, 1
    %v1890 = vmax.f32 %v1888, %v1889
    %s1891 = vtos %v1890
    %p1892 = scmp.gt.f32.partialorder %s1891, 128.0
    %s1893 = scalar_select %p1892, 255.0, 1.0
    %v1894 = vsel %vm1851, %v1835, inf
    %v1895 = vsel %vm1851, %v1836, inf
    %v1896 = vsel %vm1851, %v1837, inf
    %v1897 = vsel %vm1851, %v1838, inf
    %v1898 = vsel %vm1851, %v1839, inf
    %v1899 = vmin.f32 %v1894, %v1898
    %v1900 = vsel %vm1851, %v1840, inf
    %v1901 = vmin.f32 %v1895, %v1900
    %v1902 = vsel %vm1851, %v1841, inf
    %v1903 = vmin.f32 %v1896, %v1902
    %v1904 = vsel %vm1851, %v1842, inf
    %v1905 = vmin.f32 %v1897, %v1904
    %v1906 = vsel %vm1851, %v1843, inf
    %v1907 = vmin.f32 %v1899, %v1906
    %v1908 = vsel %vm1851, %v1844, inf
    %v1909 = vmin.f32 %v1901, %v1908
    %v1910 = vsel %vm1851, %v1845, inf
    %v1911 = vmin.f32 %v1903, %v1910
    %v1912 = vsel %vm1851, %v1846, inf
    %v1913 = vmin.f32 %v1905, %v1912
    %v1914 = vsel %vm1851, %v1847, inf
    %v1915 = vmin.f32 %v1907, %v1914
    %v1916 = vsel %vm1851, %v1848, inf
    %v1917 = vmin.f32 %v1909, %v1916
    %v1918 = vsel %vm1851, %v1849, inf
    %v1919 = vmin.f32 %v1911, %v1918
    %v1920 = vsel %vm1851, %v1850, inf
    %v1921 = vmin.f32 %v1913, %v1920
    %v1922 = vmin.f32 %v1915, %v1917
    %v1923 = vmin.f32 %v1919, %v1921
    %v1924 = vmin.f32 %v1922, %v1923
    %1925 = vmin.xlane.f32.xlu0 %v1924
    %v1926 = vpop.xlane.xlu0 %1925
    %v1927 = vrot.slane %v1926, 4
    %v1928 = vmin.f32 %v1926, %v1927
    %v1929 = vrot.slane %v1928, 2
    %v1930 = vmin.f32 %v1928, %v1929
    %v1931 = vrot.slane %v1930, 1
    %v1932 = vmin.f32 %v1930, %v1931
    %s1933 = vtos %v1932
    %p1934 = scmp.lt.f32.partialorder %s1933, -0.5
    %s1935 = scalar_select %p1934, -1.0, 0.0
    %s1936 = ssub.f32 %s1893, %s1935
    %s1937 = smul.f32 %s1936, 0.01
    %s1938 = smul.f32 %s1937, %s1937
    %s1939 = smul.f32 %s1936, 0.03
    %s1940 = smul.f32 %s1939, %s1939
    loop: start=0, step=1, limit=8
    $region17: #{focal_loss_with_iou_and_ssim.3} parent=1 // loop_pre_header
      _
    $region18: #{focal_loss_with_iou_and_ssim.3} parent=1 // loop_header
      %s1942 = sphi 0, %s1946
      %p1943 = scmp.ge.s32.totalorder %s1942, 8
      %s1947 = sphi 0.0, %s3052
      %s1948 = sphi 0.0, %s3063
    $region19: #{focal_loss_with_iou_and_ssim.3} parent=1 // loop_header_branch
      %1945 = sbr.rel (%p1943) target = $region23
    $region20: #{focal_loss_with_iou_and_ssim.3} parent=1 // loop_body
      %s1949 = smul.u32 %s1942, 16
      %s1950 = scalar_lea.vmem [#allocation2], %s1949
      %v1951 = vld [vmem:[%s1950] sm:$0xff]
      %v1952 = vld [vmem:[%s1950 + $0x8] sm:$0xff]
      %s1953 = scalar_lea.vmem [#allocation3], %s1949
      %v1954 = vld [vmem:[%s1953] sm:$0xff]
      %v1955 = vld [vmem:[%s1953 + $0x8] sm:$0xff]
      %v1957 = vsel %vm1851, %v1951, 0
      %v1960 = vsel %vm1851, %v1952, 0
      %1962 = vmatprep.subr.mxu0 0.0
      %1963 = vmatpush1.msra.mxu0 %v442
      %1964 = vmatprep.subr.mxu0 0.0
      %1965 = vmatpush1.msra.mxu0 %v443
      %1966 = vmatprep.subr.mxu0 0.0
      %1967 = vmatpush1.msra.mxu0 0.0
      %1968 = vmatprep.subr.mxu0 0.0
      %1969 = vmatpush1.msra.mxu0 0.0
      %1970 = vmatprep.subr.mxu0 0.0
      %1971 = vmatpush1.msra.mxu0 0.0
      %1972 = vmatprep.subr.mxu0 0.0
      %1973 = vmatpush1.msra.mxu0 0.0
      %1974 = vmatprep.subr.mxu0 0.0
      %1975 = vmatpush1.msra.mxu0 0.0
      %1976 = vmatprep.subr.mxu0 0.0
      %1977 = vmatpush1.msra.mxu0 0.0
      %1978 = vmatprep.subr.mxu0 0.0
      %1979 = vmatpush1.msra.mxu0 0.0
      %1980 = vmatprep.subr.mxu0 0.0
      %1981 = vmatpush1.msra.mxu0 0.0
      %1982 = vmatprep.subr.mxu0 0.0
      %1983 = vmatpush1.msra.mxu0 0.0
      %1984 = vmatprep.subr.mxu0 0.0
      %1985 = vmatpush1.msra.mxu0 0.0
      %1986 = vmatprep.subr.mxu0 0.0
      %1987 = vmatpush1.msra.mxu0 0.0
      %1988 = vmatprep.subr.mxu0 0.0
      %1989 = vmatpush1.msra.mxu0 0.0
      %1990 = vmatprep.subr.mxu0 0.0
      %1991 = vmatpush1.msra.mxu0 0.0
      %1992 = vmatprep.subr.mxu0 0.0
      %1993 = vmatpush1.msra.mxu0 0.0
      %1994 = vmatprep.subr.mxu0 0.0
      %1995 = vmatpush1.msra.mxu0 0.0
      %1996 = vmatprep.subr.mxu0 0.0
      %1997 = vmatpush1.msra.mxu0 0.0
      %1998 = vmatprep.subr.mxu0 0.0
      %1999 = vmatpush1.msra.mxu0 0.0
      %2000 = vmatprep.subr.mxu0 0.0
      %2001 = vmatpush1.msra.mxu0 0.0
      %2002 = vmatprep.subr.mxu0 0.0
      %2003 = vmatpush1.msra.mxu0 0.0
      %2004 = vmatprep.subr.mxu0 0.0
      %2005 = vmatpush1.msra.mxu0 0.0
      %2006 = vmatprep.subr.mxu0 0.0
      %2007 = vmatpush1.msra.mxu0 0.0
      %2008 = vmatprep.subr.mxu0 0.0
      %2009 = vmatpush1.msra.mxu0 0.0
      %2010 = vmatprep.subr.mxu0 0.0
      %2011 = vmatpush1.msra.mxu0 0.0
      %2012 = vmatprep.subr.mxu0 0.0
      %2013 = vmatpush1.msra.mxu0 0.0
      %2014 = vmatprep.subr.mxu0 0.0
      %2015 = vmatpush1.msra.mxu0 0.0
      %2016 = vmatprep.subr.mxu0 0.0
      %2017 = vmatpush1.msra.mxu0 0.0
      %2018 = vmatprep.subr.mxu0 0.0
      %2019 = vmatpush1.msra.mxu0 0.0
      %2020 = vmatprep.subr.mxu0 0.0
      %2021 = vmatpush1.msra.mxu0 0.0
      %2022 = vmatprep.subr.mxu0 0.0
      %2023 = vmatpush1.msra.mxu0 0.0
      %2024 = vmatprep.subr.mxu0 0.0
      %2025 = vmatpush1.msra.mxu0 0.0
      %2026 = vmatprep.mubr.f32.mxu0 0.0
      %2027 = vmatmul.mubr.f32.gmra.mrb[0].mxu0 %v1957
      %v2028 = vpop.f32.mrb[0].mxu0
      %v2029 = vadd.f32 0.0, %v2028
      %v2030 = vpop.f32.mrb[0].mxu0
      %2031 = vmatprep.mubr.f32.mxu0 0.0
      %2032 = vmatmul.mubr.f32.gmra.mrb[0].mxu0 %v1960
      %v2033 = vpop.f32.mrb[0].mxu0
      %v2034 = vadd.f32 0.0, %v2033
      %v2035 = vpop.f32.mrb[0].mxu0
      %2036 = vdwg.mxu0
      %v2038 = vsel %vm1851, %v431, 0
      %2040 = vmatprep.subr.mxu0 0.0
      %2041 = vmatpush1.msra.mxu0 %v2029
      %2042 = vmatprep.subr.mxu0 0.0
      %2043 = vmatpush1.msra.mxu0 %v2034
      %2044 = vmatprep.subr.mxu0 0.0
      %2045 = vmatpush1.msra.mxu0 0.0
      %2046 = vmatprep.subr.mxu0 0.0
      %2047 = vmatpush1.msra.mxu0 0.0
      %2048 = vmatprep.subr.mxu0 0.0
      %2049 = vmatpush1.msra.mxu0 0.0
      %2050 = vmatprep.subr.mxu0 0.0
      %2051 = vmatpush1.msra.mxu0 0.0
      %2052 = vmatprep.subr.mxu0 0.0
      %2053 = vmatpush1.msra.mxu0 0.0
      %2054 = vmatprep.subr.mxu0 0.0
      %2055 = vmatpush1.msra.mxu0 0.0
      %2056 = vmatprep.subr.mxu0 0.0
      %2057 = vmatpush1.msra.mxu0 0.0
      %2058 = vmatprep.subr.mxu0 0.0
      %2059 = vmatpush1.msra.mxu0 0.0
      %2060 = vmatprep.subr.mxu0 0.0
      %2061 = vmatpush1.msra.mxu0 0.0
      %2062 = vmatprep.subr.mxu0 0.0
      %2063 = vmatpush1.msra.mxu0 0.0
      %2064 = vmatprep.subr.mxu0 0.0
      %2065 = vmatpush1.msra.mxu0 0.0
      %2066 = vmatprep.subr.mxu0 0.0
      %2067 = vmatpush1.msra.mxu0 0.0
      %2068 = vmatprep.subr.mxu0 0.0
      %2069 = vmatpush1.msra.mxu0 0.0
      %2070 = vmatprep.subr.mxu0 0.0
      %2071 = vmatpush1.msra.mxu0 0.0
      %2072 = vmatprep.subr.mxu0 0.0
      %2073 = vmatpush1.msra.mxu0 0.0
      %2074 = vmatprep.subr.mxu0 0.0
      %2075 = vmatpush1.msra.mxu0 0.0
      %2076 = vmatprep.subr.mxu0 0.0
      %2077 = vmatpush1.msra.mxu0 0.0
      %2078 = vmatprep.subr.mxu0 0.0
      %2079 = vmatpush1.msra.mxu0 0.0
      %2080 = vmatprep.subr.mxu0 0.0
      %2081 = vmatpush1.msra.mxu0 0.0
      %2082 = vmatprep.subr.mxu0 0.0
      %2083 = vmatpush1.msra.mxu0 0.0
      %2084 = vmatprep.subr.mxu0 0.0
      %2085 = vmatpush1.msra.mxu0 0.0
      %2086 = vmatprep.subr.mxu0 0.0
      %2087 = vmatpush1.msra.mxu0 0.0
      %2088 = vmatprep.subr.mxu0 0.0
      %2089 = vmatpush1.msra.mxu0 0.0
      %2090 = vmatprep.subr.mxu0 0.0
      %2091 = vmatpush1.msra.mxu0 0.0
      %2092 = vmatprep.subr.mxu0 0.0
      %2093 = vmatpush1.msra.mxu0 0.0
      %2094 = vmatprep.subr.mxu0 0.0
      %2095 = vmatpush1.msra.mxu0 0.0
      %2096 = vmatprep.subr.mxu0 0.0
      %2097 = vmatpush1.msra.mxu0 0.0
      %2098 = vmatprep.subr.mxu0 0.0
      %2099 = vmatpush1.msra.mxu0 0.0
      %2100 = vmatprep.subr.mxu0 0.0
      %2101 = vmatpush1.msra.mxu0 0.0
      %2102 = vmatprep.subr.mxu0 0.0
      %2103 = vmatpush1.msra.mxu0 0.0
      %2104 = vmatprep.mubr.f32.mxu0 0.0
      %2105 = vmatmul.mubr.f32.gmra.mrb[0].mxu0 %v2038
      %v2106 = vpop.f32.mrb[0].mxu0
      %v2107 = vadd.f32 0.0, %v2106
      %v2108 = vpop.f32.mrb[0].mxu0
      %2109 = vdwg.mxu0
      %v2111 = vsel %vm1851, %v1954, 0
      %v2114 = vsel %vm1851, %v1955, 0
      %2116 = vmatprep.subr.mxu0 0.0
      %2117 = vmatpush1.msra.mxu0 %v442
      %2118 = vmatprep.subr.mxu0 0.0
      %2119 = vmatpush1.msra.mxu0 %v443
      %2120 = vmatprep.subr.mxu0 0.0
      %2121 = vmatpush1.msra.mxu0 0.0
      %2122 = vmatprep.subr.mxu0 0.0
      %2123 = vmatpush1.msra.mxu0 0.0
      %2124 = vmatprep.subr.mxu0 0.0
      %2125 = vmatpush1.msra.mxu0 0.0
      %2126 = vmatprep.subr.mxu0 0.0
      %2127 = vmatpush1.msra.mxu0 0.0
      %2128 = vmatprep.subr.mxu0 0.0
      %2129 = vmatpush1.msra.mxu0 0.0
      %2130 = vmatprep.subr.mxu0 0.0
      %2131 = vmatpush1.msra.mxu0 0.0
      %2132 = vmatprep.subr.mxu0 0.0
      %2133 = vmatpush1.msra.mxu0 0.0
      %2134 = vmatprep.subr.mxu0 0.0
      %2135 = vmatpush1.msra.mxu0 0.0
      %2136 = vmatprep.subr.mxu0 0.0
      %2137 = vmatpush1.msra.mxu0 0.0
      %2138 = vmatprep.subr.mxu0 0.0
      %2139 = vmatpush1.msra.mxu0 0.0
      %2140 = vmatprep.subr.mxu0 0.0
      %2141 = vmatpush1.msra.mxu0 0.0
      %2142 = vmatprep.subr.mxu0 0.0
      %2143 = vmatpush1.msra.mxu0 0.0
      %2144 = vmatprep.subr.mxu0 0.0
      %2145 = vmatpush1.msra.mxu0 0.0
      %2146 = vmatprep.subr.mxu0 0.0
      %2147 = vmatpush1.msra.mxu0 0.0
      %2148 = vmatprep.subr.mxu0 0.0
      %2149 = vmatpush1.msra.mxu0 0.0
      %2150 = vmatprep.subr.mxu0 0.0
      %2151 = vmatpush1.msra.mxu0 0.0
      %2152 = vmatprep.subr.mxu0 0.0
      %2153 = vmatpush1.msra.mxu0 0.0
      %2154 = vmatprep.subr.mxu0 0.0
      %2155 = vmatpush1.msra.mxu0 0.0
      %2156 = vmatprep.subr.mxu0 0.0
      %2157 = vmatpush1.msra.mxu0 0.0
      %2158 = vmatprep.subr.mxu0 0.0
      %2159 = vmatpush1.msra.mxu0 0.0
      %2160 = vmatprep.subr.mxu0 0.0
      %2161 = vmatpush1.msra.mxu0 0.0
      %2162 = vmatprep.subr.mxu0 0.0
      %2163 = vmatpush1.msra.mxu0 0.0
      %2164 = vmatprep.subr.mxu0 0.0
      %2165 = vmatpush1.msra.mxu0 0.0
      %2166 = vmatprep.subr.mxu0 0.0
      %2167 = vmatpush1.msra.mxu0 0.0
      %2168 = vmatprep.subr.mxu0 0.0
      %2169 = vmatpush1.msra.mxu0 0.0
      %2170 = vmatprep.subr.mxu0 0.0
      %2171 = vmatpush1.msra.mxu0 0.0
      %2172 = vmatprep.subr.mxu0 0.0
      %2173 = vmatpush1.msra.mxu0 0.0
      %2174 = vmatprep.subr.mxu0 0.0
      %2175 = vmatpush1.msra.mxu0 0.0
      %2176 = vmatprep.subr.mxu0 0.0
      %2177 = vmatpush1.msra.mxu0 0.0
      %2178 = vmatprep.subr.mxu0 0.0
      %2179 = vmatpush1.msra.mxu0 0.0
      %2180 = vmatprep.mubr.f32.mxu0 0.0
      %2181 = vmatmul.mubr.f32.gmra.mrb[0].mxu0 %v2111
      %v2182 = vpop.f32.mrb[0].mxu0
      %v2183 = vadd.f32 0.0, %v2182
      %v2184 = vpop.f32.mrb[0].mxu0
      %2185 = vmatprep.mubr.f32.mxu0 0.0
      %2186 = vmatmul.mubr.f32.gmra.mrb[0].mxu0 %v2114
      %v2187 = vpop.f32.mrb[0].mxu0
      %v2188 = vadd.f32 0.0, %v2187
      %v2189 = vpop.f32.mrb[0].mxu0
      %2190 = vdwg.mxu0
      %2191 = vmatprep.subr.mxu0 0.0
      %2192 = vmatpush1.msra.mxu0 %v2183
      %2193 = vmatprep.subr.mxu0 0.0
      %2194 = vmatpush1.msra.mxu0 %v2188
      %2195 = vmatprep.subr.mxu0 0.0
      %2196 = vmatpush1.msra.mxu0 0.0
      %2197 = vmatprep.subr.mxu0 0.0
      %2198 = vmatpush1.msra.mxu0 0.0
      %2199 = vmatprep.subr.mxu0 0.0
      %2200 = vmatpush1.msra.mxu0 0.0
      %2201 = vmatprep.subr.mxu0 0.0
      %2202 = vmatpush1.msra.mxu0 0.0
      %2203 = vmatprep.subr.mxu0 0.0
      %2204 = vmatpush1.msra.mxu0 0.0
      %2205 = vmatprep.subr.mxu0 0.0
      %2206 = vmatpush1.msra.mxu0 0.0
      %2207 = vmatprep.subr.mxu0 0.0
      %2208 = vmatpush1.msra.mxu0 0.0
      %2209 = vmatprep.subr.mxu0 0.0
      %2210 = vmatpush1.msra.mxu0 0.0
      %2211 = vmatprep.subr.mxu0 0.0
      %2212 = vmatpush1.msra.mxu0 0.0
      %2213 = vmatprep.subr.mxu0 0.0
      %2214 = vmatpush1.msra.mxu0 0.0
      %2215 = vmatprep.subr.mxu0 0.0
      %2216 = vmatpush1.msra.mxu0 0.0
      %2217 = vmatprep.subr.mxu0 0.0
      %2218 = vmatpush1.msra.mxu0 0.0
      %2219 = vmatprep.subr.mxu0 0.0
      %2220 = vmatpush1.msra.mxu0 0.0
      %2221 = vmatprep.subr.mxu0 0.0
      %2222 = vmatpush1.msra.mxu0 0.0
      %2223 = vmatprep.subr.mxu0 0.0
      %2224 = vmatpush1.msra.mxu0 0.0
      %2225 = vmatprep.subr.mxu0 0.0
      %2226 = vmatpush1.msra.mxu0 0.0
      %2227 = vmatprep.subr.mxu0 0.0
      %2228 = vmatpush1.msra.mxu0 0.0
      %2229 = vmatprep.subr.mxu0 0.0
      %2230 = vmatpush1.msra.mxu0 0.0
      %2231 = vmatprep.subr.mxu0 0.0
      %2232 = vmatpush1.msra.mxu0 0.0
      %2233 = vmatprep.subr.mxu0 0.0
      %2234 = vmatpush1.msra.mxu0 0.0
      %2235 = vmatprep.subr.mxu0 0.0
      %2236 = vmatpush1.msra.mxu0 0.0
      %2237 = vmatprep.subr.mxu0 0.0
      %2238 = vmatpush1.msra.mxu0 0.0
      %2239 = vmatprep.subr.mxu0 0.0
      %2240 = vmatpush1.msra.mxu0 0.0
      %2241 = vmatprep.subr.mxu0 0.0
      %2242 = vmatpush1.msra.mxu0 0.0
      %2243 = vmatprep.subr.mxu0 0.0
      %2244 = vmatpush1.msra.mxu0 0.0
      %2245 = vmatprep.subr.mxu0 0.0
      %2246 = vmatpush1.msra.mxu0 0.0
      %2247 = vmatprep.subr.mxu0 0.0
      %2248 = vmatpush1.msra.mxu0 0.0
      %2249 = vmatprep.subr.mxu0 0.0
      %2250 = vmatpush1.msra.mxu0 0.0
      %2251 = vmatprep.subr.mxu0 0.0
      %2252 = vmatpush1.msra.mxu0 0.0
      %2253 = vmatprep.subr.mxu0 0.0
      %2254 = vmatpush1.msra.mxu0 0.0
      %2255 = vmatprep.mubr.f32.mxu0 0.0
      %2256 = vmatmul.mubr.f32.gmra.mrb[0].mxu0 %v2038
      %v2257 = vpop.f32.mrb[0].mxu0
      %v2258 = vadd.f32 0.0, %v2257
      %v2259 = vpop.f32.mrb[0].mxu0
      %2260 = vdwg.mxu0
      %v2261 = vmul.f32 %v1951, %v1951
      %v2262 = vmul.f32 %v1952, %v1952
      %v2264 = vsel %vm1851, %v2261, 0
      %v2267 = vsel %vm1851, %v2262, 0
      %2269 = vmatprep.subr.mxu0 0.0
      %2270 = vmatpush1.msra.mxu0 %v442
      %2271 = vmatprep.subr.mxu0 0.0
      %2272 = vmatpush1.msra.mxu0 %v443
      %2273 = vmatprep.subr.mxu0 0.0
      %2274 = vmatpush1.msra.mxu0 0.0
      %2275 = vmatprep.subr.mxu0 0.0
      %2276 = vmatpush1.msra.mxu0 0.0
      %2277 = vmatprep.subr.mxu0 0.0
      %2278 = vmatpush1.msra.mxu0 0.0
      %2279 = vmatprep.subr.mxu0 0.0
      %2280 = vmatpush1.msra.mxu0 0.0
      %2281 = vmatprep.subr.mxu0 0.0
      %2282 = vmatpush1.msra.mxu0 0.0
      %2283 = vmatprep.subr.mxu0 0.0
      %2284 = vmatpush1.msra.mxu0 0.0
      %2285 = vmatprep.subr.mxu0 0.0
      %2286 = vmatpush1.msra.mxu0 0.0
      %2287 = vmatprep.subr.mxu0 0.0
      %2288 = vmatpush1.msra.mxu0 0.0
      %2289 = vmatprep.subr.mxu0 0.0
      %2290 = vmatpush1.msra.mxu0 0.0
      %2291 = vmatprep.subr.mxu0 0.0
      %2292 = vmatpush1.msra.mxu0 0.0
      %2293 = vmatprep.subr.mxu0 0.0
      %2294 = vmatpush1.msra.mxu0 0.0
      %2295 = vmatprep.subr.mxu0 0.0
      %2296 = vmatpush1.msra.mxu0 0.0
      %2297 = vmatprep.subr.mxu0 0.0
      %2298 = vmatpush1.msra.mxu0 0.0
      %2299 = vmatprep.subr.mxu0 0.0
      %2300 = vmatpush1.msra.mxu0 0.0
      %2301 = vmatprep.subr.mxu0 0.0
      %2302 = vmatpush1.msra.mxu0 0.0
      %2303 = vmatprep.subr.mxu0 0.0
      %2304 = vmatpush1.msra.mxu0 0.0
      %2305 = vmatprep.subr.mxu0 0.0
      %2306 = vmatpush1.msra.mxu0 0.0
      %2307 = vmatprep.subr.mxu0 0.0
      %2308 = vmatpush1.msra.mxu0 0.0
      %2309 = vmatprep.subr.mxu0 0.0
      %2310 = vmatpush1.msra.mxu0 0.0
      %2311 = vmatprep.subr.mxu0 0.0
      %2312 = vmatpush1.msra.mxu0 0.0
      %2313 = vmatprep.subr.mxu0 0.0
      %2314 = vmatpush1.msra.mxu0 0.0
      %2315 = vmatprep.subr.mxu0 0.0
      %2316 = vmatpush1.msra.mxu0 0.0
      %2317 = vmatprep.subr.mxu0 0.0
      %2318 = vmatpush1.msra.mxu0 0.0
      %2319 = vmatprep.subr.mxu0 0.0
      %2320 = vmatpush1.msra.mxu0 0.0
      %2321 = vmatprep.subr.mxu0 0.0
      %2322 = vmatpush1.msra.mxu0 0.0
      %2323 = vmatprep.subr.mxu0 0.0
      %2324 = vmatpush1.msra.mxu0 0.0
      %2325 = vmatprep.subr.mxu0 0.0
      %2326 = vmatpush1.msra.mxu0 0.0
      %2327 = vmatprep.subr.mxu0 0.0
      %2328 = vmatpush1.msra.mxu0 0.0
      %2329 = vmatprep.subr.mxu0 0.0
      %2330 = vmatpush1.msra.mxu0 0.0
      %2331 = vmatprep.subr.mxu0 0.0
      %2332 = vmatpush1.msra.mxu0 0.0
      %2333 = vmatprep.mubr.f32.mxu0 0.0
      %2334 = vmatmul.mubr.f32.gmra.mrb[0].mxu0 %v2264
      %v2335 = vpop.f32.mrb[0].mxu0
      %v2336 = vadd.f32 0.0, %v2335
      %v2337 = vpop.f32.mrb[0].mxu0
      %2338 = vmatprep.mubr.f32.mxu0 0.0
      %2339 = vmatmul.mubr.f32.gmra.mrb[0].mxu0 %v2267
      %v2340 = vpop.f32.mrb[0].mxu0
      %v2341 = vadd.f32 0.0, %v2340
      %v2342 = vpop.f32.mrb[0].mxu0
      %2343 = vdwg.mxu0
      %2344 = vmatprep.subr.mxu0 0.0
      %2345 = vmatpush1.msra.mxu0 %v2336
      %2346 = vmatprep.subr.mxu0 0.0
      %2347 = vmatpush1.msra.mxu0 %v2341
      %2348 = vmatprep.subr.mxu0 0.0
      %2349 = vmatpush1.msra.mxu0 0.0
      %2350 = vmatprep.subr.mxu0 0.0
      %2351 = vmatpush1.msra.mxu0 0.0
      %2352 = vmatprep.subr.mxu0 0.0
      %2353 = vmatpush1.msra.mxu0 0.0
      %2354 = vmatprep.subr.mxu0 0.0
      %2355 = vmatpush1.msra.mxu0 0.0
      %2356 = vmatprep.subr.mxu0 0.0
      %2357 = vmatpush1.msra.mxu0 0.0
      %2358 = vmatprep.subr.mxu0 0.0
      %2359 = vmatpush1.msra.mxu0 0.0
      %2360 = vmatprep.subr.mxu0 0.0
      %2361 = vmatpush1.msra.mxu0 0.0
      %2362 = vmatprep.subr.mxu0 0.0
      %2363 = vmatpush1.msra.mxu0 0.0
      %2364 = vmatprep.subr.mxu0 0.0
      %2365 = vmatpush1.msra.mxu0 0.0
      %2366 = vmatprep.subr.mxu0 0.0
      %2367 = vmatpush1.msra.mxu0 0.0
      %2368 = vmatprep.subr.mxu0 0.0
      %2369 = vmatpush1.msra.mxu0 0.0
      %2370 = vmatprep.subr.mxu0 0.0
      %2371 = vmatpush1.msra.mxu0 0.0
      %2372 = vmatprep.subr.mxu0 0.0
      %2373 = vmatpush1.msra.mxu0 0.0
      %2374 = vmatprep.subr.mxu0 0.0
      %2375 = vmatpush1.msra.mxu0 0.0
      %2376 = vmatprep.subr.mxu0 0.0
      %2377 = vmatpush1.msra.mxu0 0.0
      %2378 = vmatprep.subr.mxu0 0.0
      %2379 = vmatpush1.msra.mxu0 0.0
      %2380 = vmatprep.subr.mxu0 0.0
      %2381 = vmatpush1.msra.mxu0 0.0
      %2382 = vmatprep.subr.mxu0 0.0
      %2383 = vmatpush1.msra.mxu0 0.0
      %2384 = vmatprep.subr.mxu0 0.0
      %2385 = vmatpush1.msra.mxu0 0.0
      %2386 = vmatprep.subr.mxu0 0.0
      %2387 = vmatpush1.msra.mxu0 0.0
      %2388 = vmatprep.subr.mxu0 0.0
      %2389 = vmatpush1.msra.mxu0 0.0
      %2390 = vmatprep.subr.mxu0 0.0
      %2391 = vmatpush1.msra.mxu0 0.0
      %2392 = vmatprep.subr.mxu0 0.0
      %2393 = vmatpush1.msra.mxu0 0.0
      %2394 = vmatprep.subr.mxu0 0.0
      %2395 = vmatpush1.msra.mxu0 0.0
      %2396 = vmatprep.subr.mxu0 0.0
      %2397 = vmatpush1.msra.mxu0 0.0
      %2398 = vmatprep.subr.mxu0 0.0
      %2399 = vmatpush1.msra.mxu0 0.0
      %2400 = vmatprep.subr.mxu0 0.0
      %2401 = vmatpush1.msra.mxu0 0.0
      %2402 = vmatprep.subr.mxu0 0.0
      %2403 = vmatpush1.msra.mxu0 0.0
      %2404 = vmatprep.subr.mxu0 0.0
      %2405 = vmatpush1.msra.mxu0 0.0
      %2406 = vmatprep.subr.mxu0 0.0
      %2407 = vmatpush1.msra.mxu0 0.0
      %2408 = vmatprep.mubr.f32.mxu0 0.0
      %2409 = vmatmul.mubr.f32.gmra.mrb[0].mxu0 %v2038
      %v2410 = vpop.f32.mrb[0].mxu0
      %v2411 = vadd.f32 0.0, %v2410
      %v2412 = vpop.f32.mrb[0].mxu0
      %2413 = vdwg.mxu0
      %v2414 = vmul.f32 %v1954, %v1954
      %v2415 = vmul.f32 %v1955, %v1955
      %v2417 = vsel %vm1851, %v2414, 0
      %v2420 = vsel %vm1851, %v2415, 0
      %2422 = vmatprep.subr.mxu0 0.0
      %2423 = vmatpush1.msra.mxu0 %v442
      %2424 = vmatprep.subr.mxu0 0.0
      %2425 = vmatpush1.msra.mxu0 %v443
      %2426 = vmatprep.subr.mxu0 0.0
      %2427 = vmatpush1.msra.mxu0 0.0
      %2428 = vmatprep.subr.mxu0 0.0
      %2429 = vmatpush1.msra.mxu0 0.0
      %2430 = vmatprep.subr.mxu0 0.0
      %2431 = vmatpush1.msra.mxu0 0.0
      %2432 = vmatprep.subr.mxu0 0.0
      %2433 = vmatpush1.msra.mxu0 0.0
      %2434 = vmatprep.subr.mxu0 0.0
      %2435 = vmatpush1.msra.mxu0 0.0
      %2436 = vmatprep.subr.mxu0 0.0
      %2437 = vmatpush1.msra.mxu0 0.0
      %2438 = vmatprep.subr.mxu0 0.0
      %2439 = vmatpush1.msra.mxu0 0.0
      %2440 = vmatprep.subr.mxu0 0.0
      %2441 = vmatpush1.msra.mxu0 0.0
      %2442 = vmatprep.subr.mxu0 0.0
      %2443 = vmatpush1.msra.mxu0 0.0
      %2444 = vmatprep.subr.mxu0 0.0
      %2445 = vmatpush1.msra.mxu0 0.0
      %2446 = vmatprep.subr.mxu0 0.0
      %2447 = vmatpush1.msra.mxu0 0.0
      %2448 = vmatprep.subr.mxu0 0.0
      %2449 = vmatpush1.msra.mxu0 0.0
      %2450 = vmatprep.subr.mxu0 0.0
      %2451 = vmatpush1.msra.mxu0 0.0
      %2452 = vmatprep.subr.mxu0 0.0
      %2453 = vmatpush1.msra.mxu0 0.0
      %2454 = vmatprep.subr.mxu0 0.0
      %2455 = vmatpush1.msra.mxu0 0.0
      %2456 = vmatprep.subr.mxu0 0.0
      %2457 = vmatpush1.msra.mxu0 0.0
      %2458 = vmatprep.subr.mxu0 0.0
      %2459 = vmatpush1.msra.mxu0 0.0
      %2460 = vmatprep.subr.mxu0 0.0
      %2461 = vmatpush1.msra.mxu0 0.0
      %2462 = vmatprep.subr.mxu0 0.0
      %2463 = vmatpush1.msra.mxu0 0.0
      %2464 = vmatprep.subr.mxu0 0.0
      %2465 = vmatpush1.msra.mxu0 0.0
      %2466 = vmatprep.subr.mxu0 0.0
      %2467 = vmatpush1.msra.mxu0 0.0
      %2468 = vmatprep.subr.mxu0 0.0
      %2469 = vmatpush1.msra.mxu0 0.0
      %2470 = vmatprep.subr.mxu0 0.0
      %2471 = vmatpush1.msra.mxu0 0.0
      %2472 = vmatprep.subr.mxu0 0.0
      %2473 = vmatpush1.msra.mxu0 0.0
      %2474 = vmatprep.subr.mxu0 0.0
      %2475 = vmatpush1.msra.mxu0 0.0
      %2476 = vmatprep.subr.mxu0 0.0
      %2477 = vmatpush1.msra.mxu0 0.0
      %2478 = vmatprep.subr.mxu0 0.0
      %2479 = vmatpush1.msra.mxu0 0.0
      %2480 = vmatprep.subr.mxu0 0.0
      %2481 = vmatpush1.msra.mxu0 0.0
      %2482 = vmatprep.subr.mxu0 0.0
      %2483 = vmatpush1.msra.mxu0 0.0
      %2484 = vmatprep.subr.mxu0 0.0
      %2485 = vmatpush1.msra.mxu0 0.0
      %2486 = vmatprep.mubr.f32.mxu0 0.0
      %2487 = vmatmul.mubr.f32.gmra.mrb[0].mxu0 %v2417
      %v2488 = vpop.f32.mrb[0].mxu0
      %v2489 = vadd.f32 0.0, %v2488
      %v2490 = vpop.f32.mrb[0].mxu0
      %2491 = vmatprep.mubr.f32.mxu0 0.0
      %2492 = vmatmul.mubr.f32.gmra.mrb[0].mxu0 %v2420
      %v2493 = vpop.f32.mrb[0].mxu0
      %v2494 = vadd.f32 0.0, %v2493
      %v2495 = vpop.f32.mrb[0].mxu0
      %2496 = vdwg.mxu0
      %2497 = vmatprep.subr.mxu0 0.0
      %2498 = vmatpush1.msra.mxu0 %v2489
      %2499 = vmatprep.subr.mxu0 0.0
      %2500 = vmatpush1.msra.mxu0 %v2494
      %2501 = vmatprep.subr.mxu0 0.0
      %2502 = vmatpush1.msra.mxu0 0.0
      %2503 = vmatprep.subr.mxu0 0.0
      %2504 = vmatpush1.msra.mxu0 0.0
      %2505 = vmatprep.subr.mxu0 0.0
      %2506 = vmatpush1.msra.mxu0 0.0
      %2507 = vmatprep.subr.mxu0 0.0
      %2508 = vmatpush1.msra.mxu0 0.0
      %2509 = vmatprep.subr.mxu0 0.0
      %2510 = vmatpush1.msra.mxu0 0.0
      %2511 = vmatprep.subr.mxu0 0.0
      %2512 = vmatpush1.msra.mxu0 0.0
      %2513 = vmatprep.subr.mxu0 0.0
      %2514 = vmatpush1.msra.mxu0 0.0
      %2515 = vmatprep.subr.mxu0 0.0
      %2516 = vmatpush1.msra.mxu0 0.0
      %2517 = vmatprep.subr.mxu0 0.0
      %2518 = vmatpush1.msra.mxu0 0.0
      %2519 = vmatprep.subr.mxu0 0.0
      %2520 = vmatpush1.msra.mxu0 0.0
      %2521 = vmatprep.subr.mxu0 0.0
      %2522 = vmatpush1.msra.mxu0 0.0
      %2523 = vmatprep.subr.mxu0 0.0
      %2524 = vmatpush1.msra.mxu0 0.0
      %2525 = vmatprep.subr.mxu0 0.0
      %2526 = vmatpush1.msra.mxu0 0.0
      %2527 = vmatprep.subr.mxu0 0.0
      %2528 = vmatpush1.msra.mxu0 0.0
      %2529 = vmatprep.subr.mxu0 0.0
      %2530 = vmatpush1.msra.mxu0 0.0
      %2531 = vmatprep.subr.mxu0 0.0
      %2532 = vmatpush1.msra.mxu0 0.0
      %2533 = vmatprep.subr.mxu0 0.0
      %2534 = vmatpush1.msra.mxu0 0.0
      %2535 = vmatprep.subr.mxu0 0.0
      %2536 = vmatpush1.msra.mxu0 0.0
      %2537 = vmatprep.subr.mxu0 0.0
      %2538 = vmatpush1.msra.mxu0 0.0
      %2539 = vmatprep.subr.mxu0 0.0
      %2540 = vmatpush1.msra.mxu0 0.0
      %2541 = vmatprep.subr.mxu0 0.0
      %2542 = vmatpush1.msra.mxu0 0.0
      %2543 = vmatprep.subr.mxu0 0.0
      %2544 = vmatpush1.msra.mxu0 0.0
      %2545 = vmatprep.subr.mxu0 0.0
      %2546 = vmatpush1.msra.mxu0 0.0
      %2547 = vmatprep.subr.mxu0 0.0
      %2548 = vmatpush1.msra.mxu0 0.0
      %2549 = vmatprep.subr.mxu0 0.0
      %2550 = vmatpush1.msra.mxu0 0.0
      %2551 = vmatprep.subr.mxu0 0.0
      %2552 = vmatpush1.msra.mxu0 0.0
      %2553 = vmatprep.subr.mxu0 0.0
      %2554 = vmatpush1.msra.mxu0 0.0
      %2555 = vmatprep.subr.mxu0 0.0
      %2556 = vmatpush1.msra.mxu0 0.0
      %2557 = vmatprep.subr.mxu0 0.0
      %2558 = vmatpush1.msra.mxu0 0.0
      %2559 = vmatprep.subr.mxu0 0.0
      %2560 = vmatpush1.msra.mxu0 0.0
      %2561 = vmatprep.mubr.f32.mxu0 0.0
      %2562 = vmatmul.mubr.f32.gmra.mrb[0].mxu0 %v2038
      %v2563 = vpop.f32.mrb[0].mxu0
      %v2564 = vadd.f32 0.0, %v2563
      %v2565 = vpop.f32.mrb[0].mxu0
      %2566 = vdwg.mxu0
      %v2567 = vmul.f32 %v1951, %v1954
      %v2568 = vmul.f32 %v1952, %v1955
      %v2570 = vsel %vm1851, %v2567, 0
      %v2573 = vsel %vm1851, %v2568, 0
      %2575 = vmatprep.subr.mxu0 0.0
      %2576 = vmatpush1.msra.mxu0 %v442
      %2577 = vmatprep.subr.mxu0 0.0
      %2578 = vmatpush1.msra.mxu0 %v443
      %2579 = vmatprep.subr.mxu0 0.0
      %2580 = vmatpush1.msra.mxu0 0.0
      %2581 = vmatprep.subr.mxu0 0.0
      %2582 = vmatpush1.msra.mxu0 0.0
      %2583 = vmatprep.subr.mxu0 0.0
      %2584 = vmatpush1.msra.mxu0 0.0
      %2585 = vmatprep.subr.mxu0 0.0
      %2586 = vmatpush1.msra.mxu0 0.0
      %2587 = vmatprep.subr.mxu0 0.0
      %2588 = vmatpush1.msra.mxu0 0.0
      %2589 = vmatprep.subr.mxu0 0.0
      %2590 = vmatpush1.msra.mxu0 0.0
      %2591 = vmatprep.subr.mxu0 0.0
      %2592 = vmatpush1.msra.mxu0 0.0
      %2593 = vmatprep.subr.mxu0 0.0
      %2594 = vmatpush1.msra.mxu0 0.0
      %2595 = vmatprep.subr.mxu0 0.0
      %2596 = vmatpush1.msra.mxu0 0.0
      %2597 = vmatprep.subr.mxu0 0.0
      %2598 = vmatpush1.msra.mxu0 0.0
      %2599 = vmatprep.subr.mxu0 0.0
      %2600 = vmatpush1.msra.mxu0 0.0
      %2601 = vmatprep.subr.mxu0 0.0
      %2602 = vmatpush1.msra.mxu0 0.0
      %2603 = vmatprep.subr.mxu0 0.0
      %2604 = vmatpush1.msra.mxu0 0.0
      %2605 = vmatprep.subr.mxu0 0.0
      %2606 = vmatpush1.msra.mxu0 0.0
      %2607 = vmatprep.subr.mxu0 0.0
      %2608 = vmatpush1.msra.mxu0 0.0
      %2609 = vmatprep.subr.mxu0 0.0
      %2610 = vmatpush1.msra.mxu0 0.0
      %2611 = vmatprep.subr.mxu0 0.0
      %2612 = vmatpush1.msra.mxu0 0.0
      %2613 = vmatprep.subr.mxu0 0.0
      %2614 = vmatpush1.msra.mxu0 0.0
      %2615 = vmatprep.subr.mxu0 0.0
      %2616 = vmatpush1.msra.mxu0 0.0
      %2617 = vmatprep.subr.mxu0 0.0
      %2618 = vmatpush1.msra.mxu0 0.0
      %2619 = vmatprep.subr.mxu0 0.0
      %2620 = vmatpush1.msra.mxu0 0.0
      %2621 = vmatprep.subr.mxu0 0.0
      %2622 = vmatpush1.msra.mxu0 0.0
      %2623 = vmatprep.subr.mxu0 0.0
      %2624 = vmatpush1.msra.mxu0 0.0
      %2625 = vmatprep.subr.mxu0 0.0
      %2626 = vmatpush1.msra.mxu0 0.0
      %2627 = vmatprep.subr.mxu0 0.0
      %2628 = vmatpush1.msra.mxu0 0.0
      %2629 = vmatprep.subr.mxu0 0.0
      %2630 = vmatpush1.msra.mxu0 0.0
      %2631 = vmatprep.subr.mxu0 0.0
      %2632 = vmatpush1.msra.mxu0 0.0
      %2633 = vmatprep.subr.mxu0 0.0
      %2634 = vmatpush1.msra.mxu0 0.0
      %2635 = vmatprep.subr.mxu0 0.0
      %2636 = vmatpush1.msra.mxu0 0.0
      %2637 = vmatprep.subr.mxu0 0.0
      %2638 = vmatpush1.msra.mxu0 0.0
      %2639 = vmatprep.mubr.f32.mxu0 0.0
      %2640 = vmatmul.mubr.f32.gmra.mrb[0].mxu0 %v2570
      %v2641 = vpop.f32.mrb[0].mxu0
      %v2642 = vadd.f32 0.0, %v2641
      %v2643 = vpop.f32.mrb[0].mxu0
      %2644 = vmatprep.mubr.f32.mxu0 0.0
      %2645 = vmatmul.mubr.f32.gmra.mrb[0].mxu0 %v2573
      %v2646 = vpop.f32.mrb[0].mxu0
      %v2647 = vadd.f32 0.0, %v2646
      %v2648 = vpop.f32.mrb[0].mxu0
      %2649 = vdwg.mxu0
      %2650 = vmatprep.subr.mxu0 0.0
      %2651 = vmatpush1.msra.mxu0 %v2642
      %2652 = vmatprep.subr.mxu0 0.0
      %2653 = vmatpush1.msra.mxu0 %v2647
      %2654 = vmatprep.subr.mxu0 0.0
      %2655 = vmatpush1.msra.mxu0 0.0
      %2656 = vmatprep.subr.mxu0 0.0
      %2657 = vmatpush1.msra.mxu0 0.0
      %2658 = vmatprep.subr.mxu0 0.0
      %2659 = vmatpush1.msra.mxu0 0.0
      %2660 = vmatprep.subr.mxu0 0.0
      %2661 = vmatpush1.msra.mxu0 0.0
      %2662 = vmatprep.subr.mxu0 0.0
      %2663 = vmatpush1.msra.mxu0 0.0
      %2664 = vmatprep.subr.mxu0 0.0
      %2665 = vmatpush1.msra.mxu0 0.0
      %2666 = vmatprep.subr.mxu0 0.0
      %2667 = vmatpush1.msra.mxu0 0.0
      %2668 = vmatprep.subr.mxu0 0.0
      %2669 = vmatpush1.msra.mxu0 0.0
      %2670 = vmatprep.subr.mxu0 0.0
      %2671 = vmatpush1.msra.mxu0 0.0
      %2672 = vmatprep.subr.mxu0 0.0
      %2673 = vmatpush1.msra.mxu0 0.0
      %2674 = vmatprep.subr.mxu0 0.0
      %2675 = vmatpush1.msra.mxu0 0.0
      %2676 = vmatprep.subr.mxu0 0.0
      %2677 = vmatpush1.msra.mxu0 0.0
      %2678 = vmatprep.subr.mxu0 0.0
      %2679 = vmatpush1.msra.mxu0 0.0
      %2680 = vmatprep.subr.mxu0 0.0
      %2681 = vmatpush1.msra.mxu0 0.0
      %2682 = vmatprep.subr.mxu0 0.0
      %2683 = vmatpush1.msra.mxu0 0.0
      %2684 = vmatprep.subr.mxu0 0.0
      %2685 = vmatpush1.msra.mxu0 0.0
      %2686 = vmatprep.subr.mxu0 0.0
      %2687 = vmatpush1.msra.mxu0 0.0
      %2688 = vmatprep.subr.mxu0 0.0
      %2689 = vmatpush1.msra.mxu0 0.0
      %2690 = vmatprep.subr.mxu0 0.0
      %2691 = vmatpush1.msra.mxu0 0.0
      %2692 = vmatprep.subr.mxu0 0.0
      %2693 = vmatpush1.msra.mxu0 0.0
      %2694 = vmatprep.subr.mxu0 0.0
      %2695 = vmatpush1.msra.mxu0 0.0
      %2696 = vmatprep.subr.mxu0 0.0
      %2697 = vmatpush1.msra.mxu0 0.0
      %2698 = vmatprep.subr.mxu0 0.0
      %2699 = vmatpush1.msra.mxu0 0.0
      %2700 = vmatprep.subr.mxu0 0.0
      %2701 = vmatpush1.msra.mxu0 0.0
      %2702 = vmatprep.subr.mxu0 0.0
      %2703 = vmatpush1.msra.mxu0 0.0
      %2704 = vmatprep.subr.mxu0 0.0
      %2705 = vmatpush1.msra.mxu0 0.0
      %2706 = vmatprep.subr.mxu0 0.0
      %2707 = vmatpush1.msra.mxu0 0.0
      %2708 = vmatprep.subr.mxu0 0.0
      %2709 = vmatpush1.msra.mxu0 0.0
      %2710 = vmatprep.subr.mxu0 0.0
      %2711 = vmatpush1.msra.mxu0 0.0
      %2712 = vmatprep.subr.mxu0 0.0
      %2713 = vmatpush1.msra.mxu0 0.0
      %2714 = vmatprep.mubr.f32.mxu0 0.0
      %2715 = vmatmul.mubr.f32.gmra.mrb[0].mxu0 %v2038
      %v2716 = vpop.f32.mrb[0].mxu0
      %v2717 = vadd.f32 0.0, %v2716
      %v2718 = vpop.f32.mrb[0].mxu0
      %2719 = vdwg.mxu0
      %v2720 = vmul.f32 %v2107, %v2107
      %v2721 = vmul.f32 %v2258, %v2258
      %v2722 = vmul.f32 %v2107, %v2258
      %v2723 = vsub.f32 %v2411, %v2720
      %v2724 = vsub.f32 %v2564, %v2721
      %v2725 = vsub.f32 %v2717, %v2722
      %v2726 = vmul.f32 %v2725, 2.0
      %v2727 = vstv %s1940
      %v2728 = vadd.f32 %v2726, %v2727
      %v2729 = vadd.f32 %v2723, %v2724
      %v2730 = vadd.f32 %v2729, %v2727
      %v2731 = vrcp.pop %v2730
      %v2732 = vmul.f32 %v2728, %v2731
      %v2733 = vmul.f32 %v2722, 2.0
      %v2734 = vstv %s1938
      %v2735 = vadd.f32 %v2733, %v2734
      %v2736 = vmul.f32 %v2735, %v2728
      %v2737 = vadd.f32 %v2720, %v2721
      %v2738 = vadd.f32 %v2737, %v2734
      %v2739 = vmul.f32 %v2738, %v2730
      %v2740 = vrcp.pop %v2739
      %v2741 = vmul.f32 %v2736, %v2740
      %2742 = vmatprep.subr.mxu0 0.0
      %2743 = vmatpush1.msra.mxu0 %v472
      %2744 = vmatprep.subr.mxu0 0.0
      %2745 = vmatpush1.msra.mxu0 %v473
      %2746 = vmatprep.subr.mxu0 0.0
      %2747 = vmatpush1.msra.mxu0 0.0
      %2748 = vmatprep.subr.mxu0 0.0
      %2749 = vmatpush1.msra.mxu0 0.0
      %2750 = vmatprep.subr.mxu0 0.0
      %2751 = vmatpush1.msra.mxu0 0.0
      %2752 = vmatprep.subr.mxu0 0.0
      %2753 = vmatpush1.msra.mxu0 0.0
      %2754 = vmatprep.subr.mxu0 0.0
      %2755 = vmatpush1.msra.mxu0 0.0
      %2756 = vmatprep.subr.mxu0 0.0
      %2757 = vmatpush1.msra.mxu0 0.0
      %2758 = vmatprep.subr.mxu0 0.0
      %2759 = vmatpush1.msra.mxu0 0.0
      %2760 = vmatprep.subr.mxu0 0.0
      %2761 = vmatpush1.msra.mxu0 0.0
      %2762 = vmatprep.subr.mxu0 0.0
      %2763 = vmatpush1.msra.mxu0 0.0
      %2764 = vmatprep.subr.mxu0 0.0
      %2765 = vmatpush1.msra.mxu0 0.0
      %2766 = vmatprep.subr.mxu0 0.0
      %2767 = vmatpush1.msra.mxu0 0.0
      %2768 = vmatprep.subr.mxu0 0.0
      %2769 = vmatpush1.msra.mxu0 0.0
      %2770 = vmatprep.subr.mxu0 0.0
      %2771 = vmatpush1.msra.mxu0 0.0
      %2772 = vmatprep.subr.mxu0 0.0
      %2773 = vmatpush1.msra.mxu0 0.0
      %2774 = vmatprep.subr.mxu0 0.0
      %2775 = vmatpush1.msra.mxu0 0.0
      %2776 = vmatprep.subr.mxu0 0.0
      %2777 = vmatpush1.msra.mxu0 0.0
      %2778 = vmatprep.subr.mxu0 0.0
      %2779 = vmatpush1.msra.mxu0 0.0
      %2780 = vmatprep.subr.mxu0 0.0
      %2781 = vmatpush1.msra.mxu0 0.0
      %2782 = vmatprep.subr.mxu0 0.0
      %2783 = vmatpush1.msra.mxu0 0.0
      %2784 = vmatprep.subr.mxu0 0.0
      %2785 = vmatpush1.msra.mxu0 0.0
      %2786 = vmatprep.subr.mxu0 0.0
      %2787 = vmatpush1.msra.mxu0 0.0
      %2788 = vmatprep.subr.mxu0 0.0
      %2789 = vmatpush1.msra.mxu0 0.0
      %2790 = vmatprep.subr.mxu0 0.0
      %2791 = vmatpush1.msra.mxu0 0.0
      %2792 = vmatprep.subr.mxu0 0.0
      %2793 = vmatpush1.msra.mxu0 0.0
      %2794 = vmatprep.subr.mxu0 0.0
      %2795 = vmatpush1.msra.mxu0 0.0
      %2796 = vmatprep.subr.mxu0 0.0
      %2797 = vmatpush1.msra.mxu0 0.0
      %2798 = vmatprep.subr.mxu0 0.0
      %2799 = vmatpush1.msra.mxu0 0.0
      %2800 = vmatprep.subr.mxu0 0.0
      %2801 = vmatpush1.msra.mxu0 0.0
      %2802 = vmatprep.subr.mxu0 0.0
      %2803 = vmatpush1.msra.mxu0 0.0
      %2804 = vmatprep.subr.mxu0 0.0
      %2805 = vmatpush1.msra.mxu0 0.0
      %2806 = vmatprep.mubr.f32.mxu0 0.0
      %2807 = vmatmul.mubr.f32.gmra.mrb[0].mxu0 %v1957
      %v2808 = vpop.f32.mrb[0].mxu0
      %v2809 = vadd.f32 0.0, %v2808
      %v2810 = vpop.f32.mrb[0].mxu0
      %2811 = vmatprep.mubr.f32.mxu0 0.0
      %2812 = vmatmul.mubr.f32.gmra.mrb[0].mxu0 %v1960
      %v2813 = vpop.f32.mrb[0].mxu0
      %v2814 = vadd.f32 0.0, %v2813
      %v2815 = vpop.f32.mrb[0].mxu0
      %2816 = vdwg.mxu0
      %v2818 = vsel %vm1851, %v456, 0
      %2820 = vmatprep.subr.mxu0 0.0
      %2821 = vmatpush1.msra.mxu0 %v2809
      %2822 = vmatprep.subr.mxu0 0.0
      %2823 = vmatpush1.msra.mxu0 %v2814
      %2824 = vmatprep.subr.mxu0 0.0
      %2825 = vmatpush1.msra.mxu0 0.0
      %2826 = vmatprep.subr.mxu0 0.0
      %2827 = vmatpush1.msra.mxu0 0.0
      %2828 = vmatprep.subr.mxu0 0.0
      %2829 = vmatpush1.msra.mxu0 0.0
      %2830 = vmatprep.subr.mxu0 0.0
      %2831 = vmatpush1.msra.mxu0 0.0
      %2832 = vmatprep.subr.mxu0 0.0
      %2833 = vmatpush1.msra.mxu0 0.0
      %2834 = vmatprep.subr.mxu0 0.0
      %2835 = vmatpush1.msra.mxu0 0.0
      %2836 = vmatprep.subr.mxu0 0.0
      %2837 = vmatpush1.msra.mxu0 0.0
      %2838 = vmatprep.subr.mxu0 0.0
      %2839 = vmatpush1.msra.mxu0 0.0
      %2840 = vmatprep.subr.mxu0 0.0
      %2841 = vmatpush1.msra.mxu0 0.0
      %2842 = vmatprep.subr.mxu0 0.0
      %2843 = vmatpush1.msra.mxu0 0.0
      %2844 = vmatprep.subr.mxu0 0.0
      %2845 = vmatpush1.msra.mxu0 0.0
      %2846 = vmatprep.subr.mxu0 0.0
      %2847 = vmatpush1.msra.mxu0 0.0
      %2848 = vmatprep.subr.mxu0 0.0
      %2849 = vmatpush1.msra.mxu0 0.0
      %2850 = vmatprep.subr.mxu0 0.0
      %2851 = vmatpush1.msra.mxu0 0.0
      %2852 = vmatprep.subr.mxu0 0.0
      %2853 = vmatpush1.msra.mxu0 0.0
      %2854 = vmatprep.subr.mxu0 0.0
      %2855 = vmatpush1.msra.mxu0 0.0
      %2856 = vmatprep.subr.mxu0 0.0
      %2857 = vmatpush1.msra.mxu0 0.0
      %2858 = vmatprep.subr.mxu0 0.0
      %2859 = vmatpush1.msra.mxu0 0.0
      %2860 = vmatprep.subr.mxu0 0.0
      %2861 = vmatpush1.msra.mxu0 0.0
      %2862 = vmatprep.subr.mxu0 0.0
      %2863 = vmatpush1.msra.mxu0 0.0
      %2864 = vmatprep.subr.mxu0 0.0
      %2865 = vmatpush1.msra.mxu0 0.0
      %2866 = vmatprep.subr.mxu0 0.0
      %2867 = vmatpush1.msra.mxu0 0.0
      %2868 = vmatprep.subr.mxu0 0.0
      %2869 = vmatpush1.msra.mxu0 0.0
      %2870 = vmatprep.subr.mxu0 0.0
      %2871 = vmatpush1.msra.mxu0 0.0
      %2872 = vmatprep.subr.mxu0 0.0
      %2873 = vmatpush1.msra.mxu0 0.0
      %2874 = vmatprep.subr.mxu0 0.0
      %2875 = vmatpush1.msra.mxu0 0.0
      %2876 = vmatprep.subr.mxu0 0.0
      %2877 = vmatpush1.msra.mxu0 0.0
      %2878 = vmatprep.subr.mxu0 0.0
      %2879 = vmatpush1.msra.mxu0 0.0
      %2880 = vmatprep.subr.mxu0 0.0
      %2881 = vmatpush1.msra.mxu0 0.0
      %2882 = vmatprep.subr.mxu0 0.0
      %2883 = vmatpush1.msra.mxu0 0.0
      %2884 = vmatprep.mubr.f32.mxu0 0.0
      %2885 = vmatmul.mubr.f32.gmra.mrb[0].mxu0 %v2818
      %v2886 = vpop.f32.mrb[0].mxu0
      %v2887 = vadd.f32 0.0, %v2886
      %v2888 = vpop.f32.mrb[0].mxu0
      %2889 = vdwg.mxu0
      %s2890 = smul.u32 %s1942, 8
      %s2891 = scalar_lea.vmem [#allocation4], %s2890
      %vm2892 = vcmask 64512
      %2893 = vst.msk [vmem:[%s2891] sm:$0xff] %vm2892, %v2887
      %2894 = vmatprep.subr.mxu0 0.0
      %2895 = vmatpush1.msra.mxu0 %v472
      %2896 = vmatprep.subr.mxu0 0.0
      %2897 = vmatpush1.msra.mxu0 %v473
      %2898 = vmatprep.subr.mxu0 0.0
      %2899 = vmatpush1.msra.mxu0 0.0
      %2900 = vmatprep.subr.mxu0 0.0
      %2901 = vmatpush1.msra.mxu0 0.0
      %2902 = vmatprep.subr.mxu0 0.0
      %2903 = vmatpush1.msra.mxu0 0.0
      %2904 = vmatprep.subr.mxu0 0.0
      %2905 = vmatpush1.msra.mxu0 0.0
      %2906 = vmatprep.subr.mxu0 0.0
      %2907 = vmatpush1.msra.mxu0 0.0
      %2908 = vmatprep.subr.mxu0 0.0
      %2909 = vmatpush1.msra.mxu0 0.0
      %2910 = vmatprep.subr.mxu0 0.0
      %2911 = vmatpush1.msra.mxu0 0.0
      %2912 = vmatprep.subr.mxu0 0.0
      %2913 = vmatpush1.msra.mxu0 0.0
      %2914 = vmatprep.subr.mxu0 0.0
      %2915 = vmatpush1.msra.mxu0 0.0
      %2916 = vmatprep.subr.mxu0 0.0
      %2917 = vmatpush1.msra.mxu0 0.0
      %2918 = vmatprep.subr.mxu0 0.0
      %2919 = vmatpush1.msra.mxu0 0.0
      %2920 = vmatprep.subr.mxu0 0.0
      %2921 = vmatpush1.msra.mxu0 0.0
      %2922 = vmatprep.subr.mxu0 0.0
      %2923 = vmatpush1.msra.mxu0 0.0
      %2924 = vmatprep.subr.mxu0 0.0
      %2925 = vmatpush1.msra.mxu0 0.0
      %2926 = vmatprep.subr.mxu0 0.0
      %2927 = vmatpush1.msra.mxu0 0.0
      %2928 = vmatprep.subr.mxu0 0.0
      %2929 = vmatpush1.msra.mxu0 0.0
      %2930 = vmatprep.subr.mxu0 0.0
      %2931 = vmatpush1.msra.mxu0 0.0
      %2932 = vmatprep.subr.mxu0 0.0
      %2933 = vmatpush1.msra.mxu0 0.0
      %2934 = vmatprep.subr.mxu0 0.0
      %2935 = vmatpush1.msra.mxu0 0.0
      %2936 = vmatprep.subr.mxu0 0.0
      %2937 = vmatpush1.msra.mxu0 0.0
      %2938 = vmatprep.subr.mxu0 0.0
      %2939 = vmatpush1.msra.mxu0 0.0
      %2940 = vmatprep.subr.mxu0 0.0
      %2941 = vmatpush1.msra.mxu0 0.0
      %2942 = vmatprep.subr.mxu0 0.0
      %2943 = vmatpush1.msra.mxu0 0.0
      %2944 = vmatprep.subr.mxu0 0.0
      %2945 = vmatpush1.msra.mxu0 0.0
      %2946 = vmatprep.subr.mxu0 0.0
      %2947 = vmatpush1.msra.mxu0 0.0
      %2948 = vmatprep.subr.mxu0 0.0
      %2949 = vmatpush1.msra.mxu0 0.0
      %2950 = vmatprep.subr.mxu0 0.0
      %2951 = vmatpush1.msra.mxu0 0.0
      %2952 = vmatprep.subr.mxu0 0.0
      %2953 = vmatpush1.msra.mxu0 0.0
      %2954 = vmatprep.subr.mxu0 0.0
      %2955 = vmatpush1.msra.mxu0 0.0
      %2956 = vmatprep.subr.mxu0 0.0
      %2957 = vmatpush1.msra.mxu0 0.0
      %2958 = vmatprep.mubr.f32.mxu0 0.0
      %2959 = vmatmul.mubr.f32.gmra.mrb[0].mxu0 %v2111
      %v2960 = vpop.f32.mrb[0].mxu0
      %v2961 = vadd.f32 0.0, %v2960
      %v2962 = vpop.f32.mrb[0].mxu0
      %2963 = vmatprep.mubr.f32.mxu0 0.0
      %2964 = vmatmul.mubr.f32.gmra.mrb[0].mxu0 %v2114
      %v2965 = vpop.f32.mrb[0].mxu0
      %v2966 = vadd.f32 0.0, %v2965
      %v2967 = vpop.f32.mrb[0].mxu0
      %2968 = vdwg.mxu0
      %2969 = vmatprep.subr.mxu0 0.0
      %2970 = vmatpush1.msra.mxu0 %v2961
      %2971 = vmatprep.subr.mxu0 0.0
      %2972 = vmatpush1.msra.mxu0 %v2966
      %2973 = vmatprep.subr.mxu0 0.0
      %2974 = vmatpush1.msra.mxu0 0.0
      %2975 = vmatprep.subr.mxu0 0.0
      %2976 = vmatpush1.msra.mxu0 0.0
      %2977 = vmatprep.subr.mxu0 0.0
      %2978 = vmatpush1.msra.mxu0 0.0
      %2979 = vmatprep.subr.mxu0 0.0
      %2980 = vmatpush1.msra.mxu0 0.0
      %2981 = vmatprep.subr.mxu0 0.0
      %2982 = vmatpush1.msra.mxu0 0.0
      %2983 = vmatprep.subr.mxu0 0.0
      %2984 = vmatpush1.msra.mxu0 0.0
      %2985 = vmatprep.subr.mxu0 0.0
      %2986 = vmatpush1.msra.mxu0 0.0
      %2987 = vmatprep.subr.mxu0 0.0
      %2988 = vmatpush1.msra.mxu0 0.0
      %2989 = vmatprep.subr.mxu0 0.0
      %2990 = vmatpush1.msra.mxu0 0.0
      %2991 = vmatprep.subr.mxu0 0.0
      %2992 = vmatpush1.msra.mxu0 0.0
      %2993 = vmatprep.subr.mxu0 0.0
      %2994 = vmatpush1.msra.mxu0 0.0
      %2995 = vmatprep.subr.mxu0 0.0
      %2996 = vmatpush1.msra.mxu0 0.0
      %2997 = vmatprep.subr.mxu0 0.0
      %2998 = vmatpush1.msra.mxu0 0.0
      %2999 = vmatprep.subr.mxu0 0.0
      %3000 = vmatpush1.msra.mxu0 0.0
      %3001 = vmatprep.subr.mxu0 0.0
      %3002 = vmatpush1.msra.mxu0 0.0
      %3003 = vmatprep.subr.mxu0 0.0
      %3004 = vmatpush1.msra.mxu0 0.0
      %3005 = vmatprep.subr.mxu0 0.0
      %3006 = vmatpush1.msra.mxu0 0.0
      %3007 = vmatprep.subr.mxu0 0.0
      %3008 = vmatpush1.msra.mxu0 0.0
      %3009 = vmatprep.subr.mxu0 0.0
      %3010 = vmatpush1.msra.mxu0 0.0
      %3011 = vmatprep.subr.mxu0 0.0
      %3012 = vmatpush1.msra.mxu0 0.0
      %3013 = vmatprep.subr.mxu0 0.0
      %3014 = vmatpush1.msra.mxu0 0.0
      %3015 = vmatprep.subr.mxu0 0.0
      %3016 = vmatpush1.msra.mxu0 0.0
      %3017 = vmatprep.subr.mxu0 0.0
      %3018 = vmatpush1.msra.mxu0 0.0
      %3019 = vmatprep.subr.mxu0 0.0
      %3020 = vmatpush1.msra.mxu0 0.0
      %3021 = vmatprep.subr.mxu0 0.0
      %3022 = vmatpush1.msra.mxu0 0.0
      %3023 = vmatprep.subr.mxu0 0.0
      %3024 = vmatpush1.msra.mxu0 0.0
      %3025 = vmatprep.subr.mxu0 0.0
      %3026 = vmatpush1.msra.mxu0 0.0
      %3027 = vmatprep.subr.mxu0 0.0
      %3028 = vmatpush1.msra.mxu0 0.0
      %3029 = vmatprep.subr.mxu0 0.0
      %3030 = vmatpush1.msra.mxu0 0.0
      %3031 = vmatprep.subr.mxu0 0.0
      %3032 = vmatpush1.msra.mxu0 0.0
      %3033 = vmatprep.mubr.f32.mxu0 0.0
      %3034 = vmatmul.mubr.f32.gmra.mrb[0].mxu0 %v2818
      %v3035 = vpop.f32.mrb[0].mxu0
      %v3036 = vadd.f32 0.0, %v3035
      %v3037 = vpop.f32.mrb[0].mxu0
      %3038 = vdwg.mxu0
      %s3039 = scalar_lea.vmem [#allocation5], %s2890
      %3040 = vst.msk [vmem:[%s3039] sm:$0xff] %vm2892, %v3036
      %vm3041 = vcmask 46080
      %v3042 = vsel %vm3041, %v2741, 0.0
      %3043 = vadd.xlane.f32.xlu0 %v3042
      %v3044 = vpop.xlane.xlu0 %3043
      %v3045 = vrot.slane %v3044, 4
      %v3046 = vadd.f32 %v3044, %v3045
      %v3047 = vrot.slane %v3046, 2
      %v3048 = vadd.f32 %v3046, %v3047
      %v3049 = vrot.slane %v3048, 1
      %v3050 = vadd.f32 %v3048, %v3049
      %s3051 = vtos %v3050
      %s3052 = sadd.f32 %s1947, %s3051
      %v3053 = vsel %vm3041, %v2732, 0.0
      %3054 = vadd.xlane.f32.xlu0 %v3053
      %v3055 = vpop.xlane.xlu0 %3054
      %v3056 = vrot.slane %v3055, 4
      %v3057 = vadd.f32 %v3055, %v3056
      %v3058 = vrot.slane %v3057, 2
      %v3059 = vadd.f32 %v3057, %v3058
      %v3060 = vrot.slane %v3059, 1
      %v3061 = vadd.f32 %v3059, %v3060
      %s3062 = vtos %v3061
      %s3063 = sadd.f32 %s1948, %s3062
    $region21: #{focal_loss_with_iou_and_ssim.3} parent=1 // loop_footer
      %s1946 = sadd.s32 1, %s1942
    $region22: #{focal_loss_with_iou_and_ssim.3} parent=1 // loop_footer_branch
      %1941 = sbr.rel target = $region18
    $region23: #{focal_loss_with_iou_and_ssim.3} parent=1 // loop_exit
      _
    %s3064 = smul.f32 %s1947, 0.0034722222
    %s3065 = scalar_lea.smem [#allocation10], 1
    %3066 = sst [smem:[%s3065]] %s3064
    %s3067 = smul.f32 %s1948, 0.0034722222
    %s3068 = scalar_lea.smem [#allocation12], 1
    %3069 = sst [smem:[%s3068]] %s3067
    %v3070 = vld [vmem:[#allocation4] sm:$0xff]
    %v3071 = vld [vmem:[#allocation4 + $0x8] sm:$0xff]
    %v3072 = vld [vmem:[#allocation4 + $0x10] sm:$0xff]
    %v3073 = vld [vmem:[#allocation4 + $0x18] sm:$0xff]
    %v3074 = vld [vmem:[#allocation4 + $0x20] sm:$0xff]
    %v3075 = vld [vmem:[#allocation4 + $0x28] sm:$0xff]
    %v3076 = vld [vmem:[#allocation4 + $0x30] sm:$0xff]
    %v3077 = vld [vmem:[#allocation4 + $0x38] sm:$0xff]
    %vm3078 = vcmask 64512
    %v3079 = vsel %vm3078, %v3070, -inf
    %v3080 = vsel %vm3078, %v3071, -inf
    %v3081 = vsel %vm3078, %v3072, -inf
    %v3082 = vsel %vm3078, %v3073, -inf
    %v3083 = vsel %vm3078, %v3074, -inf
    %v3084 = vmax.f32 %v3079, %v3083
    %v3085 = vsel %vm3078, %v3075, -inf
    %v3086 = vmax.f32 %v3080, %v3085
    %v3087 = vsel %vm3078, %v3076, -inf
    %v3088 = vmax.f32 %v3081, %v3087
    %v3089 = vsel %vm3078, %v3077, -inf
    %v3090 = vmax.f32 %v3082, %v3089
    %v3091 = vmax.f32 %v3084, %v3086
    %v3092 = vmax.f32 %v3088, %v3090
    %v3093 = vmax.f32 %v3091, %v3092
    %3094 = vmax.xlane.f32.xlu0 %v3093
    %v3095 = vpop.xlane.xlu0 %3094
    %v3096 = vrot.slane %v3095, 4
    %v3097 = vmax.f32 %v3095, %v3096
    %v3098 = vrot.slane %v3097, 2
    %v3099 = vmax.f32 %v3097, %v3098
    %v3100 = vrot.slane %v3099, 1
    %v3101 = vmax.f32 %v3099, %v3100
    %s3102 = vtos %v3101
    %p3103 = scmp.gt.f32.partialorder %s3102, 128.0
    %s3104 = scalar_select %p3103, 255.0, 1.0
    %v3105 = vsel %vm3078, %v3070, inf
    %v3106 = vsel %vm3078, %v3071, inf
    %v3107 = vsel %vm3078, %v3072, inf
    %v3108 = vsel %vm3078, %v3073, inf
    %v3109 = vsel %vm3078, %v3074, inf
    %v3110 = vmin.f32 %v3105, %v3109
    %v3111 = vsel %vm3078, %v3075, inf
    %v3112 = vmin.f32 %v3106, %v3111
    %v3113 = vsel %vm3078, %v3076, inf
    %v3114 = vmin.f32 %v3107, %v3113
    %v3115 = vsel %vm3078, %v3077, inf
    %v3116 = vmin.f32 %v3108, %v3115
    %v3117 = vmin.f32 %v3110, %v3112
    %v3118 = vmin.f32 %v3114, %v3116
    %v3119 = vmin.f32 %v3117, %v3118
    %3120 = vmin.xlane.f32.xlu0 %v3119
    %v3121 = vpop.xlane.xlu0 %3120
    %v3122 = vrot.slane %v3121, 4
    %v3123 = vmin.f32 %v3121, %v3122
    %v3124 = vrot.slane %v3123, 2
    %v3125 = vmin.f32 %v3123, %v3124
    %v3126 = vrot.slane %v3125, 1
    %v3127 = vmin.f32 %v3125, %v3126
    %s3128 = vtos %v3127
    %p3129 = scmp.lt.f32.partialorder %s3128, -0.5
    %s3130 = scalar_select %p3129, -1.0, 0.0
    %s3131 = ssub.f32 %s3104, %s3130
    %s3132 = smul.f32 %s3131, 0.01
    %s3133 = smul.f32 %s3132, %s3132
    %s3134 = smul.f32 %s3131, 0.03
    %s3135 = smul.f32 %s3134, %s3134
    %vm3136 = vcmp.eq.s32.totalorder %v202, 0
    %v3137 = vsel %vm3136, 0.0076728435, 0.0
    %v3138 = vadd.f32 %v3137, 0.0
    %vm3139 = vcmp.eq.s32.totalorder %v206, 0
    %v3140 = vsel %vm3139, 0.0076728435, 0.0
    %v3141 = vadd.f32 %v3140, 0.0
    %vm3142 = vcmp.eq.s32.totalorder %v202, 1
    %v3143 = vsel %vm3142, 0.036351766, 0.0
    %v3144 = vadd.f32 %v3138, %v3143
    %vm3145 = vcmp.eq.s32.totalorder %v206, 1
    %v3146 = vsel %vm3145, 0.036351766, 0.0
    %v3147 = vadd.f32 %v3141, %v3146
    %vm3148 = vcmp.eq.s32.totalorder %v202, 2
    %v3149 = vsel %vm3148, 0.11042692, 0.0
    %v3150 = vadd.f32 %v3144, %v3149
    %vm3151 = vcmp.eq.s32.totalorder %v206, 2
    %v3152 = vsel %vm3151, 0.11042692, 0.0
    %v3153 = vadd.f32 %v3147, %v3152
    %vm3154 = vcmp.eq.s32.totalorder %v202, 3
    %v3155 = vsel %vm3154, 0.21508227, 0.0
    %v3156 = vadd.f32 %v3150, %v3155
    %vm3157 = vcmp.eq.s32.totalorder %v206, 3
    %v3158 = vsel %vm3157, 0.21508227, 0.0
    %v3159 = vadd.f32 %v3153, %v3158
    %vm3160 = vcmp.eq.s32.totalorder %v202, 4
    %v3161 = vsel %vm3160, 0.26860526, 0.0
    %v3162 = vadd.f32 %v3156, %v3161
    %vm3163 = vcmp.eq.s32.totalorder %v206, 4
    %v3164 = vsel %vm3163, 0.26860526, 0.0
    %v3165 = vadd.f32 %v3159, %v3164
    %vm3166 = vcmp.eq.s32.totalorder %v202, 5
    %v3167 = vsel %vm3166, 0.21508227, 0.0
    %v3168 = vadd.f32 %v3162, %v3167
    %vm3169 = vcmp.eq.s32.totalorder %v206, 5
    %v3170 = vsel %vm3169, 0.21508227, 0.0
    %v3171 = vadd.f32 %v3165, %v3170
    %vm3172 = vcmp.eq.s32.totalorder %v202, 6
    %v3173 = vsel %vm3172, 0.11042692, 0.0
    %v3174 = vadd.f32 %v3168, %v3173
    %vm3175 = vcmp.eq.s32.totalorder %v206, 6
    %v3176 = vsel %vm3175, 0.11042692, 0.0
    %v3177 = vadd.f32 %v3171, %v3176
    %vm3178 = vcmp.eq.s32.totalorder %v202, 7
    %v3179 = vsel %vm3178, 0.036351766, 0.0
    %v3180 = vadd.f32 %v3174, %v3179
    %vm3181 = vcmp.eq.s32.totalorder %v206, 7
    %v3182 = vsel %vm3181, 0.036351766, 0.0
    %v3183 = vadd.f32 %v3177, %v3182
    %v3184 = vmul.f32 %v3180, %v3183
    loop: start=0, step=1, limit=8
    $region24: #{focal_loss_with_iou_and_ssim.3} parent=1 // loop_pre_header
      _
    $region25: #{focal_loss_with_iou_and_ssim.3} parent=1 // loop_header
      %s3186 = sphi 0, %s3190
      %p3187 = scmp.ge.s32.totalorder %s3186, 8
      %s3191 = sphi 0.0, %s3575
      %s3192 = sphi 0.0, %s3576
    $region26: #{focal_loss_with_iou_and_ssim.3} parent=1 // loop_header_branch
      %3189 = sbr.rel (%p3187) target = $region30
    $region27: #{focal_loss_with_iou_and_ssim.3} parent=1 // loop_body
      %s3193 = smul.u32 %s3186, 8
      %s3194 = scalar_lea.vmem [#allocation4], %s3193
      %v3195 = vld [vmem:[%s3194] sm:$0xff]
      %s3196 = scalar_lea.vmem [#allocation5], %s3193
      %v3197 = vld [vmem:[%s3196] sm:$0xff]
      %v3198 = vmul.f32 %v3184, %v3195
      %v3199 = vsel %vm3078, %v3198, 0.0
      %3200 = vadd.xlane.f32.xlu0 %v3199
      %v3201 = vpop.xlane.xlu0 %3200
      %v3202 = vrot.slane %v3201, 4
      %v3203 = vadd.f32 %v3201, %v3202
      %v3204 = vrot.slane %v3203, 2
      %v3205 = vadd.f32 %v3203, %v3204
      %v3206 = vrot.slane %v3205, 1
      %v3207 = vadd.f32 %v3205, %v3206
      %s3208 = vtos %v3207
      %v3209 = vmul.f32 %v3184, %v3197
      %v3210 = vsel %vm3078, %v3209, 0.0
      %3211 = vadd.xlane.f32.xlu0 %v3210
      %v3212 = vpop.xlane.xlu0 %3211
      %v3213 = vrot.slane %v3212, 4
      %v3214 = vadd.f32 %v3212, %v3213
      %v3215 = vrot.slane %v3214, 2
      %v3216 = vadd.f32 %v3214, %v3215
      %v3217 = vrot.slane %v3216, 1
      %v3218 = vadd.f32 %v3216, %v3217
      %s3219 = vtos %v3218
      %v3220 = vmul.f32 %v3195, %v3195
      %v3221 = vmul.f32 %v3184, %v3220
      %v3222 = vsel %vm3078, %v3221, 0.0
      %3223 = vadd.xlane.f32.xlu0 %v3222
      %v3224 = vpop.xlane.xlu0 %3223
      %v3225 = vrot.slane %v3224, 4
      %v3226 = vadd.f32 %v3224, %v3225
      %v3227 = vrot.slane %v3226, 2
      %v3228 = vadd.f32 %v3226, %v3227
      %v3229 = vrot.slane %v3228, 1
      %v3230 = vadd.f32 %v3228, %v3229
      %s3231 = vtos %v3230
      %v3232 = vmul.f32 %v3197, %v3197
      %v3233 = vmul.f32 %v3184, %v3232
      %v3234 = vsel %vm3078, %v3233, 0.0
      %3235 = vadd.xlane.f32.xlu0 %v3234
      %v3236 = vpop.xlane.xlu0 %3235
      %v3237 = vrot.slane %v3236, 4
      %v3238 = vadd.f32 %v3236, %v3237
      %v3239 = vrot.slane %v3238, 2
      %v3240 = vadd.f32 %v3238, %v3239
      %v3241 = vrot.slane %v3240, 1
      %v3242 = vadd.f32 %v3240, %v3241
      %s3243 = vtos %v3242
      %v3244 = vmul.f32 %v3195, %v3197
      %v3245 = vmul.f32 %v3184, %v3244
      %v3246 = vsel %vm3078, %v3245, 0.0
      %3247 = vadd.xlane.f32.xlu0 %v3246
      %v3248 = vpop.xlane.xlu0 %3247
      %v3249 = vrot.slane %v3248, 4
      %v3250 = vadd.f32 %v3248, %v3249
      %v3251 = vrot.slane %v3250, 2
      %v3252 = vadd.f32 %v3250, %v3251
      %v3253 = vrot.slane %v3252, 1
      %v3254 = vadd.f32 %v3252, %v3253
      %s3255 = vtos %v3254
      %s3256 = smul.f32 %s3208, %s3208
      %s3257 = smul.f32 %s3219, %s3219
      %s3258 = smul.f32 %s3208, %s3219
      %s3259 = ssub.f32 %s3231, %s3256
      %s3260 = ssub.f32 %s3243, %s3257
      %s3261 = ssub.f32 %s3255, %s3258
      %s3262 = smul.f32 %s3261, 2.0
      %s3263 = sadd.f32 %s3262, %s3135
      %s3264 = sadd.f32 %s3259, %s3260
      %s3265 = sadd.f32 %s3264, %s3135
      %v3266 = vstv %s3265
      %v3267 = vrcp.pop %v3266
      %s3268 = vtos %v3267
      %s3269 = smul.f32 %s3263, %s3268
      %s3270 = smul.f32 %s3258, 2.0
      %s3271 = sadd.f32 %s3270, %s3133
      %s3272 = smul.f32 %s3271, %s3263
      %s3273 = sadd.f32 %s3256, %s3257
      %s3274 = sadd.f32 %s3273, %s3133
      %s3275 = smul.f32 %s3274, %s3265
      %v3276 = vstv %s3275
      %v3277 = vrcp.pop %v3276
      %s3278 = vtos %v3277
      %s3279 = smul.f32 %s3272, %s3278
      %v3281 = vsel %vm3078, %v3195, 0
      %3283 = vmatprep.subr.mxu0 0.0
      %3284 = vmatpush1.msra.mxu0 %v472
      %3285 = vmatprep.subr.mxu0 0.0
      %3286 = vmatpush1.msra.mxu0 0.0
      %3287 = vmatprep.subr.mxu0 0.0
      %3288 = vmatpush1.msra.mxu0 0.0
      %3289 = vmatprep.subr.mxu0 0.0
      %3290 = vmatpush1.msra.mxu0 0.0
      %3291 = vmatprep.subr.mxu0 0.0
      %3292 = vmatpush1.msra.mxu0 0.0
      %3293 = vmatprep.subr.mxu0 0.0
      %3294 = vmatpush1.msra.mxu0 0.0
      %3295 = vmatprep.subr.mxu0 0.0
      %3296 = vmatpush1.msra.mxu0 0.0
      %3297 = vmatprep.subr.mxu0 0.0
      %3298 = vmatpush1.msra.mxu0 0.0
      %3299 = vmatprep.subr.mxu0 0.0
      %3300 = vmatpush1.msra.mxu0 0.0
      %3301 = vmatprep.subr.mxu0 0.0
      %3302 = vmatpush1.msra.mxu0 0.0
      %3303 = vmatprep.subr.mxu0 0.0
      %3304 = vmatpush1.msra.mxu0 0.0
      %3305 = vmatprep.subr.mxu0 0.0
      %3306 = vmatpush1.msra.mxu0 0.0
      %3307 = vmatprep.subr.mxu0 0.0
      %3308 = vmatpush1.msra.mxu0 0.0
      %3309 = vmatprep.subr.mxu0 0.0
      %3310 = vmatpush1.msra.mxu0 0.0
      %3311 = vmatprep.subr.mxu0 0.0
      %3312 = vmatpush1.msra.mxu0 0.0
      %3313 = vmatprep.subr.mxu0 0.0
      %3314 = vmatpush1.msra.mxu0 0.0
      %3315 = vmatprep.subr.mxu0 0.0
      %3316 = vmatpush1.msra.mxu0 0.0
      %3317 = vmatprep.subr.mxu0 0.0
      %3318 = vmatpush1.msra.mxu0 0.0
      %3319 = vmatprep.subr.mxu0 0.0
      %3320 = vmatpush1.msra.mxu0 0.0
      %3321 = vmatprep.subr.mxu0 0.0
      %3322 = vmatpush1.msra.mxu0 0.0
      %3323 = vmatprep.subr.mxu0 0.0
      %3324 = vmatpush1.msra.mxu0 0.0
      %3325 = vmatprep.subr.mxu0 0.0
      %3326 = vmatpush1.msra.mxu0 0.0
      %3327 = vmatprep.subr.mxu0 0.0
      %3328 = vmatpush1.msra.mxu0 0.0
      %3329 = vmatprep.subr.mxu0 0.0
      %3330 = vmatpush1.msra.mxu0 0.0
      %3331 = vmatprep.subr.mxu0 0.0
      %3332 = vmatpush1.msra.mxu0 0.0
      %3333 = vmatprep.subr.mxu0 0.0
      %3334 = vmatpush1.msra.mxu0 0.0
      %3335 = vmatprep.subr.mxu0 0.0
      %3336 = vmatpush1.msra.mxu0 0.0
      %3337 = vmatprep.subr.mxu0 0.0
      %3338 = vmatpush1.msra.mxu0 0.0
      %3339 = vmatprep.subr.mxu0 0.0
      %3340 = vmatpush1.msra.mxu0 0.0
      %3341 = vmatprep.subr.mxu0 0.0
      %3342 = vmatpush1.msra.mxu0 0.0
      %3343 = vmatprep.subr.mxu0 0.0
      %3344 = vmatpush1.msra.mxu0 0.0
      %3345 = vmatprep.subr.mxu0 0.0
      %3346 = vmatpush1.msra.mxu0 0.0
      %3347 = vmatprep.mubr.f32.mxu0 0.0
      %3348 = vmatmul.mubr.f32.gmra.mrb[0].mxu0 %v3281
      %v3349 = vpop.f32.mrb[0].mxu0
      %v3350 = vadd.f32 0.0, %v3349
      %v3351 = vpop.f32.mrb[0].mxu0
      %3352 = vdwg.mxu0
      %v3354 = vsel %vm3078, %v456, 0
      %3356 = vmatprep.subr.mxu0 0.0
      %3357 = vmatpush1.msra.mxu0 %v3350
      %3358 = vmatprep.subr.mxu0 0.0
      %3359 = vmatpush1.msra.mxu0 0.0
      %3360 = vmatprep.subr.mxu0 0.0
      %3361 = vmatpush1.msra.mxu0 0.0
      %3362 = vmatprep.subr.mxu0 0.0
      %3363 = vmatpush1.msra.mxu0 0.0
      %3364 = vmatprep.subr.mxu0 0.0
      %3365 = vmatpush1.msra.mxu0 0.0
      %3366 = vmatprep.subr.mxu0 0.0
      %3367 = vmatpush1.msra.mxu0 0.0
      %3368 = vmatprep.subr.mxu0 0.0
      %3369 = vmatpush1.msra.mxu0 0.0
      %3370 = vmatprep.subr.mxu0 0.0
      %3371 = vmatpush1.msra.mxu0 0.0
      %3372 = vmatprep.subr.mxu0 0.0
      %3373 = vmatpush1.msra.mxu0 0.0
      %3374 = vmatprep.subr.mxu0 0.0
      %3375 = vmatpush1.msra.mxu0 0.0
      %3376 = vmatprep.subr.mxu0 0.0
      %3377 = vmatpush1.msra.mxu0 0.0
      %3378 = vmatprep.subr.mxu0 0.0
      %3379 = vmatpush1.msra.mxu0 0.0
      %3380 = vmatprep.subr.mxu0 0.0
      %3381 = vmatpush1.msra.mxu0 0.0
      %3382 = vmatprep.subr.mxu0 0.0
      %3383 = vmatpush1.msra.mxu0 0.0
      %3384 = vmatprep.subr.mxu0 0.0
      %3385 = vmatpush1.msra.mxu0 0.0
      %3386 = vmatprep.subr.mxu0 0.0
      %3387 = vmatpush1.msra.mxu0 0.0
      %3388 = vmatprep.subr.mxu0 0.0
      %3389 = vmatpush1.msra.mxu0 0.0
      %3390 = vmatprep.subr.mxu0 0.0
      %3391 = vmatpush1.msra.mxu0 0.0
      %3392 = vmatprep.subr.mxu0 0.0
      %3393 = vmatpush1.msra.mxu0 0.0
      %3394 = vmatprep.subr.mxu0 0.0
      %3395 = vmatpush1.msra.mxu0 0.0
      %3396 = vmatprep.subr.mxu0 0.0
      %3397 = vmatpush1.msra.mxu0 0.0
      %3398 = vmatprep.subr.mxu0 0.0
      %3399 = vmatpush1.msra.mxu0 0.0
      %3400 = vmatprep.subr.mxu0 0.0
      %3401 = vmatpush1.msra.mxu0 0.0
      %3402 = vmatprep.subr.mxu0 0.0
      %3403 = vmatpush1.msra.mxu0 0.0
      %3404 = vmatprep.subr.mxu0 0.0
      %3405 = vmatpush1.msra.mxu0 0.0
      %3406 = vmatprep.subr.mxu0 0.0
      %3407 = vmatpush1.msra.mxu0 0.0
      %3408 = vmatprep.subr.mxu0 0.0
      %3409 = vmatpush1.msra.mxu0 0.0
      %3410 = vmatprep.subr.mxu0 0.0
      %3411 = vmatpush1.msra.mxu0 0.0
      %3412 = vmatprep.subr.mxu0 0.0
      %3413 = vmatpush1.msra.mxu0 0.0
      %3414 = vmatprep.subr.mxu0 0.0
      %3415 = vmatpush1.msra.mxu0 0.0
      %3416 = vmatprep.subr.mxu0 0.0
      %3417 = vmatpush1.msra.mxu0 0.0
      %3418 = vmatprep.subr.mxu0 0.0
      %3419 = vmatpush1.msra.mxu0 0.0
      %3420 = vmatprep.mubr.f32.mxu0 0.0
      %3421 = vmatmul.mubr.f32.gmra.mrb[0].mxu0 %v3354
      %v3422 = vpop.f32.mrb[0].mxu0
      %v3423 = vadd.f32 0.0, %v3422
      %v3424 = vpop.f32.mrb[0].mxu0
      %3425 = vdwg.mxu0
      %s3426 = smul.u32 %s3186, 4
      %s3427 = scalar_lea.vmem [#allocation6], %s3426
      %vm3428 = vcmask 27648
      %3429 = vst.msk [vmem:[%s3427] sm:$0xf] %vm3428, %v3423
      %v3431 = vsel %vm3078, %v3197, 0
      %3433 = vmatprep.subr.mxu0 0.0
      %3434 = vmatpush1.msra.mxu0 %v472
      %3435 = vmatprep.subr.mxu0 0.0
      %3436 = vmatpush1.msra.mxu0 0.0
      %3437 = vmatprep.subr.mxu0 0.0
      %3438 = vmatpush1.msra.mxu0 0.0
      %3439 = vmatprep.subr.mxu0 0.0
      %3440 = vmatpush1.msra.mxu0 0.0
      %3441 = vmatprep.subr.mxu0 0.0
      %3442 = vmatpush1.msra.mxu0 0.0
      %3443 = vmatprep.subr.mxu0 0.0
      %3444 = vmatpush1.msra.mxu0 0.0
      %3445 = vmatprep.subr.mxu0 0.0
      %3446 = vmatpush1.msra.mxu0 0.0
      %3447 = vmatprep.subr.mxu0 0.0
      %3448 = vmatpush1.msra.mxu0 0.0
      %3449 = vmatprep.subr.mxu0 0.0
      %3450 = vmatpush1.msra.mxu0 0.0
      %3451 = vmatprep.subr.mxu0 0.0
      %3452 = vmatpush1.msra.mxu0 0.0
      %3453 = vmatprep.subr.mxu0 0.0
      %3454 = vmatpush1.msra.mxu0 0.0
      %3455 = vmatprep.subr.mxu0 0.0
      %3456 = vmatpush1.msra.mxu0 0.0
      %3457 = vmatprep.subr.mxu0 0.0
      %3458 = vmatpush1.msra.mxu0 0.0
      %3459 = vmatprep.subr.mxu0 0.0
      %3460 = vmatpush1.msra.mxu0 0.0
      %3461 = vmatprep.subr.mxu0 0.0
      %3462 = vmatpush1.msra.mxu0 0.0
      %3463 = vmatprep.subr.mxu0 0.0
      %3464 = vmatpush1.msra.mxu0 0.0
      %3465 = vmatprep.subr.mxu0 0.0
      %3466 = vmatpush1.msra.mxu0 0.0
      %3467 = vmatprep.subr.mxu0 0.0
      %3468 = vmatpush1.msra.mxu0 0.0
      %3469 = vmatprep.subr.mxu0 0.0
      %3470 = vmatpush1.msra.mxu0 0.0
      %3471 = vmatprep.subr.mxu0 0.0
      %3472 = vmatpush1.msra.mxu0 0.0
      %3473 = vmatprep.subr.mxu0 0.0
      %3474 = vmatpush1.msra.mxu0 0.0
      %3475 = vmatprep.subr.mxu0 0.0
      %3476 = vmatpush1.msra.mxu0 0.0
      %3477 = vmatprep.subr.mxu0 0.0
      %3478 = vmatpush1.msra.mxu0 0.0
      %3479 = vmatprep.subr.mxu0 0.0
      %3480 = vmatpush1.msra.mxu0 0.0
      %3481 = vmatprep.subr.mxu0 0.0
      %3482 = vmatpush1.msra.mxu0 0.0
      %3483 = vmatprep.subr.mxu0 0.0
      %3484 = vmatpush1.msra.mxu0 0.0
      %3485 = vmatprep.subr.mxu0 0.0
      %3486 = vmatpush1.msra.mxu0 0.0
      %3487 = vmatprep.subr.mxu0 0.0
      %3488 = vmatpush1.msra.mxu0 0.0
      %3489 = vmatprep.subr.mxu0 0.0
      %3490 = vmatpush1.msra.mxu0 0.0
      %3491 = vmatprep.subr.mxu0 0.0
      %3492 = vmatpush1.msra.mxu0 0.0
      %3493 = vmatprep.subr.mxu0 0.0
      %3494 = vmatpush1.msra.mxu0 0.0
      %3495 = vmatprep.subr.mxu0 0.0
      %3496 = vmatpush1.msra.mxu0 0.0
      %3497 = vmatprep.mubr.f32.mxu0 0.0
      %3498 = vmatmul.mubr.f32.gmra.mrb[0].mxu0 %v3431
      %v3499 = vpop.f32.mrb[0].mxu0
      %v3500 = vadd.f32 0.0, %v3499
      %v3501 = vpop.f32.mrb[0].mxu0
      %3502 = vdwg.mxu0
      %3503 = vmatprep.subr.mxu0 0.0
      %3504 = vmatpush1.msra.mxu0 %v3500
      %3505 = vmatprep.subr.mxu0 0.0
      %3506 = vmatpush1.msra.mxu0 0.0
      %3507 = vmatprep.subr.mxu0 0.0
      %3508 = vmatpush1.msra.mxu0 0.0
      %3509 = vmatprep.subr.mxu0 0.0
      %3510 = vmatpush1.msra.mxu0 0.0
      %3511 = vmatprep.subr.mxu0 0.0
      %3512 = vmatpush1.msra.mxu0 0.0
      %3513 = vmatprep.subr.mxu0 0.0
      %3514 = vmatpush1.msra.mxu0 0.0
      %3515 = vmatprep.subr.mxu0 0.0
      %3516 = vmatpush1.msra.mxu0 0.0
      %3517 = vmatprep.subr.mxu0 0.0
      %3518 = vmatpush1.msra.mxu0 0.0
      %3519 = vmatprep.subr.mxu0 0.0
      %3520 = vmatpush1.msra.mxu0 0.0
      %3521 = vmatprep.subr.mxu0 0.0
      %3522 = vmatpush1.msra.mxu0 0.0
      %3523 = vmatprep.subr.mxu0 0.0
      %3524 = vmatpush1.msra.mxu0 0.0
      %3525 = vmatprep.subr.mxu0 0.0
      %3526 = vmatpush1.msra.mxu0 0.0
      %3527 = vmatprep.subr.mxu0 0.0
      %3528 = vmatpush1.msra.mxu0 0.0
      %3529 = vmatprep.subr.mxu0 0.0
      %3530 = vmatpush1.msra.mxu0 0.0
      %3531 = vmatprep.subr.mxu0 0.0
      %3532 = vmatpush1.msra.mxu0 0.0
      %3533 = vmatprep.subr.mxu0 0.0
      %3534 = vmatpush1.msra.mxu0 0.0
      %3535 = vmatprep.subr.mxu0 0.0
      %3536 = vmatpush1.msra.mxu0 0.0
      %3537 = vmatprep.subr.mxu0 0.0
      %3538 = vmatpush1.msra.mxu0 0.0
      %3539 = vmatprep.subr.mxu0 0.0
      %3540 = vmatpush1.msra.mxu0 0.0
      %3541 = vmatprep.subr.mxu0 0.0
      %3542 = vmatpush1.msra.mxu0 0.0
      %3543 = vmatprep.subr.mxu0 0.0
      %3544 = vmatpush1.msra.mxu0 0.0
      %3545 = vmatprep.subr.mxu0 0.0
      %3546 = vmatpush1.msra.mxu0 0.0
      %3547 = vmatprep.subr.mxu0 0.0
      %3548 = vmatpush1.msra.mxu0 0.0
      %3549 = vmatprep.subr.mxu0 0.0
      %3550 = vmatpush1.msra.mxu0 0.0
      %3551 = vmatprep.subr.mxu0 0.0
      %3552 = vmatpush1.msra.mxu0 0.0
      %3553 = vmatprep.subr.mxu0 0.0
      %3554 = vmatpush1.msra.mxu0 0.0
      %3555 = vmatprep.subr.mxu0 0.0
      %3556 = vmatpush1.msra.mxu0 0.0
      %3557 = vmatprep.subr.mxu0 0.0
      %3558 = vmatpush1.msra.mxu0 0.0
      %3559 = vmatprep.subr.mxu0 0.0
      %3560 = vmatpush1.msra.mxu0 0.0
      %3561 = vmatprep.subr.mxu0 0.0
      %3562 = vmatpush1.msra.mxu0 0.0
      %3563 = vmatprep.subr.mxu0 0.0
      %3564 = vmatpush1.msra.mxu0 0.0
      %3565 = vmatprep.subr.mxu0 0.0
      %3566 = vmatpush1.msra.mxu0 0.0
      %3567 = vmatprep.mubr.f32.mxu0 0.0
      %3568 = vmatmul.mubr.f32.gmra.mrb[0].mxu0 %v3354
      %v3569 = vpop.f32.mrb[0].mxu0
      %v3570 = vadd.f32 0.0, %v3569
      %v3571 = vpop.f32.mrb[0].mxu0
      %3572 = vdwg.mxu0
      %s3573 = scalar_lea.vmem [#allocation7], %s3426
      %3574 = vst.msk [vmem:[%s3573] sm:$0xf] %vm3428, %v3570
      %s3575 = sadd.f32 %s3191, %s3279
      %s3576 = sadd.f32 %s3192, %s3269
    $region28: #{focal_loss_with_iou_and_ssim.3} parent=1 // loop_footer
      %s3190 = sadd.s32 1, %s3186
    $region29: #{focal_loss_with_iou_and_ssim.3} parent=1 // loop_footer_branch
      %3185 = sbr.rel target = $region25
    $region30: #{focal_loss_with_iou_and_ssim.3} parent=1 // loop_exit
      _
    %s3577 = smul.f32 %s3191, 0.125
    %s3578 = scalar_lea.smem [#allocation10], 2
    %3579 = sst [smem:[%s3578]] %s3577
    %s3580 = smul.f32 %s3192, 0.125
    %s3581 = scalar_lea.smem [#allocation12], 2
    %3582 = sst [smem:[%s3581]] %s3580
    %v3583 = vld [vmem:[#allocation6] sm:$0xf]
    %v3584 = vld [vmem:[#allocation6 + $0x4] sm:$0xf]
    %v3585 = vld [vmem:[#allocation6 + $0x8] sm:$0xf]
    %v3586 = vld [vmem:[#allocation6 + $0xc] sm:$0xf]
    %v3587 = vld [vmem:[#allocation6 + $0x10] sm:$0xf]
    %v3588 = vld [vmem:[#allocation6 + $0x14] sm:$0xf]
    %v3589 = vld [vmem:[#allocation6 + $0x18] sm:$0xf]
    %v3590 = vld [vmem:[#allocation6 + $0x1c] sm:$0xf]
    %vm3591 = vcmask 27648
    %v3592 = vsel %vm3591, %v3583, -inf
    %v3593 = vsel %vm3591, %v3584, -inf
    %v3594 = vsel %vm3591, %v3585, -inf
    %v3595 = vsel %vm3591, %v3586, -inf
    %v3596 = vsel %vm3591, %v3587, -inf
    %v3597 = vmax.f32 %v3592, %v3596
    %v3598 = vsel %vm3591, %v3588, -inf
    %v3599 = vmax.f32 %v3593, %v3598
    %v3600 = vsel %vm3591, %v3589, -inf
    %v3601 = vmax.f32 %v3594, %v3600
    %v3602 = vsel %vm3591, %v3590, -inf
    %v3603 = vmax.f32 %v3595, %v3602
    %v3604 = vmax.f32 %v3597, %v3599
    %v3605 = vmax.f32 %v3601, %v3603
    %v3606 = vmax.f32 %v3604, %v3605
    %3607 = vmax.xlane.f32.xlu0 %v3606
    %v3608 = vpop.xlane.xlu0 %3607
    %v3609 = vrot.slane %v3608, 4
    %v3610 = vmax.f32 %v3608, %v3609
    %v3611 = vrot.slane %v3610, 2
    %v3612 = vmax.f32 %v3610, %v3611
    %v3613 = vrot.slane %v3612, 1
    %v3614 = vmax.f32 %v3612, %v3613
    %s3615 = vtos %v3614
    %p3616 = scmp.gt.f32.partialorder %s3615, 128.0
    %s3617 = scalar_select %p3616, 255.0, 1.0
    %v3618 = vsel %vm3591, %v3583, inf
    %v3619 = vsel %vm3591, %v3584, inf
    %v3620 = vsel %vm3591, %v3585, inf
    %v3621 = vsel %vm3591, %v3586, inf
    %v3622 = vsel %vm3591, %v3587, inf
    %v3623 = vmin.f32 %v3618, %v3622
    %v3624 = vsel %vm3591, %v3588, inf
    %v3625 = vmin.f32 %v3619, %v3624
    %v3626 = vsel %vm3591, %v3589, inf
    %v3627 = vmin.f32 %v3620, %v3626
    %v3628 = vsel %vm3591, %v3590, inf
    %v3629 = vmin.f32 %v3621, %v3628
    %v3630 = vmin.f32 %v3623, %v3625
    %v3631 = vmin.f32 %v3627, %v3629
    %v3632 = vmin.f32 %v3630, %v3631
    %3633 = vmin.xlane.f32.xlu0 %v3632
    %v3634 = vpop.xlane.xlu0 %3633
    %v3635 = vrot.slane %v3634, 4
    %v3636 = vmin.f32 %v3634, %v3635
    %v3637 = vrot.slane %v3636, 2
    %v3638 = vmin.f32 %v3636, %v3637
    %v3639 = vrot.slane %v3638, 1
    %v3640 = vmin.f32 %v3638, %v3639
    %s3641 = vtos %v3640
    %p3642 = scmp.lt.f32.partialorder %s3641, -0.5
    %s3643 = scalar_select %p3642, -1.0, 0.0
    %s3644 = ssub.f32 %s3617, %s3643
    %s3645 = smul.f32 %s3644, 0.01
    %s3646 = smul.f32 %s3645, %s3645
    %s3647 = smul.f32 %s3644, 0.03
    %s3648 = smul.f32 %s3647, %s3647
    %v3649 = vsel %vm3136, 0.13646486, 0.0
    %v3650 = vadd.f32 %v3649, 0.0
    %v3651 = vsel %vm3139, 0.13646486, 0.0
    %v3652 = vadd.f32 %v3651, 0.0
    %v3653 = vsel %vm3142, 0.26579726, 0.0
    %v3654 = vadd.f32 %v3650, %v3653
    %v3655 = vsel %vm3145, 0.26579726, 0.0
    %v3656 = vadd.f32 %v3652, %v3655
    %v3657 = vsel %vm3148, 0.33194062, 0.0
    %v3658 = vadd.f32 %v3654, %v3657
    %v3659 = vsel %vm3151, 0.33194062, 0.0
    %v3660 = vadd.f32 %v3656, %v3659
    %v3661 = vsel %vm3154, 0.26579726, 0.0
    %v3662 = vadd.f32 %v3658, %v3661
    %v3663 = vsel %vm3157, 0.26579726, 0.0
    %v3664 = vadd.f32 %v3660, %v3663
    %v3665 = vmul.f32 %v3662, %v3664
    loop: start=0, step=1, limit=8
    $region31: #{focal_loss_with_iou_and_ssim.3} parent=1 // loop_pre_header
      _
    $region32: #{focal_loss_with_iou_and_ssim.3} parent=1 // loop_header
      %s3667 = sphi 0, %s3671
      %p3668 = scmp.ge.s32.totalorder %s3667, 8
      %s3672 = sphi 0.0, %s4067
      %s3673 = sphi 0.0, %s4068
    $region33: #{focal_loss_with_iou_and_ssim.3} parent=1 // loop_header_branch
      %3670 = sbr.rel (%p3668) target = $region37
    $region34: #{focal_loss_with_iou_and_ssim.3} parent=1 // loop_body
      %s3674 = smul.u32 %s3667, 4
      %s3675 = scalar_lea.vmem [#allocation6], %s3674
      %v3676 = vld [vmem:[%s3675] sm:$0xf]
      %s3677 = scalar_lea.vmem [#allocation7], %s3674
      %v3678 = vld [vmem:[%s3677] sm:$0xf]
      %v3679 = vmul.f32 %v3665, %v3676
      %v3680 = vsel %vm3591, %v3679, 0.0
      %3681 = vadd.xlane.f32.xlu0 %v3680
      %v3682 = vpop.xlane.xlu0 %3681
      %v3683 = vrot.slane %v3682, 4
      %v3684 = vadd.f32 %v3682, %v3683
      %v3685 = vrot.slane %v3684, 2
      %v3686 = vadd.f32 %v3684, %v3685
      %v3687 = vrot.slane %v3686, 1
      %v3688 = vadd.f32 %v3686, %v3687
      %s3689 = vtos %v3688
      %v3690 = vmul.f32 %v3665, %v3678
      %v3691 = vsel %vm3591, %v3690, 0.0
      %3692 = vadd.xlane.f32.xlu0 %v3691
      %v3693 = vpop.xlane.xlu0 %3692
      %v3694 = vrot.slane %v3693, 4
      %v3695 = vadd.f32 %v3693, %v3694
      %v3696 = vrot.slane %v3695, 2
      %v3697 = vadd.f32 %v3695, %v3696
      %v3698 = vrot.slane %v3697, 1
      %v3699 = vadd.f32 %v3697, %v3698
      %s3700 = vtos %v3699
      %v3701 = vmul.f32 %v3676, %v3676
      %v3702 = vmul.f32 %v3665, %v3701
      %v3703 = vsel %vm3591, %v3702, 0.0
      %3704 = vadd.xlane.f32.xlu0 %v3703
      %v3705 = vpop.xlane.xlu0 %3704
      %v3706 = vrot.slane %v3705, 4
      %v3707 = vadd.f32 %v3705, %v3706
      %v3708 = vrot.slane %v3707, 2
      %v3709 = vadd.f32 %v3707, %v3708
      %v3710 = vrot.slane %v3709, 1
      %v3711 = vadd.f32 %v3709, %v3710
      %s3712 = vtos %v3711
      %v3713 = vmul.f32 %v3678, %v3678
      %v3714 = vmul.f32 %v3665, %v3713
      %v3715 = vsel %vm3591, %v3714, 0.0
      %3716 = vadd.xlane.f32.xlu0 %v3715
      %v3717 = vpop.xlane.xlu0 %3716
      %v3718 = vrot.slane %v3717, 4
      %v3719 = vadd.f32 %v3717, %v3718
      %v3720 = vrot.slane %v3719, 2
      %v3721 = vadd.f32 %v3719, %v3720
      %v3722 = vrot.slane %v3721, 1
      %v3723 = vadd.f32 %v3721, %v3722
      %s3724 = vtos %v3723
      %v3725 = vmul.f32 %v3676, %v3678
      %v3726 = vmul.f32 %v3665, %v3725
      %v3727 = vsel %vm3591, %v3726, 0.0
      %3728 = vadd.xlane.f32.xlu0 %v3727
      %v3729 = vpop.xlane.xlu0 %3728
      %v3730 = vrot.slane %v3729, 4
      %v3731 = vadd.f32 %v3729, %v3730
      %v3732 = vrot.slane %v3731, 2
      %v3733 = vadd.f32 %v3731, %v3732
      %v3734 = vrot.slane %v3733, 1
      %v3735 = vadd.f32 %v3733, %v3734
      %s3736 = vtos %v3735
      %s3737 = smul.f32 %s3689, %s3689
      %s3738 = smul.f32 %s3700, %s3700
      %s3739 = smul.f32 %s3689, %s3700
      %s3740 = ssub.f32 %s3712, %s3737
      %s3741 = ssub.f32 %s3724, %s3738
      %s3742 = ssub.f32 %s3736, %s3739
      %s3743 = smul.f32 %s3742, 2.0
      %s3744 = sadd.f32 %s3743, %s3648
      %s3745 = sadd.f32 %s3740, %s3741
      %s3746 = sadd.f32 %s3745, %s3648
      %v3747 = vstv %s3746
      %v3748 = vrcp.pop %v3747
      %s3749 = vtos %v3748
      %s3750 = smul.f32 %s3744, %s3749
      %s3751 = smul.f32 %s3739, 2.0
      %s3752 = sadd.f32 %s3751, %s3646
      %s3753 = smul.f32 %s3752, %s3744
      %s3754 = sadd.f32 %s3737, %s3738
      %s3755 = sadd.f32 %s3754, %s3646
      %s3756 = smul.f32 %s3755, %s3746
      %v3757 = vstv %s3756
      %v3758 = vrcp.pop %v3757
      %s3759 = vtos %v3758
      %s3760 = smul.f32 %s3753, %s3759
      %vm3761 = vcmask 31744
      %v3763 = vsel %vm3761, %v3676, 0
      %vm3765 = vcmask 1043456
      %v3767 = vsel %vm3765, %v472, 0
      %3769 = vmatprep.subr.mxu0 0.0
      %3770 = vmatpush1.msra.mxu0 %v3767
      %3771 = vmatprep.subr.mxu0 0.0
      %3772 = vmatpush1.msra.mxu0 0.0
      %3773 = vmatprep.subr.mxu0 0.0
      %3774 = vmatpush1.msra.mxu0 0.0
      %3775 = vmatprep.subr.mxu0 0.0
      %3776 = vmatpush1.msra.mxu0 0.0
      %3777 = vmatprep.subr.mxu0 0.0
      %3778 = vmatpush1.msra.mxu0 0.0
      %3779 = vmatprep.subr.mxu0 0.0
      %3780 = vmatpush1.msra.mxu0 0.0
      %3781 = vmatprep.subr.mxu0 0.0
      %3782 = vmatpush1.msra.mxu0 0.0
      %3783 = vmatprep.subr.mxu0 0.0
      %3784 = vmatpush1.msra.mxu0 0.0
      %3785 = vmatprep.subr.mxu0 0.0
      %3786 = vmatpush1.msra.mxu0 0.0
      %3787 = vmatprep.subr.mxu0 0.0
      %3788 = vmatpush1.msra.mxu0 0.0
      %3789 = vmatprep.subr.mxu0 0.0
      %3790 = vmatpush1.msra.mxu0 0.0
      %3791 = vmatprep.subr.mxu0 0.0
      %3792 = vmatpush1.msra.mxu0 0.0
      %3793 = vmatprep.subr.mxu0 0.0
      %3794 = vmatpush1.msra.mxu0 0.0
      %3795 = vmatprep.subr.mxu0 0.0
      %3796 = vmatpush1.msra.mxu0 0.0
      %3797 = vmatprep.subr.mxu0 0.0
      %3798 = vmatpush1.msra.mxu0 0.0
      %3799 = vmatprep.subr.mxu0 0.0
      %3800 = vmatpush1.msra.mxu0 0.0
      %3801 = vmatprep.subr.mxu0 0.0
      %3802 = vmatpush1.msra.mxu0 0.0
      %3803 = vmatprep.subr.mxu0 0.0
      %3804 = vmatpush1.msra.mxu0 0.0
      %3805 = vmatprep.subr.mxu0 0.0
      %3806 = vmatpush1.msra.mxu0 0.0
      %3807 = vmatprep.subr.mxu0 0.0
      %3808 = vmatpush1.msra.mxu0 0.0
      %3809 = vmatprep.subr.mxu0 0.0
      %3810 = vmatpush1.msra.mxu0 0.0
      %3811 = vmatprep.subr.mxu0 0.0
      %3812 = vmatpush1.msra.mxu0 0.0
      %3813 = vmatprep.subr.mxu0 0.0
      %3814 = vmatpush1.msra.mxu0 0.0
      %3815 = vmatprep.subr.mxu0 0.0
      %3816 = vmatpush1.msra.mxu0 0.0
      %3817 = vmatprep.subr.mxu0 0.0
      %3818 = vmatpush1.msra.mxu0 0.0
      %3819 = vmatprep.subr.mxu0 0.0
      %3820 = vmatpush1.msra.mxu0 0.0
      %3821 = vmatprep.subr.mxu0 0.0
      %3822 = vmatpush1.msra.mxu0 0.0
      %3823 = vmatprep.subr.mxu0 0.0
      %3824 = vmatpush1.msra.mxu0 0.0
      %3825 = vmatprep.subr.mxu0 0.0
      %3826 = vmatpush1.msra.mxu0 0.0
      %3827 = vmatprep.subr.mxu0 0.0
      %3828 = vmatpush1.msra.mxu0 0.0
      %3829 = vmatprep.subr.mxu0 0.0
      %3830 = vmatpush1.msra.mxu0 0.0
      %3831 = vmatprep.subr.mxu0 0.0
      %3832 = vmatpush1.msra.mxu0 0.0
      %3833 = vmatprep.mubr.f32.mxu0 0.0
      %3834 = vmatmul.mubr.f32.gmra.mrb[0].mxu0 %v3763
      %v3835 = vpop.f32.mrb[0].mxu0
      %v3836 = vadd.f32 0.0, %v3835
      %v3837 = vpop.f32.mrb[0].mxu0
      %3838 = vdwg.mxu0
      %v3840 = vsel %vm3761, %v456, 0
      %v3843 = vsel %vm3765, %v3836, 0
      %3845 = vmatprep.subr.mxu0 0.0
      %3846 = vmatpush1.msra.mxu0 %v3843
      %3847 = vmatprep.subr.mxu0 0.0
      %3848 = vmatpush1.msra.mxu0 0.0
      %3849 = vmatprep.subr.mxu0 0.0
      %3850 = vmatpush1.msra.mxu0 0.0
      %3851 = vmatprep.subr.mxu0 0.0
      %3852 = vmatpush1.msra.mxu0 0.0
      %3853 = vmatprep.subr.mxu0 0.0
      %3854 = vmatpush1.msra.mxu0 0.0
      %3855 = vmatprep.subr.mxu0 0.0
      %3856 = vmatpush1.msra.mxu0 0.0
      %3857 = vmatprep.subr.mxu0 0.0
      %3858 = vmatpush1.msra.mxu0 0.0
      %3859 = vmatprep.subr.mxu0 0.0
      %3860 = vmatpush1.msra.mxu0 0.0
      %3861 = vmatprep.subr.mxu0 0.0
      %3862 = vmatpush1.msra.mxu0 0.0
      %3863 = vmatprep.subr.mxu0 0.0
      %3864 = vmatpush1.msra.mxu0 0.0
      %3865 = vmatprep.subr.mxu0 0.0
      %3866 = vmatpush1.msra.mxu0 0.0
      %3867 = vmatprep.subr.mxu0 0.0
      %3868 = vmatpush1.msra.mxu0 0.0
      %3869 = vmatprep.subr.mxu0 0.0
      %3870 = vmatpush1.msra.mxu0 0.0
      %3871 = vmatprep.subr.mxu0 0.0
      %3872 = vmatpush1.msra.mxu0 0.0
      %3873 = vmatprep.subr.mxu0 0.0
      %3874 = vmatpush1.msra.mxu0 0.0
      %3875 = vmatprep.subr.mxu0 0.0
      %3876 = vmatpush1.msra.mxu0 0.0
      %3877 = vmatprep.subr.mxu0 0.0
      %3878 = vmatpush1.msra.mxu0 0.0
      %3879 = vmatprep.subr.mxu0 0.0
      %3880 = vmatpush1.msra.mxu0 0.0
      %3881 = vmatprep.subr.mxu0 0.0
      %3882 = vmatpush1.msra.mxu0 0.0
      %3883 = vmatprep.subr.mxu0 0.0
      %3884 = vmatpush1.msra.mxu0 0.0
      %3885 = vmatprep.subr.mxu0 0.0
      %3886 = vmatpush1.msra.mxu0 0.0
      %3887 = vmatprep.subr.mxu0 0.0
      %3888 = vmatpush1.msra.mxu0 0.0
      %3889 = vmatprep.subr.mxu0 0.0
      %3890 = vmatpush1.msra.mxu0 0.0
      %3891 = vmatprep.subr.mxu0 0.0
      %3892 = vmatpush1.msra.mxu0 0.0
      %3893 = vmatprep.subr.mxu0 0.0
      %3894 = vmatpush1.msra.mxu0 0.0
      %3895 = vmatprep.subr.mxu0 0.0
      %3896 = vmatpush1.msra.mxu0 0.0
      %3897 = vmatprep.subr.mxu0 0.0
      %3898 = vmatpush1.msra.mxu0 0.0
      %3899 = vmatprep.subr.mxu0 0.0
      %3900 = vmatpush1.msra.mxu0 0.0
      %3901 = vmatprep.subr.mxu0 0.0
      %3902 = vmatpush1.msra.mxu0 0.0
      %3903 = vmatprep.subr.mxu0 0.0
      %3904 = vmatpush1.msra.mxu0 0.0
      %3905 = vmatprep.subr.mxu0 0.0
      %3906 = vmatpush1.msra.mxu0 0.0
      %3907 = vmatprep.subr.mxu0 0.0
      %3908 = vmatpush1.msra.mxu0 0.0
      %3909 = vmatprep.mubr.f32.mxu0 0.0
      %3910 = vmatmul.mubr.f32.gmra.mrb[0].mxu0 %v3840
      %v3911 = vpop.f32.mrb[0].mxu0
      %v3912 = vadd.f32 0.0, %v3911
      %v3913 = vpop.f32.mrb[0].mxu0
      %3914 = vdwg.mxu0
      %s3915 = smul.u32 %s3667, 2
      %s3916 = scalar_lea.vmem [#allocation8], %s3915
      %vm3917 = vcmask 9216
      %3918 = vst.msk [vmem:[%s3916] sm:$0x3] %vm3917, %v3912
      %v3920 = vsel %vm3761, %v3678, 0
      %3922 = vmatprep.subr.mxu0 0.0
      %3923 = vmatpush1.msra.mxu0 %v3767
      %3924 = vmatprep.subr.mxu0 0.0
      %3925 = vmatpush1.msra.mxu0 0.0
      %3926 = vmatprep.subr.mxu0 0.0
      %3927 = vmatpush1.msra.mxu0 0.0
      %3928 = vmatprep.subr.mxu0 0.0
      %3929 = vmatpush1.msra.mxu0 0.0
      %3930 = vmatprep.subr.mxu0 0.0
      %3931 = vmatpush1.msra.mxu0 0.0
      %3932 = vmatprep.subr.mxu0 0.0
      %3933 = vmatpush1.msra.mxu0 0.0
      %3934 = vmatprep.subr.mxu0 0.0
      %3935 = vmatpush1.msra.mxu0 0.0
      %3936 = vmatprep.subr.mxu0 0.0
      %3937 = vmatpush1.msra.mxu0 0.0
      %3938 = vmatprep.subr.mxu0 0.0
      %3939 = vmatpush1.msra.mxu0 0.0
      %3940 = vmatprep.subr.mxu0 0.0
      %3941 = vmatpush1.msra.mxu0 0.0
      %3942 = vmatprep.subr.mxu0 0.0
      %3943 = vmatpush1.msra.mxu0 0.0
      %3944 = vmatprep.subr.mxu0 0.0
      %3945 = vmatpush1.msra.mxu0 0.0
      %3946 = vmatprep.subr.mxu0 0.0
      %3947 = vmatpush1.msra.mxu0 0.0
      %3948 = vmatprep.subr.mxu0 0.0
      %3949 = vmatpush1.msra.mxu0 0.0
      %3950 = vmatprep.subr.mxu0 0.0
      %3951 = vmatpush1.msra.mxu0 0.0
      %3952 = vmatprep.subr.mxu0 0.0
      %3953 = vmatpush1.msra.mxu0 0.0
      %3954 = vmatprep.subr.mxu0 0.0
      %3955 = vmatpush1.msra.mxu0 0.0
      %3956 = vmatprep.subr.mxu0 0.0
      %3957 = vmatpush1.msra.mxu0 0.0
      %3958 = vmatprep.subr.mxu0 0.0
      %3959 = vmatpush1.msra.mxu0 0.0
      %3960 = vmatprep.subr.mxu0 0.0
      %3961 = vmatpush1.msra.mxu0 0.0
      %3962 = vmatprep.subr.mxu0 0.0
      %3963 = vmatpush1.msra.mxu0 0.0
      %3964 = vmatprep.subr.mxu0 0.0
      %3965 = vmatpush1.msra.mxu0 0.0
      %3966 = vmatprep.subr.mxu0 0.0
      %3967 = vmatpush1.msra.mxu0 0.0
      %3968 = vmatprep.subr.mxu0 0.0
      %3969 = vmatpush1.msra.mxu0 0.0
      %3970 = vmatprep.subr.mxu0 0.0
      %3971 = vmatpush1.msra.mxu0 0.0
      %3972 = vmatprep.subr.mxu0 0.0
      %3973 = vmatpush1.msra.mxu0 0.0
      %3974 = vmatprep.subr.mxu0 0.0
      %3975 = vmatpush1.msra.mxu0 0.0
      %3976 = vmatprep.subr.mxu0 0.0
      %3977 = vmatpush1.msra.mxu0 0.0
      %3978 = vmatprep.subr.mxu0 0.0
      %3979 = vmatpush1.msra.mxu0 0.0
      %3980 = vmatprep.subr.mxu0 0.0
      %3981 = vmatpush1.msra.mxu0 0.0
      %3982 = vmatprep.subr.mxu0 0.0
      %3983 = vmatpush1.msra.mxu0 0.0
      %3984 = vmatprep.subr.mxu0 0.0
      %3985 = vmatpush1.msra.mxu0 0.0
      %3986 = vmatprep.mubr.f32.mxu0 0.0
      %3987 = vmatmul.mubr.f32.gmra.mrb[0].mxu0 %v3920
      %v3988 = vpop.f32.mrb[0].mxu0
      %v3989 = vadd.f32 0.0, %v3988
      %v3990 = vpop.f32.mrb[0].mxu0
      %3991 = vdwg.mxu0
      %v3993 = vsel %vm3765, %v3989, 0
      %3995 = vmatprep.subr.mxu0 0.0
      %3996 = vmatpush1.msra.mxu0 %v3993
      %3997 = vmatprep.subr.mxu0 0.0
      %3998 = vmatpush1.msra.mxu0 0.0
      %3999 = vmatprep.subr.mxu0 0.0
      %4000 = vmatpush1.msra.mxu0 0.0
      %4001 = vmatprep.subr.mxu0 0.0
      %4002 = vmatpush1.msra.mxu0 0.0
      %4003 = vmatprep.subr.mxu0 0.0
      %4004 = vmatpush1.msra.mxu0 0.0
      %4005 = vmatprep.subr.mxu0 0.0
      %4006 = vmatpush1.msra.mxu0 0.0
      %4007 = vmatprep.subr.mxu0 0.0
      %4008 = vmatpush1.msra.mxu0 0.0
      %4009 = vmatprep.subr.mxu0 0.0
      %4010 = vmatpush1.msra.mxu0 0.0
      %4011 = vmatprep.subr.mxu0 0.0
      %4012 = vmatpush1.msra.mxu0 0.0
      %4013 = vmatprep.subr.mxu0 0.0
      %4014 = vmatpush1.msra.mxu0 0.0
      %4015 = vmatprep.subr.mxu0 0.0
      %4016 = vmatpush1.msra.mxu0 0.0
      %4017 = vmatprep.subr.mxu0 0.0
      %4018 = vmatpush1.msra.mxu0 0.0
      %4019 = vmatprep.subr.mxu0 0.0
      %4020 = vmatpush1.msra.mxu0 0.0
      %4021 = vmatprep.subr.mxu0 0.0
      %4022 = vmatpush1.msra.mxu0 0.0
      %4023 = vmatprep.subr.mxu0 0.0
      %4024 = vmatpush1.msra.mxu0 0.0
      %4025 = vmatprep.subr.mxu0 0.0
      %4026 = vmatpush1.msra.mxu0 0.0
      %4027 = vmatprep.subr.mxu0 0.0
      %4028 = vmatpush1.msra.mxu0 0.0
      %4029 = vmatprep.subr.mxu0 0.0
      %4030 = vmatpush1.msra.mxu0 0.0
      %4031 = vmatprep.subr.mxu0 0.0
      %4032 = vmatpush1.msra.mxu0 0.0
      %4033 = vmatprep.subr.mxu0 0.0
      %4034 = vmatpush1.msra.mxu0 0.0
      %4035 = vmatprep.subr.mxu0 0.0
      %4036 = vmatpush1.msra.mxu0 0.0
      %4037 = vmatprep.subr.mxu0 0.0
      %4038 = vmatpush1.msra.mxu0 0.0
      %4039 = vmatprep.subr.mxu0 0.0
      %4040 = vmatpush1.msra.mxu0 0.0
      %4041 = vmatprep.subr.mxu0 0.0
      %4042 = vmatpush1.msra.mxu0 0.0
      %4043 = vmatprep.subr.mxu0 0.0
      %4044 = vmatpush1.msra.mxu0 0.0
      %4045 = vmatprep.subr.mxu0 0.0
      %4046 = vmatpush1.msra.mxu0 0.0
      %4047 = vmatprep.subr.mxu0 0.0
      %4048 = vmatpush1.msra.mxu0 0.0
      %4049 = vmatprep.subr.mxu0 0.0
      %4050 = vmatpush1.msra.mxu0 0.0
      %4051 = vmatprep.subr.mxu0 0.0
      %4052 = vmatpush1.msra.mxu0 0.0
      %4053 = vmatprep.subr.mxu0 0.0
      %4054 = vmatpush1.msra.mxu0 0.0
      %4055 = vmatprep.subr.mxu0 0.0
      %4056 = vmatpush1.msra.mxu0 0.0
      %4057 = vmatprep.subr.mxu0 0.0
      %4058 = vmatpush1.msra.mxu0 0.0
      %4059 = vmatprep.mubr.f32.mxu0 0.0
      %4060 = vmatmul.mubr.f32.gmra.mrb[0].mxu0 %v3840
      %v4061 = vpop.f32.mrb[0].mxu0
      %v4062 = vadd.f32 0.0, %v4061
      %v4063 = vpop.f32.mrb[0].mxu0
      %4064 = vdwg.mxu0
      %s4065 = scalar_lea.vmem [#allocation9], %s3915
      %4066 = vst.msk [vmem:[%s4065] sm:$0x3] %vm3917, %v4062
      %s4067 = sadd.f32 %s3672, %s3760
      %s4068 = sadd.f32 %s3673, %s3750
    $region35: #{focal_loss_with_iou_and_ssim.3} parent=1 // loop_footer
      %s3671 = sadd.s32 1, %s3667
    $region36: #{focal_loss_with_iou_and_ssim.3} parent=1 // loop_footer_branch
      %3666 = sbr.rel target = $region32
    $region37: #{focal_loss_with_iou_and_ssim.3} parent=1 // loop_exit
      _
    %s4069 = smul.f32 %s3672, 0.125
    %s4070 = scalar_lea.smem [#allocation10], 3
    %4071 = sst [smem:[%s4070]] %s4069
    %s4072 = smul.f32 %s3673, 0.125
    %s4073 = scalar_lea.smem [#allocation12], 3
    %4074 = sst [smem:[%s4073]] %s4072
    %v4075 = vld [vmem:[#allocation8] sm:$0x3]
    %v4076 = vld [vmem:[#allocation8 + $0x2] sm:$0x3]
    %v4077 = vld [vmem:[#allocation8 + $0x4] sm:$0x3]
    %v4078 = vld [vmem:[#allocation8 + $0x6] sm:$0x3]
    %v4079 = vld [vmem:[#allocation8 + $0x8] sm:$0x3]
    %v4080 = vld [vmem:[#allocation8 + $0xa] sm:$0x3]
    %v4081 = vld [vmem:[#allocation8 + $0xc] sm:$0x3]
    %v4082 = vld [vmem:[#allocation8 + $0xe] sm:$0x3]
    %vm4083 = vcmask 9216
    %v4084 = vsel %vm4083, %v4075, -inf
    %v4085 = vsel %vm4083, %v4076, -inf
    %v4086 = vsel %vm4083, %v4077, -inf
    %v4087 = vsel %vm4083, %v4078, -inf
    %v4088 = vsel %vm4083, %v4079, -inf
    %v4089 = vmax.f32 %v4084, %v4088
    %v4090 = vsel %vm4083, %v4080, -inf
    %v4091 = vmax.f32 %v4085, %v4090
    %v4092 = vsel %vm4083, %v4081, -inf
    %v4093 = vmax.f32 %v4086, %v4092
    %v4094 = vsel %vm4083, %v4082, -inf
    %v4095 = vmax.f32 %v4087, %v4094
    %v4096 = vmax.f32 %v4089, %v4091
    %v4097 = vmax.f32 %v4093, %v4095
    %v4098 = vmax.f32 %v4096, %v4097
    %4099 = vmax.xlane.f32.xlu0 %v4098
    %v4100 = vpop.xlane.xlu0 %4099
    %v4101 = vrot.slane %v4100, 4
    %v4102 = vmax.f32 %v4100, %v4101
    %v4103 = vrot.slane %v4102, 2
    %v4104 = vmax.f32 %v4102, %v4103
    %v4105 = vrot.slane %v4104, 1
    %v4106 = vmax.f32 %v4104, %v4105
    %s4107 = vtos %v4106
    %p4108 = scmp.gt.f32.partialorder %s4107, 128.0
    %s4109 = scalar_select %p4108, 255.0, 1.0
    %v4110 = vsel %vm4083, %v4075, inf
    %v4111 = vsel %vm4083, %v4076, inf
    %v4112 = vsel %vm4083, %v4077, inf
    %v4113 = vsel %vm4083, %v4078, inf
    %v4114 = vsel %vm4083, %v4079, inf
    %v4115 = vmin.f32 %v4110, %v4114
    %v4116 = vsel %vm4083, %v4080, inf
    %v4117 = vmin.f32 %v4111, %v4116
    %v4118 = vsel %vm4083, %v4081, inf
    %v4119 = vmin.f32 %v4112, %v4118
    %v4120 = vsel %vm4083, %v4082, inf
    %v4121 = vmin.f32 %v4113, %v4120
    %v4122 = vmin.f32 %v4115, %v4117
    %v4123 = vmin.f32 %v4119, %v4121
    %v4124 = vmin.f32 %v4122, %v4123
    %4125 = vmin.xlane.f32.xlu0 %v4124
    %v4126 = vpop.xlane.xlu0 %4125
    %v4127 = vrot.slane %v4126, 4
    %v4128 = vmin.f32 %v4126, %v4127
    %v4129 = vrot.slane %v4128, 2
    %v4130 = vmin.f32 %v4128, %v4129
    %v4131 = vrot.slane %v4130, 1
    %v4132 = vmin.f32 %v4130, %v4131
    %s4133 = vtos %v4132
    %p4134 = scmp.lt.f32.partialorder %s4133, -0.5
    %s4135 = scalar_select %p4134, -1.0, 0.0
    %s4136 = ssub.f32 %s4109, %s4135
    %s4137 = smul.f32 %s4136, 0.01
    %s4138 = smul.f32 %s4137, %s4137
    %s4139 = smul.f32 %s4136, 0.03
    %s4140 = smul.f32 %s4139, %s4139
    %v4141 = vsel %vm3136, 0.44467196, 0.0
    %v4142 = vadd.f32 %v4141, 0.0
    %v4143 = vsel %vm3139, 0.44467196, 0.0
    %v4144 = vadd.f32 %v4143, 0.0
    %v4145 = vsel %vm3142, 0.5553281, 0.0
    %v4146 = vadd.f32 %v4142, %v4145
    %v4147 = vsel %vm3145, 0.5553281, 0.0
    %v4148 = vadd.f32 %v4144, %v4147
    %v4149 = vmul.f32 %v4146, %v4148
    loop: start=0, step=1, limit=8
    $region38: #{focal_loss_with_iou_and_ssim.3} parent=1 // loop_pre_header
      _
    $region39: #{focal_loss_with_iou_and_ssim.3} parent=1 // loop_header
      %s4151 = sphi 0, %s4155
      %p4152 = scmp.ge.s32.totalorder %s4151, 8
      %s4156 = sphi 0.0, %s4245
      %s4157 = sphi 0.0, %s4246
    $region40: #{focal_loss_with_iou_and_ssim.3} parent=1 // loop_header_branch
      %4154 = sbr.rel (%p4152) target = $region44
    $region41: #{focal_loss_with_iou_and_ssim.3} parent=1 // loop_body
      %s4158 = smul.u32 %s4151, 2
      %s4159 = scalar_lea.vmem [#allocation8], %s4158
      %v4160 = vld [vmem:[%s4159] sm:$0x3]
      %s4161 = scalar_lea.vmem [#allocation9], %s4158
      %v4162 = vld [vmem:[%s4161] sm:$0x3]
      %v4163 = vmul.f32 %v4149, %v4160
      %v4164 = vsel %vm4083, %v4163, 0.0
      %4165 = vadd.xlane.f32.xlu0 %v4164
      %v4166 = vpop.xlane.xlu0 %4165
      %v4167 = vrot.slane %v4166, 4
      %v4168 = vadd.f32 %v4166, %v4167
      %v4169 = vrot.slane %v4168, 2
      %v4170 = vadd.f32 %v4168, %v4169
      %v4171 = vrot.slane %v4170, 1
      %v4172 = vadd.f32 %v4170, %v4171
      %s4173 = vtos %v4172
      %v4174 = vmul.f32 %v4149, %v4162
      %v4175 = vsel %vm4083, %v4174, 0.0
      %4176 = vadd.xlane.f32.xlu0 %v4175
      %v4177 = vpop.xlane.xlu0 %4176
      %v4178 = vrot.slane %v4177, 4
      %v4179 = vadd.f32 %v4177, %v4178
      %v4180 = vrot.slane %v4179, 2
      %v4181 = vadd.f32 %v4179, %v4180
      %v4182 = vrot.slane %v4181, 1
      %v4183 = vadd.f32 %v4181, %v4182
      %s4184 = vtos %v4183
      %v4185 = vmul.f32 %v4160, %v4160
      %v4186 = vmul.f32 %v4149, %v4185
      %v4187 = vsel %vm4083, %v4186, 0.0
      %4188 = vadd.xlane.f32.xlu0 %v4187
      %v4189 = vpop.xlane.xlu0 %4188
      %v4190 = vrot.slane %v4189, 4
      %v4191 = vadd.f32 %v4189, %v4190
      %v4192 = vrot.slane %v4191, 2
      %v4193 = vadd.f32 %v4191, %v4192
      %v4194 = vrot.slane %v4193, 1
      %v4195 = vadd.f32 %v4193, %v4194
      %s4196 = vtos %v4195
      %v4197 = vmul.f32 %v4162, %v4162
      %v4198 = vmul.f32 %v4149, %v4197
      %v4199 = vsel %vm4083, %v4198, 0.0
      %4200 = vadd.xlane.f32.xlu0 %v4199
      %v4201 = vpop.xlane.xlu0 %4200
      %v4202 = vrot.slane %v4201, 4
      %v4203 = vadd.f32 %v4201, %v4202
      %v4204 = vrot.slane %v4203, 2
      %v4205 = vadd.f32 %v4203, %v4204
      %v4206 = vrot.slane %v4205, 1
      %v4207 = vadd.f32 %v4205, %v4206
      %s4208 = vtos %v4207
      %v4209 = vmul.f32 %v4160, %v4162
      %v4210 = vmul.f32 %v4149, %v4209
      %v4211 = vsel %vm4083, %v4210, 0.0
      %4212 = vadd.xlane.f32.xlu0 %v4211
      %v4213 = vpop.xlane.xlu0 %4212
      %v4214 = vrot.slane %v4213, 4
      %v4215 = vadd.f32 %v4213, %v4214
      %v4216 = vrot.slane %v4215, 2
      %v4217 = vadd.f32 %v4215, %v4216
      %v4218 = vrot.slane %v4217, 1
      %v4219 = vadd.f32 %v4217, %v4218
      %s4220 = vtos %v4219
      %s4221 = smul.f32 %s4173, %s4173
      %s4222 = smul.f32 %s4184, %s4184
      %s4223 = smul.f32 %s4173, %s4184
      %s4224 = ssub.f32 %s4196, %s4221
      %s4225 = ssub.f32 %s4208, %s4222
      %s4226 = ssub.f32 %s4220, %s4223
      %s4227 = smul.f32 %s4226, 2.0
      %s4228 = sadd.f32 %s4227, %s4140
      %s4229 = sadd.f32 %s4224, %s4225
      %s4230 = sadd.f32 %s4229, %s4140
      %v4231 = vstv %s4230
      %v4232 = vrcp.pop %v4231
      %s4233 = vtos %v4232
      %s4234 = smul.f32 %s4228, %s4233
      %s4235 = smul.f32 %s4223, 2.0
      %s4236 = sadd.f32 %s4235, %s4138
      %s4237 = smul.f32 %s4236, %s4228
      %s4238 = sadd.f32 %s4221, %s4222
      %s4239 = sadd.f32 %s4238, %s4138
      %s4240 = smul.f32 %s4239, %s4230
      %v4241 = vstv %s4240
      %v4242 = vrcp.pop %v4241
      %s4243 = vtos %v4242
      %s4244 = smul.f32 %s4237, %s4243
      %s4245 = sadd.f32 %s4156, %s4244
      %s4246 = sadd.f32 %s4157, %s4234
    $region42: #{focal_loss_with_iou_and_ssim.3} parent=1 // loop_footer
      %s4155 = sadd.s32 1, %s4151
    $region43: #{focal_loss_with_iou_and_ssim.3} parent=1 // loop_footer_branch
      %4150 = sbr.rel target = $region39
    $region44: #{focal_loss_with_iou_and_ssim.3} parent=1 // loop_exit
      _
    %s4247 = smul.f32 %s4156, 0.125
    %s4248 = scalar_lea.smem [#allocation10], 4
    %4249 = sst [smem:[%s4248]] %s4247
    %s4250 = smul.f32 %s4157, 0.125
    %s4251 = scalar_lea.smem [#allocation12], 4
    %4252 = sst [smem:[%s4251]] %s4250
    // Predicated region
    $region45: #{focal_loss_with_iou_and_ssim.3} parent=1 // pred_check
      _
    $region46: #{focal_loss_with_iou_and_ssim.3} parent=1 // pred_check_branch
      %4254 = sbr.rel (0) target = $region48
    $region47: #{focal_loss_with_iou_and_ssim.3} parent=1 // pred_region
      %s4256 = ssub.s32 16, 16
      %4257 = vsyncadd [#allocation11], %s4256
      %s4259 = sshll.u32 %s2, 4
      %s4260 = int_to_ptr.vmem [resolvable:$true] %s4259
      %4262 = dma.smem_to_vmem [#allocation10], 16, %s4260, [#allocation11]
    $region48: #{focal_loss_with_iou_and_ssim.3} parent=1 // pred_fallthru
      _
    // Predicated region
    $region49: #{focal_loss_with_iou_and_ssim.3} parent=1 // pred_check
      _
    $region50: #{focal_loss_with_iou_and_ssim.3} parent=1 // pred_check_branch
      %4264 = sbr.rel (0) target = $region52
    $region51: #{focal_loss_with_iou_and_ssim.3} parent=1 // pred_region
      %s4266 = ssub.s32 16, 16
      %4267 = vsyncadd [#allocation13], %s4266
      %s4269 = sshll.u32 %s3, 4
      %s4270 = int_to_ptr.vmem [resolvable:$true] %s4269
      %4272 = dma.smem_to_vmem [#allocation12], 16, %s4270, [#allocation13]
    $region52: #{focal_loss_with_iou_and_ssim.3} parent=1 // pred_fallthru
      _
    // Predicated region
    $region53: #{focal_loss_with_iou_and_ssim.3} parent=1 // pred_check
      _
    $region54: #{focal_loss_with_iou_and_ssim.3} parent=1 // pred_check_branch
      %4274 = sbr.rel (0) target = $region56
    $region55: #{focal_loss_with_iou_and_ssim.3} parent=1 // pred_region
      %4275 = dma.done [#allocation11], 16
    $region56: #{focal_loss_with_iou_and_ssim.3} parent=1 // pred_fallthru
      _
    // Predicated region
    $region57: #{focal_loss_with_iou_and_ssim.3} parent=1 // pred_check
      _
    $region58: #{focal_loss_with_iou_and_ssim.3} parent=1 // pred_check_branch
      %4277 = sbr.rel (0) target = $region60
    $region59: #{focal_loss_with_iou_and_ssim.3} parent=1 // pred_region
      %4278 = dma.done [#allocation13], 16
    $region60: #{focal_loss_with_iou_and_ssim.3} parent=1 // pred_fallthru
      _
    %4279 = sfence
    %4280 = vsyncpa [#allocation11], 1
    %4281 = vsyncpa [#allocation13], 1

</llo_original>
